<compile_context>
chip_gen: v7x
topology: tpu7x:2x2x1
jax: 0.10.0
libtpu: 0.0.40
codegen_flags: <defaults>
</compile_context>

<pallas_src>
import jax
import jax.numpy as jnp
from jax.experimental import pallas as pl
from jax.experimental.pallas import tpu as pltpu

BN_EPS = 1e-3  # norm_cfg eps default in the module


# ----------------- wrapper-side weight restructuring (pure JAX) -----------------

def _toeplitz_conv3x3(w_hwio, scale, W, pad_out):
    """Fold a [ZeroPad(1)+Conv3x3+BN-scale] layer into 3 block-Toeplitz mats.

    Returns (3, (W+2)*Cin, Wout*Cout) with Wout = W+2 (zero pad cols kept, so
    the result can be chained as the next layer's padded input) or W for the
    final layer.  Row layout: padded input col w_in, channel ci -> w_in*Cin+ci.
    """
    Cin, Cout = w_hwio.shape[2], w_hwio.shape[3]
    ws = w_hwio.astype(jnp.float32) * scale.astype(jnp.float32)   # fold BN scale
    wp_in = W + 2
    wp_out = W + 2 if pad_out else W
    off = 1 if pad_out else 0
    rows = jnp.arange(W)
    mats = []
    for ky in range(3):
        m = jnp.zeros((wp_in * Cin, wp_out * Cout), jnp.float32)
        for kx in range(3):
            sel = jnp.zeros((wp_in, wp_out), jnp.float32)
            sel = sel.at[rows + kx, rows + off].set(1.0)
            m = m + jnp.kron(sel, ws[ky, kx])
        mats.append(m)
    return jnp.stack(mats)


def _toeplitz_deconv2x2(w_pt, scale, W_in):
    """ConvTranspose2d(k=2,s=2)+BN-scale as 2 matrices (one per output-row
    parity dy), mapping a padded-width input row to a padded-width output row.
    w_pt: (Cin, Cout, 2, 2) PyTorch layout."""
    Cin, Cout = w_pt.shape[0], w_pt.shape[1]
    ws = w_pt.astype(jnp.float32) * scale.astype(jnp.float32)[None, :, None, None]
    wp_in, wp_out = W_in + 2, 2 * W_in + 2
    rows = jnp.arange(W_in)
    mats = []
    for dy in range(2):
        m = jnp.zeros((wp_in * Cin, wp_out * Cout), jnp.float32)
        for dx in range(2):
            sel = jnp.zeros((wp_in, wp_out), jnp.float32)
            sel = sel.at[rows + 1, 2 * rows + dx + 1].set(1.0)
            m = m + jnp.kron(sel, ws[:, :, dy, dx])
        mats.append(m)
    return jnp.stack(mats)


def _bias_row(b, W, pad_out):
    """Per-output-channel bias tiled into the lane-dense row layout (zeros at
    the spatial pad columns so the halo of the next layer stays zero)."""
    t = jnp.tile(b.astype(jnp.float32), W)
    if pad_out:
        z = jnp.zeros((b.shape[0],), jnp.float32)
        t = jnp.concatenate([z, t, z])
    return t.reshape(1, -1)


def _pad_lane_dense(x_nhwc):
    """NHWC -> zero-padded lane-dense slab (N, H+2, (W+2)*C), bf16."""
    N, H, W, C = x_nhwc.shape
    xp = jnp.pad(x_nhwc.astype(jnp.bfloat16), ((0, 0), (1, 1), (1, 1), (0, 0)))
    return xp.reshape(N, H + 2, (W + 2) * C)


# --------------------------------- the kernel ----------------------------------

def _make_kernel(H5, H4, K5, K4c, L5, L4):
    """Kernel closure over static dims / layer counts."""
    BF = jnp.bfloat16

    def dot(a, b):
        return jnp.dot(a, b, preferred_element_type=jnp.float32)

    def kernel(*refs):
        it = iter(refs)
        x5p = next(it); x4p = next(it)                 # pre-padded inputs
        t5 = next(it); b5 = next(it)                   # block_5 weights/bias
        d = next(it); bd = next(it)                    # deconv weights/bias
        t40a = next(it); t40b = next(it); b40 = next(it)   # block_4 layer 0
        t4m = b4m = t4l = b4l = None
        if L4 > 2:
            t4m = next(it); b4m = next(it)             # block_4 middle layers
        if L4 > 1:
            t4l = next(it); b4l = next(it)             # block_4 last layer
        o = next(it)                                   # output
        s5 = next(it); sup = next(it); s4 = next(it)   # VMEM slabs

        # ---- block_5: L5 x [pad+conv3x3+BN+ReLU], activation resident ------
        if L5 > 1:
            z5 = jnp.zeros((1, K5), BF)
            s5[pl.ds(0, 1), :] = z5                    # top/bottom halo rows
            s5[pl.ds(H5 + 1, 1), :] = z5
        y = None
        for l in range(L5):                            # static unroll (small L)
            if l == 0:
                taps = [x5p[0, pl.ds(ky, H5), :] for ky in range(3)]
            else:
                taps = [s5[pl.ds(ky, H5), :] for ky in range(3)]
            acc = dot(taps[0], t5[l, 0]) + dot(taps[1], t5[l, 1]) + dot(taps[2], t5[l, 2])
            y = jnp.maximum(acc + b5[pl.ds(l, 1), :], 0.0)
            if l + 1 < L5:
                s5[pl.ds(1, H5), :] = y.astype(BF)
        y5 = y.astype(BF)                              # (H5, K5), never hits HBM

        # ---- deblock_5: ConvTranspose(2,2)+BN+ReLU, row-interleaved into sup ----
        zc = jnp.zeros((1, K4c), BF)
        sup[pl.ds(0, 1), :] = zc
        sup[pl.ds(H4 + 1, 1), :] = zc
        for dy in range(2):
            u = jnp.maximum(dot(y5, d[dy]) + bd[...], 0.0).astype(BF)  # (H5, K4c)
            for h in range(H5):                        # interleave rows 2h+dy
                sup[pl.ds(1 + 2 * h + dy, 1), :] = u[h:h + 1, :]

        # ---- block_4 layer 0: conv over cat([x_conv4, up]) via split weights ----
        acc = dot(x4p[0, pl.ds(0, H4), :], t40a[0]) + dot(sup[pl.ds(0, H4), :], t40b[0])
        for ky in range(1, 3):
            acc = acc + dot(x4p[0, pl.ds(ky, H4), :], t40a[ky]) \
                      + dot(sup[pl.ds(ky, H4), :], t40b[ky])
        y = jnp.maximum(acc + b40[...], 0.0)

        if L4 == 1:
            o[0] = y.astype(o.dtype)
        else:
            K4f = s4.shape[1]
            zf = jnp.zeros((1, K4f), BF)
            s4[pl.ds(0, 1), :] = zf
            s4[pl.ds(H4 + 1, 1), :] = zf
            s4[pl.ds(1, H4), :] = y.astype(BF)
            for l in range(L4 - 2):                    # middle block_4 layers
                acc = dot(s4[pl.ds(0, H4), :], t4m[l, 0]) \
                    + dot(s4[pl.ds(1, H4), :], t4m[l, 1]) \
                    + dot(s4[pl.ds(2, H4), :], t4m[l, 2])
                s4[pl.ds(1, H4), :] = jnp.maximum(
                    acc + b4m[pl.ds(l, 1), :], 0.0).astype(BF)
            # last layer: unpadded output columns -> lane-dense (W4*F) store
            acc = dot(s4[pl.ds(0, H4), :], t4l[0]) \
                + dot(s4[pl.ds(1, H4), :], t4l[1]) \
                + dot(s4[pl.ds(2, H4), :], t4l[2])
            o[0] = jnp.maximum(acc + b4l[...], 0.0).astype(o.dtype)

    return kernel


# --------------------------------- fused wrapper --------------------------------

def _rpn_fused(params, x4_nhwc, x5_nhwc):
    N, H4, W4, C4 = x4_nhwc.shape
    _, H5, W5, C5 = x5_nhwc.shape
    assert H4 == 2 * H5 and W4 == 2 * W5, "conv4 must be 2x conv5 resolution"

    block5 = params["block_5"]
    w_pt, sd, bd_ = params["deblock_5"]
    block4 = params["block_4"]
    L5, L4 = len(block5), len(block4)
    F = block4[-1][0].shape[3]
    K5, K4c, K4f = (W5 + 2) * C5, (W4 + 2) * C4, (W4 + 2) * F
    NOUT = W4 * F
    BF = jnp.bfloat16

    # Lane-dense pre-padded inputs (fused with the bf16 cast XLA does anyway).
    x5p = _pad_lane_dense(x5_nhwc)
    x4p = _pad_lane_dense(x4_nhwc)

    # Structured weights with BN scale folded in; biases stay f32.
    t5 = jnp.stack([_toeplitz_conv3x3(w, s, W5, True) for (w, s, _) in block5]).astype(BF)
    b5 = jnp.concatenate([_bias_row(b, W5, True) for (_, _, b) in block5], axis=0)
    d = _toeplitz_deconv2x2(w_pt, sd, W5).astype(BF)
    bd = _bias_row(bd_, W4, True)
    w0, s0, b0 = block4[0]
    pad0 = L4 > 1
    t40a = _toeplitz_conv3x3(w0[:, :, :C4, :], s0, W4, pad0).astype(BF)   # x4 half
    t40b = _toeplitz_conv3x3(w0[:, :, C4:, :], s0, W4, pad0).astype(BF)   # up half
    b40 = _bias_row(b0, W4, pad0)

    args = [x5p, x4p, t5, b5, d, bd, t40a, t40b, b40]
    if L4 > 2:
        t4m = jnp.stack([_toeplitz_conv3x3(w, s, W4, True)
                         for (w, s, _) in block4[1:-1]]).astype(BF)
        b4m = jnp.concatenate([_bias_row(b, W4, True)
                               for (_, _, b) in block4[1:-1]], axis=0)
        args += [t4m, b4m]
    if L4 > 1:
        wl, sl, bl = block4[-1]
        t4l = _toeplitz_conv3x3(wl, sl, W4, False).astype(BF)
        b4l = _bias_row(bl, W4, False)
        args += [t4l, b4l]

    def full_spec(a):
        r = a.ndim
        return pl.BlockSpec(a.shape, lambda n, _r=r: (0,) * _r)

    in_specs = [pl.BlockSpec((1, H5 + 2, K5), lambda n: (n, 0, 0)),
                pl.BlockSpec((1, H4 + 2, K4c), lambda n: (n, 0, 0))]
    in_specs += [full_spec(a) for a in args[2:]]

    kernel = _make_kernel(H5, H4, K5, K4c, L5, L4)

    out = pl.pallas_call(
        kernel,
        out_shape=jax.ShapeDtypeStruct((N, H4, NOUT), jnp.float32),
        grid=(N,),
        in_specs=in_specs,
        out_specs=pl.BlockSpec((1, H4, NOUT), lambda n: (n, 0, 0)),
        scratch_shapes=[
            pltpu.VMEM((H5 + 2, K5), BF),     # block_5 padded activation slab
            pltpu.VMEM((H4 + 2, K4c), BF),    # upsampled (`up`) padded slab
            pltpu.VMEM((H4 + 2, K4f), BF),    # block_4 padded activation slab
        ],
        compiler_params=pltpu.CompilerParams(
            dimension_semantics=("parallel",),
            vmem_limit_bytes=32 * 1024 * 1024),
    )(*args)
    return out.reshape(N, H4, W4, F)


# --------------------- pure-JAX reference (bf16-matched) ----------------------

def _conv_ref(x, w_hwio, s, b):
    y = jax.lax.conv_general_dilated(
        x.astype(jnp.bfloat16), w_hwio.astype(jnp.bfloat16),
        window_strides=(1, 1), padding=((1, 1), (1, 1)),
        dimension_numbers=("NHWC", "HWIO", "NHWC"),
        preferred_element_type=jnp.float32)
    return jnp.maximum(y * s.reshape(1, 1, 1, -1) + b.reshape(1, 1, 1, -1), 0.0)


def _deconv_ref(x, w_pt, s, b):
    # w_pt: (Cin, Cout, 2, 2)  (PyTorch ConvTranspose2d layout)
    t = jnp.einsum("nhwc,cdyx->nhwyxd", x.astype(jnp.bfloat16),
                   w_pt.astype(jnp.bfloat16), preferred_element_type=jnp.float32)
    t = jnp.maximum(t * s.reshape(1, 1, 1, 1, 1, -1)
                    + b.reshape(1, 1, 1, 1, 1, -1), 0.0)
    N, H, W = x.shape[:3]
    Cout = w_pt.shape[1]
    t = t.transpose(0, 1, 3, 2, 4, 5)
    return t.reshape(N, 2 * H, 2 * W, Cout)


# --------------------------- parameter initialization --------------------------

def _init_bn(key, c):
    kg, kb, km, kv = jax.random.split(key, 4)
    gamma = 1.0 + 0.1 * jax.random.normal(kg, (c,), jnp.float32)
    beta = 0.1 * jax.random.normal(kb, (c,), jnp.float32)
    mean = 0.1 * jax.random.normal(km, (c,), jnp.float32)
    var = 0.5 + jax.random.uniform(kv, (c,), jnp.float32)
    scale = gamma * jax.lax.rsqrt(var + BN_EPS)
    bias = beta - mean * scale
    return scale, bias


def _init_conv3x3(key, cin, cout):
    fan = 3 * 3 * cin
    return jax.random.normal(key, (3, 3, cin, cout), jnp.float32) / jnp.sqrt(fan)


def _init_block(key, inplanes, planes, num_blocks):
    # mirrors _build_layer: 1 + num_blocks [ZeroPad+Conv3x3+BN+ReLU] layers
    layers = []
    keys = jax.random.split(key, (num_blocks + 1) * 2)
    cin = inplanes
    for i in range(num_blocks + 1):
        w = _init_conv3x3(keys[2 * i], cin, planes)
        s, b = _init_bn(keys[2 * i + 1], planes)
        layers.append((w, s, b))
        cin = planes
    return layers


def init_params(key, layer_nums, num_filters, in_channels):
    k5, kd, k4 = jax.random.split(key, 3)
    block_5 = _init_block(k5, in_channels[0], in_channels[0], layer_nums[0])
    kdw, kdb = jax.random.split(kd)
    cin, cout = in_channels[0], in_channels[1]
    w_pt = jax.random.normal(kdw, (cin, cout, 2, 2), jnp.float32) / jnp.sqrt(4 * cin)
    s, b = _init_bn(kdb, cout)
    block_4 = _init_block(k4, in_channels[1] * 2, num_filters, layer_nums[1])
    return dict(block_5=block_5, deblock_5=(w_pt, s, b), block_4=block_4)


# ----------------------------------- forward -----------------------------------

def rpn_v1_forward(params, x_conv4_nchw, x_conv5_nchw, use_pallas=True):
    x4 = jnp.transpose(x_conv4_nchw, (0, 2, 3, 1))     # NCHW -> NHWC
    x5 = jnp.transpose(x_conv5_nchw, (0, 2, 3, 1))

    if use_pallas:
        out = _rpn_fused(params, x4, x5)
    else:
        x = x5
        for (w, s, b) in params["block_5"]:
            x = _conv_ref(x, w, s, b)
        w_pt, ds_, db_ = params["deblock_5"]
        up = _deconv_ref(x, w_pt, ds_, db_)
        x = jnp.concatenate([x4, up], axis=-1)
        for (w, s, b) in params["block_4"]:
            x = _conv_ref(x, w, s, b)
        out = x

    return (jnp.transpose(out.astype(jnp.float32), (0, 3, 1, 2)),)  # NCHW tuple


# ------------------------------------ main --------------------------------------

if __name__ == "__main__":
    layer_nums = [1, 2]
    num_filters = 16
    in_channels = [16, 8]          # [C(conv5), C(conv4)]
    N, H5, W5 = 2, 8, 8
    H4, W4 = 2 * H5, 2 * W5        # conv4 is 2x the conv5 resolution

    key = jax.random.PRNGKey(0)
    kp, k4, k5 = jax.random.split(key, 3)
    params = init_params(kp, layer_nums, num_filters, in_channels)
    x_conv4 = jax.random.normal(k4, (N, in_channels[1], H4, W4), jnp.float32)
    x_conv5 = jax.random.normal(k5, (N, in_channels[0], H5, W5), jnp.float32)

    out = rpn_v1_forward(params, x_conv4, x_conv5, use_pallas=True)[0]
    out = jax.block_until_ready(out)

    ref = rpn_v1_forward(params, x_conv4, x_conv5, use_pallas=False)[0]
    assert out.shape == (N, num_filters, H4, W4), out.shape
    err = float(jnp.max(jnp.abs(out - ref)) / (jnp.max(jnp.abs(ref)) + 1e-6))
    assert err < 5e-2, err

    print("KERNEL_OK")
</pallas_src>

<mosaic_0001>
module attributes {stable_mosaic.version = 11 : i64} {
  func.func @kernel(%arg0: i32, %arg1: memref<1x10x160xbf16, #tpu.memory_space<vmem>>, %arg2: memref<1x18x144xbf16, #tpu.memory_space<vmem>>, %arg3: memref<2x3x160x160xbf16, #tpu.memory_space<vmem>>, %arg4: memref<2x160xf32, #tpu.memory_space<vmem>>, %arg5: memref<2x160x144xbf16, #tpu.memory_space<vmem>>, %arg6: memref<1x144xf32, #tpu.memory_space<vmem>>, %arg7: memref<3x144x288xbf16, #tpu.memory_space<vmem>>, %arg8: memref<3x144x288xbf16, #tpu.memory_space<vmem>>, %arg9: memref<1x288xf32, #tpu.memory_space<vmem>>, %arg10: memref<1x3x288x288xbf16, #tpu.memory_space<vmem>>, %arg11: memref<1x288xf32, #tpu.memory_space<vmem>>, %arg12: memref<3x288x256xbf16, #tpu.memory_space<vmem>>, %arg13: memref<1x256xf32, #tpu.memory_space<vmem>>, %arg14: memref<1x16x256xf32, #tpu.memory_space<vmem>>, %arg15: memref<10x160xbf16, #tpu.memory_space<vmem>>, %arg16: memref<18x144xbf16, #tpu.memory_space<vmem>>, %arg17: memref<18x288xbf16, #tpu.memory_space<vmem>>) attributes {dimension_semantics = [#tpu.dimension_semantics<parallel>], iteration_bounds = array<i64: 2>, scalar_prefetch = 0 : i64, scratch_operands = 3 : i64, tpu.core_type = #tpu.core_type<tc>, window_params = [{transform_indices = @transform_0, window_bounds = array<i64: 1, 10, 160>}, {transform_indices = @transform_1, window_bounds = array<i64: 1, 18, 144>}, {pipeline_mode = #tpu.pipeline_mode<synchronous>, transform_indices = @transform_2, window_bounds = array<i64: 2, 3, 160, 160>}, {pipeline_mode = #tpu.pipeline_mode<synchronous>, transform_indices = @transform_3, window_bounds = array<i64: 2, 160>}, {pipeline_mode = #tpu.pipeline_mode<synchronous>, transform_indices = @transform_4, window_bounds = array<i64: 2, 160, 144>}, {pipeline_mode = #tpu.pipeline_mode<synchronous>, transform_indices = @transform_5, window_bounds = array<i64: 1, 144>}, {pipeline_mode = #tpu.pipeline_mode<synchronous>, transform_indices = @transform_6, window_bounds = array<i64: 3, 144, 288>}, {pipeline_mode = #tpu.pipeline_mode<synchronous>, transform_indices = @transform_7, window_bounds = array<i64: 3, 144, 288>}, {pipeline_mode = #tpu.pipeline_mode<synchronous>, transform_indices = @transform_8, window_bounds = array<i64: 1, 288>}, {pipeline_mode = #tpu.pipeline_mode<synchronous>, transform_indices = @transform_9, window_bounds = array<i64: 1, 3, 288, 288>}, {pipeline_mode = #tpu.pipeline_mode<synchronous>, transform_indices = @transform_10, window_bounds = array<i64: 1, 288>}, {pipeline_mode = #tpu.pipeline_mode<synchronous>, transform_indices = @transform_11, window_bounds = array<i64: 3, 288, 256>}, {pipeline_mode = #tpu.pipeline_mode<synchronous>, transform_indices = @transform_12, window_bounds = array<i64: 1, 256>}, {transform_indices = @transform_13, window_bounds = array<i64: 1, 16, 256>}]} {
    %cst = arith.constant 0.000000e+00 : bf16
    %0 = vector.broadcast %cst : bf16 to vector<1x160xbf16>
    %c0 = arith.constant 0 : index
    %c0_0 = arith.constant 0 : index
    %1 = vector.load %arg15[%c0, %c0_0] : memref<10x160xbf16, #tpu.memory_space<vmem>>, vector<1x160xbf16>
    tpu.vector_store %arg15[%c0, %c0_0], %0 {strides = array<i32>} : memref<10x160xbf16, #tpu.memory_space<vmem>>, vector<1x160xbf16>,
    %c9 = arith.constant 9 : index
    %c0_1 = arith.constant 0 : index
    %2 = vector.load %arg15[%c9, %c0_1] : memref<10x160xbf16, #tpu.memory_space<vmem>>, vector<1x160xbf16>
    tpu.vector_store %arg15[%c9, %c0_1], %0 {strides = array<i32>} : memref<10x160xbf16, #tpu.memory_space<vmem>>, vector<1x160xbf16>,
    %c0_2 = arith.constant 0 : index
    %c0_3 = arith.constant 0 : index
    %c0_4 = arith.constant 0 : index
    %3 = vector.load %arg1[%c0_2, %c0_3, %c0_4] : memref<1x10x160xbf16, #tpu.memory_space<vmem>>, vector<1x8x160xbf16>
    %4 = vector.shape_cast %3 : vector<1x8x160xbf16> to vector<8x160xbf16>
    %c0_5 = arith.constant 0 : index
    %c1 = arith.constant 1 : index
    %c0_6 = arith.constant 0 : index
    %5 = vector.load %arg1[%c0_5, %c1, %c0_6] : memref<1x10x160xbf16, #tpu.memory_space<vmem>>, vector<1x8x160xbf16>
    %6 = vector.shape_cast %5 : vector<1x8x160xbf16> to vector<8x160xbf16>
    %c0_7 = arith.constant 0 : index
    %c2 = arith.constant 2 : index
    %c0_8 = arith.constant 0 : index
    %7 = vector.load %arg1[%c0_7, %c2, %c0_8] : memref<1x10x160xbf16, #tpu.memory_space<vmem>>, vector<1x8x160xbf16>
    %8 = vector.shape_cast %7 : vector<1x8x160xbf16> to vector<8x160xbf16>
    %c0_9 = arith.constant 0 : index
    %c0_10 = arith.constant 0 : index
    %c0_11 = arith.constant 0 : index
    %c0_12 = arith.constant 0 : index
    %9 = vector.load %arg3[%c0_9, %c0_10, %c0_11, %c0_12] : memref<2x3x160x160xbf16, #tpu.memory_space<vmem>>, vector<1x1x160x160xbf16>
    %10 = vector.shape_cast %9 : vector<1x1x160x160xbf16> to vector<160x160xbf16>
    %cst_13 = arith.constant dense<0.000000e+00> : vector<8x160xf32>
    %11 = tpu.matmul %4, %10, %cst_13 {dimension_numbers = #tpu.dot_dimension_numbers<[1], [0], [0], [1], [0, 0, 1, 1], [], []>} : vector<8x160xbf16>, vector<160x160xbf16>, vector<8x160xf32> -> vector<8x160xf32>
    %c0_14 = arith.constant 0 : index
    %c1_15 = arith.constant 1 : index
    %c0_16 = arith.constant 0 : index
    %c0_17 = arith.constant 0 : index
    %12 = vector.load %arg3[%c0_14, %c1_15, %c0_16, %c0_17] : memref<2x3x160x160xbf16, #tpu.memory_space<vmem>>, vector<1x1x160x160xbf16>
    %13 = vector.shape_cast %12 : vector<1x1x160x160xbf16> to vector<160x160xbf16>
    %cst_18 = arith.constant dense<0.000000e+00> : vector<8x160xf32>
    %14 = tpu.matmul %6, %13, %cst_18 {dimension_numbers = #tpu.dot_dimension_numbers<[1], [0], [0], [1], [0, 0, 1, 1], [], []>} : vector<8x160xbf16>, vector<160x160xbf16>, vector<8x160xf32> -> vector<8x160xf32>
    %15 = arith.addf %11, %14 : vector<8x160xf32>
    %c0_19 = arith.constant 0 : index
    %c2_20 = arith.constant 2 : index
    %c0_21 = arith.constant 0 : index
    %c0_22 = arith.constant 0 : index
    %16 = vector.load %arg3[%c0_19, %c2_20, %c0_21, %c0_22] : memref<2x3x160x160xbf16, #tpu.memory_space<vmem>>, vector<1x1x160x160xbf16>
    %17 = vector.shape_cast %16 : vector<1x1x160x160xbf16> to vector<160x160xbf16>
    %cst_23 = arith.constant dense<0.000000e+00> : vector<8x160xf32>
    %18 = tpu.matmul %8, %17, %cst_23 {dimension_numbers = #tpu.dot_dimension_numbers<[1], [0], [0], [1], [0, 0, 1, 1], [], []>} : vector<8x160xbf16>, vector<160x160xbf16>, vector<8x160xf32> -> vector<8x160xf32>
    %19 = arith.addf %15, %18 : vector<8x160xf32>
    %c0_24 = arith.constant 0 : index
    %c0_25 = arith.constant 0 : index
    %20 = vector.load %arg4[%c0_24, %c0_25] : memref<2x160xf32, #tpu.memory_space<vmem>>, vector<1x160xf32>
    %21 = vector.broadcast %20 : vector<1x160xf32> to vector<8x160xf32>
    %22 = arith.addf %19, %21 : vector<8x160xf32>
    %cst_26 = arith.constant 0.000000e+00 : f32
    %23 = vector.broadcast %cst_26 : f32 to vector<8x160xf32>
    %24 = arith.maximumf %22, %23 : vector<8x160xf32>
    %25 = arith.truncf %24 : vector<8x160xf32> to vector<8x160xbf16>
    %c1_27 = arith.constant 1 : index
    %c0_28 = arith.constant 0 : index
    %26 = vector.load %arg15[%c1_27, %c0_28] : memref<10x160xbf16, #tpu.memory_space<vmem>>, vector<8x160xbf16>
    tpu.vector_store %arg15[%c1_27, %c0_28], %25 {strides = array<i32>} : memref<10x160xbf16, #tpu.memory_space<vmem>>, vector<8x160xbf16>,
    %c0_29 = arith.constant 0 : index
    %c0_30 = arith.constant 0 : index
    %27 = vector.load %arg15[%c0_29, %c0_30] : memref<10x160xbf16, #tpu.memory_space<vmem>>, vector<8x160xbf16>
    %c1_31 = arith.constant 1 : index
    %c0_32 = arith.constant 0 : index
    %28 = vector.load %arg15[%c1_31, %c0_32] : memref<10x160xbf16, #tpu.memory_space<vmem>>, vector<8x160xbf16>
    %c2_33 = arith.constant 2 : index
    %c0_34 = arith.constant 0 : index
    %29 = vector.load %arg15[%c2_33, %c0_34] : memref<10x160xbf16, #tpu.memory_space<vmem>>, vector<8x160xbf16>
    %c1_35 = arith.constant 1 : index
    %c0_36 = arith.constant 0 : index
    %c0_37 = arith.constant 0 : index
    %c0_38 = arith.constant 0 : index
    %30 = vector.load %arg3[%c1_35, %c0_36, %c0_37, %c0_38] : memref<2x3x160x160xbf16, #tpu.memory_space<vmem>>, vector<1x1x160x160xbf16>
    %31 = vector.shape_cast %30 : vector<1x1x160x160xbf16> to vector<160x160xbf16>
    %cst_39 = arith.constant dense<0.000000e+00> : vector<8x160xf32>
    %32 = tpu.matmul %27, %31, %cst_39 {dimension_numbers = #tpu.dot_dimension_numbers<[1], [0], [0], [1], [0, 0, 1, 1], [], []>} : vector<8x160xbf16>, vector<160x160xbf16>, vector<8x160xf32> -> vector<8x160xf32>
    %c1_40 = arith.constant 1 : index
    %c1_41 = arith.constant 1 : index
    %c0_42 = arith.constant 0 : index
    %c0_43 = arith.constant 0 : index
    %33 = vector.load %arg3[%c1_40, %c1_41, %c0_42, %c0_43] : memref<2x3x160x160xbf16, #tpu.memory_space<vmem>>, vector<1x1x160x160xbf16>
    %34 = vector.shape_cast %33 : vector<1x1x160x160xbf16> to vector<160x160xbf16>
    %cst_44 = arith.constant dense<0.000000e+00> : vector<8x160xf32>
    %35 = tpu.matmul %28, %34, %cst_44 {dimension_numbers = #tpu.dot_dimension_numbers<[1], [0], [0], [1], [0, 0, 1, 1], [], []>} : vector<8x160xbf16>, vector<160x160xbf16>, vector<8x160xf32> -> vector<8x160xf32>
    %36 = arith.addf %32, %35 : vector<8x160xf32>
    %c1_45 = arith.constant 1 : index
    %c2_46 = arith.constant 2 : index
    %c0_47 = arith.constant 0 : index
    %c0_48 = arith.constant 0 : index
    %37 = vector.load %arg3[%c1_45, %c2_46, %c0_47, %c0_48] : memref<2x3x160x160xbf16, #tpu.memory_space<vmem>>, vector<1x1x160x160xbf16>
    %38 = vector.shape_cast %37 : vector<1x1x160x160xbf16> to vector<160x160xbf16>
    %cst_49 = arith.constant dense<0.000000e+00> : vector<8x160xf32>
    %39 = tpu.matmul %29, %38, %cst_49 {dimension_numbers = #tpu.dot_dimension_numbers<[1], [0], [0], [1], [0, 0, 1, 1], [], []>} : vector<8x160xbf16>, vector<160x160xbf16>, vector<8x160xf32> -> vector<8x160xf32>
    %40 = arith.addf %36, %39 : vector<8x160xf32>
    %c1_50 = arith.constant 1 : index
    %c0_51 = arith.constant 0 : index
    %41 = vector.load %arg4[%c1_50, %c0_51] : memref<2x160xf32, #tpu.memory_space<vmem>>, vector<1x160xf32>
    %42 = vector.broadcast %41 : vector<1x160xf32> to vector<8x160xf32>
    %43 = arith.addf %40, %42 : vector<8x160xf32>
    %cst_52 = arith.constant 0.000000e+00 : f32
    %44 = vector.broadcast %cst_52 : f32 to vector<8x160xf32>
    %45 = arith.maximumf %43, %44 : vector<8x160xf32>
    %46 = arith.truncf %45 : vector<8x160xf32> to vector<8x160xbf16>
    %cst_53 = arith.constant 0.000000e+00 : bf16
    %47 = vector.broadcast %cst_53 : bf16 to vector<1x144xbf16>
    %c0_54 = arith.constant 0 : index
    %c0_55 = arith.constant 0 : index
    %48 = vector.load %arg16[%c0_54, %c0_55] : memref<18x144xbf16, #tpu.memory_space<vmem>>, vector<1x144xbf16>
    tpu.vector_store %arg16[%c0_54, %c0_55], %47 {strides = array<i32>} : memref<18x144xbf16, #tpu.memory_space<vmem>>, vector<1x144xbf16>,
    %c17 = arith.constant 17 : index
    %c0_56 = arith.constant 0 : index
    %49 = vector.load %arg16[%c17, %c0_56] : memref<18x144xbf16, #tpu.memory_space<vmem>>, vector<1x144xbf16>
    tpu.vector_store %arg16[%c17, %c0_56], %47 {strides = array<i32>} : memref<18x144xbf16, #tpu.memory_space<vmem>>, vector<1x144xbf16>,
    %c0_57 = arith.constant 0 : index
    %c0_58 = arith.constant 0 : index
    %c0_59 = arith.constant 0 : index
    %50 = vector.load %arg5[%c0_57, %c0_58, %c0_59] : memref<2x160x144xbf16, #tpu.memory_space<vmem>>, vector<1x160x144xbf16>
    %51 = vector.shape_cast %50 : vector<1x160x144xbf16> to vector<160x144xbf16>
    %cst_60 = arith.constant dense<0.000000e+00> : vector<8x144xf32>
    %52 = tpu.matmul %46, %51, %cst_60 {dimension_numbers = #tpu.dot_dimension_numbers<[1], [0], [0], [1], [0, 0, 1, 1], [], []>} : vector<8x160xbf16>, vector<160x144xbf16>, vector<8x144xf32> -> vector<8x144xf32>
    %c0_61 = arith.constant 0 : index
    %c0_62 = arith.constant 0 : index
    %53 = vector.load %arg6[%c0_61, %c0_62] : memref<1x144xf32, #tpu.memory_space<vmem>>, vector<1x144xf32>
    %54 = vector.broadcast %53 : vector<1x144xf32> to vector<8x144xf32>
    %55 = arith.addf %52, %54 : vector<8x144xf32>
    %cst_63 = arith.constant 0.000000e+00 : f32
    %56 = vector.broadcast %cst_63 : f32 to vector<8x144xf32>
    %57 = arith.maximumf %55, %56 : vector<8x144xf32>
    %58 = arith.truncf %57 : vector<8x144xf32> to vector<8x144xbf16>
    %59 = vector.extract_strided_slice %58 {offsets = [0, 0], sizes = [1, 144], strides = [1, 1]} : vector<8x144xbf16> to vector<1x144xbf16>
    %c1_64 = arith.constant 1 : index
    %c0_65 = arith.constant 0 : index
    %60 = vector.load %arg16[%c1_64, %c0_65] : memref<18x144xbf16, #tpu.memory_space<vmem>>, vector<1x144xbf16>
    tpu.vector_store %arg16[%c1_64, %c0_65], %59 {strides = array<i32>} : memref<18x144xbf16, #tpu.memory_space<vmem>>, vector<1x144xbf16>,
    %61 = vector.extract_strided_slice %58 {offsets = [1, 0], sizes = [1, 144], strides = [1, 1]} : vector<8x144xbf16> to vector<1x144xbf16>
    %c3 = arith.constant 3 : index
    %c0_66 = arith.constant 0 : index
    %62 = vector.load %arg16[%c3, %c0_66] : memref<18x144xbf16, #tpu.memory_space<vmem>>, vector<1x144xbf16>
    tpu.vector_store %arg16[%c3, %c0_66], %61 {strides = array<i32>} : memref<18x144xbf16, #tpu.memory_space<vmem>>, vector<1x144xbf16>,
    %63 = vector.extract_strided_slice %58 {offsets = [2, 0], sizes = [1, 144], strides = [1, 1]} : vector<8x144xbf16> to vector<1x144xbf16>
    %c5 = arith.constant 5 : index
    %c0_67 = arith.constant 0 : index
    %64 = vector.load %arg16[%c5, %c0_67] : memref<18x144xbf16, #tpu.memory_space<vmem>>, vector<1x144xbf16>
    tpu.vector_store %arg16[%c5, %c0_67], %63 {strides = array<i32>} : memref<18x144xbf16, #tpu.memory_space<vmem>>, vector<1x144xbf16>,
    %65 = vector.extract_strided_slice %58 {offsets = [3, 0], sizes = [1, 144], strides = [1, 1]} : vector<8x144xbf16> to vector<1x144xbf16>
    %c7 = arith.constant 7 : index
    %c0_68 = arith.constant 0 : index
    %66 = vector.load %arg16[%c7, %c0_68] : memref<18x144xbf16, #tpu.memory_space<vmem>>, vector<1x144xbf16>
    tpu.vector_store %arg16[%c7, %c0_68], %65 {strides = array<i32>} : memref<18x144xbf16, #tpu.memory_space<vmem>>, vector<1x144xbf16>,
    %67 = vector.extract_strided_slice %58 {offsets = [4, 0], sizes = [1, 144], strides = [1, 1]} : vector<8x144xbf16> to vector<1x144xbf16>
    %c9_69 = arith.constant 9 : index
    %c0_70 = arith.constant 0 : index
    %68 = vector.load %arg16[%c9_69, %c0_70] : memref<18x144xbf16, #tpu.memory_space<vmem>>, vector<1x144xbf16>
    tpu.vector_store %arg16[%c9_69, %c0_70], %67 {strides = array<i32>} : memref<18x144xbf16, #tpu.memory_space<vmem>>, vector<1x144xbf16>,
    %69 = vector.extract_strided_slice %58 {offsets = [5, 0], sizes = [1, 144], strides = [1, 1]} : vector<8x144xbf16> to vector<1x144xbf16>
    %c11 = arith.constant 11 : index
    %c0_71 = arith.constant 0 : index
    %70 = vector.load %arg16[%c11, %c0_71] : memref<18x144xbf16, #tpu.memory_space<vmem>>, vector<1x144xbf16>
    tpu.vector_store %arg16[%c11, %c0_71], %69 {strides = array<i32>} : memref<18x144xbf16, #tpu.memory_space<vmem>>, vector<1x144xbf16>,
    %71 = vector.extract_strided_slice %58 {offsets = [6, 0], sizes = [1, 144], strides = [1, 1]} : vector<8x144xbf16> to vector<1x144xbf16>
    %c13 = arith.constant 13 : index
    %c0_72 = arith.constant 0 : index
    %72 = vector.load %arg16[%c13, %c0_72] : memref<18x144xbf16, #tpu.memory_space<vmem>>, vector<1x144xbf16>
    tpu.vector_store %arg16[%c13, %c0_72], %71 {strides = array<i32>} : memref<18x144xbf16, #tpu.memory_space<vmem>>, vector<1x144xbf16>,
    %73 = vector.extract_strided_slice %58 {offsets = [7, 0], sizes = [1, 144], strides = [1, 1]} : vector<8x144xbf16> to vector<1x144xbf16>
    %c15 = arith.constant 15 : index
    %c0_73 = arith.constant 0 : index
    %74 = vector.load %arg16[%c15, %c0_73] : memref<18x144xbf16, #tpu.memory_space<vmem>>, vector<1x144xbf16>
    tpu.vector_store %arg16[%c15, %c0_73], %73 {strides = array<i32>} : memref<18x144xbf16, #tpu.memory_space<vmem>>, vector<1x144xbf16>,
    %c1_74 = arith.constant 1 : index
    %c0_75 = arith.constant 0 : index
    %c0_76 = arith.constant 0 : index
    %75 = vector.load %arg5[%c1_74, %c0_75, %c0_76] : memref<2x160x144xbf16, #tpu.memory_space<vmem>>, vector<1x160x144xbf16>
    %76 = vector.shape_cast %75 : vector<1x160x144xbf16> to vector<160x144xbf16>
    %cst_77 = arith.constant dense<0.000000e+00> : vector<8x144xf32>
    %77 = tpu.matmul %46, %76, %cst_77 {dimension_numbers = #tpu.dot_dimension_numbers<[1], [0], [0], [1], [0, 0, 1, 1], [], []>} : vector<8x160xbf16>, vector<160x144xbf16>, vector<8x144xf32> -> vector<8x144xf32>
    %c0_78 = arith.constant 0 : index
    %c0_79 = arith.constant 0 : index
    %78 = vector.load %arg6[%c0_78, %c0_79] : memref<1x144xf32, #tpu.memory_space<vmem>>, vector<1x144xf32>
    %79 = vector.broadcast %78 : vector<1x144xf32> to vector<8x144xf32>
    %80 = arith.addf %77, %79 : vector<8x144xf32>
    %cst_80 = arith.constant 0.000000e+00 : f32
    %81 = vector.broadcast %cst_80 : f32 to vector<8x144xf32>
    %82 = arith.maximumf %80, %81 : vector<8x144xf32>
    %83 = arith.truncf %82 : vector<8x144xf32> to vector<8x144xbf16>
    %84 = vector.extract_strided_slice %83 {offsets = [0, 0], sizes = [1, 144], strides = [1, 1]} : vector<8x144xbf16> to vector<1x144xbf16>
    %c2_81 = arith.constant 2 : index
    %c0_82 = arith.constant 0 : index
    %85 = vector.load %arg16[%c2_81, %c0_82] : memref<18x144xbf16, #tpu.memory_space<vmem>>, vector<1x144xbf16>
    tpu.vector_store %arg16[%c2_81, %c0_82], %84 {strides = array<i32>} : memref<18x144xbf16, #tpu.memory_space<vmem>>, vector<1x144xbf16>,
    %86 = vector.extract_strided_slice %83 {offsets = [1, 0], sizes = [1, 144], strides = [1, 1]} : vector<8x144xbf16> to vector<1x144xbf16>
    %c4 = arith.constant 4 : index
    %c0_83 = arith.constant 0 : index
    %87 = vector.load %arg16[%c4, %c0_83] : memref<18x144xbf16, #tpu.memory_space<vmem>>, vector<1x144xbf16>
    tpu.vector_store %arg16[%c4, %c0_83], %86 {strides = array<i32>} : memref<18x144xbf16, #tpu.memory_space<vmem>>, vector<1x144xbf16>,
    %88 = vector.extract_strided_slice %83 {offsets = [2, 0], sizes = [1, 144], strides = [1, 1]} : vector<8x144xbf16> to vector<1x144xbf16>
    %c6 = arith.constant 6 : index
    %c0_84 = arith.constant 0 : index
    %89 = vector.load %arg16[%c6, %c0_84] : memref<18x144xbf16, #tpu.memory_space<vmem>>, vector<1x144xbf16>
    tpu.vector_store %arg16[%c6, %c0_84], %88 {strides = array<i32>} : memref<18x144xbf16, #tpu.memory_space<vmem>>, vector<1x144xbf16>,
    %90 = vector.extract_strided_slice %83 {offsets = [3, 0], sizes = [1, 144], strides = [1, 1]} : vector<8x144xbf16> to vector<1x144xbf16>
    %c8 = arith.constant 8 : index
    %c0_85 = arith.constant 0 : index
    %91 = vector.load %arg16[%c8, %c0_85] : memref<18x144xbf16, #tpu.memory_space<vmem>>, vector<1x144xbf16>
    tpu.vector_store %arg16[%c8, %c0_85], %90 {strides = array<i32>} : memref<18x144xbf16, #tpu.memory_space<vmem>>, vector<1x144xbf16>,
    %92 = vector.extract_strided_slice %83 {offsets = [4, 0], sizes = [1, 144], strides = [1, 1]} : vector<8x144xbf16> to vector<1x144xbf16>
    %c10 = arith.constant 10 : index
    %c0_86 = arith.constant 0 : index
    %93 = vector.load %arg16[%c10, %c0_86] : memref<18x144xbf16, #tpu.memory_space<vmem>>, vector<1x144xbf16>
    tpu.vector_store %arg16[%c10, %c0_86], %92 {strides = array<i32>} : memref<18x144xbf16, #tpu.memory_space<vmem>>, vector<1x144xbf16>,
    %94 = vector.extract_strided_slice %83 {offsets = [5, 0], sizes = [1, 144], strides = [1, 1]} : vector<8x144xbf16> to vector<1x144xbf16>
    %c12 = arith.constant 12 : index
    %c0_87 = arith.constant 0 : index
    %95 = vector.load %arg16[%c12, %c0_87] : memref<18x144xbf16, #tpu.memory_space<vmem>>, vector<1x144xbf16>
    tpu.vector_store %arg16[%c12, %c0_87], %94 {strides = array<i32>} : memref<18x144xbf16, #tpu.memory_space<vmem>>, vector<1x144xbf16>,
    %96 = vector.extract_strided_slice %83 {offsets = [6, 0], sizes = [1, 144], strides = [1, 1]} : vector<8x144xbf16> to vector<1x144xbf16>
    %c14 = arith.constant 14 : index
    %c0_88 = arith.constant 0 : index
    %97 = vector.load %arg16[%c14, %c0_88] : memref<18x144xbf16, #tpu.memory_space<vmem>>, vector<1x144xbf16>
    tpu.vector_store %arg16[%c14, %c0_88], %96 {strides = array<i32>} : memref<18x144xbf16, #tpu.memory_space<vmem>>, vector<1x144xbf16>,
    %98 = vector.extract_strided_slice %83 {offsets = [7, 0], sizes = [1, 144], strides = [1, 1]} : vector<8x144xbf16> to vector<1x144xbf16>
    %c16 = arith.constant 16 : index
    %c0_89 = arith.constant 0 : index
    %99 = vector.load %arg16[%c16, %c0_89] : memref<18x144xbf16, #tpu.memory_space<vmem>>, vector<1x144xbf16>
    tpu.vector_store %arg16[%c16, %c0_89], %98 {strides = array<i32>} : memref<18x144xbf16, #tpu.memory_space<vmem>>, vector<1x144xbf16>,
    %c0_90 = arith.constant 0 : index
    %c0_91 = arith.constant 0 : index
    %c0_92 = arith.constant 0 : index
    %100 = vector.load %arg2[%c0_90, %c0_91, %c0_92] : memref<1x18x144xbf16, #tpu.memory_space<vmem>>, vector<1x16x144xbf16>
    %101 = vector.shape_cast %100 : vector<1x16x144xbf16> to vector<16x144xbf16>
    %c0_93 = arith.constant 0 : index
    %c0_94 = arith.constant 0 : index
    %c0_95 = arith.constant 0 : index
    %102 = vector.load %arg7[%c0_93, %c0_94, %c0_95] : memref<3x144x288xbf16, #tpu.memory_space<vmem>>, vector<1x144x288xbf16>
    %103 = vector.shape_cast %102 : vector<1x144x288xbf16> to vector<144x288xbf16>
    %cst_96 = arith.constant dense<0.000000e+00> : vector<16x288xf32>
    %104 = tpu.matmul %101, %103, %cst_96 {dimension_numbers = #tpu.dot_dimension_numbers<[1], [0], [0], [1], [0, 0, 1, 1], [], []>} : vector<16x144xbf16>, vector<144x288xbf16>, vector<16x288xf32> -> vector<16x288xf32>
    %c0_97 = arith.constant 0 : index
    %c0_98 = arith.constant 0 : index
    %105 = vector.load %arg16[%c0_97, %c0_98] : memref<18x144xbf16, #tpu.memory_space<vmem>>, vector<16x144xbf16>
    %c0_99 = arith.constant 0 : index
    %c0_100 = arith.constant 0 : index
    %c0_101 = arith.constant 0 : index
    %106 = vector.load %arg8[%c0_99, %c0_100, %c0_101] : memref<3x144x288xbf16, #tpu.memory_space<vmem>>, vector<1x144x288xbf16>
    %107 = vector.shape_cast %106 : vector<1x144x288xbf16> to vector<144x288xbf16>
    %cst_102 = arith.constant dense<0.000000e+00> : vector<16x288xf32>
    %108 = tpu.matmul %105, %107, %cst_102 {dimension_numbers = #tpu.dot_dimension_numbers<[1], [0], [0], [1], [0, 0, 1, 1], [], []>} : vector<16x144xbf16>, vector<144x288xbf16>, vector<16x288xf32> -> vector<16x288xf32>
    %109 = arith.addf %104, %108 : vector<16x288xf32>
    %c0_103 = arith.constant 0 : index
    %c1_104 = arith.constant 1 : index
    %c0_105 = arith.constant 0 : index
    %110 = vector.load %arg2[%c0_103, %c1_104, %c0_105] : memref<1x18x144xbf16, #tpu.memory_space<vmem>>, vector<1x16x144xbf16>
    %111 = vector.shape_cast %110 : vector<1x16x144xbf16> to vector<16x144xbf16>
    %c1_106 = arith.constant 1 : index
    %c0_107 = arith.constant 0 : index
    %c0_108 = arith.constant 0 : index
    %112 = vector.load %arg7[%c1_106, %c0_107, %c0_108] : memref<3x144x288xbf16, #tpu.memory_space<vmem>>, vector<1x144x288xbf16>
    %113 = vector.shape_cast %112 : vector<1x144x288xbf16> to vector<144x288xbf16>
    %cst_109 = arith.constant dense<0.000000e+00> : vector<16x288xf32>
    %114 = tpu.matmul %111, %113, %cst_109 {dimension_numbers = #tpu.dot_dimension_numbers<[1], [0], [0], [1], [0, 0, 1, 1], [], []>} : vector<16x144xbf16>, vector<144x288xbf16>, vector<16x288xf32> -> vector<16x288xf32>
    %115 = arith.addf %109, %114 : vector<16x288xf32>
    %c1_110 = arith.constant 1 : index
    %c0_111 = arith.constant 0 : index
    %116 = vector.load %arg16[%c1_110, %c0_111] : memref<18x144xbf16, #tpu.memory_space<vmem>>, vector<16x144xbf16>
    %c1_112 = arith.constant 1 : index
    %c0_113 = arith.constant 0 : index
    %c0_114 = arith.constant 0 : index
    %117 = vector.load %arg8[%c1_112, %c0_113, %c0_114] : memref<3x144x288xbf16, #tpu.memory_space<vmem>>, vector<1x144x288xbf16>
    %118 = vector.shape_cast %117 : vector<1x144x288xbf16> to vector<144x288xbf16>
    %cst_115 = arith.constant dense<0.000000e+00> : vector<16x288xf32>
    %119 = tpu.matmul %116, %118, %cst_115 {dimension_numbers = #tpu.dot_dimension_numbers<[1], [0], [0], [1], [0, 0, 1, 1], [], []>} : vector<16x144xbf16>, vector<144x288xbf16>, vector<16x288xf32> -> vector<16x288xf32>
    %120 = arith.addf %115, %119 : vector<16x288xf32>
    %c0_116 = arith.constant 0 : index
    %c2_117 = arith.constant 2 : index
    %c0_118 = arith.constant 0 : index
    %121 = vector.load %arg2[%c0_116, %c2_117, %c0_118] : memref<1x18x144xbf16, #tpu.memory_space<vmem>>, vector<1x16x144xbf16>
    %122 = vector.shape_cast %121 : vector<1x16x144xbf16> to vector<16x144xbf16>
    %c2_119 = arith.constant 2 : index
    %c0_120 = arith.constant 0 : index
    %c0_121 = arith.constant 0 : index
    %123 = vector.load %arg7[%c2_119, %c0_120, %c0_121] : memref<3x144x288xbf16, #tpu.memory_space<vmem>>, vector<1x144x288xbf16>
    %124 = vector.shape_cast %123 : vector<1x144x288xbf16> to vector<144x288xbf16>
    %cst_122 = arith.constant dense<0.000000e+00> : vector<16x288xf32>
    %125 = tpu.matmul %122, %124, %cst_122 {dimension_numbers = #tpu.dot_dimension_numbers<[1], [0], [0], [1], [0, 0, 1, 1], [], []>} : vector<16x144xbf16>, vector<144x288xbf16>, vector<16x288xf32> -> vector<16x288xf32>
    %126 = arith.addf %120, %125 : vector<16x288xf32>
    %c2_123 = arith.constant 2 : index
    %c0_124 = arith.constant 0 : index
    %127 = vector.load %arg16[%c2_123, %c0_124] : memref<18x144xbf16, #tpu.memory_space<vmem>>, vector<16x144xbf16>
    %c2_125 = arith.constant 2 : index
    %c0_126 = arith.constant 0 : index
    %c0_127 = arith.constant 0 : index
    %128 = vector.load %arg8[%c2_125, %c0_126, %c0_127] : memref<3x144x288xbf16, #tpu.memory_space<vmem>>, vector<1x144x288xbf16>
    %129 = vector.shape_cast %128 : vector<1x144x288xbf16> to vector<144x288xbf16>
    %cst_128 = arith.constant dense<0.000000e+00> : vector<16x288xf32>
    %130 = tpu.matmul %127, %129, %cst_128 {dimension_numbers = #tpu.dot_dimension_numbers<[1], [0], [0], [1], [0, 0, 1, 1], [], []>} : vector<16x144xbf16>, vector<144x288xbf16>, vector<16x288xf32> -> vector<16x288xf32>
    %131 = arith.addf %126, %130 : vector<16x288xf32>
    %c0_129 = arith.constant 0 : index
    %c0_130 = arith.constant 0 : index
    %132 = vector.load %arg9[%c0_129, %c0_130] : memref<1x288xf32, #tpu.memory_space<vmem>>, vector<1x288xf32>
    %133 = vector.broadcast %132 : vector<1x288xf32> to vector<16x288xf32>
    %134 = arith.addf %131, %133 : vector<16x288xf32>
    %cst_131 = arith.constant 0.000000e+00 : f32
    %135 = vector.broadcast %cst_131 : f32 to vector<16x288xf32>
    %136 = arith.maximumf %134, %135 : vector<16x288xf32>
    %cst_132 = arith.constant 0.000000e+00 : bf16
    %137 = vector.broadcast %cst_132 : bf16 to vector<1x288xbf16>
    %c0_133 = arith.constant 0 : index
    %c0_134 = arith.constant 0 : index
    %138 = vector.load %arg17[%c0_133, %c0_134] : memref<18x288xbf16, #tpu.memory_space<vmem>>, vector<1x288xbf16>
    tpu.vector_store %arg17[%c0_133, %c0_134], %137 {strides = array<i32>} : memref<18x288xbf16, #tpu.memory_space<vmem>>, vector<1x288xbf16>,
    %c17_135 = arith.constant 17 : index
    %c0_136 = arith.constant 0 : index
    %139 = vector.load %arg17[%c17_135, %c0_136] : memref<18x288xbf16, #tpu.memory_space<vmem>>, vector<1x288xbf16>
    tpu.vector_store %arg17[%c17_135, %c0_136], %137 {strides = array<i32>} : memref<18x288xbf16, #tpu.memory_space<vmem>>, vector<1x288xbf16>,
    %140 = arith.truncf %136 : vector<16x288xf32> to vector<16x288xbf16>
    %c1_137 = arith.constant 1 : index
    %c0_138 = arith.constant 0 : index
    %141 = vector.load %arg17[%c1_137, %c0_138] : memref<18x288xbf16, #tpu.memory_space<vmem>>, vector<16x288xbf16>
    tpu.vector_store %arg17[%c1_137, %c0_138], %140 {strides = array<i32>} : memref<18x288xbf16, #tpu.memory_space<vmem>>, vector<16x288xbf16>,
    %c0_139 = arith.constant 0 : index
    %c0_140 = arith.constant 0 : index
    %142 = vector.load %arg17[%c0_139, %c0_140] : memref<18x288xbf16, #tpu.memory_space<vmem>>, vector<16x288xbf16>
    %c0_141 = arith.constant 0 : index
    %c0_142 = arith.constant 0 : index
    %c0_143 = arith.constant 0 : index
    %c0_144 = arith.constant 0 : index
    %143 = vector.load %arg10[%c0_141, %c0_142, %c0_143, %c0_144] : memref<1x3x288x288xbf16, #tpu.memory_space<vmem>>, vector<1x1x288x288xbf16>
    %144 = vector.shape_cast %143 : vector<1x1x288x288xbf16> to vector<288x288xbf16>
    %cst_145 = arith.constant dense<0.000000e+00> : vector<16x288xf32>
    %145 = tpu.matmul %142, %144, %cst_145 {dimension_numbers = #tpu.dot_dimension_numbers<[1], [0], [0], [1], [0, 0, 1, 1], [], []>} : vector<16x288xbf16>, vector<288x288xbf16>, vector<16x288xf32> -> vector<16x288xf32>
    %c1_146 = arith.constant 1 : index
    %c0_147 = arith.constant 0 : index
    %146 = vector.load %arg17[%c1_146, %c0_147] : memref<18x288xbf16, #tpu.memory_space<vmem>>, vector<16x288xbf16>
    %c0_148 = arith.constant 0 : index
    %c1_149 = arith.constant 1 : index
    %c0_150 = arith.constant 0 : index
    %c0_151 = arith.constant 0 : index
    %147 = vector.load %arg10[%c0_148, %c1_149, %c0_150, %c0_151] : memref<1x3x288x288xbf16, #tpu.memory_space<vmem>>, vector<1x1x288x288xbf16>
    %148 = vector.shape_cast %147 : vector<1x1x288x288xbf16> to vector<288x288xbf16>
    %cst_152 = arith.constant dense<0.000000e+00> : vector<16x288xf32>
    %149 = tpu.matmul %146, %148, %cst_152 {dimension_numbers = #tpu.dot_dimension_numbers<[1], [0], [0], [1], [0, 0, 1, 1], [], []>} : vector<16x288xbf16>, vector<288x288xbf16>, vector<16x288xf32> -> vector<16x288xf32>
    %150 = arith.addf %145, %149 : vector<16x288xf32>
    %c2_153 = arith.constant 2 : index
    %c0_154 = arith.constant 0 : index
    %151 = vector.load %arg17[%c2_153, %c0_154] : memref<18x288xbf16, #tpu.memory_space<vmem>>, vector<16x288xbf16>
    %c0_155 = arith.constant 0 : index
    %c2_156 = arith.constant 2 : index
    %c0_157 = arith.constant 0 : index
    %c0_158 = arith.constant 0 : index
    %152 = vector.load %arg10[%c0_155, %c2_156, %c0_157, %c0_158] : memref<1x3x288x288xbf16, #tpu.memory_space<vmem>>, vector<1x1x288x288xbf16>
    %153 = vector.shape_cast %152 : vector<1x1x288x288xbf16> to vector<288x288xbf16>
    %cst_159 = arith.constant dense<0.000000e+00> : vector<16x288xf32>
    %154 = tpu.matmul %151, %153, %cst_159 {dimension_numbers = #tpu.dot_dimension_numbers<[1], [0], [0], [1], [0, 0, 1, 1], [], []>} : vector<16x288xbf16>, vector<288x288xbf16>, vector<16x288xf32> -> vector<16x288xf32>
    %155 = arith.addf %150, %154 : vector<16x288xf32>
    %c0_160 = arith.constant 0 : index
    %c0_161 = arith.constant 0 : index
    %156 = vector.load %arg11[%c0_160, %c0_161] : memref<1x288xf32, #tpu.memory_space<vmem>>, vector<1x288xf32>
    %157 = vector.broadcast %156 : vector<1x288xf32> to vector<16x288xf32>
    %158 = arith.addf %155, %157 : vector<16x288xf32>
    %cst_162 = arith.constant 0.000000e+00 : f32
    %159 = vector.broadcast %cst_162 : f32 to vector<16x288xf32>
    %160 = arith.maximumf %158, %159 : vector<16x288xf32>
    %161 = arith.truncf %160 : vector<16x288xf32> to vector<16x288xbf16>
    %c1_163 = arith.constant 1 : index
    %c0_164 = arith.constant 0 : index
    %162 = vector.load %arg17[%c1_163, %c0_164] : memref<18x288xbf16, #tpu.memory_space<vmem>>, vector<16x288xbf16>
    tpu.vector_store %arg17[%c1_163, %c0_164], %161 {strides = array<i32>} : memref<18x288xbf16, #tpu.memory_space<vmem>>, vector<16x288xbf16>,
    %c0_165 = arith.constant 0 : index
    %c0_166 = arith.constant 0 : index
    %163 = vector.load %arg17[%c0_165, %c0_166] : memref<18x288xbf16, #tpu.memory_space<vmem>>, vector<16x288xbf16>
    %c0_167 = arith.constant 0 : index
    %c0_168 = arith.constant 0 : index
    %c0_169 = arith.constant 0 : index
    %164 = vector.load %arg12[%c0_167, %c0_168, %c0_169] : memref<3x288x256xbf16, #tpu.memory_space<vmem>>, vector<1x288x256xbf16>
    %165 = vector.shape_cast %164 : vector<1x288x256xbf16> to vector<288x256xbf16>
    %cst_170 = arith.constant dense<0.000000e+00> : vector<16x256xf32>
    %166 = tpu.matmul %163, %165, %cst_170 {dimension_numbers = #tpu.dot_dimension_numbers<[1], [0], [0], [1], [0, 0, 1, 1], [], []>} : vector<16x288xbf16>, vector<288x256xbf16>, vector<16x256xf32> -> vector<16x256xf32>
    %c1_171 = arith.constant 1 : index
    %c0_172 = arith.constant 0 : index
    %167 = vector.load %arg17[%c1_171, %c0_172] : memref<18x288xbf16, #tpu.memory_space<vmem>>, vector<16x288xbf16>
    %c1_173 = arith.constant 1 : index
    %c0_174 = arith.constant 0 : index
    %c0_175 = arith.constant 0 : index
    %168 = vector.load %arg12[%c1_173, %c0_174, %c0_175] : memref<3x288x256xbf16, #tpu.memory_space<vmem>>, vector<1x288x256xbf16>
    %169 = vector.shape_cast %168 : vector<1x288x256xbf16> to vector<288x256xbf16>
    %cst_176 = arith.constant dense<0.000000e+00> : vector<16x256xf32>
    %170 = tpu.matmul %167, %169, %cst_176 {dimension_numbers = #tpu.dot_dimension_numbers<[1], [0], [0], [1], [0, 0, 1, 1], [], []>} : vector<16x288xbf16>, vector<288x256xbf16>, vector<16x256xf32> -> vector<16x256xf32>
    %171 = arith.addf %166, %170 : vector<16x256xf32>
    %c2_177 = arith.constant 2 : index
    %c0_178 = arith.constant 0 : index
    %172 = vector.load %arg17[%c2_177, %c0_178] : memref<18x288xbf16, #tpu.memory_space<vmem>>, vector<16x288xbf16>
    %c2_179 = arith.constant 2 : index
    %c0_180 = arith.constant 0 : index
    %c0_181 = arith.constant 0 : index
    %173 = vector.load %arg12[%c2_179, %c0_180, %c0_181] : memref<3x288x256xbf16, #tpu.memory_space<vmem>>, vector<1x288x256xbf16>
    %174 = vector.shape_cast %173 : vector<1x288x256xbf16> to vector<288x256xbf16>
    %cst_182 = arith.constant dense<0.000000e+00> : vector<16x256xf32>
    %175 = tpu.matmul %172, %174, %cst_182 {dimension_numbers = #tpu.dot_dimension_numbers<[1], [0], [0], [1], [0, 0, 1, 1], [], []>} : vector<16x288xbf16>, vector<288x256xbf16>, vector<16x256xf32> -> vector<16x256xf32>
    %176 = arith.addf %171, %175 : vector<16x256xf32>
    %c0_183 = arith.constant 0 : index
    %c0_184 = arith.constant 0 : index
    %177 = vector.load %arg13[%c0_183, %c0_184] : memref<1x256xf32, #tpu.memory_space<vmem>>, vector<1x256xf32>
    %178 = vector.broadcast %177 : vector<1x256xf32> to vector<16x256xf32>
    %179 = arith.addf %176, %178 : vector<16x256xf32>
    %cst_185 = arith.constant 0.000000e+00 : f32
    %180 = vector.broadcast %cst_185 : f32 to vector<16x256xf32>
    %181 = arith.maximumf %179, %180 : vector<16x256xf32>
    %c0_186 = arith.constant 0 : index
    %c0_187 = arith.constant 0 : index
    %c0_188 = arith.constant 0 : index
    %182 = vector.load %arg14[%c0_186, %c0_187, %c0_188] : memref<1x16x256xf32, #tpu.memory_space<vmem>>, vector<1x16x256xf32>
    %183 = vector.shape_cast %182 : vector<1x16x256xf32> to vector<16x256xf32>
    %184 = vector.shape_cast %181 : vector<16x256xf32> to vector<1x16x256xf32>
    tpu.vector_store %arg14[%c0_186, %c0_187, %c0_188], %184 {strides = array<i32>} : memref<1x16x256xf32, #tpu.memory_space<vmem>>, vector<1x16x256xf32>,
    return
  }
  func.func @transform_0(%arg0: i32) -> (i32, i32, i32) {
    %c0_i32 = arith.constant 0 : i32
    %c0_i32_0 = arith.constant 0 : i32
    %c0_i32_1 = arith.constant 0 : i32
    return %arg0, %c0_i32, %c0_i32_0 : i32, i32, i32
  }
  func.func @transform_1(%arg0: i32) -> (i32, i32, i32) {
    %c0_i32 = arith.constant 0 : i32
    %c0_i32_0 = arith.constant 0 : i32
    %c0_i32_1 = arith.constant 0 : i32
    return %arg0, %c0_i32, %c0_i32_0 : i32, i32, i32
  }
  func.func @transform_2(%arg0: i32) -> (i32, i32, i32, i32) {
    %c0_i32 = arith.constant 0 : i32
    %c0_i32_0 = arith.constant 0 : i32
    %c0_i32_1 = arith.constant 0 : i32
    %c0_i32_2 = arith.constant 0 : i32
    %c0_i32_3 = arith.constant 0 : i32
    return %c0_i32, %c0_i32_0, %c0_i32_1, %c0_i32_2 : i32, i32, i32, i32
  }
  func.func @transform_3(%arg0: i32) -> (i32, i32) {
    %c0_i32 = arith.constant 0 : i32
    %c0_i32_0 = arith.constant 0 : i32
    %c0_i32_1 = arith.constant 0 : i32
    return %c0_i32, %c0_i32_0 : i32, i32
  }
  func.func @transform_4(%arg0: i32) -> (i32, i32, i32) {
    %c0_i32 = arith.constant 0 : i32
    %c0_i32_0 = arith.constant 0 : i32
    %c0_i32_1 = arith.constant 0 : i32
    %c0_i32_2 = arith.constant 0 : i32
    return %c0_i32, %c0_i32_0, %c0_i32_1 : i32, i32, i32
  }
  func.func @transform_5(%arg0: i32) -> (i32, i32) {
    %c0_i32 = arith.constant 0 : i32
    %c0_i32_0 = arith.constant 0 : i32
    %c0_i32_1 = arith.constant 0 : i32
    return %c0_i32, %c0_i32_0 : i32, i32
  }
  func.func @transform_6(%arg0: i32) -> (i32, i32, i32) {
    %c0_i32 = arith.constant 0 : i32
    %c0_i32_0 = arith.constant 0 : i32
    %c0_i32_1 = arith.constant 0 : i32
    %c0_i32_2 = arith.constant 0 : i32
    return %c0_i32, %c0_i32_0, %c0_i32_1 : i32, i32, i32
  }
  func.func @transform_7(%arg0: i32) -> (i32, i32, i32) {
    %c0_i32 = arith.constant 0 : i32
    %c0_i32_0 = arith.constant 0 : i32
    %c0_i32_1 = arith.constant 0 : i32
    %c0_i32_2 = arith.constant 0 : i32
    return %c0_i32, %c0_i32_0, %c0_i32_1 : i32, i32, i32
  }
  func.func @transform_8(%arg0: i32) -> (i32, i32) {
    %c0_i32 = arith.constant 0 : i32
    %c0_i32_0 = arith.constant 0 : i32
    %c0_i32_1 = arith.constant 0 : i32
    return %c0_i32, %c0_i32_0 : i32, i32
  }
  func.func @transform_9(%arg0: i32) -> (i32, i32, i32, i32) {
    %c0_i32 = arith.constant 0 : i32
    %c0_i32_0 = arith.constant 0 : i32
    %c0_i32_1 = arith.constant 0 : i32
    %c0_i32_2 = arith.constant 0 : i32
    %c0_i32_3 = arith.constant 0 : i32
    return %c0_i32, %c0_i32_0, %c0_i32_1, %c0_i32_2 : i32, i32, i32, i32
  }
  func.func @transform_10(%arg0: i32) -> (i32, i32) {
    %c0_i32 = arith.constant 0 : i32
    %c0_i32_0 = arith.constant 0 : i32
    %c0_i32_1 = arith.constant 0 : i32
    return %c0_i32, %c0_i32_0 : i32, i32
  }
  func.func @transform_11(%arg0: i32) -> (i32, i32, i32) {
    %c0_i32 = arith.constant 0 : i32
    %c0_i32_0 = arith.constant 0 : i32
    %c0_i32_1 = arith.constant 0 : i32
    %c0_i32_2 = arith.constant 0 : i32
    return %c0_i32, %c0_i32_0, %c0_i32_1 : i32, i32, i32
  }
  func.func @transform_12(%arg0: i32) -> (i32, i32) {
    %c0_i32 = arith.constant 0 : i32
    %c0_i32_0 = arith.constant 0 : i32
    %c0_i32_1 = arith.constant 0 : i32
    return %c0_i32, %c0_i32_0 : i32, i32
  }
  func.func @transform_13(%arg0: i32) -> (i32, i32, i32) {
    %c0_i32 = arith.constant 0 : i32
    %c0_i32_0 = arith.constant 0 : i32
    %c0_i32_1 = arith.constant 0 : i32
    return %arg0, %c0_i32, %c0_i32_0 : i32, i32, i32
  }
}

</mosaic_0001>

<llo_original>
// kernel: tpu_custom_call.1
$region0: #{tpu_custom_call.1}
  #allocation0 [shape = 'u32[]', space=smem, size = 0x4, offset = 0x4, fixed_abs, tag = 'smem constant byte address 0x4 - core index']
  #allocation1 [shape = 'u32[144,128]{1,0:T(1,128)}', space=vmem, size = 0x12000, scoped, tag = 'internal scratch']
  #allocation2 [shape = 'bf16[10,160]{1,0:T(8,128)(2,1)}', space=vmem, size = 0x2000, scoped, tag = 'scratch operand']
  #allocation3 [shape = 'bf16[18,144]{1,0:T(8,128)(2,1)}', space=vmem, size = 0x3000, scoped, tag = 'scratch operand']
  #allocation4 [shape = 'bf16[18,288]{1,0:T(8,128)(2,1)}', space=vmem, size = 0x4800, scoped, tag = 'scratch operand']
  %s0 = inlined_call_operand.vmem [shape: bf16[2,10,160], index: 0, kind: input, shape index: {}]
  %s1 = inlined_call_operand.vmem [shape: bf16[2,18,144], index: 1, kind: input, shape index: {}]
  %s2 = inlined_call_operand.hbm [shape: bf16[2,3,160,160], index: 2, kind: input, shape index: {}]
  %s3 = inlined_call_operand.vmem [shape: f32[2,160], index: 3, kind: input, shape index: {}]
  %s4 = inlined_call_operand.vmem [shape: bf16[2,160,144], index: 4, kind: input, shape index: {}]
  %s5 = inlined_call_operand.vmem [shape: f32[1,144], index: 5, kind: input, shape index: {}]
  %s6 = inlined_call_operand.vmem [shape: bf16[3,144,288], index: 6, kind: input, shape index: {}]
  %s7 = inlined_call_operand.hbm [shape: bf16[3,144,288], index: 7, kind: input, shape index: {}]
  %s8 = inlined_call_operand.vmem [shape: f32[1,288], index: 8, kind: input, shape index: {}]
  %s9 = inlined_call_operand.hbm [shape: bf16[1,3,288,288], index: 9, kind: input, shape index: {}]
  %s10 = inlined_call_operand.vmem [shape: f32[1,288], index: 10, kind: input, shape index: {}]
  %s11 = inlined_call_operand.hbm [shape: bf16[3,288,256], index: 11, kind: input, shape index: {}]
  %s12 = inlined_call_operand.vmem [shape: f32[1,256], index: 12, kind: input, shape index: {}]
  %s13 = inlined_call_operand.hbm [shape: f32[2,16,256], index: 13, kind: output, shape index: {}]
  %s14 = sld [smem:[#allocation0]]
  $region101: #{tpu_custom_call.1} parent=0
    _
  %s16 = ssub.s32 1, %s14
  %s17 = scalar_select 0, %s16, %s14
  $region1: #{tpu_custom_call.1} parent=0
    #allocation5 [shape = 'u8[491520]{0}', space=vmem, size = 0x78000, scoped, tag = 'input window, operand 2, single buffered']
    #allocation6 [shape = 's32[2]{0}', space=sflag, size = 0x8, scoped, tag = 'scoped memory for tpu_custom_call.1']
    #allocation7 [shape = 's32[2]{0}', space=sflag, size = 0x8, scoped, tag = 'scoped memory for tpu_custom_call.1']
    #allocation8 [shape = 'u8[331776]{0}', space=vmem, size = 0x51000, scoped, tag = 'input window, operand 7, single buffered']
    #allocation9 [shape = 's32[1]{0}', space=sflag, size = 0x4, scoped, tag = 'scoped memory for tpu_custom_call.1']
    #allocation10 [shape = 'u8[663552]{0}', space=vmem, size = 0xa2000, scoped, tag = 'input window, operand 9, single buffered']
    #allocation11 [shape = 'u8[442368]{0}', space=vmem, size = 0x6c000, scoped, tag = 'input window, operand 11, single buffered']
    #allocation12 [shape = 's32[1]{0}', space=sflag, size = 0x4, scoped, tag = 'scoped memory for tpu_custom_call.1']
    #allocation13 [shape = 'u8[32768]{0}', space=vmem, size = 0x8000, scoped, tag = 'output window, operand 0']
    %18 = vsyncpa [#allocation6], 0
    %19 = vsyncpa [#allocation9], 0
    %20 = vsyncpa [#allocation12], 0
    %21 = vsyncpa [#allocation7], 0
    %s22 = scalar_lea.sflag [#allocation7], 1
    %23 = vsyncpa %s22, 0
    loop: start=0, step=1, limit=4
    $region2: #{tpu_custom_call.1} parent=1 // loop_pre_header
      _
    $region3: #{tpu_custom_call.1} parent=1 // loop_header
      %s25 = sphi 0, %s29
      %p26 = scmp.ge.s32.totalorder %s25, 4
      %s35 = sphi 0, %s37
      %s38 = sphi 0, %s35
      %s39 = sphi 0, %s38
      %s55 = sphi 0, %s39
      %s61 = sphi 0, %s63
      %s64 = sphi 0, %s61
      %s65 = sphi 0, %s64
      %s81 = sphi 0, %s65
      %s85 = sphi 0, %s85
      %s87 = sphi 0, %s85
      %s88 = sphi 0, %s87
      %s102 = sphi 0, %s88
      %s106 = sphi 0, %s106
      %s108 = sphi 0, %s106
      %s109 = sphi 0, %s108
      %s123 = sphi 0, %s109
      %s127 = sphi 0, %s127
      %s129 = sphi 0, %s127
      %s130 = sphi 0, %s129
      %s144 = sphi 0, %s130
      %s148 = sphi 0, %s148
      %s150 = sphi 0, %s148
      %s151 = sphi 0, %s150
      %s165 = sphi 0, %s151
      %s169 = sphi 0, %s169
      %s171 = sphi 0, %s169
      %s172 = sphi 0, %s171
      %s186 = sphi 0, %s172
      %s190 = sphi 0, %s190
      %s192 = sphi 0, %s190
      %s193 = sphi 0, %s192
      %s207 = sphi 0, %s193
      %s211 = sphi 0, %s211
      %s213 = sphi 0, %s211
      %s214 = sphi 0, %s213
      %s228 = sphi 0, %s214
      %s232 = sphi 0, %s232
      %s234 = sphi 0, %s232
      %s235 = sphi 0, %s234
      %s249 = sphi 0, %s235
      %s253 = sphi 0, %s253
      %s255 = sphi 0, %s253
      %s256 = sphi 0, %s255
      %s270 = sphi 0, %s256
      %s274 = sphi 0, %s274
      %s276 = sphi 0, %s274
      %s277 = sphi 0, %s276
      %s291 = sphi 0, %s277
      %s295 = sphi 0, %s295
      %s297 = sphi 0, %s295
      %s298 = sphi 0, %s297
      %s312 = sphi 0, %s298
      %s318 = sphi 0, %s320
      %s321 = sphi 0, %s318
      %s322 = sphi 0, %s321
      %s338 = sphi 0, %s322
    $region4: #{tpu_custom_call.1} parent=1 // loop_header_branch
      %28 = sbr.rel (%p26) target = $region8
    $region5: #{tpu_custom_call.1} parent=1 // loop_body
      %s30 = ssub.s32 %s25, 1
      %s31 = ssub.s32 %s25, 2
      %s32 = sadd.s32 %s25, 1
      %s33 = ssub.s32 %s25, %s32
      %p34 = scmp.eq.s32.totalorder %s33, 0
      %s36 = sadd.s32 %s35, 1
      %s37 = scalar_select %p34, %s35, %s36
      %p40 = pneg %p34
      %p41 = scmp.eq.s32.totalorder %s25, 1
      %p42 = por %p40, %p41
      %p43 = scmp.ne.s32.totalorder %s35, %s38
      %p44 = scmp.eq.s32.totalorder %s25, 0
      %p45 = por %p43, %p44
      %p46 = scmp.ne.s32.totalorder %s35, %s38
      %p47 = scmp.eq.s32.totalorder %s30, 1
      %p48 = por %p46, %p47
      %p49 = scmp.ne.s32.totalorder %s38, %s39
      %p50 = scmp.eq.s32.totalorder %s30, 0
      %p51 = por %p49, %p50
      %p52 = scmp.ne.s32.totalorder %s38, %s39
      %p53 = scmp.eq.s32.totalorder %s31, 1
      %p54 = por %p52, %p53
      %p56 = scmp.ne.s32.totalorder %s39, %s55
      %p57 = scmp.eq.s32.totalorder %s31, 0
      %p58 = por %p56, %p57
      %s59 = ssub.s32 %s25, %s32
      %p60 = scmp.eq.s32.totalorder %s59, 0
      %s62 = sadd.s32 %s61, 1
      %s63 = scalar_select %p60, %s61, %s62
      %p66 = pneg %p60
      %p67 = scmp.eq.s32.totalorder %s25, 1
      %p68 = por %p66, %p67
      %p69 = scmp.ne.s32.totalorder %s61, %s64
      %p70 = scmp.eq.s32.totalorder %s25, 0
      %p71 = por %p69, %p70
      %p72 = scmp.ne.s32.totalorder %s61, %s64
      %p73 = scmp.eq.s32.totalorder %s30, 1
      %p74 = por %p72, %p73
      %p75 = scmp.ne.s32.totalorder %s64, %s65
      %p76 = scmp.eq.s32.totalorder %s30, 0
      %p77 = por %p75, %p76
      %p78 = scmp.ne.s32.totalorder %s64, %s65
      %p79 = scmp.eq.s32.totalorder %s31, 1
      %p80 = por %p78, %p79
      %p82 = scmp.ne.s32.totalorder %s65, %s81
      %p83 = scmp.eq.s32.totalorder %s31, 0
      %p84 = por %p82, %p83
      %s86 = sadd.s32 %s85, 1
      %p89 = scmp.eq.s32.totalorder %s25, 1
      %p90 = scmp.ne.s32.totalorder %s85, %s87
      %p91 = scmp.eq.s32.totalorder %s25, 0
      %p92 = por %p90, %p91
      %p93 = scmp.ne.s32.totalorder %s85, %s87
      %p94 = scmp.eq.s32.totalorder %s30, 1
      %p95 = por %p93, %p94
      %p96 = scmp.ne.s32.totalorder %s87, %s88
      %p97 = scmp.eq.s32.totalorder %s30, 0
      %p98 = por %p96, %p97
      %p99 = scmp.ne.s32.totalorder %s87, %s88
      %p100 = scmp.eq.s32.totalorder %s31, 1
      %p101 = por %p99, %p100
      %p103 = scmp.ne.s32.totalorder %s88, %s102
      %p104 = scmp.eq.s32.totalorder %s31, 0
      %p105 = por %p103, %p104
      %s107 = sadd.s32 %s106, 1
      %p110 = scmp.eq.s32.totalorder %s25, 1
      %p111 = scmp.ne.s32.totalorder %s106, %s108
      %p112 = scmp.eq.s32.totalorder %s25, 0
      %p113 = por %p111, %p112
      %p114 = scmp.ne.s32.totalorder %s106, %s108
      %p115 = scmp.eq.s32.totalorder %s30, 1
      %p116 = por %p114, %p115
      %p117 = scmp.ne.s32.totalorder %s108, %s109
      %p118 = scmp.eq.s32.totalorder %s30, 0
      %p119 = por %p117, %p118
      %p120 = scmp.ne.s32.totalorder %s108, %s109
      %p121 = scmp.eq.s32.totalorder %s31, 1
      %p122 = por %p120, %p121
      %p124 = scmp.ne.s32.totalorder %s109, %s123
      %p125 = scmp.eq.s32.totalorder %s31, 0
      %p126 = por %p124, %p125
      %s128 = sadd.s32 %s127, 1
      %p131 = scmp.eq.s32.totalorder %s25, 1
      %p132 = scmp.ne.s32.totalorder %s127, %s129
      %p133 = scmp.eq.s32.totalorder %s25, 0
      %p134 = por %p132, %p133
      %p135 = scmp.ne.s32.totalorder %s127, %s129
      %p136 = scmp.eq.s32.totalorder %s30, 1
      %p137 = por %p135, %p136
      %p138 = scmp.ne.s32.totalorder %s129, %s130
      %p139 = scmp.eq.s32.totalorder %s30, 0
      %p140 = por %p138, %p139
      %p141 = scmp.ne.s32.totalorder %s129, %s130
      %p142 = scmp.eq.s32.totalorder %s31, 1
      %p143 = por %p141, %p142
      %p145 = scmp.ne.s32.totalorder %s130, %s144
      %p146 = scmp.eq.s32.totalorder %s31, 0
      %p147 = por %p145, %p146
      %s149 = sadd.s32 %s148, 1
      %p152 = scmp.eq.s32.totalorder %s25, 1
      %p153 = scmp.ne.s32.totalorder %s148, %s150
      %p154 = scmp.eq.s32.totalorder %s25, 0
      %p155 = por %p153, %p154
      %p156 = scmp.ne.s32.totalorder %s148, %s150
      %p157 = scmp.eq.s32.totalorder %s30, 1
      %p158 = por %p156, %p157
      %p159 = scmp.ne.s32.totalorder %s150, %s151
      %p160 = scmp.eq.s32.totalorder %s30, 0
      %p161 = por %p159, %p160
      %p162 = scmp.ne.s32.totalorder %s150, %s151
      %p163 = scmp.eq.s32.totalorder %s31, 1
      %p164 = por %p162, %p163
      %p166 = scmp.ne.s32.totalorder %s151, %s165
      %p167 = scmp.eq.s32.totalorder %s31, 0
      %p168 = por %p166, %p167
      %s170 = sadd.s32 %s169, 1
      %p173 = scmp.eq.s32.totalorder %s25, 1
      %p174 = scmp.ne.s32.totalorder %s169, %s171
      %p175 = scmp.eq.s32.totalorder %s25, 0
      %p176 = por %p174, %p175
      %p177 = scmp.ne.s32.totalorder %s169, %s171
      %p178 = scmp.eq.s32.totalorder %s30, 1
      %p179 = por %p177, %p178
      %p180 = scmp.ne.s32.totalorder %s171, %s172
      %p181 = scmp.eq.s32.totalorder %s30, 0
      %p182 = por %p180, %p181
      %p183 = scmp.ne.s32.totalorder %s171, %s172
      %p184 = scmp.eq.s32.totalorder %s31, 1
      %p185 = por %p183, %p184
      %p187 = scmp.ne.s32.totalorder %s172, %s186
      %p188 = scmp.eq.s32.totalorder %s31, 0
      %p189 = por %p187, %p188
      %s191 = sadd.s32 %s190, 1
      %p194 = scmp.eq.s32.totalorder %s25, 1
      %p195 = scmp.ne.s32.totalorder %s190, %s192
      %p196 = scmp.eq.s32.totalorder %s25, 0
      %p197 = por %p195, %p196
      %p198 = scmp.ne.s32.totalorder %s190, %s192
      %p199 = scmp.eq.s32.totalorder %s30, 1
      %p200 = por %p198, %p199
      %p201 = scmp.ne.s32.totalorder %s192, %s193
      %p202 = scmp.eq.s32.totalorder %s30, 0
      %p203 = por %p201, %p202
      %p204 = scmp.ne.s32.totalorder %s192, %s193
      %p205 = scmp.eq.s32.totalorder %s31, 1
      %p206 = por %p204, %p205
      %p208 = scmp.ne.s32.totalorder %s193, %s207
      %p209 = scmp.eq.s32.totalorder %s31, 0
      %p210 = por %p208, %p209
      %s212 = sadd.s32 %s211, 1
      %p215 = scmp.eq.s32.totalorder %s25, 1
      %p216 = scmp.ne.s32.totalorder %s211, %s213
      %p217 = scmp.eq.s32.totalorder %s25, 0
      %p218 = por %p216, %p217
      %p219 = scmp.ne.s32.totalorder %s211, %s213
      %p220 = scmp.eq.s32.totalorder %s30, 1
      %p221 = por %p219, %p220
      %p222 = scmp.ne.s32.totalorder %s213, %s214
      %p223 = scmp.eq.s32.totalorder %s30, 0
      %p224 = por %p222, %p223
      %p225 = scmp.ne.s32.totalorder %s213, %s214
      %p226 = scmp.eq.s32.totalorder %s31, 1
      %p227 = por %p225, %p226
      %p229 = scmp.ne.s32.totalorder %s214, %s228
      %p230 = scmp.eq.s32.totalorder %s31, 0
      %p231 = por %p229, %p230
      %s233 = sadd.s32 %s232, 1
      %p236 = scmp.eq.s32.totalorder %s25, 1
      %p237 = scmp.ne.s32.totalorder %s232, %s234
      %p238 = scmp.eq.s32.totalorder %s25, 0
      %p239 = por %p237, %p238
      %p240 = scmp.ne.s32.totalorder %s232, %s234
      %p241 = scmp.eq.s32.totalorder %s30, 1
      %p242 = por %p240, %p241
      %p243 = scmp.ne.s32.totalorder %s234, %s235
      %p244 = scmp.eq.s32.totalorder %s30, 0
      %p245 = por %p243, %p244
      %p246 = scmp.ne.s32.totalorder %s234, %s235
      %p247 = scmp.eq.s32.totalorder %s31, 1
      %p248 = por %p246, %p247
      %p250 = scmp.ne.s32.totalorder %s235, %s249
      %p251 = scmp.eq.s32.totalorder %s31, 0
      %p252 = por %p250, %p251
      %s254 = sadd.s32 %s253, 1
      %p257 = scmp.eq.s32.totalorder %s25, 1
      %p258 = scmp.ne.s32.totalorder %s253, %s255
      %p259 = scmp.eq.s32.totalorder %s25, 0
      %p260 = por %p258, %p259
      %p261 = scmp.ne.s32.totalorder %s253, %s255
      %p262 = scmp.eq.s32.totalorder %s30, 1
      %p263 = por %p261, %p262
      %p264 = scmp.ne.s32.totalorder %s255, %s256
      %p265 = scmp.eq.s32.totalorder %s30, 0
      %p266 = por %p264, %p265
      %p267 = scmp.ne.s32.totalorder %s255, %s256
      %p268 = scmp.eq.s32.totalorder %s31, 1
      %p269 = por %p267, %p268
      %p271 = scmp.ne.s32.totalorder %s256, %s270
      %p272 = scmp.eq.s32.totalorder %s31, 0
      %p273 = por %p271, %p272
      %s275 = sadd.s32 %s274, 1
      %p278 = scmp.eq.s32.totalorder %s25, 1
      %p279 = scmp.ne.s32.totalorder %s274, %s276
      %p280 = scmp.eq.s32.totalorder %s25, 0
      %p281 = por %p279, %p280
      %p282 = scmp.ne.s32.totalorder %s274, %s276
      %p283 = scmp.eq.s32.totalorder %s30, 1
      %p284 = por %p282, %p283
      %p285 = scmp.ne.s32.totalorder %s276, %s277
      %p286 = scmp.eq.s32.totalorder %s30, 0
      %p287 = por %p285, %p286
      %p288 = scmp.ne.s32.totalorder %s276, %s277
      %p289 = scmp.eq.s32.totalorder %s31, 1
      %p290 = por %p288, %p289
      %p292 = scmp.ne.s32.totalorder %s277, %s291
      %p293 = scmp.eq.s32.totalorder %s31, 0
      %p294 = por %p292, %p293
      %s296 = sadd.s32 %s295, 1
      %p299 = scmp.eq.s32.totalorder %s25, 1
      %p300 = scmp.ne.s32.totalorder %s295, %s297
      %p301 = scmp.eq.s32.totalorder %s25, 0
      %p302 = por %p300, %p301
      %p303 = scmp.ne.s32.totalorder %s295, %s297
      %p304 = scmp.eq.s32.totalorder %s30, 1
      %p305 = por %p303, %p304
      %p306 = scmp.ne.s32.totalorder %s297, %s298
      %p307 = scmp.eq.s32.totalorder %s30, 0
      %p308 = por %p306, %p307
      %p309 = scmp.ne.s32.totalorder %s297, %s298
      %p310 = scmp.eq.s32.totalorder %s31, 1
      %p311 = por %p309, %p310
      %p313 = scmp.ne.s32.totalorder %s298, %s312
      %p314 = scmp.eq.s32.totalorder %s31, 0
      %p315 = por %p313, %p314
      %s316 = ssub.s32 %s25, %s32
      %p317 = scmp.eq.s32.totalorder %s316, 0
      %s319 = sadd.s32 %s318, 1
      %s320 = scalar_select %p317, %s318, %s319
      %p323 = pneg %p317
      %p324 = scmp.eq.s32.totalorder %s25, 1
      %p325 = por %p323, %p324
      %p326 = scmp.ne.s32.totalorder %s318, %s321
      %p327 = scmp.eq.s32.totalorder %s25, 0
      %p328 = por %p326, %p327
      %p329 = scmp.ne.s32.totalorder %s318, %s321
      %p330 = scmp.eq.s32.totalorder %s30, 1
      %p331 = por %p329, %p330
      %p332 = scmp.ne.s32.totalorder %s321, %s322
      %p333 = scmp.eq.s32.totalorder %s30, 0
      %p334 = por %p332, %p333
      %p335 = scmp.ne.s32.totalorder %s321, %s322
      %p336 = scmp.eq.s32.totalorder %s31, 1
      %p337 = por %p335, %p336
      %p339 = scmp.ne.s32.totalorder %s322, %s338
      %p340 = scmp.eq.s32.totalorder %s31, 0
      %p341 = por %p339, %p340
      %p342 = scmp.le.s32.totalorder 1, %s25
      %p343 = scmp.lt.s32.totalorder %s25, 3
      %p344 = pnand %p342, %p343
      %p345 = pneg %p344
      // Predicated region
      $region9: #{tpu_custom_call.1} parent=5 // pred_check
        _
      $region10: #{tpu_custom_call.1} parent=5 // pred_check_branch
        %347 = sbr.rel (%p344) target = $region12
      $region11: #{tpu_custom_call.1} parent=5 // pred_region
        %s348 = ssub.s32 %s25, 1
        // Predicated region
        $region13: #{tpu_custom_call.1} parent=11 // pred_check
          %p349 = pneg %p98
        $region14: #{tpu_custom_call.1} parent=11 // pred_check_branch
          %351 = sbr.rel (%p349) target = $region16
        $region15: #{tpu_custom_call.1} parent=11 // pred_region
          %s353 = ssub.s32 15360, 15360
          %354 = vsyncadd [#allocation6], %s353
          %s355 = sshll.u32 [#allocation5], 4
          %s356 = int_to_ptr.vmem [resolvable:$true] %s355
          %361 = dma.hbm_to_vmem [thread:$0]  %s2, 15360, %s356, [#allocation6], 128, 128, 8
        $region16: #{tpu_custom_call.1} parent=11 // pred_fallthru
          _
        // Predicated region
        $region17: #{tpu_custom_call.1} parent=11 // pred_check
          %p362 = pneg %p119
        $region18: #{tpu_custom_call.1} parent=11 // pred_check_branch
          %364 = sbr.rel (%p362) target = $region20
        $region19: #{tpu_custom_call.1} parent=11 // pred_region
          _
        $region20: #{tpu_custom_call.1} parent=11 // pred_fallthru
          _
        // Predicated region
        $region21: #{tpu_custom_call.1} parent=11 // pred_check
          %p365 = pneg %p140
        $region22: #{tpu_custom_call.1} parent=11 // pred_check_branch
          %367 = sbr.rel (%p365) target = $region24
        $region23: #{tpu_custom_call.1} parent=11 // pred_region
          _
        $region24: #{tpu_custom_call.1} parent=11 // pred_fallthru
          _
        // Predicated region
        $region25: #{tpu_custom_call.1} parent=11 // pred_check
          %p368 = pneg %p161
        $region26: #{tpu_custom_call.1} parent=11 // pred_check_branch
          %370 = sbr.rel (%p368) target = $region28
        $region27: #{tpu_custom_call.1} parent=11 // pred_region
          _
        $region28: #{tpu_custom_call.1} parent=11 // pred_fallthru
          _
        // Predicated region
        $region29: #{tpu_custom_call.1} parent=11 // pred_check
          %p371 = pneg %p182
        $region30: #{tpu_custom_call.1} parent=11 // pred_check_branch
          %373 = sbr.rel (%p371) target = $region32
        $region31: #{tpu_custom_call.1} parent=11 // pred_region
          _
        $region32: #{tpu_custom_call.1} parent=11 // pred_fallthru
          _
        // Predicated region
        $region33: #{tpu_custom_call.1} parent=11 // pred_check
          %p374 = pneg %p203
        $region34: #{tpu_custom_call.1} parent=11 // pred_check_branch
          %376 = sbr.rel (%p374) target = $region36
        $region35: #{tpu_custom_call.1} parent=11 // pred_region
          %s378 = ssub.s32 10368, 10368
          %379 = vsyncadd [#allocation9], %s378
          %s380 = sshll.u32 [#allocation8], 4
          %s381 = int_to_ptr.vmem [resolvable:$true] %s380
          %386 = dma.hbm_to_vmem [thread:$0]  %s7, 10368, %s381, [#allocation9], 192, 192, 12
        $region36: #{tpu_custom_call.1} parent=11 // pred_fallthru
          _
        // Predicated region
        $region37: #{tpu_custom_call.1} parent=11 // pred_check
          %p387 = pneg %p224
        $region38: #{tpu_custom_call.1} parent=11 // pred_check_branch
          %389 = sbr.rel (%p387) target = $region40
        $region39: #{tpu_custom_call.1} parent=11 // pred_region
          _
        $region40: #{tpu_custom_call.1} parent=11 // pred_fallthru
          _
        // Predicated region
        $region41: #{tpu_custom_call.1} parent=11 // pred_check
          %p390 = pneg %p245
        $region42: #{tpu_custom_call.1} parent=11 // pred_check_branch
          %392 = sbr.rel (%p390) target = $region44
        $region43: #{tpu_custom_call.1} parent=11 // pred_region
          %s394 = ssub.s32 20736, 20736
          %395 = vsyncadd [#allocation9], %s394
          %s396 = sshll.u32 [#allocation10], 4
          %s397 = int_to_ptr.vmem [resolvable:$true] %s396
          %402 = dma.hbm_to_vmem [thread:$0]  %s9, 20736, %s397, [#allocation9], 192, 192, 12
        $region44: #{tpu_custom_call.1} parent=11 // pred_fallthru
          _
        // Predicated region
        $region45: #{tpu_custom_call.1} parent=11 // pred_check
          %p403 = pneg %p266
        $region46: #{tpu_custom_call.1} parent=11 // pred_check_branch
          %405 = sbr.rel (%p403) target = $region48
        $region47: #{tpu_custom_call.1} parent=11 // pred_region
          _
        $region48: #{tpu_custom_call.1} parent=11 // pred_fallthru
          _
        // Predicated region
        $region49: #{tpu_custom_call.1} parent=11 // pred_check
          %p406 = pneg %p287
        $region50: #{tpu_custom_call.1} parent=11 // pred_check_branch
          %408 = sbr.rel (%p406) target = $region52
        $region51: #{tpu_custom_call.1} parent=11 // pred_region
          %s410 = ssub.s32 13824, 13824
          %411 = vsyncadd [#allocation12], %s410
          %s412 = sshll.u32 [#allocation11], 4
          %s413 = int_to_ptr.vmem [resolvable:$true] %s412
          %418 = dma.hbm_to_vmem [thread:$0]  %s11, 13824, %s413, [#allocation12], 128, 128, 8
        $region52: #{tpu_custom_call.1} parent=11 // pred_fallthru
          _
        // Predicated region
        $region53: #{tpu_custom_call.1} parent=11 // pred_check
          %p419 = pneg %p308
        $region54: #{tpu_custom_call.1} parent=11 // pred_check_branch
          %421 = sbr.rel (%p419) target = $region56
        $region55: #{tpu_custom_call.1} parent=11 // pred_region
          _
        $region56: #{tpu_custom_call.1} parent=11 // pred_fallthru
          _
      $region12: #{tpu_custom_call.1} parent=5 // pred_fallthru
        _
      %p422 = scmp.lt.s32.totalorder %s25, 2
      // Predicated region
      $region57: #{tpu_custom_call.1} parent=5 // pred_check
        %p423 = pneg %p422
      $region58: #{tpu_custom_call.1} parent=5 // pred_check_branch
        %425 = sbr.rel (%p423) target = $region60
      $region59: #{tpu_custom_call.1} parent=5 // pred_region
        // Predicated region
        $region61: #{tpu_custom_call.1} parent=59 // pred_check
          %p426 = pneg %p45
        $region62: #{tpu_custom_call.1} parent=59 // pred_check_branch
          %428 = sbr.rel (%p426) target = $region64
        $region63: #{tpu_custom_call.1} parent=59 // pred_region
          %p429 = scmp.lt.s32.totalorder %s25, 1
          %s430 = scalar_select %p429, %s25, 1
          %s431 = smul.addr %s430, 4
          %s432 = smul.addr %s431, 4
          %s433 = scalar_lea.vmem %s0, %s432
        $region64: #{tpu_custom_call.1} parent=59 // pred_fallthru
          _
        // Predicated region
        $region65: #{tpu_custom_call.1} parent=59 // pred_check
          %p434 = pneg %p71
        $region66: #{tpu_custom_call.1} parent=59 // pred_check_branch
          %436 = sbr.rel (%p434) target = $region68
        $region67: #{tpu_custom_call.1} parent=59 // pred_region
          %p437 = scmp.lt.s32.totalorder %s25, 1
          %s438 = scalar_select %p437, %s25, 1
          %s439 = smul.addr %s438, 6
          %s440 = smul.addr %s439, 4
          %s441 = scalar_lea.vmem %s1, %s440
        $region68: #{tpu_custom_call.1} parent=59 // pred_fallthru
          _
      $region60: #{tpu_custom_call.1} parent=5 // pred_fallthru
        _
      %p442 = scmp.le.s32.totalorder 1, %s25
      %p443 = scmp.lt.s32.totalorder %s25, 3
      %p444 = pnand %p442, %p443
      %p445 = pneg %p444
      // Predicated region
      $region69: #{tpu_custom_call.1} parent=5 // pred_check
        _
      $region70: #{tpu_custom_call.1} parent=5 // pred_check_branch
        %447 = sbr.rel (%p444) target = $region72
      $region71: #{tpu_custom_call.1} parent=5 // pred_region
        %s448 = ssub.s32 %s25, 1
        // Predicated region
        $region73: #{tpu_custom_call.1} parent=71 // pred_check
          %p449 = pneg %p98
        $region74: #{tpu_custom_call.1} parent=71 // pred_check_branch
          %451 = sbr.rel (%p449) target = $region76
        $region75: #{tpu_custom_call.1} parent=71 // pred_region
          %452 = dma.done [#allocation6], 15360
        $region76: #{tpu_custom_call.1} parent=71 // pred_fallthru
          _
        // Predicated region
        $region77: #{tpu_custom_call.1} parent=71 // pred_check
          %p453 = pneg %p203
        $region78: #{tpu_custom_call.1} parent=71 // pred_check_branch
          %455 = sbr.rel (%p453) target = $region80
        $region79: #{tpu_custom_call.1} parent=71 // pred_region
          %456 = dma.done [#allocation9], 10368
        $region80: #{tpu_custom_call.1} parent=71 // pred_fallthru
          _
        // Predicated region
        $region81: #{tpu_custom_call.1} parent=71 // pred_check
          %p457 = pneg %p245
        $region82: #{tpu_custom_call.1} parent=71 // pred_check_branch
          %459 = sbr.rel (%p457) target = $region84
        $region83: #{tpu_custom_call.1} parent=71 // pred_region
          %460 = dma.done [#allocation9], 20736
        $region84: #{tpu_custom_call.1} parent=71 // pred_fallthru
          _
        // Predicated region
        $region85: #{tpu_custom_call.1} parent=71 // pred_check
          %p461 = pneg %p287
        $region86: #{tpu_custom_call.1} parent=71 // pred_check_branch
          %463 = sbr.rel (%p461) target = $region88
        $region87: #{tpu_custom_call.1} parent=71 // pred_region
          %464 = dma.done [#allocation12], 13824
        $region88: #{tpu_custom_call.1} parent=71 // pred_fallthru
          _
        %p465 = scmp.lt.s32.totalorder %s30, 1
        %s466 = scalar_select %p465, %s30, 1
        %s467 = smul.addr %s466, 4
        %s468 = smul.addr %s467, 4
        %s469 = scalar_lea.vmem %s0, %s468
        %p470 = pneg %p51
        %p471 = pneg %p48
        %p472 = scmp.lt.s32.totalorder %s30, 1
        %s473 = scalar_select %p472, %s30, 1
        %s474 = smul.addr %s473, 6
        %s475 = smul.addr %s474, 4
        %s476 = scalar_lea.vmem %s1, %s475
        %p477 = pneg %p77
        %p478 = pneg %p74
        %p479 = pneg %p98
        %p480 = pneg %p95
        %p481 = pneg %p119
        %p482 = pneg %p116
        %p483 = pneg %p140
        %p484 = pneg %p137
        %p485 = pneg %p161
        %p486 = pneg %p158
        %p487 = pneg %p182
        %p488 = pneg %p179
        %p489 = pneg %p203
        %p490 = pneg %p200
        %p491 = pneg %p224
        %p492 = pneg %p221
        %p493 = pneg %p245
        %p494 = pneg %p242
        %p495 = pneg %p266
        %p496 = pneg %p263
        %p497 = pneg %p287
        %p498 = pneg %p284
        %p499 = pneg %p308
        %p500 = pneg %p305
        %p501 = pneg %p334
        %p502 = pneg %p331
        %s503 = sand.u32 %s321, 1
        %s504 = scalar_lea.sflag [#allocation7], %s503
        %s505 = sand.u32 %s321, 1
        %s506 = smul.addr %s505, 32
        %s507 = scalar_lea.vmem [#allocation13], %s506
        %p508 = scmp.lt.s32.totalorder %s30, 1
        %s509 = scalar_select %p508, %s30, 1
        %s510 = smul.addr %s509, 4
        %s511 = smul.addr %s510, 4
        %s512 = scalar_lea.vmem %s0, %s511
        %p513 = scmp.lt.s32.totalorder %s30, 1
        %s514 = scalar_select %p513, %s30, 1
        %s515 = smul.addr %s514, 6
        %s516 = smul.addr %s515, 4
        %s517 = scalar_lea.vmem %s1, %s516
        %vm519 = vcmask 1040384
        %vm520 = vsmask.f32 256
        %vm521 = vmand %vm519, %vm520
        %vm522 = vcmask 258052
        %vm523 = vsmask.f32 4352
        %vm524 = vmand %vm522, %vm523
        %vm525 = vmor %vm524, %vm521
        %v526 = vld [vmem:[#allocation2] sm:$0x11]
        %v527 = vsel %vm525, 0, %v526
        %528 = vst [vmem:[#allocation2] sm:$0x11] %v527
        %vm529 = vsmask.f32 7938
        %vm530 = vmand %vm519, %vm529
        %vm531 = vsmask.f32 7954
        %vm532 = vmand %vm522, %vm531
        %vm533 = vmor %vm532, %vm530
        %v534 = vld [vmem:[#allocation2 + $0x8] sm:$0x11]
        %v535 = vsel %vm533, 0, %v534
        %536 = vst [vmem:[#allocation2 + $0x8] sm:$0x11] %v535
        %v537 = vld [vmem:[%s512] sm:$0xff]
        %v538 = vld [vmem:[%s512 + $0x8] sm:$0x11]
        %v539 = vld [vmem:[%s512] sm:$0xee]
        %v540 = vld [vmem:[#allocation5] sm:$0xff]
        %v541 = vld [vmem:[#allocation5 + $0x8] sm:$0xff]
        %v542 = vld [vmem:[#allocation5 + $0x10] sm:$0xff]
        %v543 = vld [vmem:[#allocation5 + $0x18] sm:$0xff]
        %v544 = vld [vmem:[#allocation5 + $0x20] sm:$0xff]
        %v545 = vld [vmem:[#allocation5 + $0x28] sm:$0xff]
        %v546 = vld [vmem:[#allocation5 + $0x30] sm:$0xff]
        %v547 = vld [vmem:[#allocation5 + $0x38] sm:$0xff]
        %v548 = vld [vmem:[#allocation5 + $0x40] sm:$0xff]
        %v549 = vld [vmem:[#allocation5 + $0x48] sm:$0xff]
        %v550 = vld [vmem:[#allocation5 + $0x50] sm:$0xff]
        %v551 = vld [vmem:[#allocation5 + $0x58] sm:$0xff]
        %v552 = vld [vmem:[#allocation5 + $0x60] sm:$0xff]
        %v553 = vld [vmem:[#allocation5 + $0x68] sm:$0xff]
        %v554 = vld [vmem:[#allocation5 + $0x70] sm:$0xff]
        %v555 = vld [vmem:[#allocation5 + $0x78] sm:$0xff]
        %v556 = vld [vmem:[#allocation5 + $0x80] sm:$0xff]
        %v557 = vld [vmem:[#allocation5 + $0x88] sm:$0xff]
        %v558 = vld [vmem:[#allocation5 + $0x90] sm:$0xff]
        %v559 = vld [vmem:[#allocation5 + $0x98] sm:$0xff]
        %s560 = scalar_lea.vmem [#allocation5], 160
        %v561 = vld [vmem:[%s560] sm:$0xff]
        %v562 = vld [vmem:[%s560 + $0x8] sm:$0xff]
        %v563 = vld [vmem:[%s560 + $0x10] sm:$0xff]
        %v564 = vld [vmem:[%s560 + $0x18] sm:$0xff]
        %v565 = vld [vmem:[%s560 + $0x20] sm:$0xff]
        %v566 = vld [vmem:[%s560 + $0x28] sm:$0xff]
        %v567 = vld [vmem:[%s560 + $0x30] sm:$0xff]
        %v568 = vld [vmem:[%s560 + $0x38] sm:$0xff]
        %v569 = vld [vmem:[%s560 + $0x40] sm:$0xff]
        %v570 = vld [vmem:[%s560 + $0x48] sm:$0xff]
        %v571 = vld [vmem:[%s560 + $0x50] sm:$0xff]
        %v572 = vld [vmem:[%s560 + $0x58] sm:$0xff]
        %v573 = vld [vmem:[%s560 + $0x60] sm:$0xff]
        %v574 = vld [vmem:[%s560 + $0x68] sm:$0xff]
        %v575 = vld [vmem:[%s560 + $0x70] sm:$0xff]
        %v576 = vld [vmem:[%s560 + $0x78] sm:$0xff]
        %v577 = vld [vmem:[%s560 + $0x80] sm:$0xff]
        %v578 = vld [vmem:[%s560 + $0x88] sm:$0xff]
        %v579 = vld [vmem:[%s560 + $0x90] sm:$0xff]
        %v580 = vld [vmem:[%s560 + $0x98] sm:$0xff]
        %v583 = vunpack.c.l.b16 %v537
        %v584 = vunpack.c.h.b16 %v537
        %v585 = vunpack.c.l.b16 %v538
        %v586 = vunpack.c.h.b16 %v538
        %v587 = vpack.c.b16 %v585, %v583
        %v588 = vpack.c.b16 %v586, %v584
        %v590 = vshrl.u32 %v587, 16
        %v592 = vshll.u32 %v587, 16
        %v594 = vrot.slane %v592, 1
        %v595 = vor.u32 %v590, %v594
        %v597 = vshrl.u32 %v588, 16
        %v599 = vshll.u32 %v588, 16
        %v601 = vrot.slane %v599, 1
        %v602 = vor.u32 %v597, %v601
        %v624 = vunpack.c.l.b16 %v561
        %v625 = vunpack.c.h.b16 %v561
        %v626 = vunpack.c.l.b16 %v562
        %v627 = vunpack.c.h.b16 %v562
        %v628 = vunpack.c.l.b16 %v563
        %v629 = vunpack.c.h.b16 %v563
        %v630 = vunpack.c.l.b16 %v564
        %v631 = vunpack.c.h.b16 %v564
        %v632 = vunpack.c.l.b16 %v565
        %v633 = vunpack.c.h.b16 %v565
        %v634 = vunpack.c.l.b16 %v566
        %v635 = vunpack.c.h.b16 %v566
        %v636 = vunpack.c.l.b16 %v567
        %v637 = vunpack.c.h.b16 %v567
        %v638 = vunpack.c.l.b16 %v568
        %v639 = vunpack.c.h.b16 %v568
        %v640 = vunpack.c.l.b16 %v569
        %v641 = vunpack.c.h.b16 %v569
        %v642 = vunpack.c.l.b16 %v570
        %v643 = vunpack.c.h.b16 %v570
        %v644 = vunpack.c.l.b16 %v571
        %v645 = vunpack.c.h.b16 %v571
        %v646 = vunpack.c.l.b16 %v572
        %v647 = vunpack.c.h.b16 %v572
        %v648 = vunpack.c.l.b16 %v573
        %v649 = vunpack.c.h.b16 %v573
        %v650 = vunpack.c.l.b16 %v574
        %v651 = vunpack.c.h.b16 %v574
        %v652 = vunpack.c.l.b16 %v575
        %v653 = vunpack.c.h.b16 %v575
        %v654 = vunpack.c.l.b16 %v576
        %v655 = vunpack.c.h.b16 %v576
        %v656 = vunpack.c.l.b16 %v577
        %v657 = vunpack.c.h.b16 %v577
        %v658 = vunpack.c.l.b16 %v578
        %v659 = vunpack.c.h.b16 %v578
        %v660 = vunpack.c.l.b16 %v579
        %v661 = vunpack.c.h.b16 %v579
        %v662 = vunpack.c.l.b16 %v580
        %v663 = vunpack.c.h.b16 %v580
        %v664 = vpack.c.b16 %v626, %v624
        %v665 = vpack.c.b16 %v627, %v625
        %v666 = vpack.c.b16 %v630, %v628
        %v667 = vpack.c.b16 %v631, %v629
        %v668 = vpack.c.b16 %v634, %v632
        %v669 = vpack.c.b16 %v635, %v633
        %v670 = vpack.c.b16 %v638, %v636
        %v671 = vpack.c.b16 %v639, %v637
        %v672 = vpack.c.b16 %v642, %v640
        %v673 = vpack.c.b16 %v643, %v641
        %v674 = vpack.c.b16 %v646, %v644
        %v675 = vpack.c.b16 %v647, %v645
        %v676 = vpack.c.b16 %v650, %v648
        %v677 = vpack.c.b16 %v651, %v649
        %v678 = vpack.c.b16 %v654, %v652
        %v679 = vpack.c.b16 %v655, %v653
        %v680 = vpack.c.b16 %v658, %v656
        %v681 = vpack.c.b16 %v659, %v657
        %v682 = vpack.c.b16 %v662, %v660
        %v683 = vpack.c.b16 %v663, %v661
        %vm704 = vcmask 261120
        %v706 = vsel %vm704, %v602, 0
        %708 = vmatprep.subr.bf16.mxu0 %v665
        %709 = vmatpush1.bf16.msra.mxu0 %v664
        %710 = vmatprep.subr.bf16.mxu0 %v667
        %711 = vmatpush1.bf16.msra.mxu0 %v666
        %712 = vmatprep.subr.bf16.mxu0 %v669
        %713 = vmatpush1.bf16.msra.mxu0 %v668
        %714 = vmatprep.subr.bf16.mxu0 %v671
        %715 = vmatpush1.bf16.msra.mxu0 %v670
        %716 = vmatprep.subr.bf16.mxu0 %v673
        %717 = vmatpush1.bf16.msra.mxu0 %v672
        %718 = vmatprep.subr.bf16.mxu0 %v675
        %719 = vmatpush1.bf16.msra.mxu0 %v674
        %720 = vmatprep.subr.bf16.mxu0 %v677
        %721 = vmatpush1.bf16.msra.mxu0 %v676
        %722 = vmatprep.subr.bf16.mxu0 %v679
        %723 = vmatpush1.bf16.msra.mxu0 %v678
        %724 = vmatprep.subr.bf16.mxu0 %v681
        %725 = vmatpush1.bf16.msra.mxu0 %v680
        %726 = vmatprep.subr.bf16.mxu0 %v683
        %727 = vmatpush1.bf16.msra.mxu0 %v682
        %728 = vmatprep.subr.bf16.mxu0 0
        %729 = vmatpush1.bf16.msra.mxu0 0
        %730 = vmatprep.subr.bf16.mxu0 0
        %731 = vmatpush1.bf16.msra.mxu0 0
        %732 = vmatprep.subr.bf16.mxu0 0
        %733 = vmatpush1.bf16.msra.mxu0 0
        %734 = vmatprep.subr.bf16.mxu0 0
        %735 = vmatpush1.bf16.msra.mxu0 0
        %736 = vmatprep.subr.bf16.mxu0 0
        %737 = vmatpush1.bf16.msra.mxu0 0
        %738 = vmatprep.subr.bf16.mxu0 0
        %739 = vmatpush1.bf16.msra.mxu0 0
        %740 = vmatprep.mubr.bf16.mxu0 %v706
        %741 = vmatmul.mubr.bf16.gmra.mrb[0].mxu0 %v595
        %v742 = vpop.f32.mrb[0].mxu0
        %v743 = vadd.f32 0.0, %v742
        %v744 = vpop.f32.mrb[0].mxu0
        %v745 = vadd.f32 0.0, %v744
        %v746 = vpop.f32.mrb[0].mxu0
        %v747 = vpop.f32.mrb[0].mxu0
        %748 = vdwg.mxu0
        %v749 = vpack.c.b16 %v583, %v583
        %v750 = vpack.c.b16 %v584, %v584
        %v772 = vunpack.c.l.b16 %v540
        %v773 = vunpack.c.h.b16 %v540
        %v774 = vunpack.c.l.b16 %v541
        %v775 = vunpack.c.h.b16 %v541
        %v776 = vunpack.c.l.b16 %v542
        %v777 = vunpack.c.h.b16 %v542
        %v778 = vunpack.c.l.b16 %v543
        %v779 = vunpack.c.h.b16 %v543
        %v780 = vunpack.c.l.b16 %v544
        %v781 = vunpack.c.h.b16 %v544
        %v782 = vunpack.c.l.b16 %v545
        %v783 = vunpack.c.h.b16 %v545
        %v784 = vunpack.c.l.b16 %v546
        %v785 = vunpack.c.h.b16 %v546
        %v786 = vunpack.c.l.b16 %v547
        %v787 = vunpack.c.h.b16 %v547
        %v788 = vunpack.c.l.b16 %v548
        %v789 = vunpack.c.h.b16 %v548
        %v790 = vunpack.c.l.b16 %v549
        %v791 = vunpack.c.h.b16 %v549
        %v792 = vunpack.c.l.b16 %v550
        %v793 = vunpack.c.h.b16 %v550
        %v794 = vunpack.c.l.b16 %v551
        %v795 = vunpack.c.h.b16 %v551
        %v796 = vunpack.c.l.b16 %v552
        %v797 = vunpack.c.h.b16 %v552
        %v798 = vunpack.c.l.b16 %v553
        %v799 = vunpack.c.h.b16 %v553
        %v800 = vunpack.c.l.b16 %v554
        %v801 = vunpack.c.h.b16 %v554
        %v802 = vunpack.c.l.b16 %v555
        %v803 = vunpack.c.h.b16 %v555
        %v804 = vunpack.c.l.b16 %v556
        %v805 = vunpack.c.h.b16 %v556
        %v806 = vunpack.c.l.b16 %v557
        %v807 = vunpack.c.h.b16 %v557
        %v808 = vunpack.c.l.b16 %v558
        %v809 = vunpack.c.h.b16 %v558
        %v810 = vunpack.c.l.b16 %v559
        %v811 = vunpack.c.h.b16 %v559
        %v812 = vpack.c.b16 %v774, %v772
        %v813 = vpack.c.b16 %v775, %v773
        %v814 = vpack.c.b16 %v778, %v776
        %v815 = vpack.c.b16 %v779, %v777
        %v816 = vpack.c.b16 %v782, %v780
        %v817 = vpack.c.b16 %v783, %v781
        %v818 = vpack.c.b16 %v786, %v784
        %v819 = vpack.c.b16 %v787, %v785
        %v820 = vpack.c.b16 %v790, %v788
        %v821 = vpack.c.b16 %v791, %v789
        %v822 = vpack.c.b16 %v794, %v792
        %v823 = vpack.c.b16 %v795, %v793
        %v824 = vpack.c.b16 %v798, %v796
        %v825 = vpack.c.b16 %v799, %v797
        %v826 = vpack.c.b16 %v802, %v800
        %v827 = vpack.c.b16 %v803, %v801
        %v828 = vpack.c.b16 %v806, %v804
        %v829 = vpack.c.b16 %v807, %v805
        %v830 = vpack.c.b16 %v810, %v808
        %v831 = vpack.c.b16 %v811, %v809
        %v853 = vsel %vm704, %v750, 0
        %855 = vmatprep.subr.bf16.mxu0 %v813
        %856 = vmatpush1.bf16.msra.mxu0 %v812
        %857 = vmatprep.subr.bf16.mxu0 %v815
        %858 = vmatpush1.bf16.msra.mxu0 %v814
        %859 = vmatprep.subr.bf16.mxu0 %v817
        %860 = vmatpush1.bf16.msra.mxu0 %v816
        %861 = vmatprep.subr.bf16.mxu0 %v819
        %862 = vmatpush1.bf16.msra.mxu0 %v818
        %863 = vmatprep.subr.bf16.mxu0 %v821
        %864 = vmatpush1.bf16.msra.mxu0 %v820
        %865 = vmatprep.subr.bf16.mxu0 %v823
        %866 = vmatpush1.bf16.msra.mxu0 %v822
        %867 = vmatprep.subr.bf16.mxu0 %v825
        %868 = vmatpush1.bf16.msra.mxu0 %v824
        %869 = vmatprep.subr.bf16.mxu0 %v827
        %870 = vmatpush1.bf16.msra.mxu0 %v826
        %871 = vmatprep.subr.bf16.mxu0 %v829
        %872 = vmatpush1.bf16.msra.mxu0 %v828
        %873 = vmatprep.subr.bf16.mxu0 %v831
        %874 = vmatpush1.bf16.msra.mxu0 %v830
        %875 = vmatprep.subr.bf16.mxu0 0
        %876 = vmatpush1.bf16.msra.mxu0 0
        %877 = vmatprep.subr.bf16.mxu0 0
        %878 = vmatpush1.bf16.msra.mxu0 0
        %879 = vmatprep.subr.bf16.mxu0 0
        %880 = vmatpush1.bf16.msra.mxu0 0
        %881 = vmatprep.subr.bf16.mxu0 0
        %882 = vmatpush1.bf16.msra.mxu0 0
        %883 = vmatprep.subr.bf16.mxu0 0
        %884 = vmatpush1.bf16.msra.mxu0 0
        %885 = vmatprep.subr.bf16.mxu0 0
        %886 = vmatpush1.bf16.msra.mxu0 0
        %887 = vmatprep.mubr.bf16.mxu0 %v853
        %888 = vmatmul.mubr.bf16.gmra.mrb[0].mxu0 %v749
        %v889 = vpop.f32.mrb[0].mxu0
        %v890 = vadd.f32 %v743, %v889
        %v891 = vpop.f32.mrb[0].mxu0
        %v892 = vadd.f32 %v745, %v891
        %v893 = vpop.f32.mrb[0].mxu0
        %v894 = vpop.f32.mrb[0].mxu0
        %895 = vdwg.mxu0
        %s896 = scalar_lea.vmem [#allocation5], 320
        %v897 = vld [vmem:[%s896] sm:$0xff]
        %v898 = vld [vmem:[%s896 + $0x8] sm:$0xff]
        %v899 = vld [vmem:[%s896 + $0x10] sm:$0xff]
        %v900 = vld [vmem:[%s896 + $0x18] sm:$0xff]
        %v901 = vld [vmem:[%s896 + $0x20] sm:$0xff]
        %v902 = vld [vmem:[%s896 + $0x28] sm:$0xff]
        %v903 = vld [vmem:[%s896 + $0x30] sm:$0xff]
        %v904 = vld [vmem:[%s896 + $0x38] sm:$0xff]
        %v905 = vld [vmem:[%s896 + $0x40] sm:$0xff]
        %v906 = vld [vmem:[%s896 + $0x48] sm:$0xff]
        %v907 = vld [vmem:[%s896 + $0x50] sm:$0xff]
        %v908 = vld [vmem:[%s896 + $0x58] sm:$0xff]
        %v909 = vld [vmem:[%s896 + $0x60] sm:$0xff]
        %v910 = vld [vmem:[%s896 + $0x68] sm:$0xff]
        %v911 = vld [vmem:[%s896 + $0x70] sm:$0xff]
        %v912 = vld [vmem:[%s896 + $0x78] sm:$0xff]
        %v913 = vld [vmem:[%s896 + $0x80] sm:$0xff]
        %v914 = vld [vmem:[%s896 + $0x88] sm:$0xff]
        %v915 = vld [vmem:[%s896 + $0x90] sm:$0xff]
        %v916 = vld [vmem:[%s896 + $0x98] sm:$0xff]
        %v918 = vunpack.c.l.b16 %v539
        %v919 = vunpack.c.h.b16 %v539
        %v920 = vpack.c.b16 %v585, %v918
        %v921 = vpack.c.b16 %v586, %v919
        %v922 = vrot.slane %v920, 1
        %v923 = vrot.slane %v921, 1
        %v945 = vunpack.c.l.b16 %v897
        %v946 = vunpack.c.h.b16 %v897
        %v947 = vunpack.c.l.b16 %v898
        %v948 = vunpack.c.h.b16 %v898
        %v949 = vunpack.c.l.b16 %v899
        %v950 = vunpack.c.h.b16 %v899
        %v951 = vunpack.c.l.b16 %v900
        %v952 = vunpack.c.h.b16 %v900
        %v953 = vunpack.c.l.b16 %v901
        %v954 = vunpack.c.h.b16 %v901
        %v955 = vunpack.c.l.b16 %v902
        %v956 = vunpack.c.h.b16 %v902
        %v957 = vunpack.c.l.b16 %v903
        %v958 = vunpack.c.h.b16 %v903
        %v959 = vunpack.c.l.b16 %v904
        %v960 = vunpack.c.h.b16 %v904
        %v961 = vunpack.c.l.b16 %v905
        %v962 = vunpack.c.h.b16 %v905
        %v963 = vunpack.c.l.b16 %v906
        %v964 = vunpack.c.h.b16 %v906
        %v965 = vunpack.c.l.b16 %v907
        %v966 = vunpack.c.h.b16 %v907
        %v967 = vunpack.c.l.b16 %v908
        %v968 = vunpack.c.h.b16 %v908
        %v969 = vunpack.c.l.b16 %v909
        %v970 = vunpack.c.h.b16 %v909
        %v971 = vunpack.c.l.b16 %v910
        %v972 = vunpack.c.h.b16 %v910
        %v973 = vunpack.c.l.b16 %v911
        %v974 = vunpack.c.h.b16 %v911
        %v975 = vunpack.c.l.b16 %v912
        %v976 = vunpack.c.h.b16 %v912
        %v977 = vunpack.c.l.b16 %v913
        %v978 = vunpack.c.h.b16 %v913
        %v979 = vunpack.c.l.b16 %v914
        %v980 = vunpack.c.h.b16 %v914
        %v981 = vunpack.c.l.b16 %v915
        %v982 = vunpack.c.h.b16 %v915
        %v983 = vunpack.c.l.b16 %v916
        %v984 = vunpack.c.h.b16 %v916
        %v985 = vpack.c.b16 %v947, %v945
        %v986 = vpack.c.b16 %v948, %v946
        %v987 = vpack.c.b16 %v951, %v949
        %v988 = vpack.c.b16 %v952, %v950
        %v989 = vpack.c.b16 %v955, %v953
        %v990 = vpack.c.b16 %v956, %v954
        %v991 = vpack.c.b16 %v959, %v957
        %v992 = vpack.c.b16 %v960, %v958
        %v993 = vpack.c.b16 %v963, %v961
        %v994 = vpack.c.b16 %v964, %v962
        %v995 = vpack.c.b16 %v967, %v965
        %v996 = vpack.c.b16 %v968, %v966
        %v997 = vpack.c.b16 %v971, %v969
        %v998 = vpack.c.b16 %v972, %v970
        %v999 = vpack.c.b16 %v975, %v973
        %v1000 = vpack.c.b16 %v976, %v974
        %v1001 = vpack.c.b16 %v979, %v977
        %v1002 = vpack.c.b16 %v980, %v978
        %v1003 = vpack.c.b16 %v983, %v981
        %v1004 = vpack.c.b16 %v984, %v982
        %v1026 = vsel %vm704, %v923, 0
        %1028 = vmatprep.subr.bf16.mxu0 %v986
        %1029 = vmatpush1.bf16.msra.mxu0 %v985
        %1030 = vmatprep.subr.bf16.mxu0 %v988
        %1031 = vmatpush1.bf16.msra.mxu0 %v987
        %1032 = vmatprep.subr.bf16.mxu0 %v990
        %1033 = vmatpush1.bf16.msra.mxu0 %v989
        %1034 = vmatprep.subr.bf16.mxu0 %v992
        %1035 = vmatpush1.bf16.msra.mxu0 %v991
        %1036 = vmatprep.subr.bf16.mxu0 %v994
        %1037 = vmatpush1.bf16.msra.mxu0 %v993
        %1038 = vmatprep.subr.bf16.mxu0 %v996
        %1039 = vmatpush1.bf16.msra.mxu0 %v995
        %1040 = vmatprep.subr.bf16.mxu0 %v998
        %1041 = vmatpush1.bf16.msra.mxu0 %v997
        %1042 = vmatprep.subr.bf16.mxu0 %v1000
        %1043 = vmatpush1.bf16.msra.mxu0 %v999
        %1044 = vmatprep.subr.bf16.mxu0 %v1002
        %1045 = vmatpush1.bf16.msra.mxu0 %v1001
        %1046 = vmatprep.subr.bf16.mxu0 %v1004
        %1047 = vmatpush1.bf16.msra.mxu0 %v1003
        %1048 = vmatprep.subr.bf16.mxu0 0
        %1049 = vmatpush1.bf16.msra.mxu0 0
        %1050 = vmatprep.subr.bf16.mxu0 0
        %1051 = vmatpush1.bf16.msra.mxu0 0
        %1052 = vmatprep.subr.bf16.mxu0 0
        %1053 = vmatpush1.bf16.msra.mxu0 0
        %1054 = vmatprep.subr.bf16.mxu0 0
        %1055 = vmatpush1.bf16.msra.mxu0 0
        %1056 = vmatprep.subr.bf16.mxu0 0
        %1057 = vmatpush1.bf16.msra.mxu0 0
        %1058 = vmatprep.subr.bf16.mxu0 0
        %1059 = vmatpush1.bf16.msra.mxu0 0
        %1060 = vmatprep.mubr.bf16.mxu0 %v1026
        %1061 = vmatmul.mubr.bf16.gmra.mrb[0].mxu0 %v922
        %v1062 = vpop.f32.mrb[0].mxu0
        %v1063 = vadd.f32 0.0, %v1062
        %v1064 = vpop.f32.mrb[0].mxu0
        %v1065 = vadd.f32 0.0, %v1064
        %v1066 = vpop.f32.mrb[0].mxu0
        %v1067 = vpop.f32.mrb[0].mxu0
        %1068 = vdwg.mxu0
        %v1069 = vadd.f32 %v890, %v1063
        %v1070 = vadd.f32 %v892, %v1065
        %v1071 = vld [vmem:[%s3] ss:$2 sm:$0x3]
        %v1073 = vlaneseq
        %v1074 = vshrl.u32 %v1073, 7
        %v1075 = vsub.s32 0, %v1074
        %v1076 = vrot.slane %v1071, %v1075
        %v1077 = vlaneseq
        %v1078 = vshrl.u32 %v1077, 7
        %v1079 = vsub.s32 1, %v1078
        %v1080 = vrot.slane %v1071, %v1079
        %v1083 = vadd.f32 %v1069, %v1076
        %v1084 = vadd.f32 %v1070, %v1080
        %v1085 = vmax.f32 %v1083, 0.0
        %v1086 = vmax.f32 %v1084, 0.0
        %v1087 = vpack.c.bf16 %v1085, %v1085
        %v1088 = vpack.c.bf16 %v1086, %v1086
        %v1091 = vunpack.c.l.b16 %v1087
        %v1092 = vunpack.c.l.b16 %v1088
        %v1093 = vpack.c.b16 %v1092, %v1091
        %v1095 = vshrl.u32 %v1093, 16
        %v1097 = vrot.slane %v1095, 7
        %v1098 = vshll.u32 %v1093, 16
        %v1100 = vor.u32 %v1097, %v1098
        %v1101 = vrot.slane %v1097, 4
        %vm1104 = vcmask 1043456
        %vm1105 = vmand %vm1104, %vm529
        %vm1106 = vcmask 261124
        %vm1107 = vmand %vm1106, %vm531
        %vm1108 = vmor %vm1107, %vm1105
        %v1109 = vld [vmem:[#allocation2] sm:$0xff]
        %v1110 = vsel %vm1108, %v1100, %v1109
        %1111 = vst [vmem:[#allocation2] sm:$0xff] %v1110
        %v1112 = vld [vmem:[#allocation2 + $0x8] sm:$0x11]
        %v1113 = vsel %vm525, %v1101, %v1112
        %1114 = vst [vmem:[#allocation2 + $0x8] sm:$0x11] %v1113
        %v1115 = vld [vmem:[#allocation2] sm:$0xff]
        %v1116 = vld [vmem:[#allocation2 + $0x8] sm:$0x11]
        %v1117 = vld [vmem:[#allocation2] sm:$0xee]
        %s1118 = scalar_lea.vmem [#allocation5], 480
        %v1119 = vld [vmem:[%s1118] sm:$0xff]
        %v1120 = vld [vmem:[%s1118 + $0x8] sm:$0xff]
        %v1121 = vld [vmem:[%s1118 + $0x10] sm:$0xff]
        %v1122 = vld [vmem:[%s1118 + $0x18] sm:$0xff]
        %v1123 = vld [vmem:[%s1118 + $0x20] sm:$0xff]
        %v1124 = vld [vmem:[%s1118 + $0x28] sm:$0xff]
        %v1125 = vld [vmem:[%s1118 + $0x30] sm:$0xff]
        %v1126 = vld [vmem:[%s1118 + $0x38] sm:$0xff]
        %v1127 = vld [vmem:[%s1118 + $0x40] sm:$0xff]
        %v1128 = vld [vmem:[%s1118 + $0x48] sm:$0xff]
        %v1129 = vld [vmem:[%s1118 + $0x50] sm:$0xff]
        %v1130 = vld [vmem:[%s1118 + $0x58] sm:$0xff]
        %v1131 = vld [vmem:[%s1118 + $0x60] sm:$0xff]
        %v1132 = vld [vmem:[%s1118 + $0x68] sm:$0xff]
        %v1133 = vld [vmem:[%s1118 + $0x70] sm:$0xff]
        %v1134 = vld [vmem:[%s1118 + $0x78] sm:$0xff]
        %v1135 = vld [vmem:[%s1118 + $0x80] sm:$0xff]
        %v1136 = vld [vmem:[%s1118 + $0x88] sm:$0xff]
        %v1137 = vld [vmem:[%s1118 + $0x90] sm:$0xff]
        %v1138 = vld [vmem:[%s1118 + $0x98] sm:$0xff]
        %s1139 = scalar_lea.vmem [#allocation5], 640
        %v1140 = vld [vmem:[%s1139] sm:$0xff]
        %v1141 = vld [vmem:[%s1139 + $0x8] sm:$0xff]
        %v1142 = vld [vmem:[%s1139 + $0x10] sm:$0xff]
        %v1143 = vld [vmem:[%s1139 + $0x18] sm:$0xff]
        %v1144 = vld [vmem:[%s1139 + $0x20] sm:$0xff]
        %v1145 = vld [vmem:[%s1139 + $0x28] sm:$0xff]
        %v1146 = vld [vmem:[%s1139 + $0x30] sm:$0xff]
        %v1147 = vld [vmem:[%s1139 + $0x38] sm:$0xff]
        %v1148 = vld [vmem:[%s1139 + $0x40] sm:$0xff]
        %v1149 = vld [vmem:[%s1139 + $0x48] sm:$0xff]
        %v1150 = vld [vmem:[%s1139 + $0x50] sm:$0xff]
        %v1151 = vld [vmem:[%s1139 + $0x58] sm:$0xff]
        %v1152 = vld [vmem:[%s1139 + $0x60] sm:$0xff]
        %v1153 = vld [vmem:[%s1139 + $0x68] sm:$0xff]
        %v1154 = vld [vmem:[%s1139 + $0x70] sm:$0xff]
        %v1155 = vld [vmem:[%s1139 + $0x78] sm:$0xff]
        %v1156 = vld [vmem:[%s1139 + $0x80] sm:$0xff]
        %v1157 = vld [vmem:[%s1139 + $0x88] sm:$0xff]
        %v1158 = vld [vmem:[%s1139 + $0x90] sm:$0xff]
        %v1159 = vld [vmem:[%s1139 + $0x98] sm:$0xff]
        %v1162 = vunpack.c.l.b16 %v1115
        %v1163 = vunpack.c.h.b16 %v1115
        %v1164 = vunpack.c.l.b16 %v1116
        %v1165 = vunpack.c.h.b16 %v1116
        %v1166 = vpack.c.b16 %v1164, %v1162
        %v1167 = vpack.c.b16 %v1165, %v1163
        %v1169 = vshrl.u32 %v1166, 16
        %v1171 = vshll.u32 %v1166, 16
        %v1173 = vrot.slane %v1171, 1
        %v1174 = vor.u32 %v1169, %v1173
        %v1176 = vshrl.u32 %v1167, 16
        %v1178 = vshll.u32 %v1167, 16
        %v1180 = vrot.slane %v1178, 1
        %v1181 = vor.u32 %v1176, %v1180
        %v1203 = vunpack.c.l.b16 %v1140
        %v1204 = vunpack.c.h.b16 %v1140
        %v1205 = vunpack.c.l.b16 %v1141
        %v1206 = vunpack.c.h.b16 %v1141
        %v1207 = vunpack.c.l.b16 %v1142
        %v1208 = vunpack.c.h.b16 %v1142
        %v1209 = vunpack.c.l.b16 %v1143
        %v1210 = vunpack.c.h.b16 %v1143
        %v1211 = vunpack.c.l.b16 %v1144
        %v1212 = vunpack.c.h.b16 %v1144
        %v1213 = vunpack.c.l.b16 %v1145
        %v1214 = vunpack.c.h.b16 %v1145
        %v1215 = vunpack.c.l.b16 %v1146
        %v1216 = vunpack.c.h.b16 %v1146
        %v1217 = vunpack.c.l.b16 %v1147
        %v1218 = vunpack.c.h.b16 %v1147
        %v1219 = vunpack.c.l.b16 %v1148
        %v1220 = vunpack.c.h.b16 %v1148
        %v1221 = vunpack.c.l.b16 %v1149
        %v1222 = vunpack.c.h.b16 %v1149
        %v1223 = vunpack.c.l.b16 %v1150
        %v1224 = vunpack.c.h.b16 %v1150
        %v1225 = vunpack.c.l.b16 %v1151
        %v1226 = vunpack.c.h.b16 %v1151
        %v1227 = vunpack.c.l.b16 %v1152
        %v1228 = vunpack.c.h.b16 %v1152
        %v1229 = vunpack.c.l.b16 %v1153
        %v1230 = vunpack.c.h.b16 %v1153
        %v1231 = vunpack.c.l.b16 %v1154
        %v1232 = vunpack.c.h.b16 %v1154
        %v1233 = vunpack.c.l.b16 %v1155
        %v1234 = vunpack.c.h.b16 %v1155
        %v1235 = vunpack.c.l.b16 %v1156
        %v1236 = vunpack.c.h.b16 %v1156
        %v1237 = vunpack.c.l.b16 %v1157
        %v1238 = vunpack.c.h.b16 %v1157
        %v1239 = vunpack.c.l.b16 %v1158
        %v1240 = vunpack.c.h.b16 %v1158
        %v1241 = vunpack.c.l.b16 %v1159
        %v1242 = vunpack.c.h.b16 %v1159
        %v1243 = vpack.c.b16 %v1205, %v1203
        %v1244 = vpack.c.b16 %v1206, %v1204
        %v1245 = vpack.c.b16 %v1209, %v1207
        %v1246 = vpack.c.b16 %v1210, %v1208
        %v1247 = vpack.c.b16 %v1213, %v1211
        %v1248 = vpack.c.b16 %v1214, %v1212
        %v1249 = vpack.c.b16 %v1217, %v1215
        %v1250 = vpack.c.b16 %v1218, %v1216
        %v1251 = vpack.c.b16 %v1221, %v1219
        %v1252 = vpack.c.b16 %v1222, %v1220
        %v1253 = vpack.c.b16 %v1225, %v1223
        %v1254 = vpack.c.b16 %v1226, %v1224
        %v1255 = vpack.c.b16 %v1229, %v1227
        %v1256 = vpack.c.b16 %v1230, %v1228
        %v1257 = vpack.c.b16 %v1233, %v1231
        %v1258 = vpack.c.b16 %v1234, %v1232
        %v1259 = vpack.c.b16 %v1237, %v1235
        %v1260 = vpack.c.b16 %v1238, %v1236
        %v1261 = vpack.c.b16 %v1241, %v1239
        %v1262 = vpack.c.b16 %v1242, %v1240
        %v1284 = vsel %vm704, %v1181, 0
        %1286 = vmatprep.subr.bf16.mxu0 %v1244
        %1287 = vmatpush1.bf16.msra.mxu0 %v1243
        %1288 = vmatprep.subr.bf16.mxu0 %v1246
        %1289 = vmatpush1.bf16.msra.mxu0 %v1245
        %1290 = vmatprep.subr.bf16.mxu0 %v1248
        %1291 = vmatpush1.bf16.msra.mxu0 %v1247
        %1292 = vmatprep.subr.bf16.mxu0 %v1250
        %1293 = vmatpush1.bf16.msra.mxu0 %v1249
        %1294 = vmatprep.subr.bf16.mxu0 %v1252
        %1295 = vmatpush1.bf16.msra.mxu0 %v1251
        %1296 = vmatprep.subr.bf16.mxu0 %v1254
        %1297 = vmatpush1.bf16.msra.mxu0 %v1253
        %1298 = vmatprep.subr.bf16.mxu0 %v1256
        %1299 = vmatpush1.bf16.msra.mxu0 %v1255
        %1300 = vmatprep.subr.bf16.mxu0 %v1258
        %1301 = vmatpush1.bf16.msra.mxu0 %v1257
        %1302 = vmatprep.subr.bf16.mxu0 %v1260
        %1303 = vmatpush1.bf16.msra.mxu0 %v1259
        %1304 = vmatprep.subr.bf16.mxu0 %v1262
        %1305 = vmatpush1.bf16.msra.mxu0 %v1261
        %1306 = vmatprep.subr.bf16.mxu0 0
        %1307 = vmatpush1.bf16.msra.mxu0 0
        %1308 = vmatprep.subr.bf16.mxu0 0
        %1309 = vmatpush1.bf16.msra.mxu0 0
        %1310 = vmatprep.subr.bf16.mxu0 0
        %1311 = vmatpush1.bf16.msra.mxu0 0
        %1312 = vmatprep.subr.bf16.mxu0 0
        %1313 = vmatpush1.bf16.msra.mxu0 0
        %1314 = vmatprep.subr.bf16.mxu0 0
        %1315 = vmatpush1.bf16.msra.mxu0 0
        %1316 = vmatprep.subr.bf16.mxu0 0
        %1317 = vmatpush1.bf16.msra.mxu0 0
        %1318 = vmatprep.mubr.bf16.mxu0 %v1284
        %1319 = vmatmul.mubr.bf16.gmra.mrb[0].mxu0 %v1174
        %v1320 = vpop.f32.mrb[0].mxu0
        %v1321 = vadd.f32 0.0, %v1320
        %v1322 = vpop.f32.mrb[0].mxu0
        %v1323 = vadd.f32 0.0, %v1322
        %v1324 = vpop.f32.mrb[0].mxu0
        %v1325 = vpop.f32.mrb[0].mxu0
        %1326 = vdwg.mxu0
        %v1327 = vpack.c.b16 %v1162, %v1162
        %v1328 = vpack.c.b16 %v1163, %v1163
        %v1350 = vunpack.c.l.b16 %v1119
        %v1351 = vunpack.c.h.b16 %v1119
        %v1352 = vunpack.c.l.b16 %v1120
        %v1353 = vunpack.c.h.b16 %v1120
        %v1354 = vunpack.c.l.b16 %v1121
        %v1355 = vunpack.c.h.b16 %v1121
        %v1356 = vunpack.c.l.b16 %v1122
        %v1357 = vunpack.c.h.b16 %v1122
        %v1358 = vunpack.c.l.b16 %v1123
        %v1359 = vunpack.c.h.b16 %v1123
        %v1360 = vunpack.c.l.b16 %v1124
        %v1361 = vunpack.c.h.b16 %v1124
        %v1362 = vunpack.c.l.b16 %v1125
        %v1363 = vunpack.c.h.b16 %v1125
        %v1364 = vunpack.c.l.b16 %v1126
        %v1365 = vunpack.c.h.b16 %v1126
        %v1366 = vunpack.c.l.b16 %v1127
        %v1367 = vunpack.c.h.b16 %v1127
        %v1368 = vunpack.c.l.b16 %v1128
        %v1369 = vunpack.c.h.b16 %v1128
        %v1370 = vunpack.c.l.b16 %v1129
        %v1371 = vunpack.c.h.b16 %v1129
        %v1372 = vunpack.c.l.b16 %v1130
        %v1373 = vunpack.c.h.b16 %v1130
        %v1374 = vunpack.c.l.b16 %v1131
        %v1375 = vunpack.c.h.b16 %v1131
        %v1376 = vunpack.c.l.b16 %v1132
        %v1377 = vunpack.c.h.b16 %v1132
        %v1378 = vunpack.c.l.b16 %v1133
        %v1379 = vunpack.c.h.b16 %v1133
        %v1380 = vunpack.c.l.b16 %v1134
        %v1381 = vunpack.c.h.b16 %v1134
        %v1382 = vunpack.c.l.b16 %v1135
        %v1383 = vunpack.c.h.b16 %v1135
        %v1384 = vunpack.c.l.b16 %v1136
        %v1385 = vunpack.c.h.b16 %v1136
        %v1386 = vunpack.c.l.b16 %v1137
        %v1387 = vunpack.c.h.b16 %v1137
        %v1388 = vunpack.c.l.b16 %v1138
        %v1389 = vunpack.c.h.b16 %v1138
        %v1390 = vpack.c.b16 %v1352, %v1350
        %v1391 = vpack.c.b16 %v1353, %v1351
        %v1392 = vpack.c.b16 %v1356, %v1354
        %v1393 = vpack.c.b16 %v1357, %v1355
        %v1394 = vpack.c.b16 %v1360, %v1358
        %v1395 = vpack.c.b16 %v1361, %v1359
        %v1396 = vpack.c.b16 %v1364, %v1362
        %v1397 = vpack.c.b16 %v1365, %v1363
        %v1398 = vpack.c.b16 %v1368, %v1366
        %v1399 = vpack.c.b16 %v1369, %v1367
        %v1400 = vpack.c.b16 %v1372, %v1370
        %v1401 = vpack.c.b16 %v1373, %v1371
        %v1402 = vpack.c.b16 %v1376, %v1374
        %v1403 = vpack.c.b16 %v1377, %v1375
        %v1404 = vpack.c.b16 %v1380, %v1378
        %v1405 = vpack.c.b16 %v1381, %v1379
        %v1406 = vpack.c.b16 %v1384, %v1382
        %v1407 = vpack.c.b16 %v1385, %v1383
        %v1408 = vpack.c.b16 %v1388, %v1386
        %v1409 = vpack.c.b16 %v1389, %v1387
        %v1431 = vsel %vm704, %v1328, 0
        %1433 = vmatprep.subr.bf16.mxu0 %v1391
        %1434 = vmatpush1.bf16.msra.mxu0 %v1390
        %1435 = vmatprep.subr.bf16.mxu0 %v1393
        %1436 = vmatpush1.bf16.msra.mxu0 %v1392
        %1437 = vmatprep.subr.bf16.mxu0 %v1395
        %1438 = vmatpush1.bf16.msra.mxu0 %v1394
        %1439 = vmatprep.subr.bf16.mxu0 %v1397
        %1440 = vmatpush1.bf16.msra.mxu0 %v1396
        %1441 = vmatprep.subr.bf16.mxu0 %v1399
        %1442 = vmatpush1.bf16.msra.mxu0 %v1398
        %1443 = vmatprep.subr.bf16.mxu0 %v1401
        %1444 = vmatpush1.bf16.msra.mxu0 %v1400
        %1445 = vmatprep.subr.bf16.mxu0 %v1403
        %1446 = vmatpush1.bf16.msra.mxu0 %v1402
        %1447 = vmatprep.subr.bf16.mxu0 %v1405
        %1448 = vmatpush1.bf16.msra.mxu0 %v1404
        %1449 = vmatprep.subr.bf16.mxu0 %v1407
        %1450 = vmatpush1.bf16.msra.mxu0 %v1406
        %1451 = vmatprep.subr.bf16.mxu0 %v1409
        %1452 = vmatpush1.bf16.msra.mxu0 %v1408
        %1453 = vmatprep.subr.bf16.mxu0 0
        %1454 = vmatpush1.bf16.msra.mxu0 0
        %1455 = vmatprep.subr.bf16.mxu0 0
        %1456 = vmatpush1.bf16.msra.mxu0 0
        %1457 = vmatprep.subr.bf16.mxu0 0
        %1458 = vmatpush1.bf16.msra.mxu0 0
        %1459 = vmatprep.subr.bf16.mxu0 0
        %1460 = vmatpush1.bf16.msra.mxu0 0
        %1461 = vmatprep.subr.bf16.mxu0 0
        %1462 = vmatpush1.bf16.msra.mxu0 0
        %1463 = vmatprep.subr.bf16.mxu0 0
        %1464 = vmatpush1.bf16.msra.mxu0 0
        %1465 = vmatprep.mubr.bf16.mxu0 %v1431
        %1466 = vmatmul.mubr.bf16.gmra.mrb[0].mxu0 %v1327
        %v1467 = vpop.f32.mrb[0].mxu0
        %v1468 = vadd.f32 %v1321, %v1467
        %v1469 = vpop.f32.mrb[0].mxu0
        %v1470 = vadd.f32 %v1323, %v1469
        %v1471 = vpop.f32.mrb[0].mxu0
        %v1472 = vpop.f32.mrb[0].mxu0
        %1473 = vdwg.mxu0
        %s1474 = scalar_lea.vmem [#allocation5], 800
        %v1475 = vld [vmem:[%s1474] sm:$0xff]
        %v1476 = vld [vmem:[%s1474 + $0x8] sm:$0xff]
        %v1477 = vld [vmem:[%s1474 + $0x10] sm:$0xff]
        %v1478 = vld [vmem:[%s1474 + $0x18] sm:$0xff]
        %v1479 = vld [vmem:[%s1474 + $0x20] sm:$0xff]
        %v1480 = vld [vmem:[%s1474 + $0x28] sm:$0xff]
        %v1481 = vld [vmem:[%s1474 + $0x30] sm:$0xff]
        %v1482 = vld [vmem:[%s1474 + $0x38] sm:$0xff]
        %v1483 = vld [vmem:[%s1474 + $0x40] sm:$0xff]
        %v1484 = vld [vmem:[%s1474 + $0x48] sm:$0xff]
        %v1485 = vld [vmem:[%s1474 + $0x50] sm:$0xff]
        %v1486 = vld [vmem:[%s1474 + $0x58] sm:$0xff]
        %v1487 = vld [vmem:[%s1474 + $0x60] sm:$0xff]
        %v1488 = vld [vmem:[%s1474 + $0x68] sm:$0xff]
        %v1489 = vld [vmem:[%s1474 + $0x70] sm:$0xff]
        %v1490 = vld [vmem:[%s1474 + $0x78] sm:$0xff]
        %v1491 = vld [vmem:[%s1474 + $0x80] sm:$0xff]
        %v1492 = vld [vmem:[%s1474 + $0x88] sm:$0xff]
        %v1493 = vld [vmem:[%s1474 + $0x90] sm:$0xff]
        %v1494 = vld [vmem:[%s1474 + $0x98] sm:$0xff]
        %v1496 = vunpack.c.l.b16 %v1117
        %v1497 = vunpack.c.h.b16 %v1117
        %v1498 = vpack.c.b16 %v1164, %v1496
        %v1499 = vpack.c.b16 %v1165, %v1497
        %v1500 = vrot.slane %v1498, 1
        %v1501 = vrot.slane %v1499, 1
        %v1523 = vunpack.c.l.b16 %v1475
        %v1524 = vunpack.c.h.b16 %v1475
        %v1525 = vunpack.c.l.b16 %v1476
        %v1526 = vunpack.c.h.b16 %v1476
        %v1527 = vunpack.c.l.b16 %v1477
        %v1528 = vunpack.c.h.b16 %v1477
        %v1529 = vunpack.c.l.b16 %v1478
        %v1530 = vunpack.c.h.b16 %v1478
        %v1531 = vunpack.c.l.b16 %v1479
        %v1532 = vunpack.c.h.b16 %v1479
        %v1533 = vunpack.c.l.b16 %v1480
        %v1534 = vunpack.c.h.b16 %v1480
        %v1535 = vunpack.c.l.b16 %v1481
        %v1536 = vunpack.c.h.b16 %v1481
        %v1537 = vunpack.c.l.b16 %v1482
        %v1538 = vunpack.c.h.b16 %v1482
        %v1539 = vunpack.c.l.b16 %v1483
        %v1540 = vunpack.c.h.b16 %v1483
        %v1541 = vunpack.c.l.b16 %v1484
        %v1542 = vunpack.c.h.b16 %v1484
        %v1543 = vunpack.c.l.b16 %v1485
        %v1544 = vunpack.c.h.b16 %v1485
        %v1545 = vunpack.c.l.b16 %v1486
        %v1546 = vunpack.c.h.b16 %v1486
        %v1547 = vunpack.c.l.b16 %v1487
        %v1548 = vunpack.c.h.b16 %v1487
        %v1549 = vunpack.c.l.b16 %v1488
        %v1550 = vunpack.c.h.b16 %v1488
        %v1551 = vunpack.c.l.b16 %v1489
        %v1552 = vunpack.c.h.b16 %v1489
        %v1553 = vunpack.c.l.b16 %v1490
        %v1554 = vunpack.c.h.b16 %v1490
        %v1555 = vunpack.c.l.b16 %v1491
        %v1556 = vunpack.c.h.b16 %v1491
        %v1557 = vunpack.c.l.b16 %v1492
        %v1558 = vunpack.c.h.b16 %v1492
        %v1559 = vunpack.c.l.b16 %v1493
        %v1560 = vunpack.c.h.b16 %v1493
        %v1561 = vunpack.c.l.b16 %v1494
        %v1562 = vunpack.c.h.b16 %v1494
        %v1563 = vpack.c.b16 %v1525, %v1523
        %v1564 = vpack.c.b16 %v1526, %v1524
        %v1565 = vpack.c.b16 %v1529, %v1527
        %v1566 = vpack.c.b16 %v1530, %v1528
        %v1567 = vpack.c.b16 %v1533, %v1531
        %v1568 = vpack.c.b16 %v1534, %v1532
        %v1569 = vpack.c.b16 %v1537, %v1535
        %v1570 = vpack.c.b16 %v1538, %v1536
        %v1571 = vpack.c.b16 %v1541, %v1539
        %v1572 = vpack.c.b16 %v1542, %v1540
        %v1573 = vpack.c.b16 %v1545, %v1543
        %v1574 = vpack.c.b16 %v1546, %v1544
        %v1575 = vpack.c.b16 %v1549, %v1547
        %v1576 = vpack.c.b16 %v1550, %v1548
        %v1577 = vpack.c.b16 %v1553, %v1551
        %v1578 = vpack.c.b16 %v1554, %v1552
        %v1579 = vpack.c.b16 %v1557, %v1555
        %v1580 = vpack.c.b16 %v1558, %v1556
        %v1581 = vpack.c.b16 %v1561, %v1559
        %v1582 = vpack.c.b16 %v1562, %v1560
        %v1604 = vsel %vm704, %v1501, 0
        %1606 = vmatprep.subr.bf16.mxu0 %v1564
        %1607 = vmatpush1.bf16.msra.mxu0 %v1563
        %1608 = vmatprep.subr.bf16.mxu0 %v1566
        %1609 = vmatpush1.bf16.msra.mxu0 %v1565
        %1610 = vmatprep.subr.bf16.mxu0 %v1568
        %1611 = vmatpush1.bf16.msra.mxu0 %v1567
        %1612 = vmatprep.subr.bf16.mxu0 %v1570
        %1613 = vmatpush1.bf16.msra.mxu0 %v1569
        %1614 = vmatprep.subr.bf16.mxu0 %v1572
        %1615 = vmatpush1.bf16.msra.mxu0 %v1571
        %1616 = vmatprep.subr.bf16.mxu0 %v1574
        %1617 = vmatpush1.bf16.msra.mxu0 %v1573
        %1618 = vmatprep.subr.bf16.mxu0 %v1576
        %1619 = vmatpush1.bf16.msra.mxu0 %v1575
        %1620 = vmatprep.subr.bf16.mxu0 %v1578
        %1621 = vmatpush1.bf16.msra.mxu0 %v1577
        %1622 = vmatprep.subr.bf16.mxu0 %v1580
        %1623 = vmatpush1.bf16.msra.mxu0 %v1579
        %1624 = vmatprep.subr.bf16.mxu0 %v1582
        %1625 = vmatpush1.bf16.msra.mxu0 %v1581
        %1626 = vmatprep.subr.bf16.mxu0 0
        %1627 = vmatpush1.bf16.msra.mxu0 0
        %1628 = vmatprep.subr.bf16.mxu0 0
        %1629 = vmatpush1.bf16.msra.mxu0 0
        %1630 = vmatprep.subr.bf16.mxu0 0
        %1631 = vmatpush1.bf16.msra.mxu0 0
        %1632 = vmatprep.subr.bf16.mxu0 0
        %1633 = vmatpush1.bf16.msra.mxu0 0
        %1634 = vmatprep.subr.bf16.mxu0 0
        %1635 = vmatpush1.bf16.msra.mxu0 0
        %1636 = vmatprep.subr.bf16.mxu0 0
        %1637 = vmatpush1.bf16.msra.mxu0 0
        %1638 = vmatprep.mubr.bf16.mxu0 %v1604
        %1639 = vmatmul.mubr.bf16.gmra.mrb[0].mxu0 %v1500
        %v1640 = vpop.f32.mrb[0].mxu0
        %v1641 = vadd.f32 0.0, %v1640
        %v1642 = vpop.f32.mrb[0].mxu0
        %v1643 = vadd.f32 0.0, %v1642
        %v1644 = vpop.f32.mrb[0].mxu0
        %v1645 = vpop.f32.mrb[0].mxu0
        %1646 = vdwg.mxu0
        %v1647 = vadd.f32 %v1468, %v1641
        %v1648 = vadd.f32 %v1470, %v1643
        %s1649 = scalar_lea.vmem %s3, 1
        %v1650 = vld [vmem:[%s1649] ss:$2 sm:$0x3]
        %v1652 = vlaneseq
        %v1653 = vshrl.u32 %v1652, 7
        %v1654 = vsub.s32 0, %v1653
        %v1655 = vrot.slane %v1650, %v1654
        %v1656 = vlaneseq
        %v1657 = vshrl.u32 %v1656, 7
        %v1658 = vsub.s32 1, %v1657
        %v1659 = vrot.slane %v1650, %v1658
        %v1662 = vadd.f32 %v1647, %v1655
        %v1663 = vadd.f32 %v1648, %v1659
        %v1664 = vmax.f32 %v1662, 0.0
        %v1665 = vmax.f32 %v1663, 0.0
        %v1666 = vpack.c.bf16 %v1664, %v1664
        %v1667 = vpack.c.bf16 %v1665, %v1665
        %vm1668 = vcmask 126980
        %vm1669 = vmand %vm1668, %vm523
        %vm1670 = vmor %vm1669, %vm521
        %v1671 = vld [vmem:[#allocation3] sm:$0x11]
        %v1672 = vsel %vm1670, 0, %v1671
        %1673 = vst [vmem:[#allocation3] sm:$0x11] %v1672
        %vm1674 = vmand %vm1668, %vm531
        %vm1675 = vmor %vm1674, %vm530
        %v1676 = vld [vmem:[#allocation3 + $0x10] sm:$0x11]
        %v1677 = vsel %vm1675, 0, %v1676
        %1678 = vst [vmem:[#allocation3 + $0x10] sm:$0x11] %v1677
        %v1679 = vld [vmem:[%s4] sm:$0xff]
        %v1680 = vld [vmem:[%s4 + $0x8] sm:$0xff]
        %v1681 = vld [vmem:[%s4 + $0x10] sm:$0xff]
        %v1682 = vld [vmem:[%s4 + $0x18] sm:$0xff]
        %v1683 = vld [vmem:[%s4 + $0x20] sm:$0xff]
        %v1684 = vld [vmem:[%s4 + $0x28] sm:$0xff]
        %v1685 = vld [vmem:[%s4 + $0x30] sm:$0xff]
        %v1686 = vld [vmem:[%s4 + $0x38] sm:$0xff]
        %v1687 = vld [vmem:[%s4 + $0x40] sm:$0xff]
        %v1688 = vld [vmem:[%s4 + $0x48] sm:$0xff]
        %v1689 = vld [vmem:[%s4 + $0x50] sm:$0xff]
        %v1690 = vld [vmem:[%s4 + $0x58] sm:$0xff]
        %v1691 = vld [vmem:[%s4 + $0x60] sm:$0xff]
        %v1692 = vld [vmem:[%s4 + $0x68] sm:$0xff]
        %v1693 = vld [vmem:[%s4 + $0x70] sm:$0xff]
        %v1694 = vld [vmem:[%s4 + $0x78] sm:$0xff]
        %v1695 = vld [vmem:[%s4 + $0x80] sm:$0xff]
        %v1696 = vld [vmem:[%s4 + $0x88] sm:$0xff]
        %v1697 = vld [vmem:[%s4 + $0x90] sm:$0xff]
        %v1698 = vld [vmem:[%s4 + $0x98] sm:$0xff]
        %v1699 = vld [vmem:[%s5] sm:$0x3]
        %v1701 = vlaneseq
        %v1702 = vshrl.u32 %v1701, 7
        %v1703 = vsub.s32 0, %v1702
        %v1704 = vrot.slane %v1699, %v1703
        %v1705 = vlaneseq
        %v1706 = vshrl.u32 %v1705, 7
        %v1707 = vsub.s32 1, %v1706
        %v1708 = vrot.slane %v1699, %v1707
        %v1731 = vunpack.c.l.b16 %v1679
        %v1732 = vunpack.c.h.b16 %v1679
        %v1733 = vunpack.c.l.b16 %v1680
        %v1734 = vunpack.c.h.b16 %v1680
        %v1735 = vunpack.c.l.b16 %v1681
        %v1736 = vunpack.c.h.b16 %v1681
        %v1737 = vunpack.c.l.b16 %v1682
        %v1738 = vunpack.c.h.b16 %v1682
        %v1739 = vunpack.c.l.b16 %v1683
        %v1740 = vunpack.c.h.b16 %v1683
        %v1741 = vunpack.c.l.b16 %v1684
        %v1742 = vunpack.c.h.b16 %v1684
        %v1743 = vunpack.c.l.b16 %v1685
        %v1744 = vunpack.c.h.b16 %v1685
        %v1745 = vunpack.c.l.b16 %v1686
        %v1746 = vunpack.c.h.b16 %v1686
        %v1747 = vunpack.c.l.b16 %v1687
        %v1748 = vunpack.c.h.b16 %v1687
        %v1749 = vunpack.c.l.b16 %v1688
        %v1750 = vunpack.c.h.b16 %v1688
        %v1751 = vunpack.c.l.b16 %v1689
        %v1752 = vunpack.c.h.b16 %v1689
        %v1753 = vunpack.c.l.b16 %v1690
        %v1754 = vunpack.c.h.b16 %v1690
        %v1755 = vunpack.c.l.b16 %v1691
        %v1756 = vunpack.c.h.b16 %v1691
        %v1757 = vunpack.c.l.b16 %v1692
        %v1758 = vunpack.c.h.b16 %v1692
        %v1759 = vunpack.c.l.b16 %v1693
        %v1760 = vunpack.c.h.b16 %v1693
        %v1761 = vunpack.c.l.b16 %v1694
        %v1762 = vunpack.c.h.b16 %v1694
        %v1763 = vunpack.c.l.b16 %v1695
        %v1764 = vunpack.c.h.b16 %v1695
        %v1765 = vunpack.c.l.b16 %v1696
        %v1766 = vunpack.c.h.b16 %v1696
        %v1767 = vunpack.c.l.b16 %v1697
        %v1768 = vunpack.c.h.b16 %v1697
        %v1769 = vunpack.c.l.b16 %v1698
        %v1770 = vunpack.c.h.b16 %v1698
        %v1771 = vpack.c.b16 %v1733, %v1731
        %v1772 = vpack.c.b16 %v1734, %v1732
        %v1773 = vpack.c.b16 %v1737, %v1735
        %v1774 = vpack.c.b16 %v1738, %v1736
        %v1775 = vpack.c.b16 %v1741, %v1739
        %v1776 = vpack.c.b16 %v1742, %v1740
        %v1777 = vpack.c.b16 %v1745, %v1743
        %v1778 = vpack.c.b16 %v1746, %v1744
        %v1779 = vpack.c.b16 %v1749, %v1747
        %v1780 = vpack.c.b16 %v1750, %v1748
        %v1781 = vpack.c.b16 %v1753, %v1751
        %v1782 = vpack.c.b16 %v1754, %v1752
        %v1783 = vpack.c.b16 %v1757, %v1755
        %v1784 = vpack.c.b16 %v1758, %v1756
        %v1785 = vpack.c.b16 %v1761, %v1759
        %v1786 = vpack.c.b16 %v1762, %v1760
        %v1787 = vpack.c.b16 %v1765, %v1763
        %v1788 = vpack.c.b16 %v1766, %v1764
        %v1789 = vpack.c.b16 %v1769, %v1767
        %v1790 = vpack.c.b16 %v1770, %v1768
        %v1812 = vsel %vm704, %v1667, 0
        %1814 = vmatprep.subr.bf16.mxu0 %v1772
        %1815 = vmatpush1.bf16.msra.mxu0 %v1771
        %1816 = vmatprep.subr.bf16.mxu0 %v1774
        %1817 = vmatpush1.bf16.msra.mxu0 %v1773
        %1818 = vmatprep.subr.bf16.mxu0 %v1776
        %1819 = vmatpush1.bf16.msra.mxu0 %v1775
        %1820 = vmatprep.subr.bf16.mxu0 %v1778
        %1821 = vmatpush1.bf16.msra.mxu0 %v1777
        %1822 = vmatprep.subr.bf16.mxu0 %v1780
        %1823 = vmatpush1.bf16.msra.mxu0 %v1779
        %1824 = vmatprep.subr.bf16.mxu0 %v1782
        %1825 = vmatpush1.bf16.msra.mxu0 %v1781
        %1826 = vmatprep.subr.bf16.mxu0 %v1784
        %1827 = vmatpush1.bf16.msra.mxu0 %v1783
        %1828 = vmatprep.subr.bf16.mxu0 %v1786
        %1829 = vmatpush1.bf16.msra.mxu0 %v1785
        %1830 = vmatprep.subr.bf16.mxu0 %v1788
        %1831 = vmatpush1.bf16.msra.mxu0 %v1787
        %1832 = vmatprep.subr.bf16.mxu0 %v1790
        %1833 = vmatpush1.bf16.msra.mxu0 %v1789
        %1834 = vmatprep.subr.bf16.mxu0 0
        %1835 = vmatpush1.bf16.msra.mxu0 0
        %1836 = vmatprep.subr.bf16.mxu0 0
        %1837 = vmatpush1.bf16.msra.mxu0 0
        %1838 = vmatprep.subr.bf16.mxu0 0
        %1839 = vmatpush1.bf16.msra.mxu0 0
        %1840 = vmatprep.subr.bf16.mxu0 0
        %1841 = vmatpush1.bf16.msra.mxu0 0
        %1842 = vmatprep.subr.bf16.mxu0 0
        %1843 = vmatpush1.bf16.msra.mxu0 0
        %1844 = vmatprep.subr.bf16.mxu0 0
        %1845 = vmatpush1.bf16.msra.mxu0 0
        %1846 = vmatprep.mubr.bf16.mxu0 %v1812
        %1847 = vmatmul.mubr.bf16.gmra.mrb[0].mxu0 %v1666
        %v1848 = vpop.f32.mrb[0].mxu0
        %v1849 = vadd.f32 %v1704, %v1848
        %v1850 = vpop.f32.mrb[0].mxu0
        %v1851 = vadd.f32 %v1708, %v1850
        %v1852 = vpop.f32.mrb[0].mxu0
        %v1853 = vpop.f32.mrb[0].mxu0
        %1854 = vdwg.mxu0
        %v1855 = vmax.f32 %v1849, 0.0
        %v1856 = vmax.f32 %v1851, 0.0
        %v1857 = vpack.c.bf16 %v1855, %v1855
        %v1858 = vpack.c.bf16 %v1856, %v1856
        %v1861 = vunpack.c.l.b16 %v1857
        %v1862 = vunpack.c.l.b16 %v1858
        %v1863 = vpack.c.b16 %v1862, %v1861
        %v1865 = vshll.u32 %v1863, 16
        %v1868 = vld [vmem:[#allocation3] sm:$0x11]
        %v1869 = vsel %vm1675, %v1865, %v1868
        %1870 = vst [vmem:[#allocation3] sm:$0x11] %v1869
        %v1871 = vrot.slane %v1863, 7
        %vm1873 = vcmask 1041409
        %vm1874 = vsmask.f32 7942
        %vm1875 = vmand %vm1873, %vm1874
        %vm1876 = vcmask 128005
        %vm1877 = vsmask.f32 7958
        %vm1878 = vmand %vm1876, %vm1877
        %vm1879 = vmor %vm1878, %vm1875
        %v1880 = vld [vmem:[#allocation3] sm:$0x22]
        %v1881 = vsel %vm1879, %v1871, %v1880
        %1882 = vst [vmem:[#allocation3] sm:$0x22] %v1881
        %v1883 = vrot.slane %v1865, 7
        %vm1885 = vcmask 1042434
        %vm1886 = vsmask.f32 7946
        %vm1887 = vmand %vm1885, %vm1886
        %vm1888 = vcmask 129030
        %vm1889 = vsmask.f32 7962
        %vm1890 = vmand %vm1888, %vm1889
        %vm1891 = vmor %vm1890, %vm1887
        %v1892 = vld [vmem:[#allocation3] sm:$0x44]
        %v1893 = vsel %vm1891, %v1883, %v1892
        %1894 = vst [vmem:[#allocation3] sm:$0x44] %v1893
        %v1895 = vrot.slane %v1863, 6
        %vm1897 = vcmask 1043459
        %vm1898 = vsmask.f32 7950
        %vm1899 = vmand %vm1897, %vm1898
        %vm1900 = vcmask 130055
        %vm1901 = vsmask.f32 7966
        %vm1902 = vmand %vm1900, %vm1901
        %vm1903 = vmor %vm1902, %vm1899
        %v1904 = vld [vmem:[#allocation3] sm:$0x88]
        %v1905 = vsel %vm1903, %v1895, %v1904
        %1906 = vst [vmem:[#allocation3] sm:$0x88] %v1905
        %v1907 = vrot.slane %v1865, 6
        %v1908 = vrot.slane %v1907, 4
        %v1910 = vld [vmem:[#allocation3 + $0x8] sm:$0x11]
        %v1911 = vsel %vm1675, %v1908, %v1910
        %1912 = vst [vmem:[#allocation3 + $0x8] sm:$0x11] %v1911
        %v1913 = vrot.slane %v1863, 5
        %v1914 = vrot.slane %v1913, 4
        %v1916 = vld [vmem:[#allocation3 + $0x8] sm:$0x22]
        %v1917 = vsel %vm1879, %v1914, %v1916
        %1918 = vst [vmem:[#allocation3 + $0x8] sm:$0x22] %v1917
        %v1919 = vrot.slane %v1865, 5
        %v1920 = vrot.slane %v1919, 4
        %v1922 = vld [vmem:[#allocation3 + $0x8] sm:$0x44]
        %v1923 = vsel %vm1891, %v1920, %v1922
        %1924 = vst [vmem:[#allocation3 + $0x8] sm:$0x44] %v1923
        %v1926 = vld [vmem:[#allocation3 + $0x8] sm:$0x88]
        %v1927 = vsel %vm1903, %v1863, %v1926
        %1928 = vst [vmem:[#allocation3 + $0x8] sm:$0x88] %v1927
        %s1929 = scalar_lea.vmem %s4, 160
        %v1930 = vld [vmem:[%s1929] sm:$0xff]
        %v1931 = vld [vmem:[%s1929 + $0x8] sm:$0xff]
        %v1932 = vld [vmem:[%s1929 + $0x10] sm:$0xff]
        %v1933 = vld [vmem:[%s1929 + $0x18] sm:$0xff]
        %v1934 = vld [vmem:[%s1929 + $0x20] sm:$0xff]
        %v1935 = vld [vmem:[%s1929 + $0x28] sm:$0xff]
        %v1936 = vld [vmem:[%s1929 + $0x30] sm:$0xff]
        %v1937 = vld [vmem:[%s1929 + $0x38] sm:$0xff]
        %v1938 = vld [vmem:[%s1929 + $0x40] sm:$0xff]
        %v1939 = vld [vmem:[%s1929 + $0x48] sm:$0xff]
        %v1940 = vld [vmem:[%s1929 + $0x50] sm:$0xff]
        %v1941 = vld [vmem:[%s1929 + $0x58] sm:$0xff]
        %v1942 = vld [vmem:[%s1929 + $0x60] sm:$0xff]
        %v1943 = vld [vmem:[%s1929 + $0x68] sm:$0xff]
        %v1944 = vld [vmem:[%s1929 + $0x70] sm:$0xff]
        %v1945 = vld [vmem:[%s1929 + $0x78] sm:$0xff]
        %v1946 = vld [vmem:[%s1929 + $0x80] sm:$0xff]
        %v1947 = vld [vmem:[%s1929 + $0x88] sm:$0xff]
        %v1948 = vld [vmem:[%s1929 + $0x90] sm:$0xff]
        %v1949 = vld [vmem:[%s1929 + $0x98] sm:$0xff]
        %v1950 = vld [vmem:[%s5] sm:$0x3]
        %v1952 = vlaneseq
        %v1953 = vshrl.u32 %v1952, 7
        %v1954 = vsub.s32 0, %v1953
        %v1955 = vrot.slane %v1950, %v1954
        %v1956 = vlaneseq
        %v1957 = vshrl.u32 %v1956, 7
        %v1958 = vsub.s32 1, %v1957
        %v1959 = vrot.slane %v1950, %v1958
        %v1982 = vunpack.c.l.b16 %v1930
        %v1983 = vunpack.c.h.b16 %v1930
        %v1984 = vunpack.c.l.b16 %v1931
        %v1985 = vunpack.c.h.b16 %v1931
        %v1986 = vunpack.c.l.b16 %v1932
        %v1987 = vunpack.c.h.b16 %v1932
        %v1988 = vunpack.c.l.b16 %v1933
        %v1989 = vunpack.c.h.b16 %v1933
        %v1990 = vunpack.c.l.b16 %v1934
        %v1991 = vunpack.c.h.b16 %v1934
        %v1992 = vunpack.c.l.b16 %v1935
        %v1993 = vunpack.c.h.b16 %v1935
        %v1994 = vunpack.c.l.b16 %v1936
        %v1995 = vunpack.c.h.b16 %v1936
        %v1996 = vunpack.c.l.b16 %v1937
        %v1997 = vunpack.c.h.b16 %v1937
        %v1998 = vunpack.c.l.b16 %v1938
        %v1999 = vunpack.c.h.b16 %v1938
        %v2000 = vunpack.c.l.b16 %v1939
        %v2001 = vunpack.c.h.b16 %v1939
        %v2002 = vunpack.c.l.b16 %v1940
        %v2003 = vunpack.c.h.b16 %v1940
        %v2004 = vunpack.c.l.b16 %v1941
        %v2005 = vunpack.c.h.b16 %v1941
        %v2006 = vunpack.c.l.b16 %v1942
        %v2007 = vunpack.c.h.b16 %v1942
        %v2008 = vunpack.c.l.b16 %v1943
        %v2009 = vunpack.c.h.b16 %v1943
        %v2010 = vunpack.c.l.b16 %v1944
        %v2011 = vunpack.c.h.b16 %v1944
        %v2012 = vunpack.c.l.b16 %v1945
        %v2013 = vunpack.c.h.b16 %v1945
        %v2014 = vunpack.c.l.b16 %v1946
        %v2015 = vunpack.c.h.b16 %v1946
        %v2016 = vunpack.c.l.b16 %v1947
        %v2017 = vunpack.c.h.b16 %v1947
        %v2018 = vunpack.c.l.b16 %v1948
        %v2019 = vunpack.c.h.b16 %v1948
        %v2020 = vunpack.c.l.b16 %v1949
        %v2021 = vunpack.c.h.b16 %v1949
        %v2022 = vpack.c.b16 %v1984, %v1982
        %v2023 = vpack.c.b16 %v1985, %v1983
        %v2024 = vpack.c.b16 %v1988, %v1986
        %v2025 = vpack.c.b16 %v1989, %v1987
        %v2026 = vpack.c.b16 %v1992, %v1990
        %v2027 = vpack.c.b16 %v1993, %v1991
        %v2028 = vpack.c.b16 %v1996, %v1994
        %v2029 = vpack.c.b16 %v1997, %v1995
        %v2030 = vpack.c.b16 %v2000, %v1998
        %v2031 = vpack.c.b16 %v2001, %v1999
        %v2032 = vpack.c.b16 %v2004, %v2002
        %v2033 = vpack.c.b16 %v2005, %v2003
        %v2034 = vpack.c.b16 %v2008, %v2006
        %v2035 = vpack.c.b16 %v2009, %v2007
        %v2036 = vpack.c.b16 %v2012, %v2010
        %v2037 = vpack.c.b16 %v2013, %v2011
        %v2038 = vpack.c.b16 %v2016, %v2014
        %v2039 = vpack.c.b16 %v2017, %v2015
        %v2040 = vpack.c.b16 %v2020, %v2018
        %v2041 = vpack.c.b16 %v2021, %v2019
        %2062 = vmatprep.subr.bf16.mxu0 %v2023
        %2063 = vmatpush1.bf16.msra.mxu0 %v2022
        %2064 = vmatprep.subr.bf16.mxu0 %v2025
        %2065 = vmatpush1.bf16.msra.mxu0 %v2024
        %2066 = vmatprep.subr.bf16.mxu0 %v2027
        %2067 = vmatpush1.bf16.msra.mxu0 %v2026
        %2068 = vmatprep.subr.bf16.mxu0 %v2029
        %2069 = vmatpush1.bf16.msra.mxu0 %v2028
        %2070 = vmatprep.subr.bf16.mxu0 %v2031
        %2071 = vmatpush1.bf16.msra.mxu0 %v2030
        %2072 = vmatprep.subr.bf16.mxu0 %v2033
        %2073 = vmatpush1.bf16.msra.mxu0 %v2032
        %2074 = vmatprep.subr.bf16.mxu0 %v2035
        %2075 = vmatpush1.bf16.msra.mxu0 %v2034
        %2076 = vmatprep.subr.bf16.mxu0 %v2037
        %2077 = vmatpush1.bf16.msra.mxu0 %v2036
        %2078 = vmatprep.subr.bf16.mxu0 %v2039
        %2079 = vmatpush1.bf16.msra.mxu0 %v2038
        %2080 = vmatprep.subr.bf16.mxu0 %v2041
        %2081 = vmatpush1.bf16.msra.mxu0 %v2040
        %2082 = vmatprep.subr.bf16.mxu0 0
        %2083 = vmatpush1.bf16.msra.mxu0 0
        %2084 = vmatprep.subr.bf16.mxu0 0
        %2085 = vmatpush1.bf16.msra.mxu0 0
        %2086 = vmatprep.subr.bf16.mxu0 0
        %2087 = vmatpush1.bf16.msra.mxu0 0
        %2088 = vmatprep.subr.bf16.mxu0 0
        %2089 = vmatpush1.bf16.msra.mxu0 0
        %2090 = vmatprep.subr.bf16.mxu0 0
        %2091 = vmatpush1.bf16.msra.mxu0 0
        %2092 = vmatprep.subr.bf16.mxu0 0
        %2093 = vmatpush1.bf16.msra.mxu0 0
        %2094 = vmatprep.mubr.bf16.mxu0 %v1812
        %2095 = vmatmul.mubr.bf16.gmra.mrb[0].mxu0 %v1666
        %v2096 = vpop.f32.mrb[0].mxu0
        %v2097 = vadd.f32 %v1955, %v2096
        %v2098 = vpop.f32.mrb[0].mxu0
        %v2099 = vadd.f32 %v1959, %v2098
        %v2100 = vpop.f32.mrb[0].mxu0
        %v2101 = vpop.f32.mrb[0].mxu0
        %2102 = vdwg.mxu0
        %v2103 = vmax.f32 %v2097, 0.0
        %v2104 = vmax.f32 %v2099, 0.0
        %v2105 = vpack.c.bf16 %v2103, %v2103
        %v2106 = vpack.c.bf16 %v2104, %v2104
        %v2109 = vunpack.c.l.b16 %v2105
        %v2110 = vunpack.c.l.b16 %v2106
        %v2111 = vpack.c.b16 %v2110, %v2109
        %v2112 = vrot.slane %v2111, 7
        %vm2114 = vsmask.f32 1280
        %vm2115 = vmand %vm1873, %vm2114
        %vm2116 = vsmask.f32 5376
        %vm2117 = vmand %vm1876, %vm2116
        %vm2118 = vmor %vm2117, %vm2115
        %v2119 = vld [vmem:[#allocation3] sm:$0x22]
        %v2120 = vsel %vm2118, %v2112, %v2119
        %2121 = vst [vmem:[#allocation3] sm:$0x22] %v2120
        %v2123 = vshrl.u32 %v2111, 16
        %v2125 = vrot.slane %v2123, 6
        %vm2127 = vsmask.f32 2304
        %vm2128 = vmand %vm1885, %vm2127
        %vm2129 = vsmask.f32 6400
        %vm2130 = vmand %vm1888, %vm2129
        %vm2131 = vmor %vm2130, %vm2128
        %v2132 = vld [vmem:[#allocation3] sm:$0x44]
        %v2133 = vsel %vm2131, %v2125, %v2132
        %2134 = vst [vmem:[#allocation3] sm:$0x44] %v2133
        %v2135 = vrot.slane %v2111, 6
        %vm2137 = vsmask.f32 3328
        %vm2138 = vmand %vm1897, %vm2137
        %vm2139 = vsmask.f32 7424
        %vm2140 = vmand %vm1900, %vm2139
        %vm2141 = vmor %vm2140, %vm2138
        %v2142 = vld [vmem:[#allocation3] sm:$0x88]
        %v2143 = vsel %vm2141, %v2135, %v2142
        %2144 = vst [vmem:[#allocation3] sm:$0x88] %v2143
        %v2145 = vrot.slane %v2123, 5
        %v2146 = vrot.slane %v2145, 4
        %v2148 = vld [vmem:[#allocation3 + $0x8] sm:$0x11]
        %v2149 = vsel %vm1670, %v2146, %v2148
        %2150 = vst [vmem:[#allocation3 + $0x8] sm:$0x11] %v2149
        %v2151 = vrot.slane %v2111, 5
        %v2152 = vrot.slane %v2151, 4
        %v2154 = vld [vmem:[#allocation3 + $0x8] sm:$0x22]
        %v2155 = vsel %vm2118, %v2152, %v2154
        %2156 = vst [vmem:[#allocation3 + $0x8] sm:$0x22] %v2155
        %v2157 = vrot.slane %v2123, 4
        %v2158 = vrot.slane %v2157, 4
        %v2160 = vld [vmem:[#allocation3 + $0x8] sm:$0x44]
        %v2161 = vsel %vm2131, %v2158, %v2160
        %2162 = vst [vmem:[#allocation3 + $0x8] sm:$0x44] %v2161
        %v2164 = vld [vmem:[#allocation3 + $0x8] sm:$0x88]
        %v2165 = vsel %vm2141, %v2111, %v2164
        %2166 = vst [vmem:[#allocation3 + $0x8] sm:$0x88] %v2165
        %v2167 = vrot.slane %v2123, 7
        %v2168 = vrot.slane %v2167, 4
        %v2170 = vld [vmem:[#allocation3 + $0x10] sm:$0x11]
        %v2171 = vsel %vm1670, %v2168, %v2170
        %2172 = vst [vmem:[#allocation3 + $0x10] sm:$0x11] %v2171
        %v2173 = vld [vmem:[%s517] sm:$0xff]
        %v2174 = vld [vmem:[%s517 + $0x8] sm:$0xff]
        %v2175 = vld [vmem:[%s6] sm:$0xff]
        %v2176 = vld [vmem:[%s6 + $0x8] sm:$0xf]
        %v2177 = vld [vmem:[%s6 + $0xc] sm:$0xff]
        %v2178 = vld [vmem:[%s6 + $0x14] sm:$0xf]
        %v2179 = vld [vmem:[%s6 + $0x18] sm:$0xff]
        %v2180 = vld [vmem:[%s6 + $0x20] sm:$0xf]
        %v2181 = vld [vmem:[%s6 + $0x24] sm:$0xff]
        %v2182 = vld [vmem:[%s6 + $0x2c] sm:$0xf]
        %v2183 = vld [vmem:[%s6 + $0x30] sm:$0xff]
        %v2184 = vld [vmem:[%s6 + $0x38] sm:$0xf]
        %v2185 = vld [vmem:[%s6 + $0x3c] sm:$0xff]
        %v2186 = vld [vmem:[%s6 + $0x44] sm:$0xf]
        %v2187 = vld [vmem:[%s6 + $0x48] sm:$0xff]
        %v2188 = vld [vmem:[%s6 + $0x50] sm:$0xf]
        %v2189 = vld [vmem:[%s6 + $0x54] sm:$0xff]
        %v2190 = vld [vmem:[%s6 + $0x5c] sm:$0xf]
        %v2191 = vld [vmem:[%s6 + $0x60] sm:$0xff]
        %v2192 = vld [vmem:[%s6 + $0x68] sm:$0xf]
        %v2193 = vld [vmem:[%s6 + $0x6c] sm:$0xff]
        %v2194 = vld [vmem:[%s6 + $0x74] sm:$0xf]
        %v2195 = vld [vmem:[%s6 + $0x78] sm:$0xff]
        %v2196 = vld [vmem:[%s6 + $0x80] sm:$0xf]
        %v2197 = vld [vmem:[%s6 + $0x84] sm:$0xff]
        %v2198 = vld [vmem:[%s6 + $0x8c] sm:$0xf]
        %v2199 = vld [vmem:[%s6 + $0x90] sm:$0xff]
        %v2200 = vld [vmem:[%s6 + $0x98] sm:$0xf]
        %v2201 = vld [vmem:[%s6 + $0x9c] sm:$0xff]
        %v2202 = vld [vmem:[%s6 + $0xa4] sm:$0xf]
        %v2203 = vld [vmem:[%s6 + $0xa8] sm:$0xff]
        %v2204 = vld [vmem:[%s6 + $0xb0] sm:$0xf]
        %v2205 = vld [vmem:[%s6 + $0xb4] sm:$0xff]
        %v2206 = vld [vmem:[%s6 + $0xbc] sm:$0xf]
        %v2207 = vld [vmem:[%s6 + $0xc0] sm:$0xff]
        %v2208 = vld [vmem:[%s6 + $0xc8] sm:$0xf]
        %v2209 = vld [vmem:[%s6 + $0xcc] sm:$0xff]
        %v2210 = vld [vmem:[%s6 + $0xd4] sm:$0xf]
        %v2211 = vld [vmem:[#allocation3] sm:$0xff]
        %v2212 = vld [vmem:[#allocation3 + $0x8] sm:$0xff]
        %v2213 = vld [vmem:[#allocation8] sm:$0xff]
        %v2214 = vld [vmem:[#allocation8 + $0x8] sm:$0xf]
        %v2215 = vld [vmem:[#allocation8 + $0xc] sm:$0xff]
        %v2216 = vld [vmem:[#allocation8 + $0x14] sm:$0xf]
        %v2217 = vld [vmem:[#allocation8 + $0x18] sm:$0xff]
        %v2218 = vld [vmem:[#allocation8 + $0x20] sm:$0xf]
        %v2219 = vld [vmem:[#allocation8 + $0x24] sm:$0xff]
        %v2220 = vld [vmem:[#allocation8 + $0x2c] sm:$0xf]
        %v2221 = vld [vmem:[#allocation8 + $0x30] sm:$0xff]
        %v2222 = vld [vmem:[#allocation8 + $0x38] sm:$0xf]
        %v2223 = vld [vmem:[#allocation8 + $0x3c] sm:$0xff]
        %v2224 = vld [vmem:[#allocation8 + $0x44] sm:$0xf]
        %v2225 = vld [vmem:[#allocation8 + $0x48] sm:$0xff]
        %v2226 = vld [vmem:[#allocation8 + $0x50] sm:$0xf]
        %v2227 = vld [vmem:[#allocation8 + $0x54] sm:$0xff]
        %v2228 = vld [vmem:[#allocation8 + $0x5c] sm:$0xf]
        %v2229 = vld [vmem:[#allocation8 + $0x60] sm:$0xff]
        %v2230 = vld [vmem:[#allocation8 + $0x68] sm:$0xf]
        %v2231 = vld [vmem:[#allocation8 + $0x6c] sm:$0xff]
        %v2232 = vld [vmem:[#allocation8 + $0x74] sm:$0xf]
        %v2233 = vld [vmem:[#allocation8 + $0x78] sm:$0xff]
        %v2234 = vld [vmem:[#allocation8 + $0x80] sm:$0xf]
        %v2235 = vld [vmem:[#allocation8 + $0x84] sm:$0xff]
        %v2236 = vld [vmem:[#allocation8 + $0x8c] sm:$0xf]
        %v2237 = vld [vmem:[#allocation8 + $0x90] sm:$0xff]
        %v2238 = vld [vmem:[#allocation8 + $0x98] sm:$0xf]
        %v2239 = vld [vmem:[#allocation8 + $0x9c] sm:$0xff]
        %v2240 = vld [vmem:[#allocation8 + $0xa4] sm:$0xf]
        %v2241 = vld [vmem:[#allocation8 + $0xa8] sm:$0xff]
        %v2242 = vld [vmem:[#allocation8 + $0xb0] sm:$0xf]
        %v2243 = vld [vmem:[#allocation8 + $0xb4] sm:$0xff]
        %v2244 = vld [vmem:[#allocation8 + $0xbc] sm:$0xf]
        %v2245 = vld [vmem:[#allocation8 + $0xc0] sm:$0xff]
        %v2246 = vld [vmem:[#allocation8 + $0xc8] sm:$0xf]
        %v2247 = vld [vmem:[#allocation8 + $0xcc] sm:$0xff]
        %v2248 = vld [vmem:[#allocation8 + $0xd4] sm:$0xf]
        %v2251 = vunpack.c.l.b16 %v2211
        %v2252 = vunpack.c.h.b16 %v2211
        %v2253 = vunpack.c.l.b16 %v2212
        %v2254 = vunpack.c.h.b16 %v2212
        %v2255 = vpack.c.b16 %v2253, %v2251
        %v2256 = vpack.c.b16 %v2254, %v2252
        %v2294 = vunpack.c.l.b16 %v2213
        %v2295 = vunpack.c.h.b16 %v2213
        %v2296 = vunpack.c.l.b16 %v2214
        %v2297 = vunpack.c.l.b16 %v2215
        %v2298 = vunpack.c.h.b16 %v2215
        %v2299 = vunpack.c.l.b16 %v2216
        %v2300 = vunpack.c.l.b16 %v2217
        %v2301 = vunpack.c.h.b16 %v2217
        %v2302 = vunpack.c.l.b16 %v2218
        %v2303 = vunpack.c.l.b16 %v2219
        %v2304 = vunpack.c.h.b16 %v2219
        %v2305 = vunpack.c.l.b16 %v2220
        %v2306 = vunpack.c.l.b16 %v2221
        %v2307 = vunpack.c.h.b16 %v2221
        %v2308 = vunpack.c.l.b16 %v2222
        %v2309 = vunpack.c.l.b16 %v2223
        %v2310 = vunpack.c.h.b16 %v2223
        %v2311 = vunpack.c.l.b16 %v2224
        %v2312 = vunpack.c.l.b16 %v2225
        %v2313 = vunpack.c.h.b16 %v2225
        %v2314 = vunpack.c.l.b16 %v2226
        %v2315 = vunpack.c.l.b16 %v2227
        %v2316 = vunpack.c.h.b16 %v2227
        %v2317 = vunpack.c.l.b16 %v2228
        %v2318 = vunpack.c.l.b16 %v2229
        %v2319 = vunpack.c.h.b16 %v2229
        %v2320 = vunpack.c.l.b16 %v2230
        %v2321 = vunpack.c.l.b16 %v2231
        %v2322 = vunpack.c.h.b16 %v2231
        %v2323 = vunpack.c.l.b16 %v2232
        %v2324 = vunpack.c.l.b16 %v2233
        %v2325 = vunpack.c.h.b16 %v2233
        %v2326 = vunpack.c.l.b16 %v2234
        %v2327 = vunpack.c.l.b16 %v2235
        %v2328 = vunpack.c.h.b16 %v2235
        %v2329 = vunpack.c.l.b16 %v2236
        %v2330 = vunpack.c.l.b16 %v2237
        %v2331 = vunpack.c.h.b16 %v2237
        %v2332 = vunpack.c.l.b16 %v2238
        %v2333 = vunpack.c.l.b16 %v2239
        %v2334 = vunpack.c.h.b16 %v2239
        %v2335 = vunpack.c.l.b16 %v2240
        %v2336 = vunpack.c.l.b16 %v2241
        %v2337 = vunpack.c.h.b16 %v2241
        %v2338 = vunpack.c.l.b16 %v2242
        %v2339 = vunpack.c.l.b16 %v2243
        %v2340 = vunpack.c.h.b16 %v2243
        %v2341 = vunpack.c.l.b16 %v2244
        %v2342 = vunpack.c.l.b16 %v2245
        %v2343 = vunpack.c.h.b16 %v2245
        %v2344 = vunpack.c.l.b16 %v2246
        %v2345 = vunpack.c.l.b16 %v2247
        %v2346 = vunpack.c.h.b16 %v2247
        %v2347 = vunpack.c.l.b16 %v2248
        %v2348 = vpack.c.b16 %v2297, %v2294
        %v2349 = vpack.c.b16 %v2298, %v2295
        %v2350 = vpack.c.b16 %v2299, %v2296
        %v2351 = vpack.c.b16 %v2303, %v2300
        %v2352 = vpack.c.b16 %v2304, %v2301
        %v2353 = vpack.c.b16 %v2305, %v2302
        %v2354 = vpack.c.b16 %v2309, %v2306
        %v2355 = vpack.c.b16 %v2310, %v2307
        %v2356 = vpack.c.b16 %v2311, %v2308
        %v2357 = vpack.c.b16 %v2315, %v2312
        %v2358 = vpack.c.b16 %v2316, %v2313
        %v2359 = vpack.c.b16 %v2317, %v2314
        %v2360 = vpack.c.b16 %v2321, %v2318
        %v2361 = vpack.c.b16 %v2322, %v2319
        %v2362 = vpack.c.b16 %v2323, %v2320
        %v2363 = vpack.c.b16 %v2327, %v2324
        %v2364 = vpack.c.b16 %v2328, %v2325
        %v2365 = vpack.c.b16 %v2329, %v2326
        %v2366 = vpack.c.b16 %v2333, %v2330
        %v2367 = vpack.c.b16 %v2334, %v2331
        %v2368 = vpack.c.b16 %v2335, %v2332
        %v2369 = vpack.c.b16 %v2339, %v2336
        %v2370 = vpack.c.b16 %v2340, %v2337
        %v2371 = vpack.c.b16 %v2341, %v2338
        %v2372 = vpack.c.b16 %v2345, %v2342
        %v2373 = vpack.c.b16 %v2346, %v2343
        %v2374 = vpack.c.b16 %v2347, %v2344
        %vm2402 = vcmask 130048
        %v2404 = vsel %vm2402, %v2256, 0
        %2406 = vmatprep.subr.bf16.mxu0 %v2349
        %2407 = vmatpush1.bf16.msra.mxu0 %v2348
        %2408 = vmatprep.subr.bf16.mxu0 %v2352
        %2409 = vmatpush1.bf16.msra.mxu0 %v2351
        %2410 = vmatprep.subr.bf16.mxu0 %v2355
        %2411 = vmatpush1.bf16.msra.mxu0 %v2354
        %2412 = vmatprep.subr.bf16.mxu0 %v2358
        %2413 = vmatpush1.bf16.msra.mxu0 %v2357
        %2414 = vmatprep.subr.bf16.mxu0 %v2361
        %2415 = vmatpush1.bf16.msra.mxu0 %v2360
        %2416 = vmatprep.subr.bf16.mxu0 %v2364
        %2417 = vmatpush1.bf16.msra.mxu0 %v2363
        %2418 = vmatprep.subr.bf16.mxu0 %v2367
        %2419 = vmatpush1.bf16.msra.mxu0 %v2366
        %2420 = vmatprep.subr.bf16.mxu0 %v2370
        %2421 = vmatpush1.bf16.msra.mxu0 %v2369
        %2422 = vmatprep.subr.bf16.mxu0 %v2373
        %2423 = vmatpush1.bf16.msra.mxu0 %v2372
        %2424 = vmatprep.subr.bf16.mxu0 0
        %2425 = vmatpush1.bf16.msra.mxu0 0
        %2426 = vmatprep.subr.bf16.mxu0 0
        %2427 = vmatpush1.bf16.msra.mxu0 0
        %2428 = vmatprep.subr.bf16.mxu0 0
        %2429 = vmatpush1.bf16.msra.mxu0 0
        %2430 = vmatprep.subr.bf16.mxu0 0
        %2431 = vmatpush1.bf16.msra.mxu0 0
        %2432 = vmatprep.subr.bf16.mxu0 0
        %2433 = vmatpush1.bf16.msra.mxu0 0
        %2434 = vmatprep.subr.bf16.mxu0 0
        %2435 = vmatpush1.bf16.msra.mxu0 0
        %2436 = vmatprep.subr.bf16.mxu0 0
        %2437 = vmatpush1.bf16.msra.mxu0 0
        %2438 = vmatprep.mubr.bf16.mxu0 %v2404
        %2439 = vmatmul.mubr.bf16.gmra.mrb[0].mxu0 %v2255
        %v2440 = vpop.f32.mrb[0].mxu0
        %v2441 = vadd.f32 0.0, %v2440
        %v2442 = vpop.f32.mrb[0].mxu0
        %v2443 = vadd.f32 0.0, %v2442
        %v2444 = vpop.f32.mrb[0].mxu0
        %v2445 = vadd.f32 0.0, %v2444
        %v2446 = vpop.f32.mrb[0].mxu0
        %v2447 = vadd.f32 0.0, %v2446
        %2448 = vdwg.mxu0
        %2449 = vmatprep.subr.bf16.mxu0 0
        %2450 = vmatpush1.bf16.msra.mxu0 %v2350
        %2451 = vmatprep.subr.bf16.mxu0 0
        %2452 = vmatpush1.bf16.msra.mxu0 %v2353
        %2453 = vmatprep.subr.bf16.mxu0 0
        %2454 = vmatpush1.bf16.msra.mxu0 %v2356
        %2455 = vmatprep.subr.bf16.mxu0 0
        %2456 = vmatpush1.bf16.msra.mxu0 %v2359
        %2457 = vmatprep.subr.bf16.mxu0 0
        %2458 = vmatpush1.bf16.msra.mxu0 %v2362
        %2459 = vmatprep.subr.bf16.mxu0 0
        %2460 = vmatpush1.bf16.msra.mxu0 %v2365
        %2461 = vmatprep.subr.bf16.mxu0 0
        %2462 = vmatpush1.bf16.msra.mxu0 %v2368
        %2463 = vmatprep.subr.bf16.mxu0 0
        %2464 = vmatpush1.bf16.msra.mxu0 %v2371
        %2465 = vmatprep.subr.bf16.mxu0 0
        %2466 = vmatpush1.bf16.msra.mxu0 %v2374
        %2467 = vmatprep.subr.bf16.mxu0 0
        %2468 = vmatpush1.bf16.msra.mxu0 0
        %2469 = vmatprep.subr.bf16.mxu0 0
        %2470 = vmatpush1.bf16.msra.mxu0 0
        %2471 = vmatprep.subr.bf16.mxu0 0
        %2472 = vmatpush1.bf16.msra.mxu0 0
        %2473 = vmatprep.subr.bf16.mxu0 0
        %2474 = vmatpush1.bf16.msra.mxu0 0
        %2475 = vmatprep.subr.bf16.mxu0 0
        %2476 = vmatpush1.bf16.msra.mxu0 0
        %2477 = vmatprep.subr.bf16.mxu0 0
        %2478 = vmatpush1.bf16.msra.mxu0 0
        %2479 = vmatprep.subr.bf16.mxu0 0
        %2480 = vmatpush1.bf16.msra.mxu0 0
        %2481 = vmatprep.mubr.bf16.mxu0 %v2404
        %2482 = vmatmul.mubr.bf16.gmra.mrb[0].mxu0 %v2255
        %v2483 = vpop.f32.mrb[0].mxu0
        %v2484 = vadd.f32 0.0, %v2483
        %v2485 = vpop.f32.mrb[0].mxu0
        %v2486 = vpop.f32.mrb[0].mxu0
        %v2487 = vadd.f32 0.0, %v2486
        %v2488 = vpop.f32.mrb[0].mxu0
        %2489 = vdwg.mxu0
        %v2492 = vunpack.c.l.b16 %v2173
        %v2493 = vunpack.c.h.b16 %v2173
        %v2494 = vunpack.c.l.b16 %v2174
        %v2495 = vunpack.c.h.b16 %v2174
        %v2496 = vpack.c.b16 %v2494, %v2492
        %v2497 = vpack.c.b16 %v2495, %v2493
        %v2535 = vunpack.c.l.b16 %v2175
        %v2536 = vunpack.c.h.b16 %v2175
        %v2537 = vunpack.c.l.b16 %v2176
        %v2538 = vunpack.c.l.b16 %v2177
        %v2539 = vunpack.c.h.b16 %v2177
        %v2540 = vunpack.c.l.b16 %v2178
        %v2541 = vunpack.c.l.b16 %v2179
        %v2542 = vunpack.c.h.b16 %v2179
        %v2543 = vunpack.c.l.b16 %v2180
        %v2544 = vunpack.c.l.b16 %v2181
        %v2545 = vunpack.c.h.b16 %v2181
        %v2546 = vunpack.c.l.b16 %v2182
        %v2547 = vunpack.c.l.b16 %v2183
        %v2548 = vunpack.c.h.b16 %v2183
        %v2549 = vunpack.c.l.b16 %v2184
        %v2550 = vunpack.c.l.b16 %v2185
        %v2551 = vunpack.c.h.b16 %v2185
        %v2552 = vunpack.c.l.b16 %v2186
        %v2553 = vunpack.c.l.b16 %v2187
        %v2554 = vunpack.c.h.b16 %v2187
        %v2555 = vunpack.c.l.b16 %v2188
        %v2556 = vunpack.c.l.b16 %v2189
        %v2557 = vunpack.c.h.b16 %v2189
        %v2558 = vunpack.c.l.b16 %v2190
        %v2559 = vunpack.c.l.b16 %v2191
        %v2560 = vunpack.c.h.b16 %v2191
        %v2561 = vunpack.c.l.b16 %v2192
        %v2562 = vunpack.c.l.b16 %v2193
        %v2563 = vunpack.c.h.b16 %v2193
        %v2564 = vunpack.c.l.b16 %v2194
        %v2565 = vunpack.c.l.b16 %v2195
        %v2566 = vunpack.c.h.b16 %v2195
        %v2567 = vunpack.c.l.b16 %v2196
        %v2568 = vunpack.c.l.b16 %v2197
        %v2569 = vunpack.c.h.b16 %v2197
        %v2570 = vunpack.c.l.b16 %v2198
        %v2571 = vunpack.c.l.b16 %v2199
        %v2572 = vunpack.c.h.b16 %v2199
        %v2573 = vunpack.c.l.b16 %v2200
        %v2574 = vunpack.c.l.b16 %v2201
        %v2575 = vunpack.c.h.b16 %v2201
        %v2576 = vunpack.c.l.b16 %v2202
        %v2577 = vunpack.c.l.b16 %v2203
        %v2578 = vunpack.c.h.b16 %v2203
        %v2579 = vunpack.c.l.b16 %v2204
        %v2580 = vunpack.c.l.b16 %v2205
        %v2581 = vunpack.c.h.b16 %v2205
        %v2582 = vunpack.c.l.b16 %v2206
        %v2583 = vunpack.c.l.b16 %v2207
        %v2584 = vunpack.c.h.b16 %v2207
        %v2585 = vunpack.c.l.b16 %v2208
        %v2586 = vunpack.c.l.b16 %v2209
        %v2587 = vunpack.c.h.b16 %v2209
        %v2588 = vunpack.c.l.b16 %v2210
        %v2589 = vpack.c.b16 %v2538, %v2535
        %v2590 = vpack.c.b16 %v2539, %v2536
        %v2591 = vpack.c.b16 %v2540, %v2537
        %v2592 = vpack.c.b16 %v2544, %v2541
        %v2593 = vpack.c.b16 %v2545, %v2542
        %v2594 = vpack.c.b16 %v2546, %v2543
        %v2595 = vpack.c.b16 %v2550, %v2547
        %v2596 = vpack.c.b16 %v2551, %v2548
        %v2597 = vpack.c.b16 %v2552, %v2549
        %v2598 = vpack.c.b16 %v2556, %v2553
        %v2599 = vpack.c.b16 %v2557, %v2554
        %v2600 = vpack.c.b16 %v2558, %v2555
        %v2601 = vpack.c.b16 %v2562, %v2559
        %v2602 = vpack.c.b16 %v2563, %v2560
        %v2603 = vpack.c.b16 %v2564, %v2561
        %v2604 = vpack.c.b16 %v2568, %v2565
        %v2605 = vpack.c.b16 %v2569, %v2566
        %v2606 = vpack.c.b16 %v2570, %v2567
        %v2607 = vpack.c.b16 %v2574, %v2571
        %v2608 = vpack.c.b16 %v2575, %v2572
        %v2609 = vpack.c.b16 %v2576, %v2573
        %v2610 = vpack.c.b16 %v2580, %v2577
        %v2611 = vpack.c.b16 %v2581, %v2578
        %v2612 = vpack.c.b16 %v2582, %v2579
        %v2613 = vpack.c.b16 %v2586, %v2583
        %v2614 = vpack.c.b16 %v2587, %v2584
        %v2615 = vpack.c.b16 %v2588, %v2585
        %v2644 = vsel %vm2402, %v2497, 0
        %2646 = vmatprep.subr.bf16.mxu0 %v2590
        %2647 = vmatpush1.bf16.msra.mxu0 %v2589
        %2648 = vmatprep.subr.bf16.mxu0 %v2593
        %2649 = vmatpush1.bf16.msra.mxu0 %v2592
        %2650 = vmatprep.subr.bf16.mxu0 %v2596
        %2651 = vmatpush1.bf16.msra.mxu0 %v2595
        %2652 = vmatprep.subr.bf16.mxu0 %v2599
        %2653 = vmatpush1.bf16.msra.mxu0 %v2598
        %2654 = vmatprep.subr.bf16.mxu0 %v2602
        %2655 = vmatpush1.bf16.msra.mxu0 %v2601
        %2656 = vmatprep.subr.bf16.mxu0 %v2605
        %2657 = vmatpush1.bf16.msra.mxu0 %v2604
        %2658 = vmatprep.subr.bf16.mxu0 %v2608
        %2659 = vmatpush1.bf16.msra.mxu0 %v2607
        %2660 = vmatprep.subr.bf16.mxu0 %v2611
        %2661 = vmatpush1.bf16.msra.mxu0 %v2610
        %2662 = vmatprep.subr.bf16.mxu0 %v2614
        %2663 = vmatpush1.bf16.msra.mxu0 %v2613
        %2664 = vmatprep.subr.bf16.mxu0 0
        %2665 = vmatpush1.bf16.msra.mxu0 0
        %2666 = vmatprep.subr.bf16.mxu0 0
        %2667 = vmatpush1.bf16.msra.mxu0 0
        %2668 = vmatprep.subr.bf16.mxu0 0
        %2669 = vmatpush1.bf16.msra.mxu0 0
        %2670 = vmatprep.subr.bf16.mxu0 0
        %2671 = vmatpush1.bf16.msra.mxu0 0
        %2672 = vmatprep.subr.bf16.mxu0 0
        %2673 = vmatpush1.bf16.msra.mxu0 0
        %2674 = vmatprep.subr.bf16.mxu0 0
        %2675 = vmatpush1.bf16.msra.mxu0 0
        %2676 = vmatprep.subr.bf16.mxu0 0
        %2677 = vmatpush1.bf16.msra.mxu0 0
        %2678 = vmatprep.mubr.bf16.mxu0 %v2644
        %2679 = vmatmul.mubr.bf16.gmra.mrb[0].mxu0 %v2496
        %v2680 = vpop.f32.mrb[0].mxu0
        %v2681 = vadd.f32 %v2441, %v2680
        %v2682 = vpop.f32.mrb[0].mxu0
        %v2683 = vadd.f32 %v2443, %v2682
        %v2684 = vpop.f32.mrb[0].mxu0
        %v2685 = vadd.f32 %v2445, %v2684
        %v2686 = vpop.f32.mrb[0].mxu0
        %v2687 = vadd.f32 %v2447, %v2686
        %2688 = vdwg.mxu0
        %2689 = vmatprep.subr.bf16.mxu0 0
        %2690 = vmatpush1.bf16.msra.mxu0 %v2591
        %2691 = vmatprep.subr.bf16.mxu0 0
        %2692 = vmatpush1.bf16.msra.mxu0 %v2594
        %2693 = vmatprep.subr.bf16.mxu0 0
        %2694 = vmatpush1.bf16.msra.mxu0 %v2597
        %2695 = vmatprep.subr.bf16.mxu0 0
        %2696 = vmatpush1.bf16.msra.mxu0 %v2600
        %2697 = vmatprep.subr.bf16.mxu0 0
        %2698 = vmatpush1.bf16.msra.mxu0 %v2603
        %2699 = vmatprep.subr.bf16.mxu0 0
        %2700 = vmatpush1.bf16.msra.mxu0 %v2606
        %2701 = vmatprep.subr.bf16.mxu0 0
        %2702 = vmatpush1.bf16.msra.mxu0 %v2609
        %2703 = vmatprep.subr.bf16.mxu0 0
        %2704 = vmatpush1.bf16.msra.mxu0 %v2612
        %2705 = vmatprep.subr.bf16.mxu0 0
        %2706 = vmatpush1.bf16.msra.mxu0 %v2615
        %2707 = vmatprep.subr.bf16.mxu0 0
        %2708 = vmatpush1.bf16.msra.mxu0 0
        %2709 = vmatprep.subr.bf16.mxu0 0
        %2710 = vmatpush1.bf16.msra.mxu0 0
        %2711 = vmatprep.subr.bf16.mxu0 0
        %2712 = vmatpush1.bf16.msra.mxu0 0
        %2713 = vmatprep.subr.bf16.mxu0 0
        %2714 = vmatpush1.bf16.msra.mxu0 0
        %2715 = vmatprep.subr.bf16.mxu0 0
        %2716 = vmatpush1.bf16.msra.mxu0 0
        %2717 = vmatprep.subr.bf16.mxu0 0
        %2718 = vmatpush1.bf16.msra.mxu0 0
        %2719 = vmatprep.subr.bf16.mxu0 0
        %2720 = vmatpush1.bf16.msra.mxu0 0
        %2721 = vmatprep.mubr.bf16.mxu0 %v2644
        %2722 = vmatmul.mubr.bf16.gmra.mrb[0].mxu0 %v2496
        %v2723 = vpop.f32.mrb[0].mxu0
        %v2724 = vadd.f32 %v2484, %v2723
        %v2725 = vpop.f32.mrb[0].mxu0
        %v2726 = vpop.f32.mrb[0].mxu0
        %v2727 = vadd.f32 %v2487, %v2726
        %v2728 = vpop.f32.mrb[0].mxu0
        %2729 = vdwg.mxu0
        %v2730 = vld [vmem:[%s517] sm:$0xff]
        %v2731 = vld [vmem:[%s517 + $0x8] sm:$0xff]
        %v2732 = vld [vmem:[%s517 + $0x10] sm:$0x11]
        %s2733 = scalar_lea.vmem %s6, 216
        %v2734 = vld [vmem:[%s2733] sm:$0xff]
        %v2735 = vld [vmem:[%s2733 + $0x8] sm:$0xf]
        %v2736 = vld [vmem:[%s2733 + $0xc] sm:$0xff]
        %v2737 = vld [vmem:[%s2733 + $0x14] sm:$0xf]
        %v2738 = vld [vmem:[%s2733 + $0x18] sm:$0xff]
        %v2739 = vld [vmem:[%s2733 + $0x20] sm:$0xf]
        %v2740 = vld [vmem:[%s2733 + $0x24] sm:$0xff]
        %v2741 = vld [vmem:[%s2733 + $0x2c] sm:$0xf]
        %v2742 = vld [vmem:[%s2733 + $0x30] sm:$0xff]
        %v2743 = vld [vmem:[%s2733 + $0x38] sm:$0xf]
        %v2744 = vld [vmem:[%s2733 + $0x3c] sm:$0xff]
        %v2745 = vld [vmem:[%s2733 + $0x44] sm:$0xf]
        %v2746 = vld [vmem:[%s2733 + $0x48] sm:$0xff]
        %v2747 = vld [vmem:[%s2733 + $0x50] sm:$0xf]
        %v2748 = vld [vmem:[%s2733 + $0x54] sm:$0xff]
        %v2749 = vld [vmem:[%s2733 + $0x5c] sm:$0xf]
        %v2750 = vld [vmem:[%s2733 + $0x60] sm:$0xff]
        %v2751 = vld [vmem:[%s2733 + $0x68] sm:$0xf]
        %v2752 = vld [vmem:[%s2733 + $0x6c] sm:$0xff]
        %v2753 = vld [vmem:[%s2733 + $0x74] sm:$0xf]
        %v2754 = vld [vmem:[%s2733 + $0x78] sm:$0xff]
        %v2755 = vld [vmem:[%s2733 + $0x80] sm:$0xf]
        %v2756 = vld [vmem:[%s2733 + $0x84] sm:$0xff]
        %v2757 = vld [vmem:[%s2733 + $0x8c] sm:$0xf]
        %v2758 = vld [vmem:[%s2733 + $0x90] sm:$0xff]
        %v2759 = vld [vmem:[%s2733 + $0x98] sm:$0xf]
        %v2760 = vld [vmem:[%s2733 + $0x9c] sm:$0xff]
        %v2761 = vld [vmem:[%s2733 + $0xa4] sm:$0xf]
        %v2762 = vld [vmem:[%s2733 + $0xa8] sm:$0xff]
        %v2763 = vld [vmem:[%s2733 + $0xb0] sm:$0xf]
        %v2764 = vld [vmem:[%s2733 + $0xb4] sm:$0xff]
        %v2765 = vld [vmem:[%s2733 + $0xbc] sm:$0xf]
        %v2766 = vld [vmem:[%s2733 + $0xc0] sm:$0xff]
        %v2767 = vld [vmem:[%s2733 + $0xc8] sm:$0xf]
        %v2768 = vld [vmem:[%s2733 + $0xcc] sm:$0xff]
        %v2769 = vld [vmem:[%s2733 + $0xd4] sm:$0xf]
        %v2773 = vunpack.c.l.b16 %v2730
        %v2774 = vunpack.c.h.b16 %v2730
        %v2775 = vunpack.c.l.b16 %v2731
        %v2776 = vunpack.c.h.b16 %v2731
        %v2777 = vunpack.c.l.b16 %v2732
        %v2778 = vunpack.c.h.b16 %v2732
        %v2779 = vpack.c.b16 %v2775, %v2773
        %v2780 = vpack.c.b16 %v2776, %v2774
        %v2781 = vpack.c.b16 %v2777, %v2777
        %v2782 = vpack.c.b16 %v2778, %v2778
        %v2784 = vshrl.u32 %v2779, 16
        %v2786 = vshll.u32 %v2779, 16
        %v2788 = vrot.slane %v2786, 1
        %v2789 = vor.u32 %v2784, %v2788
        %v2791 = vshll.u32 %v2781, 16
        %v2793 = vrot.slane %v2791, 1
        %v2794 = vsel %vm2139, %v2789, %v2793
        %v2796 = vshrl.u32 %v2780, 16
        %v2798 = vshll.u32 %v2780, 16
        %v2800 = vrot.slane %v2798, 1
        %v2801 = vor.u32 %v2796, %v2800
        %v2803 = vshll.u32 %v2782, 16
        %v2805 = vrot.slane %v2803, 1
        %v2806 = vsel %vm2139, %v2801, %v2805
        %v2844 = vunpack.c.l.b16 %v2734
        %v2845 = vunpack.c.h.b16 %v2734
        %v2846 = vunpack.c.l.b16 %v2735
        %v2847 = vunpack.c.l.b16 %v2736
        %v2848 = vunpack.c.h.b16 %v2736
        %v2849 = vunpack.c.l.b16 %v2737
        %v2850 = vunpack.c.l.b16 %v2738
        %v2851 = vunpack.c.h.b16 %v2738
        %v2852 = vunpack.c.l.b16 %v2739
        %v2853 = vunpack.c.l.b16 %v2740
        %v2854 = vunpack.c.h.b16 %v2740
        %v2855 = vunpack.c.l.b16 %v2741
        %v2856 = vunpack.c.l.b16 %v2742
        %v2857 = vunpack.c.h.b16 %v2742
        %v2858 = vunpack.c.l.b16 %v2743
        %v2859 = vunpack.c.l.b16 %v2744
        %v2860 = vunpack.c.h.b16 %v2744
        %v2861 = vunpack.c.l.b16 %v2745
        %v2862 = vunpack.c.l.b16 %v2746
        %v2863 = vunpack.c.h.b16 %v2746
        %v2864 = vunpack.c.l.b16 %v2747
        %v2865 = vunpack.c.l.b16 %v2748
        %v2866 = vunpack.c.h.b16 %v2748
        %v2867 = vunpack.c.l.b16 %v2749
        %v2868 = vunpack.c.l.b16 %v2750
        %v2869 = vunpack.c.h.b16 %v2750
        %v2870 = vunpack.c.l.b16 %v2751
        %v2871 = vunpack.c.l.b16 %v2752
        %v2872 = vunpack.c.h.b16 %v2752
        %v2873 = vunpack.c.l.b16 %v2753
        %v2874 = vunpack.c.l.b16 %v2754
        %v2875 = vunpack.c.h.b16 %v2754
        %v2876 = vunpack.c.l.b16 %v2755
        %v2877 = vunpack.c.l.b16 %v2756
        %v2878 = vunpack.c.h.b16 %v2756
        %v2879 = vunpack.c.l.b16 %v2757
        %v2880 = vunpack.c.l.b16 %v2758
        %v2881 = vunpack.c.h.b16 %v2758
        %v2882 = vunpack.c.l.b16 %v2759
        %v2883 = vunpack.c.l.b16 %v2760
        %v2884 = vunpack.c.h.b16 %v2760
        %v2885 = vunpack.c.l.b16 %v2761
        %v2886 = vunpack.c.l.b16 %v2762
        %v2887 = vunpack.c.h.b16 %v2762
        %v2888 = vunpack.c.l.b16 %v2763
        %v2889 = vunpack.c.l.b16 %v2764
        %v2890 = vunpack.c.h.b16 %v2764
        %v2891 = vunpack.c.l.b16 %v2765
        %v2892 = vunpack.c.l.b16 %v2766
        %v2893 = vunpack.c.h.b16 %v2766
        %v2894 = vunpack.c.l.b16 %v2767
        %v2895 = vunpack.c.l.b16 %v2768
        %v2896 = vunpack.c.h.b16 %v2768
        %v2897 = vunpack.c.l.b16 %v2769
        %v2898 = vpack.c.b16 %v2847, %v2844
        %v2899 = vpack.c.b16 %v2848, %v2845
        %v2900 = vpack.c.b16 %v2849, %v2846
        %v2901 = vpack.c.b16 %v2853, %v2850
        %v2902 = vpack.c.b16 %v2854, %v2851
        %v2903 = vpack.c.b16 %v2855, %v2852
        %v2904 = vpack.c.b16 %v2859, %v2856
        %v2905 = vpack.c.b16 %v2860, %v2857
        %v2906 = vpack.c.b16 %v2861, %v2858
        %v2907 = vpack.c.b16 %v2865, %v2862
        %v2908 = vpack.c.b16 %v2866, %v2863
        %v2909 = vpack.c.b16 %v2867, %v2864
        %v2910 = vpack.c.b16 %v2871, %v2868
        %v2911 = vpack.c.b16 %v2872, %v2869
        %v2912 = vpack.c.b16 %v2873, %v2870
        %v2913 = vpack.c.b16 %v2877, %v2874
        %v2914 = vpack.c.b16 %v2878, %v2875
        %v2915 = vpack.c.b16 %v2879, %v2876
        %v2916 = vpack.c.b16 %v2883, %v2880
        %v2917 = vpack.c.b16 %v2884, %v2881
        %v2918 = vpack.c.b16 %v2885, %v2882
        %v2919 = vpack.c.b16 %v2889, %v2886
        %v2920 = vpack.c.b16 %v2890, %v2887
        %v2921 = vpack.c.b16 %v2891, %v2888
        %v2922 = vpack.c.b16 %v2895, %v2892
        %v2923 = vpack.c.b16 %v2896, %v2893
        %v2924 = vpack.c.b16 %v2897, %v2894
        %v2953 = vsel %vm2402, %v2806, 0
        %2955 = vmatprep.subr.bf16.mxu0 %v2899
        %2956 = vmatpush1.bf16.msra.mxu0 %v2898
        %2957 = vmatprep.subr.bf16.mxu0 %v2902
        %2958 = vmatpush1.bf16.msra.mxu0 %v2901
        %2959 = vmatprep.subr.bf16.mxu0 %v2905
        %2960 = vmatpush1.bf16.msra.mxu0 %v2904
        %2961 = vmatprep.subr.bf16.mxu0 %v2908
        %2962 = vmatpush1.bf16.msra.mxu0 %v2907
        %2963 = vmatprep.subr.bf16.mxu0 %v2911
        %2964 = vmatpush1.bf16.msra.mxu0 %v2910
        %2965 = vmatprep.subr.bf16.mxu0 %v2914
        %2966 = vmatpush1.bf16.msra.mxu0 %v2913
        %2967 = vmatprep.subr.bf16.mxu0 %v2917
        %2968 = vmatpush1.bf16.msra.mxu0 %v2916
        %2969 = vmatprep.subr.bf16.mxu0 %v2920
        %2970 = vmatpush1.bf16.msra.mxu0 %v2919
        %2971 = vmatprep.subr.bf16.mxu0 %v2923
        %2972 = vmatpush1.bf16.msra.mxu0 %v2922
        %2973 = vmatprep.subr.bf16.mxu0 0
        %2974 = vmatpush1.bf16.msra.mxu0 0
        %2975 = vmatprep.subr.bf16.mxu0 0
        %2976 = vmatpush1.bf16.msra.mxu0 0
        %2977 = vmatprep.subr.bf16.mxu0 0
        %2978 = vmatpush1.bf16.msra.mxu0 0
        %2979 = vmatprep.subr.bf16.mxu0 0
        %2980 = vmatpush1.bf16.msra.mxu0 0
        %2981 = vmatprep.subr.bf16.mxu0 0
        %2982 = vmatpush1.bf16.msra.mxu0 0
        %2983 = vmatprep.subr.bf16.mxu0 0
        %2984 = vmatpush1.bf16.msra.mxu0 0
        %2985 = vmatprep.subr.bf16.mxu0 0
        %2986 = vmatpush1.bf16.msra.mxu0 0
        %2987 = vmatprep.mubr.bf16.mxu0 %v2953
        %2988 = vmatmul.mubr.bf16.gmra.mrb[0].mxu0 %v2794
        %v2989 = vpop.f32.mrb[0].mxu0
        %v2990 = vadd.f32 0.0, %v2989
        %v2991 = vpop.f32.mrb[0].mxu0
        %v2992 = vadd.f32 0.0, %v2991
        %v2993 = vpop.f32.mrb[0].mxu0
        %v2994 = vadd.f32 0.0, %v2993
        %v2995 = vpop.f32.mrb[0].mxu0
        %v2996 = vadd.f32 0.0, %v2995
        %2997 = vdwg.mxu0
        %2998 = vmatprep.subr.bf16.mxu0 0
        %2999 = vmatpush1.bf16.msra.mxu0 %v2900
        %3000 = vmatprep.subr.bf16.mxu0 0
        %3001 = vmatpush1.bf16.msra.mxu0 %v2903
        %3002 = vmatprep.subr.bf16.mxu0 0
        %3003 = vmatpush1.bf16.msra.mxu0 %v2906
        %3004 = vmatprep.subr.bf16.mxu0 0
        %3005 = vmatpush1.bf16.msra.mxu0 %v2909
        %3006 = vmatprep.subr.bf16.mxu0 0
        %3007 = vmatpush1.bf16.msra.mxu0 %v2912
        %3008 = vmatprep.subr.bf16.mxu0 0
        %3009 = vmatpush1.bf16.msra.mxu0 %v2915
        %3010 = vmatprep.subr.bf16.mxu0 0
        %3011 = vmatpush1.bf16.msra.mxu0 %v2918
        %3012 = vmatprep.subr.bf16.mxu0 0
        %3013 = vmatpush1.bf16.msra.mxu0 %v2921
        %3014 = vmatprep.subr.bf16.mxu0 0
        %3015 = vmatpush1.bf16.msra.mxu0 %v2924
        %3016 = vmatprep.subr.bf16.mxu0 0
        %3017 = vmatpush1.bf16.msra.mxu0 0
        %3018 = vmatprep.subr.bf16.mxu0 0
        %3019 = vmatpush1.bf16.msra.mxu0 0
        %3020 = vmatprep.subr.bf16.mxu0 0
        %3021 = vmatpush1.bf16.msra.mxu0 0
        %3022 = vmatprep.subr.bf16.mxu0 0
        %3023 = vmatpush1.bf16.msra.mxu0 0
        %3024 = vmatprep.subr.bf16.mxu0 0
        %3025 = vmatpush1.bf16.msra.mxu0 0
        %3026 = vmatprep.subr.bf16.mxu0 0
        %3027 = vmatpush1.bf16.msra.mxu0 0
        %3028 = vmatprep.subr.bf16.mxu0 0
        %3029 = vmatpush1.bf16.msra.mxu0 0
        %3030 = vmatprep.mubr.bf16.mxu0 %v2953
        %3031 = vmatmul.mubr.bf16.gmra.mrb[0].mxu0 %v2794
        %v3032 = vpop.f32.mrb[0].mxu0
        %v3033 = vadd.f32 0.0, %v3032
        %v3034 = vpop.f32.mrb[0].mxu0
        %v3035 = vpop.f32.mrb[0].mxu0
        %v3036 = vadd.f32 0.0, %v3035
        %v3037 = vpop.f32.mrb[0].mxu0
        %3038 = vdwg.mxu0
        %v3039 = vadd.f32 %v2681, %v2990
        %v3040 = vadd.f32 %v2683, %v2992
        %v3041 = vadd.f32 %v2724, %v3033
        %v3042 = vadd.f32 %v2685, %v2994
        %v3043 = vadd.f32 %v2687, %v2996
        %v3044 = vadd.f32 %v2727, %v3036
        %v3045 = vld [vmem:[#allocation3] sm:$0xff]
        %v3046 = vld [vmem:[#allocation3 + $0x8] sm:$0xff]
        %v3047 = vld [vmem:[#allocation3 + $0x10] sm:$0x11]
        %s3048 = scalar_lea.vmem [#allocation8], 216
        %v3049 = vld [vmem:[%s3048] sm:$0xff]
        %v3050 = vld [vmem:[%s3048 + $0x8] sm:$0xf]
        %v3051 = vld [vmem:[%s3048 + $0xc] sm:$0xff]
        %v3052 = vld [vmem:[%s3048 + $0x14] sm:$0xf]
        %v3053 = vld [vmem:[%s3048 + $0x18] sm:$0xff]
        %v3054 = vld [vmem:[%s3048 + $0x20] sm:$0xf]
        %v3055 = vld [vmem:[%s3048 + $0x24] sm:$0xff]
        %v3056 = vld [vmem:[%s3048 + $0x2c] sm:$0xf]
        %v3057 = vld [vmem:[%s3048 + $0x30] sm:$0xff]
        %v3058 = vld [vmem:[%s3048 + $0x38] sm:$0xf]
        %v3059 = vld [vmem:[%s3048 + $0x3c] sm:$0xff]
        %v3060 = vld [vmem:[%s3048 + $0x44] sm:$0xf]
        %v3061 = vld [vmem:[%s3048 + $0x48] sm:$0xff]
        %v3062 = vld [vmem:[%s3048 + $0x50] sm:$0xf]
        %v3063 = vld [vmem:[%s3048 + $0x54] sm:$0xff]
        %v3064 = vld [vmem:[%s3048 + $0x5c] sm:$0xf]
        %v3065 = vld [vmem:[%s3048 + $0x60] sm:$0xff]
        %v3066 = vld [vmem:[%s3048 + $0x68] sm:$0xf]
        %v3067 = vld [vmem:[%s3048 + $0x6c] sm:$0xff]
        %v3068 = vld [vmem:[%s3048 + $0x74] sm:$0xf]
        %v3069 = vld [vmem:[%s3048 + $0x78] sm:$0xff]
        %v3070 = vld [vmem:[%s3048 + $0x80] sm:$0xf]
        %v3071 = vld [vmem:[%s3048 + $0x84] sm:$0xff]
        %v3072 = vld [vmem:[%s3048 + $0x8c] sm:$0xf]
        %v3073 = vld [vmem:[%s3048 + $0x90] sm:$0xff]
        %v3074 = vld [vmem:[%s3048 + $0x98] sm:$0xf]
        %v3075 = vld [vmem:[%s3048 + $0x9c] sm:$0xff]
        %v3076 = vld [vmem:[%s3048 + $0xa4] sm:$0xf]
        %v3077 = vld [vmem:[%s3048 + $0xa8] sm:$0xff]
        %v3078 = vld [vmem:[%s3048 + $0xb0] sm:$0xf]
        %v3079 = vld [vmem:[%s3048 + $0xb4] sm:$0xff]
        %v3080 = vld [vmem:[%s3048 + $0xbc] sm:$0xf]
        %v3081 = vld [vmem:[%s3048 + $0xc0] sm:$0xff]
        %v3082 = vld [vmem:[%s3048 + $0xc8] sm:$0xf]
        %v3083 = vld [vmem:[%s3048 + $0xcc] sm:$0xff]
        %v3084 = vld [vmem:[%s3048 + $0xd4] sm:$0xf]
        %v3088 = vunpack.c.l.b16 %v3045
        %v3089 = vunpack.c.h.b16 %v3045
        %v3090 = vunpack.c.l.b16 %v3046
        %v3091 = vunpack.c.h.b16 %v3046
        %v3092 = vunpack.c.l.b16 %v3047
        %v3093 = vunpack.c.h.b16 %v3047
        %v3094 = vpack.c.b16 %v3090, %v3088
        %v3095 = vpack.c.b16 %v3091, %v3089
        %v3096 = vpack.c.b16 %v3092, %v3092
        %v3097 = vpack.c.b16 %v3093, %v3093
        %v3099 = vshrl.u32 %v3094, 16
        %v3101 = vshll.u32 %v3094, 16
        %v3103 = vrot.slane %v3101, 1
        %v3104 = vor.u32 %v3099, %v3103
        %v3106 = vshll.u32 %v3096, 16
        %v3108 = vrot.slane %v3106, 1
        %v3109 = vsel %vm2139, %v3104, %v3108
        %v3111 = vshrl.u32 %v3095, 16
        %v3113 = vshll.u32 %v3095, 16
        %v3115 = vrot.slane %v3113, 1
        %v3116 = vor.u32 %v3111, %v3115
        %v3118 = vshll.u32 %v3097, 16
        %v3120 = vrot.slane %v3118, 1
        %v3121 = vsel %vm2139, %v3116, %v3120
        %v3159 = vunpack.c.l.b16 %v3049
        %v3160 = vunpack.c.h.b16 %v3049
        %v3161 = vunpack.c.l.b16 %v3050
        %v3162 = vunpack.c.l.b16 %v3051
        %v3163 = vunpack.c.h.b16 %v3051
        %v3164 = vunpack.c.l.b16 %v3052
        %v3165 = vunpack.c.l.b16 %v3053
        %v3166 = vunpack.c.h.b16 %v3053
        %v3167 = vunpack.c.l.b16 %v3054
        %v3168 = vunpack.c.l.b16 %v3055
        %v3169 = vunpack.c.h.b16 %v3055
        %v3170 = vunpack.c.l.b16 %v3056
        %v3171 = vunpack.c.l.b16 %v3057
        %v3172 = vunpack.c.h.b16 %v3057
        %v3173 = vunpack.c.l.b16 %v3058
        %v3174 = vunpack.c.l.b16 %v3059
        %v3175 = vunpack.c.h.b16 %v3059
        %v3176 = vunpack.c.l.b16 %v3060
        %v3177 = vunpack.c.l.b16 %v3061
        %v3178 = vunpack.c.h.b16 %v3061
        %v3179 = vunpack.c.l.b16 %v3062
        %v3180 = vunpack.c.l.b16 %v3063
        %v3181 = vunpack.c.h.b16 %v3063
        %v3182 = vunpack.c.l.b16 %v3064
        %v3183 = vunpack.c.l.b16 %v3065
        %v3184 = vunpack.c.h.b16 %v3065
        %v3185 = vunpack.c.l.b16 %v3066
        %v3186 = vunpack.c.l.b16 %v3067
        %v3187 = vunpack.c.h.b16 %v3067
        %v3188 = vunpack.c.l.b16 %v3068
        %v3189 = vunpack.c.l.b16 %v3069
        %v3190 = vunpack.c.h.b16 %v3069
        %v3191 = vunpack.c.l.b16 %v3070
        %v3192 = vunpack.c.l.b16 %v3071
        %v3193 = vunpack.c.h.b16 %v3071
        %v3194 = vunpack.c.l.b16 %v3072
        %v3195 = vunpack.c.l.b16 %v3073
        %v3196 = vunpack.c.h.b16 %v3073
        %v3197 = vunpack.c.l.b16 %v3074
        %v3198 = vunpack.c.l.b16 %v3075
        %v3199 = vunpack.c.h.b16 %v3075
        %v3200 = vunpack.c.l.b16 %v3076
        %v3201 = vunpack.c.l.b16 %v3077
        %v3202 = vunpack.c.h.b16 %v3077
        %v3203 = vunpack.c.l.b16 %v3078
        %v3204 = vunpack.c.l.b16 %v3079
        %v3205 = vunpack.c.h.b16 %v3079
        %v3206 = vunpack.c.l.b16 %v3080
        %v3207 = vunpack.c.l.b16 %v3081
        %v3208 = vunpack.c.h.b16 %v3081
        %v3209 = vunpack.c.l.b16 %v3082
        %v3210 = vunpack.c.l.b16 %v3083
        %v3211 = vunpack.c.h.b16 %v3083
        %v3212 = vunpack.c.l.b16 %v3084
        %v3213 = vpack.c.b16 %v3162, %v3159
        %v3214 = vpack.c.b16 %v3163, %v3160
        %v3215 = vpack.c.b16 %v3164, %v3161
        %v3216 = vpack.c.b16 %v3168, %v3165
        %v3217 = vpack.c.b16 %v3169, %v3166
        %v3218 = vpack.c.b16 %v3170, %v3167
        %v3219 = vpack.c.b16 %v3174, %v3171
        %v3220 = vpack.c.b16 %v3175, %v3172
        %v3221 = vpack.c.b16 %v3176, %v3173
        %v3222 = vpack.c.b16 %v3180, %v3177
        %v3223 = vpack.c.b16 %v3181, %v3178
        %v3224 = vpack.c.b16 %v3182, %v3179
        %v3225 = vpack.c.b16 %v3186, %v3183
        %v3226 = vpack.c.b16 %v3187, %v3184
        %v3227 = vpack.c.b16 %v3188, %v3185
        %v3228 = vpack.c.b16 %v3192, %v3189
        %v3229 = vpack.c.b16 %v3193, %v3190
        %v3230 = vpack.c.b16 %v3194, %v3191
        %v3231 = vpack.c.b16 %v3198, %v3195
        %v3232 = vpack.c.b16 %v3199, %v3196
        %v3233 = vpack.c.b16 %v3200, %v3197
        %v3234 = vpack.c.b16 %v3204, %v3201
        %v3235 = vpack.c.b16 %v3205, %v3202
        %v3236 = vpack.c.b16 %v3206, %v3203
        %v3237 = vpack.c.b16 %v3210, %v3207
        %v3238 = vpack.c.b16 %v3211, %v3208
        %v3239 = vpack.c.b16 %v3212, %v3209
        %v3268 = vsel %vm2402, %v3121, 0
        %3270 = vmatprep.subr.bf16.mxu0 %v3214
        %3271 = vmatpush1.bf16.msra.mxu0 %v3213
        %3272 = vmatprep.subr.bf16.mxu0 %v3217
        %3273 = vmatpush1.bf16.msra.mxu0 %v3216
        %3274 = vmatprep.subr.bf16.mxu0 %v3220
        %3275 = vmatpush1.bf16.msra.mxu0 %v3219
        %3276 = vmatprep.subr.bf16.mxu0 %v3223
        %3277 = vmatpush1.bf16.msra.mxu0 %v3222
        %3278 = vmatprep.subr.bf16.mxu0 %v3226
        %3279 = vmatpush1.bf16.msra.mxu0 %v3225
        %3280 = vmatprep.subr.bf16.mxu0 %v3229
        %3281 = vmatpush1.bf16.msra.mxu0 %v3228
        %3282 = vmatprep.subr.bf16.mxu0 %v3232
        %3283 = vmatpush1.bf16.msra.mxu0 %v3231
        %3284 = vmatprep.subr.bf16.mxu0 %v3235
        %3285 = vmatpush1.bf16.msra.mxu0 %v3234
        %3286 = vmatprep.subr.bf16.mxu0 %v3238
        %3287 = vmatpush1.bf16.msra.mxu0 %v3237
        %3288 = vmatprep.subr.bf16.mxu0 0
        %3289 = vmatpush1.bf16.msra.mxu0 0
        %3290 = vmatprep.subr.bf16.mxu0 0
        %3291 = vmatpush1.bf16.msra.mxu0 0
        %3292 = vmatprep.subr.bf16.mxu0 0
        %3293 = vmatpush1.bf16.msra.mxu0 0
        %3294 = vmatprep.subr.bf16.mxu0 0
        %3295 = vmatpush1.bf16.msra.mxu0 0
        %3296 = vmatprep.subr.bf16.mxu0 0
        %3297 = vmatpush1.bf16.msra.mxu0 0
        %3298 = vmatprep.subr.bf16.mxu0 0
        %3299 = vmatpush1.bf16.msra.mxu0 0
        %3300 = vmatprep.subr.bf16.mxu0 0
        %3301 = vmatpush1.bf16.msra.mxu0 0
        %3302 = vmatprep.mubr.bf16.mxu0 %v3268
        %3303 = vmatmul.mubr.bf16.gmra.mrb[0].mxu0 %v3109
        %v3304 = vpop.f32.mrb[0].mxu0
        %v3305 = vadd.f32 0.0, %v3304
        %v3306 = vpop.f32.mrb[0].mxu0
        %v3307 = vadd.f32 0.0, %v3306
        %v3308 = vpop.f32.mrb[0].mxu0
        %v3309 = vadd.f32 0.0, %v3308
        %v3310 = vpop.f32.mrb[0].mxu0
        %v3311 = vadd.f32 0.0, %v3310
        %3312 = vdwg.mxu0
        %3313 = vmatprep.subr.bf16.mxu0 0
        %3314 = vmatpush1.bf16.msra.mxu0 %v3215
        %3315 = vmatprep.subr.bf16.mxu0 0
        %3316 = vmatpush1.bf16.msra.mxu0 %v3218
        %3317 = vmatprep.subr.bf16.mxu0 0
        %3318 = vmatpush1.bf16.msra.mxu0 %v3221
        %3319 = vmatprep.subr.bf16.mxu0 0
        %3320 = vmatpush1.bf16.msra.mxu0 %v3224
        %3321 = vmatprep.subr.bf16.mxu0 0
        %3322 = vmatpush1.bf16.msra.mxu0 %v3227
        %3323 = vmatprep.subr.bf16.mxu0 0
        %3324 = vmatpush1.bf16.msra.mxu0 %v3230
        %3325 = vmatprep.subr.bf16.mxu0 0
        %3326 = vmatpush1.bf16.msra.mxu0 %v3233
        %3327 = vmatprep.subr.bf16.mxu0 0
        %3328 = vmatpush1.bf16.msra.mxu0 %v3236
        %3329 = vmatprep.subr.bf16.mxu0 0
        %3330 = vmatpush1.bf16.msra.mxu0 %v3239
        %3331 = vmatprep.subr.bf16.mxu0 0
        %3332 = vmatpush1.bf16.msra.mxu0 0
        %3333 = vmatprep.subr.bf16.mxu0 0
        %3334 = vmatpush1.bf16.msra.mxu0 0
        %3335 = vmatprep.subr.bf16.mxu0 0
        %3336 = vmatpush1.bf16.msra.mxu0 0
        %3337 = vmatprep.subr.bf16.mxu0 0
        %3338 = vmatpush1.bf16.msra.mxu0 0
        %3339 = vmatprep.subr.bf16.mxu0 0
        %3340 = vmatpush1.bf16.msra.mxu0 0
        %3341 = vmatprep.subr.bf16.mxu0 0
        %3342 = vmatpush1.bf16.msra.mxu0 0
        %3343 = vmatprep.subr.bf16.mxu0 0
        %3344 = vmatpush1.bf16.msra.mxu0 0
        %3345 = vmatprep.mubr.bf16.mxu0 %v3268
        %3346 = vmatmul.mubr.bf16.gmra.mrb[0].mxu0 %v3109
        %v3347 = vpop.f32.mrb[0].mxu0
        %v3348 = vadd.f32 0.0, %v3347
        %v3349 = vpop.f32.mrb[0].mxu0
        %v3350 = vpop.f32.mrb[0].mxu0
        %v3351 = vadd.f32 0.0, %v3350
        %v3352 = vpop.f32.mrb[0].mxu0
        %3353 = vdwg.mxu0
        %v3354 = vadd.f32 %v3039, %v3305
        %v3355 = vadd.f32 %v3040, %v3307
        %v3356 = vadd.f32 %v3041, %v3348
        %v3357 = vadd.f32 %v3042, %v3309
        %v3358 = vadd.f32 %v3043, %v3311
        %v3359 = vadd.f32 %v3044, %v3351
        %v3360 = vld [vmem:[%s517] sm:$0xee]
        %s3361 = scalar_lea.vmem %s6, 432
        %v3362 = vld [vmem:[%s3361] sm:$0xff]
        %v3363 = vld [vmem:[%s3361 + $0x8] sm:$0xf]
        %v3364 = vld [vmem:[%s3361 + $0xc] sm:$0xff]
        %v3365 = vld [vmem:[%s3361 + $0x14] sm:$0xf]
        %v3366 = vld [vmem:[%s3361 + $0x18] sm:$0xff]
        %v3367 = vld [vmem:[%s3361 + $0x20] sm:$0xf]
        %v3368 = vld [vmem:[%s3361 + $0x24] sm:$0xff]
        %v3369 = vld [vmem:[%s3361 + $0x2c] sm:$0xf]
        %v3370 = vld [vmem:[%s3361 + $0x30] sm:$0xff]
        %v3371 = vld [vmem:[%s3361 + $0x38] sm:$0xf]
        %v3372 = vld [vmem:[%s3361 + $0x3c] sm:$0xff]
        %v3373 = vld [vmem:[%s3361 + $0x44] sm:$0xf]
        %v3374 = vld [vmem:[%s3361 + $0x48] sm:$0xff]
        %v3375 = vld [vmem:[%s3361 + $0x50] sm:$0xf]
        %v3376 = vld [vmem:[%s3361 + $0x54] sm:$0xff]
        %v3377 = vld [vmem:[%s3361 + $0x5c] sm:$0xf]
        %v3378 = vld [vmem:[%s3361 + $0x60] sm:$0xff]
        %v3379 = vld [vmem:[%s3361 + $0x68] sm:$0xf]
        %v3380 = vld [vmem:[%s3361 + $0x6c] sm:$0xff]
        %v3381 = vld [vmem:[%s3361 + $0x74] sm:$0xf]
        %v3382 = vld [vmem:[%s3361 + $0x78] sm:$0xff]
        %v3383 = vld [vmem:[%s3361 + $0x80] sm:$0xf]
        %v3384 = vld [vmem:[%s3361 + $0x84] sm:$0xff]
        %v3385 = vld [vmem:[%s3361 + $0x8c] sm:$0xf]
        %v3386 = vld [vmem:[%s3361 + $0x90] sm:$0xff]
        %v3387 = vld [vmem:[%s3361 + $0x98] sm:$0xf]
        %v3388 = vld [vmem:[%s3361 + $0x9c] sm:$0xff]
        %v3389 = vld [vmem:[%s3361 + $0xa4] sm:$0xf]
        %v3390 = vld [vmem:[%s3361 + $0xa8] sm:$0xff]
        %v3391 = vld [vmem:[%s3361 + $0xb0] sm:$0xf]
        %v3392 = vld [vmem:[%s3361 + $0xb4] sm:$0xff]
        %v3393 = vld [vmem:[%s3361 + $0xbc] sm:$0xf]
        %v3394 = vld [vmem:[%s3361 + $0xc0] sm:$0xff]
        %v3395 = vld [vmem:[%s3361 + $0xc8] sm:$0xf]
        %v3396 = vld [vmem:[%s3361 + $0xcc] sm:$0xff]
        %v3397 = vld [vmem:[%s3361 + $0xd4] sm:$0xf]
        %v3399 = vunpack.c.l.b16 %v3360
        %v3400 = vunpack.c.h.b16 %v3360
        %v3401 = vpack.c.b16 %v2775, %v3399
        %v3402 = vpack.c.b16 %v2776, %v3400
        %vm3403 = vcmask 1046528
        %v3404 = vrot.slane %v3401, 1
        %v3405 = vrot.slane %v2781, 1
        %v3406 = vsel %vm3403, %v3404, %v3405
        %v3407 = vrot.slane %v3402, 1
        %v3408 = vrot.slane %v2782, 1
        %v3409 = vsel %vm3403, %v3407, %v3408
        %v3447 = vunpack.c.l.b16 %v3362
        %v3448 = vunpack.c.h.b16 %v3362
        %v3449 = vunpack.c.l.b16 %v3363
        %v3450 = vunpack.c.l.b16 %v3364
        %v3451 = vunpack.c.h.b16 %v3364
        %v3452 = vunpack.c.l.b16 %v3365
        %v3453 = vunpack.c.l.b16 %v3366
        %v3454 = vunpack.c.h.b16 %v3366
        %v3455 = vunpack.c.l.b16 %v3367
        %v3456 = vunpack.c.l.b16 %v3368
        %v3457 = vunpack.c.h.b16 %v3368
        %v3458 = vunpack.c.l.b16 %v3369
        %v3459 = vunpack.c.l.b16 %v3370
        %v3460 = vunpack.c.h.b16 %v3370
        %v3461 = vunpack.c.l.b16 %v3371
        %v3462 = vunpack.c.l.b16 %v3372
        %v3463 = vunpack.c.h.b16 %v3372
        %v3464 = vunpack.c.l.b16 %v3373
        %v3465 = vunpack.c.l.b16 %v3374
        %v3466 = vunpack.c.h.b16 %v3374
        %v3467 = vunpack.c.l.b16 %v3375
        %v3468 = vunpack.c.l.b16 %v3376
        %v3469 = vunpack.c.h.b16 %v3376
        %v3470 = vunpack.c.l.b16 %v3377
        %v3471 = vunpack.c.l.b16 %v3378
        %v3472 = vunpack.c.h.b16 %v3378
        %v3473 = vunpack.c.l.b16 %v3379
        %v3474 = vunpack.c.l.b16 %v3380
        %v3475 = vunpack.c.h.b16 %v3380
        %v3476 = vunpack.c.l.b16 %v3381
        %v3477 = vunpack.c.l.b16 %v3382
        %v3478 = vunpack.c.h.b16 %v3382
        %v3479 = vunpack.c.l.b16 %v3383
        %v3480 = vunpack.c.l.b16 %v3384
        %v3481 = vunpack.c.h.b16 %v3384
        %v3482 = vunpack.c.l.b16 %v3385
        %v3483 = vunpack.c.l.b16 %v3386
        %v3484 = vunpack.c.h.b16 %v3386
        %v3485 = vunpack.c.l.b16 %v3387
        %v3486 = vunpack.c.l.b16 %v3388
        %v3487 = vunpack.c.h.b16 %v3388
        %v3488 = vunpack.c.l.b16 %v3389
        %v3489 = vunpack.c.l.b16 %v3390
        %v3490 = vunpack.c.h.b16 %v3390
        %v3491 = vunpack.c.l.b16 %v3391
        %v3492 = vunpack.c.l.b16 %v3392
        %v3493 = vunpack.c.h.b16 %v3392
        %v3494 = vunpack.c.l.b16 %v3393
        %v3495 = vunpack.c.l.b16 %v3394
        %v3496 = vunpack.c.h.b16 %v3394
        %v3497 = vunpack.c.l.b16 %v3395
        %v3498 = vunpack.c.l.b16 %v3396
        %v3499 = vunpack.c.h.b16 %v3396
        %v3500 = vunpack.c.l.b16 %v3397
        %v3501 = vpack.c.b16 %v3450, %v3447
        %v3502 = vpack.c.b16 %v3451, %v3448
        %v3503 = vpack.c.b16 %v3452, %v3449
        %v3504 = vpack.c.b16 %v3456, %v3453
        %v3505 = vpack.c.b16 %v3457, %v3454
        %v3506 = vpack.c.b16 %v3458, %v3455
        %v3507 = vpack.c.b16 %v3462, %v3459
        %v3508 = vpack.c.b16 %v3463, %v3460
        %v3509 = vpack.c.b16 %v3464, %v3461
        %v3510 = vpack.c.b16 %v3468, %v3465
        %v3511 = vpack.c.b16 %v3469, %v3466
        %v3512 = vpack.c.b16 %v3470, %v3467
        %v3513 = vpack.c.b16 %v3474, %v3471
        %v3514 = vpack.c.b16 %v3475, %v3472
        %v3515 = vpack.c.b16 %v3476, %v3473
        %v3516 = vpack.c.b16 %v3480, %v3477
        %v3517 = vpack.c.b16 %v3481, %v3478
        %v3518 = vpack.c.b16 %v3482, %v3479
        %v3519 = vpack.c.b16 %v3486, %v3483
        %v3520 = vpack.c.b16 %v3487, %v3484
        %v3521 = vpack.c.b16 %v3488, %v3485
        %v3522 = vpack.c.b16 %v3492, %v3489
        %v3523 = vpack.c.b16 %v3493, %v3490
        %v3524 = vpack.c.b16 %v3494, %v3491
        %v3525 = vpack.c.b16 %v3498, %v3495
        %v3526 = vpack.c.b16 %v3499, %v3496
        %v3527 = vpack.c.b16 %v3500, %v3497
        %v3556 = vsel %vm2402, %v3409, 0
        %3558 = vmatprep.subr.bf16.mxu0 %v3502
        %3559 = vmatpush1.bf16.msra.mxu0 %v3501
        %3560 = vmatprep.subr.bf16.mxu0 %v3505
        %3561 = vmatpush1.bf16.msra.mxu0 %v3504
        %3562 = vmatprep.subr.bf16.mxu0 %v3508
        %3563 = vmatpush1.bf16.msra.mxu0 %v3507
        %3564 = vmatprep.subr.bf16.mxu0 %v3511
        %3565 = vmatpush1.bf16.msra.mxu0 %v3510
        %3566 = vmatprep.subr.bf16.mxu0 %v3514
        %3567 = vmatpush1.bf16.msra.mxu0 %v3513
        %3568 = vmatprep.subr.bf16.mxu0 %v3517
        %3569 = vmatpush1.bf16.msra.mxu0 %v3516
        %3570 = vmatprep.subr.bf16.mxu0 %v3520
        %3571 = vmatpush1.bf16.msra.mxu0 %v3519
        %3572 = vmatprep.subr.bf16.mxu0 %v3523
        %3573 = vmatpush1.bf16.msra.mxu0 %v3522
        %3574 = vmatprep.subr.bf16.mxu0 %v3526
        %3575 = vmatpush1.bf16.msra.mxu0 %v3525
        %3576 = vmatprep.subr.bf16.mxu0 0
        %3577 = vmatpush1.bf16.msra.mxu0 0
        %3578 = vmatprep.subr.bf16.mxu0 0
        %3579 = vmatpush1.bf16.msra.mxu0 0
        %3580 = vmatprep.subr.bf16.mxu0 0
        %3581 = vmatpush1.bf16.msra.mxu0 0
        %3582 = vmatprep.subr.bf16.mxu0 0
        %3583 = vmatpush1.bf16.msra.mxu0 0
        %3584 = vmatprep.subr.bf16.mxu0 0
        %3585 = vmatpush1.bf16.msra.mxu0 0
        %3586 = vmatprep.subr.bf16.mxu0 0
        %3587 = vmatpush1.bf16.msra.mxu0 0
        %3588 = vmatprep.subr.bf16.mxu0 0
        %3589 = vmatpush1.bf16.msra.mxu0 0
        %3590 = vmatprep.mubr.bf16.mxu0 %v3556
        %3591 = vmatmul.mubr.bf16.gmra.mrb[0].mxu0 %v3406
        %v3592 = vpop.f32.mrb[0].mxu0
        %v3593 = vadd.f32 0.0, %v3592
        %v3594 = vpop.f32.mrb[0].mxu0
        %v3595 = vadd.f32 0.0, %v3594
        %v3596 = vpop.f32.mrb[0].mxu0
        %v3597 = vadd.f32 0.0, %v3596
        %v3598 = vpop.f32.mrb[0].mxu0
        %v3599 = vadd.f32 0.0, %v3598
        %3600 = vdwg.mxu0
        %3601 = vmatprep.subr.bf16.mxu0 0
        %3602 = vmatpush1.bf16.msra.mxu0 %v3503
        %3603 = vmatprep.subr.bf16.mxu0 0
        %3604 = vmatpush1.bf16.msra.mxu0 %v3506
        %3605 = vmatprep.subr.bf16.mxu0 0
        %3606 = vmatpush1.bf16.msra.mxu0 %v3509
        %3607 = vmatprep.subr.bf16.mxu0 0
        %3608 = vmatpush1.bf16.msra.mxu0 %v3512
        %3609 = vmatprep.subr.bf16.mxu0 0
        %3610 = vmatpush1.bf16.msra.mxu0 %v3515
        %3611 = vmatprep.subr.bf16.mxu0 0
        %3612 = vmatpush1.bf16.msra.mxu0 %v3518
        %3613 = vmatprep.subr.bf16.mxu0 0
        %3614 = vmatpush1.bf16.msra.mxu0 %v3521
        %3615 = vmatprep.subr.bf16.mxu0 0
        %3616 = vmatpush1.bf16.msra.mxu0 %v3524
        %3617 = vmatprep.subr.bf16.mxu0 0
        %3618 = vmatpush1.bf16.msra.mxu0 %v3527
        %3619 = vmatprep.subr.bf16.mxu0 0
        %3620 = vmatpush1.bf16.msra.mxu0 0
        %3621 = vmatprep.subr.bf16.mxu0 0
        %3622 = vmatpush1.bf16.msra.mxu0 0
        %3623 = vmatprep.subr.bf16.mxu0 0
        %3624 = vmatpush1.bf16.msra.mxu0 0
        %3625 = vmatprep.subr.bf16.mxu0 0
        %3626 = vmatpush1.bf16.msra.mxu0 0
        %3627 = vmatprep.subr.bf16.mxu0 0
        %3628 = vmatpush1.bf16.msra.mxu0 0
        %3629 = vmatprep.subr.bf16.mxu0 0
        %3630 = vmatpush1.bf16.msra.mxu0 0
        %3631 = vmatprep.subr.bf16.mxu0 0
        %3632 = vmatpush1.bf16.msra.mxu0 0
        %3633 = vmatprep.mubr.bf16.mxu0 %v3556
        %3634 = vmatmul.mubr.bf16.gmra.mrb[0].mxu0 %v3406
        %v3635 = vpop.f32.mrb[0].mxu0
        %v3636 = vadd.f32 0.0, %v3635
        %v3637 = vpop.f32.mrb[0].mxu0
        %v3638 = vpop.f32.mrb[0].mxu0
        %v3639 = vadd.f32 0.0, %v3638
        %v3640 = vpop.f32.mrb[0].mxu0
        %3641 = vdwg.mxu0
        %v3642 = vadd.f32 %v3354, %v3593
        %v3643 = vadd.f32 %v3355, %v3595
        %v3644 = vadd.f32 %v3356, %v3636
        %v3645 = vadd.f32 %v3357, %v3597
        %v3646 = vadd.f32 %v3358, %v3599
        %v3647 = vadd.f32 %v3359, %v3639
        %v3648 = vld [vmem:[#allocation3] sm:$0xee]
        %s3649 = scalar_lea.vmem [#allocation8], 432
        %v3650 = vld [vmem:[%s3649] sm:$0xff]
        %v3651 = vld [vmem:[%s3649 + $0x8] sm:$0xf]
        %v3652 = vld [vmem:[%s3649 + $0xc] sm:$0xff]
        %v3653 = vld [vmem:[%s3649 + $0x14] sm:$0xf]
        %v3654 = vld [vmem:[%s3649 + $0x18] sm:$0xff]
        %v3655 = vld [vmem:[%s3649 + $0x20] sm:$0xf]
        %v3656 = vld [vmem:[%s3649 + $0x24] sm:$0xff]
        %v3657 = vld [vmem:[%s3649 + $0x2c] sm:$0xf]
        %v3658 = vld [vmem:[%s3649 + $0x30] sm:$0xff]
        %v3659 = vld [vmem:[%s3649 + $0x38] sm:$0xf]
        %v3660 = vld [vmem:[%s3649 + $0x3c] sm:$0xff]
        %v3661 = vld [vmem:[%s3649 + $0x44] sm:$0xf]
        %v3662 = vld [vmem:[%s3649 + $0x48] sm:$0xff]
        %v3663 = vld [vmem:[%s3649 + $0x50] sm:$0xf]
        %v3664 = vld [vmem:[%s3649 + $0x54] sm:$0xff]
        %v3665 = vld [vmem:[%s3649 + $0x5c] sm:$0xf]
        %v3666 = vld [vmem:[%s3649 + $0x60] sm:$0xff]
        %v3667 = vld [vmem:[%s3649 + $0x68] sm:$0xf]
        %v3668 = vld [vmem:[%s3649 + $0x6c] sm:$0xff]
        %v3669 = vld [vmem:[%s3649 + $0x74] sm:$0xf]
        %v3670 = vld [vmem:[%s3649 + $0x78] sm:$0xff]
        %v3671 = vld [vmem:[%s3649 + $0x80] sm:$0xf]
        %v3672 = vld [vmem:[%s3649 + $0x84] sm:$0xff]
        %v3673 = vld [vmem:[%s3649 + $0x8c] sm:$0xf]
        %v3674 = vld [vmem:[%s3649 + $0x90] sm:$0xff]
        %v3675 = vld [vmem:[%s3649 + $0x98] sm:$0xf]
        %v3676 = vld [vmem:[%s3649 + $0x9c] sm:$0xff]
        %v3677 = vld [vmem:[%s3649 + $0xa4] sm:$0xf]
        %v3678 = vld [vmem:[%s3649 + $0xa8] sm:$0xff]
        %v3679 = vld [vmem:[%s3649 + $0xb0] sm:$0xf]
        %v3680 = vld [vmem:[%s3649 + $0xb4] sm:$0xff]
        %v3681 = vld [vmem:[%s3649 + $0xbc] sm:$0xf]
        %v3682 = vld [vmem:[%s3649 + $0xc0] sm:$0xff]
        %v3683 = vld [vmem:[%s3649 + $0xc8] sm:$0xf]
        %v3684 = vld [vmem:[%s3649 + $0xcc] sm:$0xff]
        %v3685 = vld [vmem:[%s3649 + $0xd4] sm:$0xf]
        %v3687 = vunpack.c.l.b16 %v3648
        %v3688 = vunpack.c.h.b16 %v3648
        %v3689 = vpack.c.b16 %v3090, %v3687
        %v3690 = vpack.c.b16 %v3091, %v3688
        %v3691 = vrot.slane %v3689, 1
        %v3692 = vrot.slane %v3096, 1
        %v3693 = vsel %vm3403, %v3691, %v3692
        %v3694 = vrot.slane %v3690, 1
        %v3695 = vrot.slane %v3097, 1
        %v3696 = vsel %vm3403, %v3694, %v3695
        %v3734 = vunpack.c.l.b16 %v3650
        %v3735 = vunpack.c.h.b16 %v3650
        %v3736 = vunpack.c.l.b16 %v3651
        %v3737 = vunpack.c.l.b16 %v3652
        %v3738 = vunpack.c.h.b16 %v3652
        %v3739 = vunpack.c.l.b16 %v3653
        %v3740 = vunpack.c.l.b16 %v3654
        %v3741 = vunpack.c.h.b16 %v3654
        %v3742 = vunpack.c.l.b16 %v3655
        %v3743 = vunpack.c.l.b16 %v3656
        %v3744 = vunpack.c.h.b16 %v3656
        %v3745 = vunpack.c.l.b16 %v3657
        %v3746 = vunpack.c.l.b16 %v3658
        %v3747 = vunpack.c.h.b16 %v3658
        %v3748 = vunpack.c.l.b16 %v3659
        %v3749 = vunpack.c.l.b16 %v3660
        %v3750 = vunpack.c.h.b16 %v3660
        %v3751 = vunpack.c.l.b16 %v3661
        %v3752 = vunpack.c.l.b16 %v3662
        %v3753 = vunpack.c.h.b16 %v3662
        %v3754 = vunpack.c.l.b16 %v3663
        %v3755 = vunpack.c.l.b16 %v3664
        %v3756 = vunpack.c.h.b16 %v3664
        %v3757 = vunpack.c.l.b16 %v3665
        %v3758 = vunpack.c.l.b16 %v3666
        %v3759 = vunpack.c.h.b16 %v3666
        %v3760 = vunpack.c.l.b16 %v3667
        %v3761 = vunpack.c.l.b16 %v3668
        %v3762 = vunpack.c.h.b16 %v3668
        %v3763 = vunpack.c.l.b16 %v3669
        %v3764 = vunpack.c.l.b16 %v3670
        %v3765 = vunpack.c.h.b16 %v3670
        %v3766 = vunpack.c.l.b16 %v3671
        %v3767 = vunpack.c.l.b16 %v3672
        %v3768 = vunpack.c.h.b16 %v3672
        %v3769 = vunpack.c.l.b16 %v3673
        %v3770 = vunpack.c.l.b16 %v3674
        %v3771 = vunpack.c.h.b16 %v3674
        %v3772 = vunpack.c.l.b16 %v3675
        %v3773 = vunpack.c.l.b16 %v3676
        %v3774 = vunpack.c.h.b16 %v3676
        %v3775 = vunpack.c.l.b16 %v3677
        %v3776 = vunpack.c.l.b16 %v3678
        %v3777 = vunpack.c.h.b16 %v3678
        %v3778 = vunpack.c.l.b16 %v3679
        %v3779 = vunpack.c.l.b16 %v3680
        %v3780 = vunpack.c.h.b16 %v3680
        %v3781 = vunpack.c.l.b16 %v3681
        %v3782 = vunpack.c.l.b16 %v3682
        %v3783 = vunpack.c.h.b16 %v3682
        %v3784 = vunpack.c.l.b16 %v3683
        %v3785 = vunpack.c.l.b16 %v3684
        %v3786 = vunpack.c.h.b16 %v3684
        %v3787 = vunpack.c.l.b16 %v3685
        %v3788 = vpack.c.b16 %v3737, %v3734
        %v3789 = vpack.c.b16 %v3738, %v3735
        %v3790 = vpack.c.b16 %v3739, %v3736
        %v3791 = vpack.c.b16 %v3743, %v3740
        %v3792 = vpack.c.b16 %v3744, %v3741
        %v3793 = vpack.c.b16 %v3745, %v3742
        %v3794 = vpack.c.b16 %v3749, %v3746
        %v3795 = vpack.c.b16 %v3750, %v3747
        %v3796 = vpack.c.b16 %v3751, %v3748
        %v3797 = vpack.c.b16 %v3755, %v3752
        %v3798 = vpack.c.b16 %v3756, %v3753
        %v3799 = vpack.c.b16 %v3757, %v3754
        %v3800 = vpack.c.b16 %v3761, %v3758
        %v3801 = vpack.c.b16 %v3762, %v3759
        %v3802 = vpack.c.b16 %v3763, %v3760
        %v3803 = vpack.c.b16 %v3767, %v3764
        %v3804 = vpack.c.b16 %v3768, %v3765
        %v3805 = vpack.c.b16 %v3769, %v3766
        %v3806 = vpack.c.b16 %v3773, %v3770
        %v3807 = vpack.c.b16 %v3774, %v3771
        %v3808 = vpack.c.b16 %v3775, %v3772
        %v3809 = vpack.c.b16 %v3779, %v3776
        %v3810 = vpack.c.b16 %v3780, %v3777
        %v3811 = vpack.c.b16 %v3781, %v3778
        %v3812 = vpack.c.b16 %v3785, %v3782
        %v3813 = vpack.c.b16 %v3786, %v3783
        %v3814 = vpack.c.b16 %v3787, %v3784
        %v3843 = vsel %vm2402, %v3696, 0
        %3845 = vmatprep.subr.bf16.mxu0 %v3789
        %3846 = vmatpush1.bf16.msra.mxu0 %v3788
        %3847 = vmatprep.subr.bf16.mxu0 %v3792
        %3848 = vmatpush1.bf16.msra.mxu0 %v3791
        %3849 = vmatprep.subr.bf16.mxu0 %v3795
        %3850 = vmatpush1.bf16.msra.mxu0 %v3794
        %3851 = vmatprep.subr.bf16.mxu0 %v3798
        %3852 = vmatpush1.bf16.msra.mxu0 %v3797
        %3853 = vmatprep.subr.bf16.mxu0 %v3801
        %3854 = vmatpush1.bf16.msra.mxu0 %v3800
        %3855 = vmatprep.subr.bf16.mxu0 %v3804
        %3856 = vmatpush1.bf16.msra.mxu0 %v3803
        %3857 = vmatprep.subr.bf16.mxu0 %v3807
        %3858 = vmatpush1.bf16.msra.mxu0 %v3806
        %3859 = vmatprep.subr.bf16.mxu0 %v3810
        %3860 = vmatpush1.bf16.msra.mxu0 %v3809
        %3861 = vmatprep.subr.bf16.mxu0 %v3813
        %3862 = vmatpush1.bf16.msra.mxu0 %v3812
        %3863 = vmatprep.subr.bf16.mxu0 0
        %3864 = vmatpush1.bf16.msra.mxu0 0
        %3865 = vmatprep.subr.bf16.mxu0 0
        %3866 = vmatpush1.bf16.msra.mxu0 0
        %3867 = vmatprep.subr.bf16.mxu0 0
        %3868 = vmatpush1.bf16.msra.mxu0 0
        %3869 = vmatprep.subr.bf16.mxu0 0
        %3870 = vmatpush1.bf16.msra.mxu0 0
        %3871 = vmatprep.subr.bf16.mxu0 0
        %3872 = vmatpush1.bf16.msra.mxu0 0
        %3873 = vmatprep.subr.bf16.mxu0 0
        %3874 = vmatpush1.bf16.msra.mxu0 0
        %3875 = vmatprep.subr.bf16.mxu0 0
        %3876 = vmatpush1.bf16.msra.mxu0 0
        %3877 = vmatprep.mubr.bf16.mxu0 %v3843
        %3878 = vmatmul.mubr.bf16.gmra.mrb[0].mxu0 %v3693
        %v3879 = vpop.f32.mrb[0].mxu0
        %v3880 = vadd.f32 0.0, %v3879
        %v3881 = vpop.f32.mrb[0].mxu0
        %v3882 = vadd.f32 0.0, %v3881
        %v3883 = vpop.f32.mrb[0].mxu0
        %v3884 = vadd.f32 0.0, %v3883
        %v3885 = vpop.f32.mrb[0].mxu0
        %v3886 = vadd.f32 0.0, %v3885
        %3887 = vdwg.mxu0
        %3888 = vmatprep.subr.bf16.mxu0 0
        %3889 = vmatpush1.bf16.msra.mxu0 %v3790
        %3890 = vmatprep.subr.bf16.mxu0 0
        %3891 = vmatpush1.bf16.msra.mxu0 %v3793
        %3892 = vmatprep.subr.bf16.mxu0 0
        %3893 = vmatpush1.bf16.msra.mxu0 %v3796
        %3894 = vmatprep.subr.bf16.mxu0 0
        %3895 = vmatpush1.bf16.msra.mxu0 %v3799
        %3896 = vmatprep.subr.bf16.mxu0 0
        %3897 = vmatpush1.bf16.msra.mxu0 %v3802
        %3898 = vmatprep.subr.bf16.mxu0 0
        %3899 = vmatpush1.bf16.msra.mxu0 %v3805
        %3900 = vmatprep.subr.bf16.mxu0 0
        %3901 = vmatpush1.bf16.msra.mxu0 %v3808
        %3902 = vmatprep.subr.bf16.mxu0 0
        %3903 = vmatpush1.bf16.msra.mxu0 %v3811
        %3904 = vmatprep.subr.bf16.mxu0 0
        %3905 = vmatpush1.bf16.msra.mxu0 %v3814
        %3906 = vmatprep.subr.bf16.mxu0 0
        %3907 = vmatpush1.bf16.msra.mxu0 0
        %3908 = vmatprep.subr.bf16.mxu0 0
        %3909 = vmatpush1.bf16.msra.mxu0 0
        %3910 = vmatprep.subr.bf16.mxu0 0
        %3911 = vmatpush1.bf16.msra.mxu0 0
        %3912 = vmatprep.subr.bf16.mxu0 0
        %3913 = vmatpush1.bf16.msra.mxu0 0
        %3914 = vmatprep.subr.bf16.mxu0 0
        %3915 = vmatpush1.bf16.msra.mxu0 0
        %3916 = vmatprep.subr.bf16.mxu0 0
        %3917 = vmatpush1.bf16.msra.mxu0 0
        %3918 = vmatprep.subr.bf16.mxu0 0
        %3919 = vmatpush1.bf16.msra.mxu0 0
        %3920 = vmatprep.mubr.bf16.mxu0 %v3843
        %3921 = vmatmul.mubr.bf16.gmra.mrb[0].mxu0 %v3693
        %v3922 = vpop.f32.mrb[0].mxu0
        %v3923 = vadd.f32 0.0, %v3922
        %v3924 = vpop.f32.mrb[0].mxu0
        %v3925 = vpop.f32.mrb[0].mxu0
        %v3926 = vadd.f32 0.0, %v3925
        %v3927 = vpop.f32.mrb[0].mxu0
        %3928 = vdwg.mxu0
        %v3929 = vadd.f32 %v3642, %v3880
        %v3930 = vadd.f32 %v3643, %v3882
        %v3931 = vadd.f32 %v3644, %v3923
        %v3932 = vadd.f32 %v3645, %v3884
        %v3933 = vadd.f32 %v3646, %v3886
        %v3934 = vadd.f32 %v3647, %v3926
        %v3935 = vld [vmem:[%s8] sm:$0x7]
        %v3937 = vlaneseq
        %v3938 = vshrl.u32 %v3937, 7
        %v3939 = vsub.s32 0, %v3938
        %v3940 = vrot.slane %v3935, %v3939
        %v3941 = vlaneseq
        %v3942 = vshrl.u32 %v3941, 7
        %v3943 = vsub.s32 1, %v3942
        %v3944 = vrot.slane %v3935, %v3943
        %v3945 = vlaneseq
        %v3946 = vshrl.u32 %v3945, 7
        %v3947 = vsub.s32 2, %v3946
        %v3948 = vrot.slane %v3935, %v3947
        %v3952 = vadd.f32 %v3929, %v3940
        %v3953 = vadd.f32 %v3930, %v3944
        %v3954 = vadd.f32 %v3931, %v3948
        %v3955 = vadd.f32 %v3932, %v3940
        %v3956 = vadd.f32 %v3933, %v3944
        %v3957 = vadd.f32 %v3934, %v3948
        %v3958 = vmax.f32 %v3952, 0.0
        %v3959 = vmax.f32 %v3953, 0.0
        %v3960 = vmax.f32 %v3954, 0.0
        %v3961 = vmax.f32 %v3955, 0.0
        %v3962 = vmax.f32 %v3956, 0.0
        %v3963 = vmax.f32 %v3957, 0.0
        %vm3964 = vcmask 1044484
        %vm3965 = vmand %vm3964, %vm523
        %vm3966 = vmor %vm3965, %vm521
        %v3967 = vld [vmem:[#allocation4] sm:$0x11]
        %v3968 = vsel %vm3966, 0, %v3967
        %3969 = vst [vmem:[#allocation4] sm:$0x11] %v3968
        %vm3970 = vcmask 253952
        %vm3971 = vmand %vm3970, %vm520
        %v3972 = vld [vmem:[#allocation4 + $0x8] sm:$0x1]
        %v3973 = vsel %vm3971, 0, %v3972
        %3974 = vst [vmem:[#allocation4 + $0x8] sm:$0x1] %v3973
        %vm3975 = vmand %vm3964, %vm531
        %vm3976 = vmor %vm3975, %vm530
        %v3977 = vld [vmem:[#allocation4 + $0x18] sm:$0x11]
        %v3978 = vsel %vm3976, 0, %v3977
        %3979 = vst [vmem:[#allocation4 + $0x18] sm:$0x11] %v3978
        %vm3980 = vmand %vm3970, %vm529
        %v3981 = vld [vmem:[#allocation4 + $0x20] sm:$0x1]
        %v3982 = vsel %vm3980, 0, %v3981
        %3983 = vst [vmem:[#allocation4 + $0x20] sm:$0x1] %v3982
        %v3984 = vpack.c.bf16 %v3961, %v3958
        %v3985 = vpack.c.bf16 %v3962, %v3959
        %v3986 = vpack.c.bf16 %v3963, %v3960
        %v3990 = vunpack.c.l.b16 %v3984
        %v3991 = vunpack.c.l.b16 %v3985
        %v3992 = vunpack.c.l.b16 %v3986
        %v3993 = vunpack.c.h.b16 %v3984
        %v3994 = vunpack.c.h.b16 %v3985
        %v3995 = vunpack.c.h.b16 %v3986
        %v3996 = vpack.c.b16 %v3991, %v3990
        %v3997 = vpack.c.b16 %v3992, %v3992
        %v3998 = vpack.c.b16 %v3994, %v3993
        %v3999 = vpack.c.b16 %v3995, %v3995
        %vm4000 = vsmask.f32 4368
        %vm4001 = vmor %vm520, %vm4000
        %v4003 = vshrl.u32 %v3996, 16
        %v4005 = vrot.slane %v4003, 7
        %v4006 = vshll.u32 %v3996, 16
        %v4008 = vor.u32 %v4005, %v4006
        %v4010 = vshrl.u32 %v3997, 16
        %v4012 = vrot.slane %v4010, 7
        %v4013 = vshll.u32 %v3997, 16
        %v4015 = vor.u32 %v4012, %v4013
        %v4016 = vrot.slane %v4005, 4
        %v4018 = vshrl.u32 %v3998, 16
        %v4020 = vrot.slane %v4018, 7
        %v4021 = vshll.u32 %v3998, 16
        %v4023 = vor.u32 %v4020, %v4021
        %v4024 = vsel %vm4001, %v4016, %v4023
        %v4025 = vrot.slane %v4012, 4
        %v4027 = vshrl.u32 %v3999, 16
        %v4029 = vrot.slane %v4027, 7
        %v4030 = vshll.u32 %v3999, 16
        %v4032 = vor.u32 %v4029, %v4030
        %v4033 = vsel %vm4001, %v4025, %v4032
        %v4034 = vrot.slane %v4020, 4
        %v4035 = vrot.slane %v4029, 4
        %vm4042 = vcmask 1047556
        %vm4043 = vmand %vm4042, %vm531
        %vm4044 = vmor %vm4043, %vm1105
        %v4045 = vld [vmem:[#allocation4] sm:$0xff]
        %v4046 = vsel %vm4044, %v4008, %v4045
        %4047 = vst [vmem:[#allocation4] sm:$0xff] %v4046
        %vm4048 = vcmask 257024
        %vm4049 = vmand %vm4048, %vm529
        %v4050 = vld [vmem:[#allocation4 + $0x8] sm:$0xf]
        %v4051 = vsel %vm4049, %v4015, %v4050
        %4052 = vst [vmem:[#allocation4 + $0x8] sm:$0xf] %v4051
        %4053 = vst [vmem:[#allocation4 + $0xc] sm:$0xff] %v4024
        %vm4054 = vcmask 257024
        %4055 = vst.msk [vmem:[#allocation4 + $0x14] sm:$0xf] %vm4054, %v4033
        %v4056 = vld [vmem:[#allocation4 + $0x18] sm:$0x11]
        %v4057 = vsel %vm3966, %v4034, %v4056
        %4058 = vst [vmem:[#allocation4 + $0x18] sm:$0x11] %v4057
        %v4059 = vld [vmem:[#allocation4 + $0x20] sm:$0x1]
        %v4060 = vsel %vm3971, %v4035, %v4059
        %4061 = vst [vmem:[#allocation4 + $0x20] sm:$0x1] %v4060
        %v4062 = vld [vmem:[#allocation4] sm:$0xff]
        %v4063 = vld [vmem:[#allocation4 + $0x8] sm:$0xf]
        %v4064 = vld [vmem:[#allocation4 + $0xc] sm:$0xff]
        %v4065 = vld [vmem:[#allocation4 + $0x14] sm:$0xf]
        %v4066 = vld [vmem:[#allocation10] sm:$0xff]
        %v4067 = vld [vmem:[#allocation10 + $0x8] sm:$0xf]
        %v4068 = vld [vmem:[#allocation10 + $0xc] sm:$0xff]
        %v4069 = vld [vmem:[#allocation10 + $0x14] sm:$0xf]
        %v4070 = vld [vmem:[#allocation10 + $0x18] sm:$0xff]
        %v4071 = vld [vmem:[#allocation10 + $0x20] sm:$0xf]
        %v4072 = vld [vmem:[#allocation10 + $0x24] sm:$0xff]
        %v4073 = vld [vmem:[#allocation10 + $0x2c] sm:$0xf]
        %v4074 = vld [vmem:[#allocation10 + $0x30] sm:$0xff]
        %v4075 = vld [vmem:[#allocation10 + $0x38] sm:$0xf]
        %v4076 = vld [vmem:[#allocation10 + $0x3c] sm:$0xff]
        %v4077 = vld [vmem:[#allocation10 + $0x44] sm:$0xf]
        %v4078 = vld [vmem:[#allocation10 + $0x48] sm:$0xff]
        %v4079 = vld [vmem:[#allocation10 + $0x50] sm:$0xf]
        %v4080 = vld [vmem:[#allocation10 + $0x54] sm:$0xff]
        %v4081 = vld [vmem:[#allocation10 + $0x5c] sm:$0xf]
        %v4082 = vld [vmem:[#allocation10 + $0x60] sm:$0xff]
        %v4083 = vld [vmem:[#allocation10 + $0x68] sm:$0xf]
        %v4084 = vld [vmem:[#allocation10 + $0x6c] sm:$0xff]
        %v4085 = vld [vmem:[#allocation10 + $0x74] sm:$0xf]
        %v4086 = vld [vmem:[#allocation10 + $0x78] sm:$0xff]
        %v4087 = vld [vmem:[#allocation10 + $0x80] sm:$0xf]
        %v4088 = vld [vmem:[#allocation10 + $0x84] sm:$0xff]
        %v4089 = vld [vmem:[#allocation10 + $0x8c] sm:$0xf]
        %v4090 = vld [vmem:[#allocation10 + $0x90] sm:$0xff]
        %v4091 = vld [vmem:[#allocation10 + $0x98] sm:$0xf]
        %v4092 = vld [vmem:[#allocation10 + $0x9c] sm:$0xff]
        %v4093 = vld [vmem:[#allocation10 + $0xa4] sm:$0xf]
        %v4094 = vld [vmem:[#allocation10 + $0xa8] sm:$0xff]
        %v4095 = vld [vmem:[#allocation10 + $0xb0] sm:$0xf]
        %v4096 = vld [vmem:[#allocation10 + $0xb4] sm:$0xff]
        %v4097 = vld [vmem:[#allocation10 + $0xbc] sm:$0xf]
        %v4098 = vld [vmem:[#allocation10 + $0xc0] sm:$0xff]
        %v4099 = vld [vmem:[#allocation10 + $0xc8] sm:$0xf]
        %v4100 = vld [vmem:[#allocation10 + $0xcc] sm:$0xff]
        %v4101 = vld [vmem:[#allocation10 + $0xd4] sm:$0xf]
        %v4102 = vld [vmem:[#allocation10 + $0xd8] sm:$0xff]
        %v4103 = vld [vmem:[#allocation10 + $0xe0] sm:$0xf]
        %v4104 = vld [vmem:[#allocation10 + $0xe4] sm:$0xff]
        %v4105 = vld [vmem:[#allocation10 + $0xec] sm:$0xf]
        %v4106 = vld [vmem:[#allocation10 + $0xf0] sm:$0xff]
        %v4107 = vld [vmem:[#allocation10 + $0xf8] sm:$0xf]
        %v4108 = vld [vmem:[#allocation10 + $0xfc] sm:$0xff]
        %v4109 = vld [vmem:[#allocation10 + $0x104] sm:$0xf]
        %v4110 = vld [vmem:[#allocation10 + $0x108] sm:$0xff]
        %v4111 = vld [vmem:[#allocation10 + $0x110] sm:$0xf]
        %v4112 = vld [vmem:[#allocation10 + $0x114] sm:$0xff]
        %v4113 = vld [vmem:[#allocation10 + $0x11c] sm:$0xf]
        %v4114 = vld [vmem:[#allocation10 + $0x120] sm:$0xff]
        %v4115 = vld [vmem:[#allocation10 + $0x128] sm:$0xf]
        %v4116 = vld [vmem:[#allocation10 + $0x12c] sm:$0xff]
        %v4117 = vld [vmem:[#allocation10 + $0x134] sm:$0xf]
        %v4118 = vld [vmem:[#allocation10 + $0x138] sm:$0xff]
        %v4119 = vld [vmem:[#allocation10 + $0x140] sm:$0xf]
        %v4120 = vld [vmem:[#allocation10 + $0x144] sm:$0xff]
        %v4121 = vld [vmem:[#allocation10 + $0x14c] sm:$0xf]
        %v4122 = vld [vmem:[#allocation10 + $0x150] sm:$0xff]
        %v4123 = vld [vmem:[#allocation10 + $0x158] sm:$0xf]
        %v4124 = vld [vmem:[#allocation10 + $0x15c] sm:$0xff]
        %v4125 = vld [vmem:[#allocation10 + $0x164] sm:$0xf]
        %v4126 = vld [vmem:[#allocation10 + $0x168] sm:$0xff]
        %v4127 = vld [vmem:[#allocation10 + $0x170] sm:$0xf]
        %v4128 = vld [vmem:[#allocation10 + $0x174] sm:$0xff]
        %v4129 = vld [vmem:[#allocation10 + $0x17c] sm:$0xf]
        %v4130 = vld [vmem:[#allocation10 + $0x180] sm:$0xff]
        %v4131 = vld [vmem:[#allocation10 + $0x188] sm:$0xf]
        %v4132 = vld [vmem:[#allocation10 + $0x18c] sm:$0xff]
        %v4133 = vld [vmem:[#allocation10 + $0x194] sm:$0xf]
        %v4134 = vld [vmem:[#allocation10 + $0x198] sm:$0xff]
        %v4135 = vld [vmem:[#allocation10 + $0x1a0] sm:$0xf]
        %v4136 = vld [vmem:[#allocation10 + $0x1a4] sm:$0xff]
        %v4137 = vld [vmem:[#allocation10 + $0x1ac] sm:$0xf]
        %v4138 = vld [vmem:[#allocation4 + $0x18] sm:$0x11]
        %v4139 = vld [vmem:[#allocation4 + $0x20] sm:$0x1]
        %s4140 = scalar_lea.vmem [#allocation10], 432
        %v4141 = vld [vmem:[%s4140] sm:$0xff]
        %v4142 = vld [vmem:[%s4140 + $0x8] sm:$0xf]
        %v4143 = vld [vmem:[%s4140 + $0xc] sm:$0xff]
        %v4144 = vld [vmem:[%s4140 + $0x14] sm:$0xf]
        %v4145 = vld [vmem:[%s4140 + $0x18] sm:$0xff]
        %v4146 = vld [vmem:[%s4140 + $0x20] sm:$0xf]
        %v4147 = vld [vmem:[%s4140 + $0x24] sm:$0xff]
        %v4148 = vld [vmem:[%s4140 + $0x2c] sm:$0xf]
        %v4149 = vld [vmem:[%s4140 + $0x30] sm:$0xff]
        %v4150 = vld [vmem:[%s4140 + $0x38] sm:$0xf]
        %v4151 = vld [vmem:[%s4140 + $0x3c] sm:$0xff]
        %v4152 = vld [vmem:[%s4140 + $0x44] sm:$0xf]
        %v4153 = vld [vmem:[%s4140 + $0x48] sm:$0xff]
        %v4154 = vld [vmem:[%s4140 + $0x50] sm:$0xf]
        %v4155 = vld [vmem:[%s4140 + $0x54] sm:$0xff]
        %v4156 = vld [vmem:[%s4140 + $0x5c] sm:$0xf]
        %v4157 = vld [vmem:[%s4140 + $0x60] sm:$0xff]
        %v4158 = vld [vmem:[%s4140 + $0x68] sm:$0xf]
        %v4159 = vld [vmem:[%s4140 + $0x6c] sm:$0xff]
        %v4160 = vld [vmem:[%s4140 + $0x74] sm:$0xf]
        %v4161 = vld [vmem:[%s4140 + $0x78] sm:$0xff]
        %v4162 = vld [vmem:[%s4140 + $0x80] sm:$0xf]
        %v4163 = vld [vmem:[%s4140 + $0x84] sm:$0xff]
        %v4164 = vld [vmem:[%s4140 + $0x8c] sm:$0xf]
        %v4165 = vld [vmem:[%s4140 + $0x90] sm:$0xff]
        %v4166 = vld [vmem:[%s4140 + $0x98] sm:$0xf]
        %v4167 = vld [vmem:[%s4140 + $0x9c] sm:$0xff]
        %v4168 = vld [vmem:[%s4140 + $0xa4] sm:$0xf]
        %v4169 = vld [vmem:[%s4140 + $0xa8] sm:$0xff]
        %v4170 = vld [vmem:[%s4140 + $0xb0] sm:$0xf]
        %v4171 = vld [vmem:[%s4140 + $0xb4] sm:$0xff]
        %v4172 = vld [vmem:[%s4140 + $0xbc] sm:$0xf]
        %v4173 = vld [vmem:[%s4140 + $0xc0] sm:$0xff]
        %v4174 = vld [vmem:[%s4140 + $0xc8] sm:$0xf]
        %v4175 = vld [vmem:[%s4140 + $0xcc] sm:$0xff]
        %v4176 = vld [vmem:[%s4140 + $0xd4] sm:$0xf]
        %v4177 = vld [vmem:[%s4140 + $0xd8] sm:$0xff]
        %v4178 = vld [vmem:[%s4140 + $0xe0] sm:$0xf]
        %v4179 = vld [vmem:[%s4140 + $0xe4] sm:$0xff]
        %v4180 = vld [vmem:[%s4140 + $0xec] sm:$0xf]
        %v4181 = vld [vmem:[%s4140 + $0xf0] sm:$0xff]
        %v4182 = vld [vmem:[%s4140 + $0xf8] sm:$0xf]
        %v4183 = vld [vmem:[%s4140 + $0xfc] sm:$0xff]
        %v4184 = vld [vmem:[%s4140 + $0x104] sm:$0xf]
        %v4185 = vld [vmem:[%s4140 + $0x108] sm:$0xff]
        %v4186 = vld [vmem:[%s4140 + $0x110] sm:$0xf]
        %v4187 = vld [vmem:[%s4140 + $0x114] sm:$0xff]
        %v4188 = vld [vmem:[%s4140 + $0x11c] sm:$0xf]
        %v4189 = vld [vmem:[%s4140 + $0x120] sm:$0xff]
        %v4190 = vld [vmem:[%s4140 + $0x128] sm:$0xf]
        %v4191 = vld [vmem:[%s4140 + $0x12c] sm:$0xff]
        %v4192 = vld [vmem:[%s4140 + $0x134] sm:$0xf]
        %v4193 = vld [vmem:[%s4140 + $0x138] sm:$0xff]
        %v4194 = vld [vmem:[%s4140 + $0x140] sm:$0xf]
        %v4195 = vld [vmem:[%s4140 + $0x144] sm:$0xff]
        %v4196 = vld [vmem:[%s4140 + $0x14c] sm:$0xf]
        %v4197 = vld [vmem:[%s4140 + $0x150] sm:$0xff]
        %v4198 = vld [vmem:[%s4140 + $0x158] sm:$0xf]
        %v4199 = vld [vmem:[%s4140 + $0x15c] sm:$0xff]
        %v4200 = vld [vmem:[%s4140 + $0x164] sm:$0xf]
        %v4201 = vld [vmem:[%s4140 + $0x168] sm:$0xff]
        %v4202 = vld [vmem:[%s4140 + $0x170] sm:$0xf]
        %v4203 = vld [vmem:[%s4140 + $0x174] sm:$0xff]
        %v4204 = vld [vmem:[%s4140 + $0x17c] sm:$0xf]
        %v4205 = vld [vmem:[%s4140 + $0x180] sm:$0xff]
        %v4206 = vld [vmem:[%s4140 + $0x188] sm:$0xf]
        %v4207 = vld [vmem:[%s4140 + $0x18c] sm:$0xff]
        %v4208 = vld [vmem:[%s4140 + $0x194] sm:$0xf]
        %v4209 = vld [vmem:[%s4140 + $0x198] sm:$0xff]
        %v4210 = vld [vmem:[%s4140 + $0x1a0] sm:$0xf]
        %v4211 = vld [vmem:[%s4140 + $0x1a4] sm:$0xff]
        %v4212 = vld [vmem:[%s4140 + $0x1ac] sm:$0xf]
        %v4219 = vunpack.c.l.b16 %v4062
        %v4220 = vunpack.c.h.b16 %v4062
        %v4221 = vunpack.c.l.b16 %v4063
        %v4222 = vunpack.c.l.b16 %v4064
        %v4223 = vunpack.c.h.b16 %v4064
        %v4224 = vunpack.c.l.b16 %v4065
        %v4225 = vunpack.c.l.b16 %v4138
        %v4226 = vunpack.c.h.b16 %v4138
        %v4227 = vunpack.c.l.b16 %v4139
        %v4228 = vpack.c.b16 %v4222, %v4219
        %v4229 = vpack.c.b16 %v4223, %v4220
        %v4230 = vpack.c.b16 %v4224, %v4221
        %v4231 = vpack.c.b16 %v4225, %v4225
        %v4232 = vpack.c.b16 %v4226, %v4226
        %v4233 = vpack.c.b16 %v4227, %v4227
        %v4235 = vshrl.u32 %v4228, 16
        %v4237 = vshll.u32 %v4228, 16
        %v4239 = vrot.slane %v4237, 1
        %v4240 = vor.u32 %v4235, %v4239
        %v4242 = vshll.u32 %v4231, 16
        %v4244 = vrot.slane %v4242, 1
        %v4245 = vsel %vm2139, %v4240, %v4244
        %v4247 = vshrl.u32 %v4229, 16
        %v4249 = vshll.u32 %v4229, 16
        %v4251 = vrot.slane %v4249, 1
        %v4252 = vor.u32 %v4247, %v4251
        %v4254 = vshll.u32 %v4232, 16
        %v4256 = vrot.slane %v4254, 1
        %v4257 = vsel %vm2139, %v4252, %v4256
        %v4259 = vshrl.u32 %v4230, 16
        %v4261 = vshll.u32 %v4230, 16
        %v4263 = vrot.slane %v4261, 1
        %v4264 = vor.u32 %v4259, %v4263
        %v4266 = vshll.u32 %v4233, 16
        %v4268 = vrot.slane %v4266, 1
        %v4269 = vsel %vm2139, %v4264, %v4268
        %v4344 = vunpack.c.l.b16 %v4141
        %v4345 = vunpack.c.h.b16 %v4141
        %v4346 = vunpack.c.l.b16 %v4142
        %v4347 = vunpack.c.l.b16 %v4143
        %v4348 = vunpack.c.h.b16 %v4143
        %v4349 = vunpack.c.l.b16 %v4144
        %v4350 = vunpack.c.l.b16 %v4145
        %v4351 = vunpack.c.h.b16 %v4145
        %v4352 = vunpack.c.l.b16 %v4146
        %v4353 = vunpack.c.l.b16 %v4147
        %v4354 = vunpack.c.h.b16 %v4147
        %v4355 = vunpack.c.l.b16 %v4148
        %v4356 = vunpack.c.l.b16 %v4149
        %v4357 = vunpack.c.h.b16 %v4149
        %v4358 = vunpack.c.l.b16 %v4150
        %v4359 = vunpack.c.l.b16 %v4151
        %v4360 = vunpack.c.h.b16 %v4151
        %v4361 = vunpack.c.l.b16 %v4152
        %v4362 = vunpack.c.l.b16 %v4153
        %v4363 = vunpack.c.h.b16 %v4153
        %v4364 = vunpack.c.l.b16 %v4154
        %v4365 = vunpack.c.l.b16 %v4155
        %v4366 = vunpack.c.h.b16 %v4155
        %v4367 = vunpack.c.l.b16 %v4156
        %v4368 = vunpack.c.l.b16 %v4157
        %v4369 = vunpack.c.h.b16 %v4157
        %v4370 = vunpack.c.l.b16 %v4158
        %v4371 = vunpack.c.l.b16 %v4159
        %v4372 = vunpack.c.h.b16 %v4159
        %v4373 = vunpack.c.l.b16 %v4160
        %v4374 = vunpack.c.l.b16 %v4161
        %v4375 = vunpack.c.h.b16 %v4161
        %v4376 = vunpack.c.l.b16 %v4162
        %v4377 = vunpack.c.l.b16 %v4163
        %v4378 = vunpack.c.h.b16 %v4163
        %v4379 = vunpack.c.l.b16 %v4164
        %v4380 = vunpack.c.l.b16 %v4165
        %v4381 = vunpack.c.h.b16 %v4165
        %v4382 = vunpack.c.l.b16 %v4166
        %v4383 = vunpack.c.l.b16 %v4167
        %v4384 = vunpack.c.h.b16 %v4167
        %v4385 = vunpack.c.l.b16 %v4168
        %v4386 = vunpack.c.l.b16 %v4169
        %v4387 = vunpack.c.h.b16 %v4169
        %v4388 = vunpack.c.l.b16 %v4170
        %v4389 = vunpack.c.l.b16 %v4171
        %v4390 = vunpack.c.h.b16 %v4171
        %v4391 = vunpack.c.l.b16 %v4172
        %v4392 = vunpack.c.l.b16 %v4173
        %v4393 = vunpack.c.h.b16 %v4173
        %v4394 = vunpack.c.l.b16 %v4174
        %v4395 = vunpack.c.l.b16 %v4175
        %v4396 = vunpack.c.h.b16 %v4175
        %v4397 = vunpack.c.l.b16 %v4176
        %v4398 = vunpack.c.l.b16 %v4177
        %v4399 = vunpack.c.h.b16 %v4177
        %v4400 = vunpack.c.l.b16 %v4178
        %v4401 = vunpack.c.l.b16 %v4179
        %v4402 = vunpack.c.h.b16 %v4179
        %v4403 = vunpack.c.l.b16 %v4180
        %v4404 = vunpack.c.l.b16 %v4181
        %v4405 = vunpack.c.h.b16 %v4181
        %v4406 = vunpack.c.l.b16 %v4182
        %v4407 = vunpack.c.l.b16 %v4183
        %v4408 = vunpack.c.h.b16 %v4183
        %v4409 = vunpack.c.l.b16 %v4184
        %v4410 = vunpack.c.l.b16 %v4185
        %v4411 = vunpack.c.h.b16 %v4185
        %v4412 = vunpack.c.l.b16 %v4186
        %v4413 = vunpack.c.l.b16 %v4187
        %v4414 = vunpack.c.h.b16 %v4187
        %v4415 = vunpack.c.l.b16 %v4188
        %v4416 = vunpack.c.l.b16 %v4189
        %v4417 = vunpack.c.h.b16 %v4189
        %v4418 = vunpack.c.l.b16 %v4190
        %v4419 = vunpack.c.l.b16 %v4191
        %v4420 = vunpack.c.h.b16 %v4191
        %v4421 = vunpack.c.l.b16 %v4192
        %v4422 = vunpack.c.l.b16 %v4193
        %v4423 = vunpack.c.h.b16 %v4193
        %v4424 = vunpack.c.l.b16 %v4194
        %v4425 = vunpack.c.l.b16 %v4195
        %v4426 = vunpack.c.h.b16 %v4195
        %v4427 = vunpack.c.l.b16 %v4196
        %v4428 = vunpack.c.l.b16 %v4197
        %v4429 = vunpack.c.h.b16 %v4197
        %v4430 = vunpack.c.l.b16 %v4198
        %v4431 = vunpack.c.l.b16 %v4199
        %v4432 = vunpack.c.h.b16 %v4199
        %v4433 = vunpack.c.l.b16 %v4200
        %v4434 = vunpack.c.l.b16 %v4201
        %v4435 = vunpack.c.h.b16 %v4201
        %v4436 = vunpack.c.l.b16 %v4202
        %v4437 = vunpack.c.l.b16 %v4203
        %v4438 = vunpack.c.h.b16 %v4203
        %v4439 = vunpack.c.l.b16 %v4204
        %v4440 = vunpack.c.l.b16 %v4205
        %v4441 = vunpack.c.h.b16 %v4205
        %v4442 = vunpack.c.l.b16 %v4206
        %v4443 = vunpack.c.l.b16 %v4207
        %v4444 = vunpack.c.h.b16 %v4207
        %v4445 = vunpack.c.l.b16 %v4208
        %v4446 = vunpack.c.l.b16 %v4209
        %v4447 = vunpack.c.h.b16 %v4209
        %v4448 = vunpack.c.l.b16 %v4210
        %v4449 = vunpack.c.l.b16 %v4211
        %v4450 = vunpack.c.h.b16 %v4211
        %v4451 = vunpack.c.l.b16 %v4212
        %v4452 = vpack.c.b16 %v4347, %v4344
        %v4453 = vpack.c.b16 %v4348, %v4345
        %v4454 = vpack.c.b16 %v4349, %v4346
        %v4455 = vpack.c.b16 %v4353, %v4350
        %v4456 = vpack.c.b16 %v4354, %v4351
        %v4457 = vpack.c.b16 %v4355, %v4352
        %v4458 = vpack.c.b16 %v4359, %v4356
        %v4459 = vpack.c.b16 %v4360, %v4357
        %v4460 = vpack.c.b16 %v4361, %v4358
        %v4461 = vpack.c.b16 %v4365, %v4362
        %v4462 = vpack.c.b16 %v4366, %v4363
        %v4463 = vpack.c.b16 %v4367, %v4364
        %v4464 = vpack.c.b16 %v4371, %v4368
        %v4465 = vpack.c.b16 %v4372, %v4369
        %v4466 = vpack.c.b16 %v4373, %v4370
        %v4467 = vpack.c.b16 %v4377, %v4374
        %v4468 = vpack.c.b16 %v4378, %v4375
        %v4469 = vpack.c.b16 %v4379, %v4376
        %v4470 = vpack.c.b16 %v4383, %v4380
        %v4471 = vpack.c.b16 %v4384, %v4381
        %v4472 = vpack.c.b16 %v4385, %v4382
        %v4473 = vpack.c.b16 %v4389, %v4386
        %v4474 = vpack.c.b16 %v4390, %v4387
        %v4475 = vpack.c.b16 %v4391, %v4388
        %v4476 = vpack.c.b16 %v4395, %v4392
        %v4477 = vpack.c.b16 %v4396, %v4393
        %v4478 = vpack.c.b16 %v4397, %v4394
        %v4479 = vpack.c.b16 %v4401, %v4398
        %v4480 = vpack.c.b16 %v4402, %v4399
        %v4481 = vpack.c.b16 %v4403, %v4400
        %v4482 = vpack.c.b16 %v4407, %v4404
        %v4483 = vpack.c.b16 %v4408, %v4405
        %v4484 = vpack.c.b16 %v4409, %v4406
        %v4485 = vpack.c.b16 %v4413, %v4410
        %v4486 = vpack.c.b16 %v4414, %v4411
        %v4487 = vpack.c.b16 %v4415, %v4412
        %v4488 = vpack.c.b16 %v4419, %v4416
        %v4489 = vpack.c.b16 %v4420, %v4417
        %v4490 = vpack.c.b16 %v4421, %v4418
        %v4491 = vpack.c.b16 %v4425, %v4422
        %v4492 = vpack.c.b16 %v4426, %v4423
        %v4493 = vpack.c.b16 %v4427, %v4424
        %v4494 = vpack.c.b16 %v4431, %v4428
        %v4495 = vpack.c.b16 %v4432, %v4429
        %v4496 = vpack.c.b16 %v4433, %v4430
        %v4497 = vpack.c.b16 %v4437, %v4434
        %v4498 = vpack.c.b16 %v4438, %v4435
        %v4499 = vpack.c.b16 %v4439, %v4436
        %v4500 = vpack.c.b16 %v4443, %v4440
        %v4501 = vpack.c.b16 %v4444, %v4441
        %v4502 = vpack.c.b16 %v4445, %v4442
        %v4503 = vpack.c.b16 %v4449, %v4446
        %v4504 = vpack.c.b16 %v4450, %v4447
        %v4505 = vpack.c.b16 %v4451, %v4448
        %v4561 = vsel %vm704, %v4269, 0
        %4563 = vmatprep.subr.bf16.mxu0 %v4453
        %4564 = vmatpush1.bf16.msra.mxu0 %v4452
        %4565 = vmatprep.subr.bf16.mxu0 %v4456
        %4566 = vmatpush1.bf16.msra.mxu0 %v4455
        %4567 = vmatprep.subr.bf16.mxu0 %v4459
        %4568 = vmatpush1.bf16.msra.mxu0 %v4458
        %4569 = vmatprep.subr.bf16.mxu0 %v4462
        %4570 = vmatpush1.bf16.msra.mxu0 %v4461
        %4571 = vmatprep.subr.bf16.mxu0 %v4465
        %4572 = vmatpush1.bf16.msra.mxu0 %v4464
        %4573 = vmatprep.subr.bf16.mxu0 %v4468
        %4574 = vmatpush1.bf16.msra.mxu0 %v4467
        %4575 = vmatprep.subr.bf16.mxu0 %v4471
        %4576 = vmatpush1.bf16.msra.mxu0 %v4470
        %4577 = vmatprep.subr.bf16.mxu0 %v4474
        %4578 = vmatpush1.bf16.msra.mxu0 %v4473
        %4579 = vmatprep.subr.bf16.mxu0 %v4477
        %4580 = vmatpush1.bf16.msra.mxu0 %v4476
        %4581 = vmatprep.subr.bf16.mxu0 %v4480
        %4582 = vmatpush1.bf16.msra.mxu0 %v4479
        %4583 = vmatprep.subr.bf16.mxu0 %v4483
        %4584 = vmatpush1.bf16.msra.mxu0 %v4482
        %4585 = vmatprep.subr.bf16.mxu0 %v4486
        %4586 = vmatpush1.bf16.msra.mxu0 %v4485
        %4587 = vmatprep.subr.bf16.mxu0 %v4489
        %4588 = vmatpush1.bf16.msra.mxu0 %v4488
        %4589 = vmatprep.subr.bf16.mxu0 %v4492
        %4590 = vmatpush1.bf16.msra.mxu0 %v4491
        %4591 = vmatprep.subr.bf16.mxu0 %v4495
        %4592 = vmatpush1.bf16.msra.mxu0 %v4494
        %4593 = vmatprep.subr.bf16.mxu0 %v4498
        %4594 = vmatpush1.bf16.msra.mxu0 %v4497
        %4595 = vmatprep.mubr.bf16.mxu0 %v4257
        %4596 = vmatmul.mubr.bf16.gmra.mrb[0].mxu0 %v4245
        %v4597 = vpop.f32.mrb[0].mxu0
        %v4598 = vadd.f32 0.0, %v4597
        %v4599 = vpop.f32.mrb[0].mxu0
        %v4600 = vadd.f32 0.0, %v4599
        %v4601 = vpop.f32.mrb[0].mxu0
        %v4602 = vadd.f32 0.0, %v4601
        %v4603 = vpop.f32.mrb[0].mxu0
        %v4604 = vadd.f32 0.0, %v4603
        %4605 = vdwg.mxu0
        %4606 = vmatprep.subr.bf16.mxu0 %v4501
        %4607 = vmatpush1.bf16.msra.mxu0 %v4500
        %4608 = vmatprep.subr.bf16.mxu0 %v4504
        %4609 = vmatpush1.bf16.msra.mxu0 %v4503
        %4610 = vmatprep.subr.bf16.mxu0 0
        %4611 = vmatpush1.bf16.msra.mxu0 0
        %4612 = vmatprep.subr.bf16.mxu0 0
        %4613 = vmatpush1.bf16.msra.mxu0 0
        %4614 = vmatprep.subr.bf16.mxu0 0
        %4615 = vmatpush1.bf16.msra.mxu0 0
        %4616 = vmatprep.subr.bf16.mxu0 0
        %4617 = vmatpush1.bf16.msra.mxu0 0
        %4618 = vmatprep.subr.bf16.mxu0 0
        %4619 = vmatpush1.bf16.msra.mxu0 0
        %4620 = vmatprep.subr.bf16.mxu0 0
        %4621 = vmatpush1.bf16.msra.mxu0 0
        %4622 = vmatprep.subr.bf16.mxu0 0
        %4623 = vmatpush1.bf16.msra.mxu0 0
        %4624 = vmatprep.subr.bf16.mxu0 0
        %4625 = vmatpush1.bf16.msra.mxu0 0
        %4626 = vmatprep.subr.bf16.mxu0 0
        %4627 = vmatpush1.bf16.msra.mxu0 0
        %4628 = vmatprep.subr.bf16.mxu0 0
        %4629 = vmatpush1.bf16.msra.mxu0 0
        %4630 = vmatprep.subr.bf16.mxu0 0
        %4631 = vmatpush1.bf16.msra.mxu0 0
        %4632 = vmatprep.subr.bf16.mxu0 0
        %4633 = vmatpush1.bf16.msra.mxu0 0
        %4634 = vmatprep.subr.bf16.mxu0 0
        %4635 = vmatpush1.bf16.msra.mxu0 0
        %4636 = vmatprep.subr.bf16.mxu0 0
        %4637 = vmatpush1.bf16.msra.mxu0 0
        %4638 = vmatprep.mubr.bf16.mxu0 0
        %4639 = vmatmul.mubr.bf16.gmra.mrb[0].mxu0 %v4561
        %v4640 = vpop.f32.mrb[0].mxu0
        %v4641 = vadd.f32 %v4598, %v4640
        %v4642 = vpop.f32.mrb[0].mxu0
        %v4643 = vadd.f32 %v4600, %v4642
        %v4644 = vpop.f32.mrb[0].mxu0
        %v4645 = vadd.f32 %v4602, %v4644
        %v4646 = vpop.f32.mrb[0].mxu0
        %v4647 = vadd.f32 %v4604, %v4646
        %4648 = vdwg.mxu0
        %4649 = vmatprep.subr.bf16.mxu0 0
        %4650 = vmatpush1.bf16.msra.mxu0 %v4454
        %4651 = vmatprep.subr.bf16.mxu0 0
        %4652 = vmatpush1.bf16.msra.mxu0 %v4457
        %4653 = vmatprep.subr.bf16.mxu0 0
        %4654 = vmatpush1.bf16.msra.mxu0 %v4460
        %4655 = vmatprep.subr.bf16.mxu0 0
        %4656 = vmatpush1.bf16.msra.mxu0 %v4463
        %4657 = vmatprep.subr.bf16.mxu0 0
        %4658 = vmatpush1.bf16.msra.mxu0 %v4466
        %4659 = vmatprep.subr.bf16.mxu0 0
        %4660 = vmatpush1.bf16.msra.mxu0 %v4469
        %4661 = vmatprep.subr.bf16.mxu0 0
        %4662 = vmatpush1.bf16.msra.mxu0 %v4472
        %4663 = vmatprep.subr.bf16.mxu0 0
        %4664 = vmatpush1.bf16.msra.mxu0 %v4475
        %4665 = vmatprep.subr.bf16.mxu0 0
        %4666 = vmatpush1.bf16.msra.mxu0 %v4478
        %4667 = vmatprep.subr.bf16.mxu0 0
        %4668 = vmatpush1.bf16.msra.mxu0 %v4481
        %4669 = vmatprep.subr.bf16.mxu0 0
        %4670 = vmatpush1.bf16.msra.mxu0 %v4484
        %4671 = vmatprep.subr.bf16.mxu0 0
        %4672 = vmatpush1.bf16.msra.mxu0 %v4487
        %4673 = vmatprep.subr.bf16.mxu0 0
        %4674 = vmatpush1.bf16.msra.mxu0 %v4490
        %4675 = vmatprep.subr.bf16.mxu0 0
        %4676 = vmatpush1.bf16.msra.mxu0 %v4493
        %4677 = vmatprep.subr.bf16.mxu0 0
        %4678 = vmatpush1.bf16.msra.mxu0 %v4496
        %4679 = vmatprep.subr.bf16.mxu0 0
        %4680 = vmatpush1.bf16.msra.mxu0 %v4499
        %4681 = vmatprep.mubr.bf16.mxu0 %v4257
        %4682 = vmatmul.mubr.bf16.gmra.mrb[0].mxu0 %v4245
        %v4683 = vpop.f32.mrb[0].mxu0
        %v4684 = vadd.f32 0.0, %v4683
        %v4685 = vpop.f32.mrb[0].mxu0
        %v4686 = vpop.f32.mrb[0].mxu0
        %v4687 = vadd.f32 0.0, %v4686
        %v4688 = vpop.f32.mrb[0].mxu0
        %4689 = vdwg.mxu0
        %4690 = vmatprep.subr.bf16.mxu0 0
        %4691 = vmatpush1.bf16.msra.mxu0 %v4502
        %4692 = vmatprep.subr.bf16.mxu0 0
        %4693 = vmatpush1.bf16.msra.mxu0 %v4505
        %4694 = vmatprep.subr.bf16.mxu0 0
        %4695 = vmatpush1.bf16.msra.mxu0 0
        %4696 = vmatprep.subr.bf16.mxu0 0
        %4697 = vmatpush1.bf16.msra.mxu0 0
        %4698 = vmatprep.subr.bf16.mxu0 0
        %4699 = vmatpush1.bf16.msra.mxu0 0
        %4700 = vmatprep.subr.bf16.mxu0 0
        %4701 = vmatpush1.bf16.msra.mxu0 0
        %4702 = vmatprep.subr.bf16.mxu0 0
        %4703 = vmatpush1.bf16.msra.mxu0 0
        %4704 = vmatprep.subr.bf16.mxu0 0
        %4705 = vmatpush1.bf16.msra.mxu0 0
        %4706 = vmatprep.subr.bf16.mxu0 0
        %4707 = vmatpush1.bf16.msra.mxu0 0
        %4708 = vmatprep.subr.bf16.mxu0 0
        %4709 = vmatpush1.bf16.msra.mxu0 0
        %4710 = vmatprep.subr.bf16.mxu0 0
        %4711 = vmatpush1.bf16.msra.mxu0 0
        %4712 = vmatprep.subr.bf16.mxu0 0
        %4713 = vmatpush1.bf16.msra.mxu0 0
        %4714 = vmatprep.subr.bf16.mxu0 0
        %4715 = vmatpush1.bf16.msra.mxu0 0
        %4716 = vmatprep.subr.bf16.mxu0 0
        %4717 = vmatpush1.bf16.msra.mxu0 0
        %4718 = vmatprep.subr.bf16.mxu0 0
        %4719 = vmatpush1.bf16.msra.mxu0 0
        %4720 = vmatprep.subr.bf16.mxu0 0
        %4721 = vmatpush1.bf16.msra.mxu0 0
        %4722 = vmatprep.mubr.bf16.mxu0 0
        %4723 = vmatmul.mubr.bf16.gmra.mrb[0].mxu0 %v4561
        %v4724 = vpop.f32.mrb[0].mxu0
        %v4725 = vadd.f32 %v4684, %v4724
        %v4726 = vpop.f32.mrb[0].mxu0
        %v4727 = vpop.f32.mrb[0].mxu0
        %v4728 = vadd.f32 %v4687, %v4727
        %v4729 = vpop.f32.mrb[0].mxu0
        %4730 = vdwg.mxu0
        %v4805 = vunpack.c.l.b16 %v4066
        %v4806 = vunpack.c.h.b16 %v4066
        %v4807 = vunpack.c.l.b16 %v4067
        %v4808 = vunpack.c.l.b16 %v4068
        %v4809 = vunpack.c.h.b16 %v4068
        %v4810 = vunpack.c.l.b16 %v4069
        %v4811 = vunpack.c.l.b16 %v4070
        %v4812 = vunpack.c.h.b16 %v4070
        %v4813 = vunpack.c.l.b16 %v4071
        %v4814 = vunpack.c.l.b16 %v4072
        %v4815 = vunpack.c.h.b16 %v4072
        %v4816 = vunpack.c.l.b16 %v4073
        %v4817 = vunpack.c.l.b16 %v4074
        %v4818 = vunpack.c.h.b16 %v4074
        %v4819 = vunpack.c.l.b16 %v4075
        %v4820 = vunpack.c.l.b16 %v4076
        %v4821 = vunpack.c.h.b16 %v4076
        %v4822 = vunpack.c.l.b16 %v4077
        %v4823 = vunpack.c.l.b16 %v4078
        %v4824 = vunpack.c.h.b16 %v4078
        %v4825 = vunpack.c.l.b16 %v4079
        %v4826 = vunpack.c.l.b16 %v4080
        %v4827 = vunpack.c.h.b16 %v4080
        %v4828 = vunpack.c.l.b16 %v4081
        %v4829 = vunpack.c.l.b16 %v4082
        %v4830 = vunpack.c.h.b16 %v4082
        %v4831 = vunpack.c.l.b16 %v4083
        %v4832 = vunpack.c.l.b16 %v4084
        %v4833 = vunpack.c.h.b16 %v4084
        %v4834 = vunpack.c.l.b16 %v4085
        %v4835 = vunpack.c.l.b16 %v4086
        %v4836 = vunpack.c.h.b16 %v4086
        %v4837 = vunpack.c.l.b16 %v4087
        %v4838 = vunpack.c.l.b16 %v4088
        %v4839 = vunpack.c.h.b16 %v4088
        %v4840 = vunpack.c.l.b16 %v4089
        %v4841 = vunpack.c.l.b16 %v4090
        %v4842 = vunpack.c.h.b16 %v4090
        %v4843 = vunpack.c.l.b16 %v4091
        %v4844 = vunpack.c.l.b16 %v4092
        %v4845 = vunpack.c.h.b16 %v4092
        %v4846 = vunpack.c.l.b16 %v4093
        %v4847 = vunpack.c.l.b16 %v4094
        %v4848 = vunpack.c.h.b16 %v4094
        %v4849 = vunpack.c.l.b16 %v4095
        %v4850 = vunpack.c.l.b16 %v4096
        %v4851 = vunpack.c.h.b16 %v4096
        %v4852 = vunpack.c.l.b16 %v4097
        %v4853 = vunpack.c.l.b16 %v4098
        %v4854 = vunpack.c.h.b16 %v4098
        %v4855 = vunpack.c.l.b16 %v4099
        %v4856 = vunpack.c.l.b16 %v4100
        %v4857 = vunpack.c.h.b16 %v4100
        %v4858 = vunpack.c.l.b16 %v4101
        %v4859 = vunpack.c.l.b16 %v4102
        %v4860 = vunpack.c.h.b16 %v4102
        %v4861 = vunpack.c.l.b16 %v4103
        %v4862 = vunpack.c.l.b16 %v4104
        %v4863 = vunpack.c.h.b16 %v4104
        %v4864 = vunpack.c.l.b16 %v4105
        %v4865 = vunpack.c.l.b16 %v4106
        %v4866 = vunpack.c.h.b16 %v4106
        %v4867 = vunpack.c.l.b16 %v4107
        %v4868 = vunpack.c.l.b16 %v4108
        %v4869 = vunpack.c.h.b16 %v4108
        %v4870 = vunpack.c.l.b16 %v4109
        %v4871 = vunpack.c.l.b16 %v4110
        %v4872 = vunpack.c.h.b16 %v4110
        %v4873 = vunpack.c.l.b16 %v4111
        %v4874 = vunpack.c.l.b16 %v4112
        %v4875 = vunpack.c.h.b16 %v4112
        %v4876 = vunpack.c.l.b16 %v4113
        %v4877 = vunpack.c.l.b16 %v4114
        %v4878 = vunpack.c.h.b16 %v4114
        %v4879 = vunpack.c.l.b16 %v4115
        %v4880 = vunpack.c.l.b16 %v4116
        %v4881 = vunpack.c.h.b16 %v4116
        %v4882 = vunpack.c.l.b16 %v4117
        %v4883 = vunpack.c.l.b16 %v4118
        %v4884 = vunpack.c.h.b16 %v4118
        %v4885 = vunpack.c.l.b16 %v4119
        %v4886 = vunpack.c.l.b16 %v4120
        %v4887 = vunpack.c.h.b16 %v4120
        %v4888 = vunpack.c.l.b16 %v4121
        %v4889 = vunpack.c.l.b16 %v4122
        %v4890 = vunpack.c.h.b16 %v4122
        %v4891 = vunpack.c.l.b16 %v4123
        %v4892 = vunpack.c.l.b16 %v4124
        %v4893 = vunpack.c.h.b16 %v4124
        %v4894 = vunpack.c.l.b16 %v4125
        %v4895 = vunpack.c.l.b16 %v4126
        %v4896 = vunpack.c.h.b16 %v4126
        %v4897 = vunpack.c.l.b16 %v4127
        %v4898 = vunpack.c.l.b16 %v4128
        %v4899 = vunpack.c.h.b16 %v4128
        %v4900 = vunpack.c.l.b16 %v4129
        %v4901 = vunpack.c.l.b16 %v4130
        %v4902 = vunpack.c.h.b16 %v4130
        %v4903 = vunpack.c.l.b16 %v4131
        %v4904 = vunpack.c.l.b16 %v4132
        %v4905 = vunpack.c.h.b16 %v4132
        %v4906 = vunpack.c.l.b16 %v4133
        %v4907 = vunpack.c.l.b16 %v4134
        %v4908 = vunpack.c.h.b16 %v4134
        %v4909 = vunpack.c.l.b16 %v4135
        %v4910 = vunpack.c.l.b16 %v4136
        %v4911 = vunpack.c.h.b16 %v4136
        %v4912 = vunpack.c.l.b16 %v4137
        %v4913 = vpack.c.b16 %v4808, %v4805
        %v4914 = vpack.c.b16 %v4809, %v4806
        %v4915 = vpack.c.b16 %v4810, %v4807
        %v4916 = vpack.c.b16 %v4814, %v4811
        %v4917 = vpack.c.b16 %v4815, %v4812
        %v4918 = vpack.c.b16 %v4816, %v4813
        %v4919 = vpack.c.b16 %v4820, %v4817
        %v4920 = vpack.c.b16 %v4821, %v4818
        %v4921 = vpack.c.b16 %v4822, %v4819
        %v4922 = vpack.c.b16 %v4826, %v4823
        %v4923 = vpack.c.b16 %v4827, %v4824
        %v4924 = vpack.c.b16 %v4828, %v4825
        %v4925 = vpack.c.b16 %v4832, %v4829
        %v4926 = vpack.c.b16 %v4833, %v4830
        %v4927 = vpack.c.b16 %v4834, %v4831
        %v4928 = vpack.c.b16 %v4838, %v4835
        %v4929 = vpack.c.b16 %v4839, %v4836
        %v4930 = vpack.c.b16 %v4840, %v4837
        %v4931 = vpack.c.b16 %v4844, %v4841
        %v4932 = vpack.c.b16 %v4845, %v4842
        %v4933 = vpack.c.b16 %v4846, %v4843
        %v4934 = vpack.c.b16 %v4850, %v4847
        %v4935 = vpack.c.b16 %v4851, %v4848
        %v4936 = vpack.c.b16 %v4852, %v4849
        %v4937 = vpack.c.b16 %v4856, %v4853
        %v4938 = vpack.c.b16 %v4857, %v4854
        %v4939 = vpack.c.b16 %v4858, %v4855
        %v4940 = vpack.c.b16 %v4862, %v4859
        %v4941 = vpack.c.b16 %v4863, %v4860
        %v4942 = vpack.c.b16 %v4864, %v4861
        %v4943 = vpack.c.b16 %v4868, %v4865
        %v4944 = vpack.c.b16 %v4869, %v4866
        %v4945 = vpack.c.b16 %v4870, %v4867
        %v4946 = vpack.c.b16 %v4874, %v4871
        %v4947 = vpack.c.b16 %v4875, %v4872
        %v4948 = vpack.c.b16 %v4876, %v4873
        %v4949 = vpack.c.b16 %v4880, %v4877
        %v4950 = vpack.c.b16 %v4881, %v4878
        %v4951 = vpack.c.b16 %v4882, %v4879
        %v4952 = vpack.c.b16 %v4886, %v4883
        %v4953 = vpack.c.b16 %v4887, %v4884
        %v4954 = vpack.c.b16 %v4888, %v4885
        %v4955 = vpack.c.b16 %v4892, %v4889
        %v4956 = vpack.c.b16 %v4893, %v4890
        %v4957 = vpack.c.b16 %v4894, %v4891
        %v4958 = vpack.c.b16 %v4898, %v4895
        %v4959 = vpack.c.b16 %v4899, %v4896
        %v4960 = vpack.c.b16 %v4900, %v4897
        %v4961 = vpack.c.b16 %v4904, %v4901
        %v4962 = vpack.c.b16 %v4905, %v4902
        %v4963 = vpack.c.b16 %v4906, %v4903
        %v4964 = vpack.c.b16 %v4910, %v4907
        %v4965 = vpack.c.b16 %v4911, %v4908
        %v4966 = vpack.c.b16 %v4912, %v4909
        %v5021 = vsel %vm704, %v4230, 0
        %5023 = vmatprep.subr.bf16.mxu0 %v4914
        %5024 = vmatpush1.bf16.msra.mxu0 %v4913
        %5025 = vmatprep.subr.bf16.mxu0 %v4917
        %5026 = vmatpush1.bf16.msra.mxu0 %v4916
        %5027 = vmatprep.subr.bf16.mxu0 %v4920
        %5028 = vmatpush1.bf16.msra.mxu0 %v4919
        %5029 = vmatprep.subr.bf16.mxu0 %v4923
        %5030 = vmatpush1.bf16.msra.mxu0 %v4922
        %5031 = vmatprep.subr.bf16.mxu0 %v4926
        %5032 = vmatpush1.bf16.msra.mxu0 %v4925
        %5033 = vmatprep.subr.bf16.mxu0 %v4929
        %5034 = vmatpush1.bf16.msra.mxu0 %v4928
        %5035 = vmatprep.subr.bf16.mxu0 %v4932
        %5036 = vmatpush1.bf16.msra.mxu0 %v4931
        %5037 = vmatprep.subr.bf16.mxu0 %v4935
        %5038 = vmatpush1.bf16.msra.mxu0 %v4934
        %5039 = vmatprep.subr.bf16.mxu0 %v4938
        %5040 = vmatpush1.bf16.msra.mxu0 %v4937
        %5041 = vmatprep.subr.bf16.mxu0 %v4941
        %5042 = vmatpush1.bf16.msra.mxu0 %v4940
        %5043 = vmatprep.subr.bf16.mxu0 %v4944
        %5044 = vmatpush1.bf16.msra.mxu0 %v4943
        %5045 = vmatprep.subr.bf16.mxu0 %v4947
        %5046 = vmatpush1.bf16.msra.mxu0 %v4946
        %5047 = vmatprep.subr.bf16.mxu0 %v4950
        %5048 = vmatpush1.bf16.msra.mxu0 %v4949
        %5049 = vmatprep.subr.bf16.mxu0 %v4953
        %5050 = vmatpush1.bf16.msra.mxu0 %v4952
        %5051 = vmatprep.subr.bf16.mxu0 %v4956
        %5052 = vmatpush1.bf16.msra.mxu0 %v4955
        %5053 = vmatprep.subr.bf16.mxu0 %v4959
        %5054 = vmatpush1.bf16.msra.mxu0 %v4958
        %5055 = vmatprep.mubr.bf16.mxu0 %v4229
        %5056 = vmatmul.mubr.bf16.gmra.mrb[0].mxu0 %v4228
        %v5057 = vpop.f32.mrb[0].mxu0
        %v5058 = vadd.f32 %v4641, %v5057
        %v5059 = vpop.f32.mrb[0].mxu0
        %v5060 = vadd.f32 %v4643, %v5059
        %v5061 = vpop.f32.mrb[0].mxu0
        %v5062 = vadd.f32 %v4645, %v5061
        %v5063 = vpop.f32.mrb[0].mxu0
        %v5064 = vadd.f32 %v4647, %v5063
        %5065 = vdwg.mxu0
        %5066 = vmatprep.subr.bf16.mxu0 %v4962
        %5067 = vmatpush1.bf16.msra.mxu0 %v4961
        %5068 = vmatprep.subr.bf16.mxu0 %v4965
        %5069 = vmatpush1.bf16.msra.mxu0 %v4964
        %5070 = vmatprep.subr.bf16.mxu0 0
        %5071 = vmatpush1.bf16.msra.mxu0 0
        %5072 = vmatprep.subr.bf16.mxu0 0
        %5073 = vmatpush1.bf16.msra.mxu0 0
        %5074 = vmatprep.subr.bf16.mxu0 0
        %5075 = vmatpush1.bf16.msra.mxu0 0
        %5076 = vmatprep.subr.bf16.mxu0 0
        %5077 = vmatpush1.bf16.msra.mxu0 0
        %5078 = vmatprep.subr.bf16.mxu0 0
        %5079 = vmatpush1.bf16.msra.mxu0 0
        %5080 = vmatprep.subr.bf16.mxu0 0
        %5081 = vmatpush1.bf16.msra.mxu0 0
        %5082 = vmatprep.subr.bf16.mxu0 0
        %5083 = vmatpush1.bf16.msra.mxu0 0
        %5084 = vmatprep.subr.bf16.mxu0 0
        %5085 = vmatpush1.bf16.msra.mxu0 0
        %5086 = vmatprep.subr.bf16.mxu0 0
        %5087 = vmatpush1.bf16.msra.mxu0 0
        %5088 = vmatprep.subr.bf16.mxu0 0
        %5089 = vmatpush1.bf16.msra.mxu0 0
        %5090 = vmatprep.subr.bf16.mxu0 0
        %5091 = vmatpush1.bf16.msra.mxu0 0
        %5092 = vmatprep.subr.bf16.mxu0 0
        %5093 = vmatpush1.bf16.msra.mxu0 0
        %5094 = vmatprep.subr.bf16.mxu0 0
        %5095 = vmatpush1.bf16.msra.mxu0 0
        %5096 = vmatprep.subr.bf16.mxu0 0
        %5097 = vmatpush1.bf16.msra.mxu0 0
        %5098 = vmatprep.mubr.bf16.mxu0 0
        %5099 = vmatmul.mubr.bf16.gmra.mrb[0].mxu0 %v5021
        %v5100 = vpop.f32.mrb[0].mxu0
        %v5101 = vadd.f32 %v5058, %v5100
        %v5102 = vpop.f32.mrb[0].mxu0
        %v5103 = vadd.f32 %v5060, %v5102
        %v5104 = vpop.f32.mrb[0].mxu0
        %v5105 = vadd.f32 %v5062, %v5104
        %v5106 = vpop.f32.mrb[0].mxu0
        %v5107 = vadd.f32 %v5064, %v5106
        %5108 = vdwg.mxu0
        %5109 = vmatprep.subr.bf16.mxu0 0
        %5110 = vmatpush1.bf16.msra.mxu0 %v4915
        %5111 = vmatprep.subr.bf16.mxu0 0
        %5112 = vmatpush1.bf16.msra.mxu0 %v4918
        %5113 = vmatprep.subr.bf16.mxu0 0
        %5114 = vmatpush1.bf16.msra.mxu0 %v4921
        %5115 = vmatprep.subr.bf16.mxu0 0
        %5116 = vmatpush1.bf16.msra.mxu0 %v4924
        %5117 = vmatprep.subr.bf16.mxu0 0
        %5118 = vmatpush1.bf16.msra.mxu0 %v4927
        %5119 = vmatprep.subr.bf16.mxu0 0
        %5120 = vmatpush1.bf16.msra.mxu0 %v4930
        %5121 = vmatprep.subr.bf16.mxu0 0
        %5122 = vmatpush1.bf16.msra.mxu0 %v4933
        %5123 = vmatprep.subr.bf16.mxu0 0
        %5124 = vmatpush1.bf16.msra.mxu0 %v4936
        %5125 = vmatprep.subr.bf16.mxu0 0
        %5126 = vmatpush1.bf16.msra.mxu0 %v4939
        %5127 = vmatprep.subr.bf16.mxu0 0
        %5128 = vmatpush1.bf16.msra.mxu0 %v4942
        %5129 = vmatprep.subr.bf16.mxu0 0
        %5130 = vmatpush1.bf16.msra.mxu0 %v4945
        %5131 = vmatprep.subr.bf16.mxu0 0
        %5132 = vmatpush1.bf16.msra.mxu0 %v4948
        %5133 = vmatprep.subr.bf16.mxu0 0
        %5134 = vmatpush1.bf16.msra.mxu0 %v4951
        %5135 = vmatprep.subr.bf16.mxu0 0
        %5136 = vmatpush1.bf16.msra.mxu0 %v4954
        %5137 = vmatprep.subr.bf16.mxu0 0
        %5138 = vmatpush1.bf16.msra.mxu0 %v4957
        %5139 = vmatprep.subr.bf16.mxu0 0
        %5140 = vmatpush1.bf16.msra.mxu0 %v4960
        %5141 = vmatprep.mubr.bf16.mxu0 %v4229
        %5142 = vmatmul.mubr.bf16.gmra.mrb[0].mxu0 %v4228
        %v5143 = vpop.f32.mrb[0].mxu0
        %v5144 = vadd.f32 %v4725, %v5143
        %v5145 = vpop.f32.mrb[0].mxu0
        %v5146 = vpop.f32.mrb[0].mxu0
        %v5147 = vadd.f32 %v4728, %v5146
        %v5148 = vpop.f32.mrb[0].mxu0
        %5149 = vdwg.mxu0
        %5150 = vmatprep.subr.bf16.mxu0 0
        %5151 = vmatpush1.bf16.msra.mxu0 %v4963
        %5152 = vmatprep.subr.bf16.mxu0 0
        %5153 = vmatpush1.bf16.msra.mxu0 %v4966
        %5154 = vmatprep.subr.bf16.mxu0 0
        %5155 = vmatpush1.bf16.msra.mxu0 0
        %5156 = vmatprep.subr.bf16.mxu0 0
        %5157 = vmatpush1.bf16.msra.mxu0 0
        %5158 = vmatprep.subr.bf16.mxu0 0
        %5159 = vmatpush1.bf16.msra.mxu0 0
        %5160 = vmatprep.subr.bf16.mxu0 0
        %5161 = vmatpush1.bf16.msra.mxu0 0
        %5162 = vmatprep.subr.bf16.mxu0 0
        %5163 = vmatpush1.bf16.msra.mxu0 0
        %5164 = vmatprep.subr.bf16.mxu0 0
        %5165 = vmatpush1.bf16.msra.mxu0 0
        %5166 = vmatprep.subr.bf16.mxu0 0
        %5167 = vmatpush1.bf16.msra.mxu0 0
        %5168 = vmatprep.subr.bf16.mxu0 0
        %5169 = vmatpush1.bf16.msra.mxu0 0
        %5170 = vmatprep.subr.bf16.mxu0 0
        %5171 = vmatpush1.bf16.msra.mxu0 0
        %5172 = vmatprep.subr.bf16.mxu0 0
        %5173 = vmatpush1.bf16.msra.mxu0 0
        %5174 = vmatprep.subr.bf16.mxu0 0
        %5175 = vmatpush1.bf16.msra.mxu0 0
        %5176 = vmatprep.subr.bf16.mxu0 0
        %5177 = vmatpush1.bf16.msra.mxu0 0
        %5178 = vmatprep.subr.bf16.mxu0 0
        %5179 = vmatpush1.bf16.msra.mxu0 0
        %5180 = vmatprep.subr.bf16.mxu0 0
        %5181 = vmatpush1.bf16.msra.mxu0 0
        %5182 = vmatprep.mubr.bf16.mxu0 0
        %5183 = vmatmul.mubr.bf16.gmra.mrb[0].mxu0 %v5021
        %v5184 = vpop.f32.mrb[0].mxu0
        %v5185 = vadd.f32 %v5144, %v5184
        %v5186 = vpop.f32.mrb[0].mxu0
        %v5187 = vpop.f32.mrb[0].mxu0
        %v5188 = vadd.f32 %v5147, %v5187
        %v5189 = vpop.f32.mrb[0].mxu0
        %5190 = vdwg.mxu0
        %v5191 = vld [vmem:[#allocation4] sm:$0xee]
        %v5192 = vld [vmem:[#allocation4 + $0x8] sm:$0xe]
        %s5193 = scalar_lea.vmem [#allocation10], 864
        %v5194 = vld [vmem:[%s5193] sm:$0xff]
        %v5195 = vld [vmem:[%s5193 + $0x8] sm:$0xf]
        %v5196 = vld [vmem:[%s5193 + $0xc] sm:$0xff]
        %v5197 = vld [vmem:[%s5193 + $0x14] sm:$0xf]
        %v5198 = vld [vmem:[%s5193 + $0x18] sm:$0xff]
        %v5199 = vld [vmem:[%s5193 + $0x20] sm:$0xf]
        %v5200 = vld [vmem:[%s5193 + $0x24] sm:$0xff]
        %v5201 = vld [vmem:[%s5193 + $0x2c] sm:$0xf]
        %v5202 = vld [vmem:[%s5193 + $0x30] sm:$0xff]
        %v5203 = vld [vmem:[%s5193 + $0x38] sm:$0xf]
        %v5204 = vld [vmem:[%s5193 + $0x3c] sm:$0xff]
        %v5205 = vld [vmem:[%s5193 + $0x44] sm:$0xf]
        %v5206 = vld [vmem:[%s5193 + $0x48] sm:$0xff]
        %v5207 = vld [vmem:[%s5193 + $0x50] sm:$0xf]
        %v5208 = vld [vmem:[%s5193 + $0x54] sm:$0xff]
        %v5209 = vld [vmem:[%s5193 + $0x5c] sm:$0xf]
        %v5210 = vld [vmem:[%s5193 + $0x60] sm:$0xff]
        %v5211 = vld [vmem:[%s5193 + $0x68] sm:$0xf]
        %v5212 = vld [vmem:[%s5193 + $0x6c] sm:$0xff]
        %v5213 = vld [vmem:[%s5193 + $0x74] sm:$0xf]
        %v5214 = vld [vmem:[%s5193 + $0x78] sm:$0xff]
        %v5215 = vld [vmem:[%s5193 + $0x80] sm:$0xf]
        %v5216 = vld [vmem:[%s5193 + $0x84] sm:$0xff]
        %v5217 = vld [vmem:[%s5193 + $0x8c] sm:$0xf]
        %v5218 = vld [vmem:[%s5193 + $0x90] sm:$0xff]
        %v5219 = vld [vmem:[%s5193 + $0x98] sm:$0xf]
        %v5220 = vld [vmem:[%s5193 + $0x9c] sm:$0xff]
        %v5221 = vld [vmem:[%s5193 + $0xa4] sm:$0xf]
        %v5222 = vld [vmem:[%s5193 + $0xa8] sm:$0xff]
        %v5223 = vld [vmem:[%s5193 + $0xb0] sm:$0xf]
        %v5224 = vld [vmem:[%s5193 + $0xb4] sm:$0xff]
        %v5225 = vld [vmem:[%s5193 + $0xbc] sm:$0xf]
        %v5226 = vld [vmem:[%s5193 + $0xc0] sm:$0xff]
        %v5227 = vld [vmem:[%s5193 + $0xc8] sm:$0xf]
        %v5228 = vld [vmem:[%s5193 + $0xcc] sm:$0xff]
        %v5229 = vld [vmem:[%s5193 + $0xd4] sm:$0xf]
        %v5230 = vld [vmem:[%s5193 + $0xd8] sm:$0xff]
        %v5231 = vld [vmem:[%s5193 + $0xe0] sm:$0xf]
        %v5232 = vld [vmem:[%s5193 + $0xe4] sm:$0xff]
        %v5233 = vld [vmem:[%s5193 + $0xec] sm:$0xf]
        %v5234 = vld [vmem:[%s5193 + $0xf0] sm:$0xff]
        %v5235 = vld [vmem:[%s5193 + $0xf8] sm:$0xf]
        %v5236 = vld [vmem:[%s5193 + $0xfc] sm:$0xff]
        %v5237 = vld [vmem:[%s5193 + $0x104] sm:$0xf]
        %v5238 = vld [vmem:[%s5193 + $0x108] sm:$0xff]
        %v5239 = vld [vmem:[%s5193 + $0x110] sm:$0xf]
        %v5240 = vld [vmem:[%s5193 + $0x114] sm:$0xff]
        %v5241 = vld [vmem:[%s5193 + $0x11c] sm:$0xf]
        %v5242 = vld [vmem:[%s5193 + $0x120] sm:$0xff]
        %v5243 = vld [vmem:[%s5193 + $0x128] sm:$0xf]
        %v5244 = vld [vmem:[%s5193 + $0x12c] sm:$0xff]
        %v5245 = vld [vmem:[%s5193 + $0x134] sm:$0xf]
        %v5246 = vld [vmem:[%s5193 + $0x138] sm:$0xff]
        %v5247 = vld [vmem:[%s5193 + $0x140] sm:$0xf]
        %v5248 = vld [vmem:[%s5193 + $0x144] sm:$0xff]
        %v5249 = vld [vmem:[%s5193 + $0x14c] sm:$0xf]
        %v5250 = vld [vmem:[%s5193 + $0x150] sm:$0xff]
        %v5251 = vld [vmem:[%s5193 + $0x158] sm:$0xf]
        %v5252 = vld [vmem:[%s5193 + $0x15c] sm:$0xff]
        %v5253 = vld [vmem:[%s5193 + $0x164] sm:$0xf]
        %v5254 = vld [vmem:[%s5193 + $0x168] sm:$0xff]
        %v5255 = vld [vmem:[%s5193 + $0x170] sm:$0xf]
        %v5256 = vld [vmem:[%s5193 + $0x174] sm:$0xff]
        %v5257 = vld [vmem:[%s5193 + $0x17c] sm:$0xf]
        %v5258 = vld [vmem:[%s5193 + $0x180] sm:$0xff]
        %v5259 = vld [vmem:[%s5193 + $0x188] sm:$0xf]
        %v5260 = vld [vmem:[%s5193 + $0x18c] sm:$0xff]
        %v5261 = vld [vmem:[%s5193 + $0x194] sm:$0xf]
        %v5262 = vld [vmem:[%s5193 + $0x198] sm:$0xff]
        %v5263 = vld [vmem:[%s5193 + $0x1a0] sm:$0xf]
        %v5264 = vld [vmem:[%s5193 + $0x1a4] sm:$0xff]
        %v5265 = vld [vmem:[%s5193 + $0x1ac] sm:$0xf]
        %v5268 = vunpack.c.l.b16 %v5191
        %v5269 = vunpack.c.h.b16 %v5191
        %v5270 = vunpack.c.l.b16 %v5192
        %v5271 = vpack.c.b16 %v4222, %v5268
        %v5272 = vpack.c.b16 %v4223, %v5269
        %v5273 = vpack.c.b16 %v4224, %v5270
        %v5274 = vrot.slane %v5271, 1
        %v5275 = vrot.slane %v4231, 1
        %v5276 = vsel %vm3403, %v5274, %v5275
        %v5277 = vrot.slane %v5272, 1
        %v5278 = vrot.slane %v4232, 1
        %v5279 = vsel %vm3403, %v5277, %v5278
        %v5280 = vrot.slane %v5273, 1
        %v5281 = vrot.slane %v4233, 1
        %v5282 = vsel %vm3403, %v5280, %v5281
        %v5357 = vunpack.c.l.b16 %v5194
        %v5358 = vunpack.c.h.b16 %v5194
        %v5359 = vunpack.c.l.b16 %v5195
        %v5360 = vunpack.c.l.b16 %v5196
        %v5361 = vunpack.c.h.b16 %v5196
        %v5362 = vunpack.c.l.b16 %v5197
        %v5363 = vunpack.c.l.b16 %v5198
        %v5364 = vunpack.c.h.b16 %v5198
        %v5365 = vunpack.c.l.b16 %v5199
        %v5366 = vunpack.c.l.b16 %v5200
        %v5367 = vunpack.c.h.b16 %v5200
        %v5368 = vunpack.c.l.b16 %v5201
        %v5369 = vunpack.c.l.b16 %v5202
        %v5370 = vunpack.c.h.b16 %v5202
        %v5371 = vunpack.c.l.b16 %v5203
        %v5372 = vunpack.c.l.b16 %v5204
        %v5373 = vunpack.c.h.b16 %v5204
        %v5374 = vunpack.c.l.b16 %v5205
        %v5375 = vunpack.c.l.b16 %v5206
        %v5376 = vunpack.c.h.b16 %v5206
        %v5377 = vunpack.c.l.b16 %v5207
        %v5378 = vunpack.c.l.b16 %v5208
        %v5379 = vunpack.c.h.b16 %v5208
        %v5380 = vunpack.c.l.b16 %v5209
        %v5381 = vunpack.c.l.b16 %v5210
        %v5382 = vunpack.c.h.b16 %v5210
        %v5383 = vunpack.c.l.b16 %v5211
        %v5384 = vunpack.c.l.b16 %v5212
        %v5385 = vunpack.c.h.b16 %v5212
        %v5386 = vunpack.c.l.b16 %v5213
        %v5387 = vunpack.c.l.b16 %v5214
        %v5388 = vunpack.c.h.b16 %v5214
        %v5389 = vunpack.c.l.b16 %v5215
        %v5390 = vunpack.c.l.b16 %v5216
        %v5391 = vunpack.c.h.b16 %v5216
        %v5392 = vunpack.c.l.b16 %v5217
        %v5393 = vunpack.c.l.b16 %v5218
        %v5394 = vunpack.c.h.b16 %v5218
        %v5395 = vunpack.c.l.b16 %v5219
        %v5396 = vunpack.c.l.b16 %v5220
        %v5397 = vunpack.c.h.b16 %v5220
        %v5398 = vunpack.c.l.b16 %v5221
        %v5399 = vunpack.c.l.b16 %v5222
        %v5400 = vunpack.c.h.b16 %v5222
        %v5401 = vunpack.c.l.b16 %v5223
        %v5402 = vunpack.c.l.b16 %v5224
        %v5403 = vunpack.c.h.b16 %v5224
        %v5404 = vunpack.c.l.b16 %v5225
        %v5405 = vunpack.c.l.b16 %v5226
        %v5406 = vunpack.c.h.b16 %v5226
        %v5407 = vunpack.c.l.b16 %v5227
        %v5408 = vunpack.c.l.b16 %v5228
        %v5409 = vunpack.c.h.b16 %v5228
        %v5410 = vunpack.c.l.b16 %v5229
        %v5411 = vunpack.c.l.b16 %v5230
        %v5412 = vunpack.c.h.b16 %v5230
        %v5413 = vunpack.c.l.b16 %v5231
        %v5414 = vunpack.c.l.b16 %v5232
        %v5415 = vunpack.c.h.b16 %v5232
        %v5416 = vunpack.c.l.b16 %v5233
        %v5417 = vunpack.c.l.b16 %v5234
        %v5418 = vunpack.c.h.b16 %v5234
        %v5419 = vunpack.c.l.b16 %v5235
        %v5420 = vunpack.c.l.b16 %v5236
        %v5421 = vunpack.c.h.b16 %v5236
        %v5422 = vunpack.c.l.b16 %v5237
        %v5423 = vunpack.c.l.b16 %v5238
        %v5424 = vunpack.c.h.b16 %v5238
        %v5425 = vunpack.c.l.b16 %v5239
        %v5426 = vunpack.c.l.b16 %v5240
        %v5427 = vunpack.c.h.b16 %v5240
        %v5428 = vunpack.c.l.b16 %v5241
        %v5429 = vunpack.c.l.b16 %v5242
        %v5430 = vunpack.c.h.b16 %v5242
        %v5431 = vunpack.c.l.b16 %v5243
        %v5432 = vunpack.c.l.b16 %v5244
        %v5433 = vunpack.c.h.b16 %v5244
        %v5434 = vunpack.c.l.b16 %v5245
        %v5435 = vunpack.c.l.b16 %v5246
        %v5436 = vunpack.c.h.b16 %v5246
        %v5437 = vunpack.c.l.b16 %v5247
        %v5438 = vunpack.c.l.b16 %v5248
        %v5439 = vunpack.c.h.b16 %v5248
        %v5440 = vunpack.c.l.b16 %v5249
        %v5441 = vunpack.c.l.b16 %v5250
        %v5442 = vunpack.c.h.b16 %v5250
        %v5443 = vunpack.c.l.b16 %v5251
        %v5444 = vunpack.c.l.b16 %v5252
        %v5445 = vunpack.c.h.b16 %v5252
        %v5446 = vunpack.c.l.b16 %v5253
        %v5447 = vunpack.c.l.b16 %v5254
        %v5448 = vunpack.c.h.b16 %v5254
        %v5449 = vunpack.c.l.b16 %v5255
        %v5450 = vunpack.c.l.b16 %v5256
        %v5451 = vunpack.c.h.b16 %v5256
        %v5452 = vunpack.c.l.b16 %v5257
        %v5453 = vunpack.c.l.b16 %v5258
        %v5454 = vunpack.c.h.b16 %v5258
        %v5455 = vunpack.c.l.b16 %v5259
        %v5456 = vunpack.c.l.b16 %v5260
        %v5457 = vunpack.c.h.b16 %v5260
        %v5458 = vunpack.c.l.b16 %v5261
        %v5459 = vunpack.c.l.b16 %v5262
        %v5460 = vunpack.c.h.b16 %v5262
        %v5461 = vunpack.c.l.b16 %v5263
        %v5462 = vunpack.c.l.b16 %v5264
        %v5463 = vunpack.c.h.b16 %v5264
        %v5464 = vunpack.c.l.b16 %v5265
        %v5465 = vpack.c.b16 %v5360, %v5357
        %v5466 = vpack.c.b16 %v5361, %v5358
        %v5467 = vpack.c.b16 %v5362, %v5359
        %v5468 = vpack.c.b16 %v5366, %v5363
        %v5469 = vpack.c.b16 %v5367, %v5364
        %v5470 = vpack.c.b16 %v5368, %v5365
        %v5471 = vpack.c.b16 %v5372, %v5369
        %v5472 = vpack.c.b16 %v5373, %v5370
        %v5473 = vpack.c.b16 %v5374, %v5371
        %v5474 = vpack.c.b16 %v5378, %v5375
        %v5475 = vpack.c.b16 %v5379, %v5376
        %v5476 = vpack.c.b16 %v5380, %v5377
        %v5477 = vpack.c.b16 %v5384, %v5381
        %v5478 = vpack.c.b16 %v5385, %v5382
        %v5479 = vpack.c.b16 %v5386, %v5383
        %v5480 = vpack.c.b16 %v5390, %v5387
        %v5481 = vpack.c.b16 %v5391, %v5388
        %v5482 = vpack.c.b16 %v5392, %v5389
        %v5483 = vpack.c.b16 %v5396, %v5393
        %v5484 = vpack.c.b16 %v5397, %v5394
        %v5485 = vpack.c.b16 %v5398, %v5395
        %v5486 = vpack.c.b16 %v5402, %v5399
        %v5487 = vpack.c.b16 %v5403, %v5400
        %v5488 = vpack.c.b16 %v5404, %v5401
        %v5489 = vpack.c.b16 %v5408, %v5405
        %v5490 = vpack.c.b16 %v5409, %v5406
        %v5491 = vpack.c.b16 %v5410, %v5407
        %v5492 = vpack.c.b16 %v5414, %v5411
        %v5493 = vpack.c.b16 %v5415, %v5412
        %v5494 = vpack.c.b16 %v5416, %v5413
        %v5495 = vpack.c.b16 %v5420, %v5417
        %v5496 = vpack.c.b16 %v5421, %v5418
        %v5497 = vpack.c.b16 %v5422, %v5419
        %v5498 = vpack.c.b16 %v5426, %v5423
        %v5499 = vpack.c.b16 %v5427, %v5424
        %v5500 = vpack.c.b16 %v5428, %v5425
        %v5501 = vpack.c.b16 %v5432, %v5429
        %v5502 = vpack.c.b16 %v5433, %v5430
        %v5503 = vpack.c.b16 %v5434, %v5431
        %v5504 = vpack.c.b16 %v5438, %v5435
        %v5505 = vpack.c.b16 %v5439, %v5436
        %v5506 = vpack.c.b16 %v5440, %v5437
        %v5507 = vpack.c.b16 %v5444, %v5441
        %v5508 = vpack.c.b16 %v5445, %v5442
        %v5509 = vpack.c.b16 %v5446, %v5443
        %v5510 = vpack.c.b16 %v5450, %v5447
        %v5511 = vpack.c.b16 %v5451, %v5448
        %v5512 = vpack.c.b16 %v5452, %v5449
        %v5513 = vpack.c.b16 %v5456, %v5453
        %v5514 = vpack.c.b16 %v5457, %v5454
        %v5515 = vpack.c.b16 %v5458, %v5455
        %v5516 = vpack.c.b16 %v5462, %v5459
        %v5517 = vpack.c.b16 %v5463, %v5460
        %v5518 = vpack.c.b16 %v5464, %v5461
        %v5574 = vsel %vm704, %v5282, 0
        %5576 = vmatprep.subr.bf16.mxu0 %v5466
        %5577 = vmatpush1.bf16.msra.mxu0 %v5465
        %5578 = vmatprep.subr.bf16.mxu0 %v5469
        %5579 = vmatpush1.bf16.msra.mxu0 %v5468
        %5580 = vmatprep.subr.bf16.mxu0 %v5472
        %5581 = vmatpush1.bf16.msra.mxu0 %v5471
        %5582 = vmatprep.subr.bf16.mxu0 %v5475
        %5583 = vmatpush1.bf16.msra.mxu0 %v5474
        %5584 = vmatprep.subr.bf16.mxu0 %v5478
        %5585 = vmatpush1.bf16.msra.mxu0 %v5477
        %5586 = vmatprep.subr.bf16.mxu0 %v5481
        %5587 = vmatpush1.bf16.msra.mxu0 %v5480
        %5588 = vmatprep.subr.bf16.mxu0 %v5484
        %5589 = vmatpush1.bf16.msra.mxu0 %v5483
        %5590 = vmatprep.subr.bf16.mxu0 %v5487
        %5591 = vmatpush1.bf16.msra.mxu0 %v5486
        %5592 = vmatprep.subr.bf16.mxu0 %v5490
        %5593 = vmatpush1.bf16.msra.mxu0 %v5489
        %5594 = vmatprep.subr.bf16.mxu0 %v5493
        %5595 = vmatpush1.bf16.msra.mxu0 %v5492
        %5596 = vmatprep.subr.bf16.mxu0 %v5496
        %5597 = vmatpush1.bf16.msra.mxu0 %v5495
        %5598 = vmatprep.subr.bf16.mxu0 %v5499
        %5599 = vmatpush1.bf16.msra.mxu0 %v5498
        %5600 = vmatprep.subr.bf16.mxu0 %v5502
        %5601 = vmatpush1.bf16.msra.mxu0 %v5501
        %5602 = vmatprep.subr.bf16.mxu0 %v5505
        %5603 = vmatpush1.bf16.msra.mxu0 %v5504
        %5604 = vmatprep.subr.bf16.mxu0 %v5508
        %5605 = vmatpush1.bf16.msra.mxu0 %v5507
        %5606 = vmatprep.subr.bf16.mxu0 %v5511
        %5607 = vmatpush1.bf16.msra.mxu0 %v5510
        %5608 = vmatprep.mubr.bf16.mxu0 %v5279
        %5609 = vmatmul.mubr.bf16.gmra.mrb[0].mxu0 %v5276
        %v5610 = vpop.f32.mrb[0].mxu0
        %v5611 = vadd.f32 0.0, %v5610
        %v5612 = vpop.f32.mrb[0].mxu0
        %v5613 = vadd.f32 0.0, %v5612
        %v5614 = vpop.f32.mrb[0].mxu0
        %v5615 = vadd.f32 0.0, %v5614
        %v5616 = vpop.f32.mrb[0].mxu0
        %v5617 = vadd.f32 0.0, %v5616
        %5618 = vdwg.mxu0
        %5619 = vmatprep.subr.bf16.mxu0 %v5514
        %5620 = vmatpush1.bf16.msra.mxu0 %v5513
        %5621 = vmatprep.subr.bf16.mxu0 %v5517
        %5622 = vmatpush1.bf16.msra.mxu0 %v5516
        %5623 = vmatprep.subr.bf16.mxu0 0
        %5624 = vmatpush1.bf16.msra.mxu0 0
        %5625 = vmatprep.subr.bf16.mxu0 0
        %5626 = vmatpush1.bf16.msra.mxu0 0
        %5627 = vmatprep.subr.bf16.mxu0 0
        %5628 = vmatpush1.bf16.msra.mxu0 0
        %5629 = vmatprep.subr.bf16.mxu0 0
        %5630 = vmatpush1.bf16.msra.mxu0 0
        %5631 = vmatprep.subr.bf16.mxu0 0
        %5632 = vmatpush1.bf16.msra.mxu0 0
        %5633 = vmatprep.subr.bf16.mxu0 0
        %5634 = vmatpush1.bf16.msra.mxu0 0
        %5635 = vmatprep.subr.bf16.mxu0 0
        %5636 = vmatpush1.bf16.msra.mxu0 0
        %5637 = vmatprep.subr.bf16.mxu0 0
        %5638 = vmatpush1.bf16.msra.mxu0 0
        %5639 = vmatprep.subr.bf16.mxu0 0
        %5640 = vmatpush1.bf16.msra.mxu0 0
        %5641 = vmatprep.subr.bf16.mxu0 0
        %5642 = vmatpush1.bf16.msra.mxu0 0
        %5643 = vmatprep.subr.bf16.mxu0 0
        %5644 = vmatpush1.bf16.msra.mxu0 0
        %5645 = vmatprep.subr.bf16.mxu0 0
        %5646 = vmatpush1.bf16.msra.mxu0 0
        %5647 = vmatprep.subr.bf16.mxu0 0
        %5648 = vmatpush1.bf16.msra.mxu0 0
        %5649 = vmatprep.subr.bf16.mxu0 0
        %5650 = vmatpush1.bf16.msra.mxu0 0
        %5651 = vmatprep.mubr.bf16.mxu0 0
        %5652 = vmatmul.mubr.bf16.gmra.mrb[0].mxu0 %v5574
        %v5653 = vpop.f32.mrb[0].mxu0
        %v5654 = vadd.f32 %v5611, %v5653
        %v5655 = vpop.f32.mrb[0].mxu0
        %v5656 = vadd.f32 %v5613, %v5655
        %v5657 = vpop.f32.mrb[0].mxu0
        %v5658 = vadd.f32 %v5615, %v5657
        %v5659 = vpop.f32.mrb[0].mxu0
        %v5660 = vadd.f32 %v5617, %v5659
        %5661 = vdwg.mxu0
        %5662 = vmatprep.subr.bf16.mxu0 0
        %5663 = vmatpush1.bf16.msra.mxu0 %v5467
        %5664 = vmatprep.subr.bf16.mxu0 0
        %5665 = vmatpush1.bf16.msra.mxu0 %v5470
        %5666 = vmatprep.subr.bf16.mxu0 0
        %5667 = vmatpush1.bf16.msra.mxu0 %v5473
        %5668 = vmatprep.subr.bf16.mxu0 0
        %5669 = vmatpush1.bf16.msra.mxu0 %v5476
        %5670 = vmatprep.subr.bf16.mxu0 0
        %5671 = vmatpush1.bf16.msra.mxu0 %v5479
        %5672 = vmatprep.subr.bf16.mxu0 0
        %5673 = vmatpush1.bf16.msra.mxu0 %v5482
        %5674 = vmatprep.subr.bf16.mxu0 0
        %5675 = vmatpush1.bf16.msra.mxu0 %v5485
        %5676 = vmatprep.subr.bf16.mxu0 0
        %5677 = vmatpush1.bf16.msra.mxu0 %v5488
        %5678 = vmatprep.subr.bf16.mxu0 0
        %5679 = vmatpush1.bf16.msra.mxu0 %v5491
        %5680 = vmatprep.subr.bf16.mxu0 0
        %5681 = vmatpush1.bf16.msra.mxu0 %v5494
        %5682 = vmatprep.subr.bf16.mxu0 0
        %5683 = vmatpush1.bf16.msra.mxu0 %v5497
        %5684 = vmatprep.subr.bf16.mxu0 0
        %5685 = vmatpush1.bf16.msra.mxu0 %v5500
        %5686 = vmatprep.subr.bf16.mxu0 0
        %5687 = vmatpush1.bf16.msra.mxu0 %v5503
        %5688 = vmatprep.subr.bf16.mxu0 0
        %5689 = vmatpush1.bf16.msra.mxu0 %v5506
        %5690 = vmatprep.subr.bf16.mxu0 0
        %5691 = vmatpush1.bf16.msra.mxu0 %v5509
        %5692 = vmatprep.subr.bf16.mxu0 0
        %5693 = vmatpush1.bf16.msra.mxu0 %v5512
        %5694 = vmatprep.mubr.bf16.mxu0 %v5279
        %5695 = vmatmul.mubr.bf16.gmra.mrb[0].mxu0 %v5276
        %v5696 = vpop.f32.mrb[0].mxu0
        %v5697 = vadd.f32 0.0, %v5696
        %v5698 = vpop.f32.mrb[0].mxu0
        %v5699 = vpop.f32.mrb[0].mxu0
        %v5700 = vadd.f32 0.0, %v5699
        %v5701 = vpop.f32.mrb[0].mxu0
        %5702 = vdwg.mxu0
        %5703 = vmatprep.subr.bf16.mxu0 0
        %5704 = vmatpush1.bf16.msra.mxu0 %v5515
        %5705 = vmatprep.subr.bf16.mxu0 0
        %5706 = vmatpush1.bf16.msra.mxu0 %v5518
        %5707 = vmatprep.subr.bf16.mxu0 0
        %5708 = vmatpush1.bf16.msra.mxu0 0
        %5709 = vmatprep.subr.bf16.mxu0 0
        %5710 = vmatpush1.bf16.msra.mxu0 0
        %5711 = vmatprep.subr.bf16.mxu0 0
        %5712 = vmatpush1.bf16.msra.mxu0 0
        %5713 = vmatprep.subr.bf16.mxu0 0
        %5714 = vmatpush1.bf16.msra.mxu0 0
        %5715 = vmatprep.subr.bf16.mxu0 0
        %5716 = vmatpush1.bf16.msra.mxu0 0
        %5717 = vmatprep.subr.bf16.mxu0 0
        %5718 = vmatpush1.bf16.msra.mxu0 0
        %5719 = vmatprep.subr.bf16.mxu0 0
        %5720 = vmatpush1.bf16.msra.mxu0 0
        %5721 = vmatprep.subr.bf16.mxu0 0
        %5722 = vmatpush1.bf16.msra.mxu0 0
        %5723 = vmatprep.subr.bf16.mxu0 0
        %5724 = vmatpush1.bf16.msra.mxu0 0
        %5725 = vmatprep.subr.bf16.mxu0 0
        %5726 = vmatpush1.bf16.msra.mxu0 0
        %5727 = vmatprep.subr.bf16.mxu0 0
        %5728 = vmatpush1.bf16.msra.mxu0 0
        %5729 = vmatprep.subr.bf16.mxu0 0
        %5730 = vmatpush1.bf16.msra.mxu0 0
        %5731 = vmatprep.subr.bf16.mxu0 0
        %5732 = vmatpush1.bf16.msra.mxu0 0
        %5733 = vmatprep.subr.bf16.mxu0 0
        %5734 = vmatpush1.bf16.msra.mxu0 0
        %5735 = vmatprep.mubr.bf16.mxu0 0
        %5736 = vmatmul.mubr.bf16.gmra.mrb[0].mxu0 %v5574
        %v5737 = vpop.f32.mrb[0].mxu0
        %v5738 = vadd.f32 %v5697, %v5737
        %v5739 = vpop.f32.mrb[0].mxu0
        %v5740 = vpop.f32.mrb[0].mxu0
        %v5741 = vadd.f32 %v5700, %v5740
        %v5742 = vpop.f32.mrb[0].mxu0
        %5743 = vdwg.mxu0
        %v5744 = vadd.f32 %v5101, %v5654
        %v5745 = vadd.f32 %v5103, %v5656
        %v5746 = vadd.f32 %v5185, %v5738
        %v5747 = vadd.f32 %v5105, %v5658
        %v5748 = vadd.f32 %v5107, %v5660
        %v5749 = vadd.f32 %v5188, %v5741
        %v5750 = vld [vmem:[%s10] sm:$0x7]
        %v5752 = vlaneseq
        %v5753 = vshrl.u32 %v5752, 7
        %v5754 = vsub.s32 0, %v5753
        %v5755 = vrot.slane %v5750, %v5754
        %v5756 = vlaneseq
        %v5757 = vshrl.u32 %v5756, 7
        %v5758 = vsub.s32 1, %v5757
        %v5759 = vrot.slane %v5750, %v5758
        %v5760 = vlaneseq
        %v5761 = vshrl.u32 %v5760, 7
        %v5762 = vsub.s32 2, %v5761
        %v5763 = vrot.slane %v5750, %v5762
        %v5767 = vadd.f32 %v5744, %v5755
        %v5768 = vadd.f32 %v5745, %v5759
        %v5769 = vadd.f32 %v5746, %v5763
        %v5770 = vadd.f32 %v5747, %v5755
        %v5771 = vadd.f32 %v5748, %v5759
        %v5772 = vadd.f32 %v5749, %v5763
        %v5773 = vmax.f32 %v5767, 0.0
        %v5774 = vmax.f32 %v5768, 0.0
        %v5775 = vmax.f32 %v5769, 0.0
        %v5776 = vmax.f32 %v5770, 0.0
        %v5777 = vmax.f32 %v5771, 0.0
        %v5778 = vmax.f32 %v5772, 0.0
        %v5779 = vpack.c.bf16 %v5776, %v5773
        %v5780 = vpack.c.bf16 %v5777, %v5774
        %v5781 = vpack.c.bf16 %v5778, %v5775
        %v5785 = vunpack.c.l.b16 %v5779
        %v5786 = vunpack.c.l.b16 %v5780
        %v5787 = vunpack.c.l.b16 %v5781
        %v5788 = vunpack.c.h.b16 %v5779
        %v5789 = vunpack.c.h.b16 %v5780
        %v5790 = vunpack.c.h.b16 %v5781
        %v5791 = vpack.c.b16 %v5786, %v5785
        %v5792 = vpack.c.b16 %v5787, %v5787
        %v5793 = vpack.c.b16 %v5789, %v5788
        %v5794 = vpack.c.b16 %v5790, %v5790
        %v5796 = vshrl.u32 %v5791, 16
        %v5798 = vrot.slane %v5796, 7
        %v5799 = vshll.u32 %v5791, 16
        %v5801 = vor.u32 %v5798, %v5799
        %v5803 = vshrl.u32 %v5792, 16
        %v5805 = vrot.slane %v5803, 7
        %v5806 = vshll.u32 %v5792, 16
        %v5808 = vor.u32 %v5805, %v5806
        %v5809 = vrot.slane %v5798, 4
        %v5811 = vshrl.u32 %v5793, 16
        %v5813 = vrot.slane %v5811, 7
        %v5814 = vshll.u32 %v5793, 16
        %v5816 = vor.u32 %v5813, %v5814
        %v5817 = vsel %vm4001, %v5809, %v5816
        %v5818 = vrot.slane %v5805, 4
        %v5820 = vshrl.u32 %v5794, 16
        %v5822 = vrot.slane %v5820, 7
        %v5823 = vshll.u32 %v5794, 16
        %v5825 = vor.u32 %v5822, %v5823
        %v5826 = vsel %vm4001, %v5818, %v5825
        %v5827 = vrot.slane %v5813, 4
        %v5828 = vrot.slane %v5822, 4
        %v5835 = vsel %vm4044, %v5801, %v4062
        %5836 = vst [vmem:[#allocation4] sm:$0xff] %v5835
        %v5837 = vld [vmem:[#allocation4 + $0x8] sm:$0xf]
        %v5838 = vsel %vm4049, %v5808, %v5837
        %5839 = vst [vmem:[#allocation4 + $0x8] sm:$0xf] %v5838
        %5840 = vst [vmem:[#allocation4 + $0xc] sm:$0xff] %v5817
        %5841 = vst.msk [vmem:[#allocation4 + $0x14] sm:$0xf] %vm4054, %v5826
        %v5842 = vld [vmem:[#allocation4 + $0x18] sm:$0x11]
        %v5843 = vsel %vm3966, %v5827, %v5842
        %5844 = vst [vmem:[#allocation4 + $0x18] sm:$0x11] %v5843
        %v5845 = vld [vmem:[#allocation4 + $0x20] sm:$0x1]
        %v5846 = vsel %vm3971, %v5828, %v5845
        %5847 = vst [vmem:[#allocation4 + $0x20] sm:$0x1] %v5846
        %v5848 = vld [vmem:[#allocation4] sm:$0xff]
        %v5849 = vld [vmem:[#allocation4 + $0x8] sm:$0xf]
        %v5850 = vld [vmem:[#allocation4 + $0xc] sm:$0xff]
        %v5851 = vld [vmem:[#allocation4 + $0x14] sm:$0xf]
        %v5852 = vld [vmem:[#allocation11] sm:$0xff]
        %v5853 = vld [vmem:[#allocation11 + $0x8] sm:$0xff]
        %v5854 = vld [vmem:[#allocation11 + $0x10] sm:$0xff]
        %v5855 = vld [vmem:[#allocation11 + $0x18] sm:$0xff]
        %v5856 = vld [vmem:[#allocation11 + $0x20] sm:$0xff]
        %v5857 = vld [vmem:[#allocation11 + $0x28] sm:$0xff]
        %v5858 = vld [vmem:[#allocation11 + $0x30] sm:$0xff]
        %v5859 = vld [vmem:[#allocation11 + $0x38] sm:$0xff]
        %v5860 = vld [vmem:[#allocation11 + $0x40] sm:$0xff]
        %v5861 = vld [vmem:[#allocation11 + $0x48] sm:$0xff]
        %v5862 = vld [vmem:[#allocation11 + $0x50] sm:$0xff]
        %v5863 = vld [vmem:[#allocation11 + $0x58] sm:$0xff]
        %v5864 = vld [vmem:[#allocation11 + $0x60] sm:$0xff]
        %v5865 = vld [vmem:[#allocation11 + $0x68] sm:$0xff]
        %v5866 = vld [vmem:[#allocation11 + $0x70] sm:$0xff]
        %v5867 = vld [vmem:[#allocation11 + $0x78] sm:$0xff]
        %v5868 = vld [vmem:[#allocation11 + $0x80] sm:$0xff]
        %v5869 = vld [vmem:[#allocation11 + $0x88] sm:$0xff]
        %v5870 = vld [vmem:[#allocation11 + $0x90] sm:$0xff]
        %v5871 = vld [vmem:[#allocation11 + $0x98] sm:$0xff]
        %v5872 = vld [vmem:[#allocation11 + $0xa0] sm:$0xff]
        %v5873 = vld [vmem:[#allocation11 + $0xa8] sm:$0xff]
        %v5874 = vld [vmem:[#allocation11 + $0xb0] sm:$0xff]
        %v5875 = vld [vmem:[#allocation11 + $0xb8] sm:$0xff]
        %v5876 = vld [vmem:[#allocation11 + $0xc0] sm:$0xff]
        %v5877 = vld [vmem:[#allocation11 + $0xc8] sm:$0xff]
        %v5878 = vld [vmem:[#allocation11 + $0xd0] sm:$0xff]
        %v5879 = vld [vmem:[#allocation11 + $0xd8] sm:$0xff]
        %v5880 = vld [vmem:[#allocation11 + $0xe0] sm:$0xff]
        %v5881 = vld [vmem:[#allocation11 + $0xe8] sm:$0xff]
        %v5882 = vld [vmem:[#allocation11 + $0xf0] sm:$0xff]
        %v5883 = vld [vmem:[#allocation11 + $0xf8] sm:$0xff]
        %v5884 = vld [vmem:[#allocation11 + $0x100] sm:$0xff]
        %v5885 = vld [vmem:[#allocation11 + $0x108] sm:$0xff]
        %v5886 = vld [vmem:[#allocation11 + $0x110] sm:$0xff]
        %v5887 = vld [vmem:[#allocation11 + $0x118] sm:$0xff]
        %v5888 = vld [vmem:[#allocation4 + $0x18] sm:$0x11]
        %v5889 = vld [vmem:[#allocation4 + $0x20] sm:$0x1]
        %s5890 = scalar_lea.vmem [#allocation11], 288
        %v5891 = vld [vmem:[%s5890] sm:$0xff]
        %v5892 = vld [vmem:[%s5890 + $0x8] sm:$0xff]
        %v5893 = vld [vmem:[%s5890 + $0x10] sm:$0xff]
        %v5894 = vld [vmem:[%s5890 + $0x18] sm:$0xff]
        %v5895 = vld [vmem:[%s5890 + $0x20] sm:$0xff]
        %v5896 = vld [vmem:[%s5890 + $0x28] sm:$0xff]
        %v5897 = vld [vmem:[%s5890 + $0x30] sm:$0xff]
        %v5898 = vld [vmem:[%s5890 + $0x38] sm:$0xff]
        %v5899 = vld [vmem:[%s5890 + $0x40] sm:$0xff]
        %v5900 = vld [vmem:[%s5890 + $0x48] sm:$0xff]
        %v5901 = vld [vmem:[%s5890 + $0x50] sm:$0xff]
        %v5902 = vld [vmem:[%s5890 + $0x58] sm:$0xff]
        %v5903 = vld [vmem:[%s5890 + $0x60] sm:$0xff]
        %v5904 = vld [vmem:[%s5890 + $0x68] sm:$0xff]
        %v5905 = vld [vmem:[%s5890 + $0x70] sm:$0xff]
        %v5906 = vld [vmem:[%s5890 + $0x78] sm:$0xff]
        %v5907 = vld [vmem:[%s5890 + $0x80] sm:$0xff]
        %v5908 = vld [vmem:[%s5890 + $0x88] sm:$0xff]
        %v5909 = vld [vmem:[%s5890 + $0x90] sm:$0xff]
        %v5910 = vld [vmem:[%s5890 + $0x98] sm:$0xff]
        %v5911 = vld [vmem:[%s5890 + $0xa0] sm:$0xff]
        %v5912 = vld [vmem:[%s5890 + $0xa8] sm:$0xff]
        %v5913 = vld [vmem:[%s5890 + $0xb0] sm:$0xff]
        %v5914 = vld [vmem:[%s5890 + $0xb8] sm:$0xff]
        %v5915 = vld [vmem:[%s5890 + $0xc0] sm:$0xff]
        %v5916 = vld [vmem:[%s5890 + $0xc8] sm:$0xff]
        %v5917 = vld [vmem:[%s5890 + $0xd0] sm:$0xff]
        %v5918 = vld [vmem:[%s5890 + $0xd8] sm:$0xff]
        %v5919 = vld [vmem:[%s5890 + $0xe0] sm:$0xff]
        %v5920 = vld [vmem:[%s5890 + $0xe8] sm:$0xff]
        %v5921 = vld [vmem:[%s5890 + $0xf0] sm:$0xff]
        %v5922 = vld [vmem:[%s5890 + $0xf8] sm:$0xff]
        %v5923 = vld [vmem:[%s5890 + $0x100] sm:$0xff]
        %v5924 = vld [vmem:[%s5890 + $0x108] sm:$0xff]
        %v5925 = vld [vmem:[%s5890 + $0x110] sm:$0xff]
        %v5926 = vld [vmem:[%s5890 + $0x118] sm:$0xff]
        %v5933 = vunpack.c.l.b16 %v5848
        %v5934 = vunpack.c.h.b16 %v5848
        %v5935 = vunpack.c.l.b16 %v5849
        %v5936 = vunpack.c.l.b16 %v5850
        %v5937 = vunpack.c.h.b16 %v5850
        %v5938 = vunpack.c.l.b16 %v5851
        %v5939 = vunpack.c.l.b16 %v5888
        %v5940 = vunpack.c.h.b16 %v5888
        %v5941 = vunpack.c.l.b16 %v5889
        %v5942 = vpack.c.b16 %v5936, %v5933
        %v5943 = vpack.c.b16 %v5937, %v5934
        %v5944 = vpack.c.b16 %v5938, %v5935
        %v5945 = vpack.c.b16 %v5939, %v5939
        %v5946 = vpack.c.b16 %v5940, %v5940
        %v5947 = vpack.c.b16 %v5941, %v5941
        %v5949 = vshrl.u32 %v5942, 16
        %v5951 = vshll.u32 %v5942, 16
        %v5953 = vrot.slane %v5951, 1
        %v5954 = vor.u32 %v5949, %v5953
        %v5956 = vshll.u32 %v5945, 16
        %v5958 = vrot.slane %v5956, 1
        %v5959 = vsel %vm2139, %v5954, %v5958
        %v5961 = vshrl.u32 %v5943, 16
        %v5963 = vshll.u32 %v5943, 16
        %v5965 = vrot.slane %v5963, 1
        %v5966 = vor.u32 %v5961, %v5965
        %v5968 = vshll.u32 %v5946, 16
        %v5970 = vrot.slane %v5968, 1
        %v5971 = vsel %vm2139, %v5966, %v5970
        %v5973 = vshrl.u32 %v5944, 16
        %v5975 = vshll.u32 %v5944, 16
        %v5977 = vrot.slane %v5975, 1
        %v5978 = vor.u32 %v5973, %v5977
        %v5980 = vshll.u32 %v5947, 16
        %v5982 = vrot.slane %v5980, 1
        %v5983 = vsel %vm2139, %v5978, %v5982
        %v6022 = vunpack.c.l.b16 %v5891
        %v6023 = vunpack.c.h.b16 %v5891
        %v6024 = vunpack.c.l.b16 %v5892
        %v6025 = vunpack.c.h.b16 %v5892
        %v6026 = vunpack.c.l.b16 %v5893
        %v6027 = vunpack.c.h.b16 %v5893
        %v6028 = vunpack.c.l.b16 %v5894
        %v6029 = vunpack.c.h.b16 %v5894
        %v6030 = vunpack.c.l.b16 %v5895
        %v6031 = vunpack.c.h.b16 %v5895
        %v6032 = vunpack.c.l.b16 %v5896
        %v6033 = vunpack.c.h.b16 %v5896
        %v6034 = vunpack.c.l.b16 %v5897
        %v6035 = vunpack.c.h.b16 %v5897
        %v6036 = vunpack.c.l.b16 %v5898
        %v6037 = vunpack.c.h.b16 %v5898
        %v6038 = vunpack.c.l.b16 %v5899
        %v6039 = vunpack.c.h.b16 %v5899
        %v6040 = vunpack.c.l.b16 %v5900
        %v6041 = vunpack.c.h.b16 %v5900
        %v6042 = vunpack.c.l.b16 %v5901
        %v6043 = vunpack.c.h.b16 %v5901
        %v6044 = vunpack.c.l.b16 %v5902
        %v6045 = vunpack.c.h.b16 %v5902
        %v6046 = vunpack.c.l.b16 %v5903
        %v6047 = vunpack.c.h.b16 %v5903
        %v6048 = vunpack.c.l.b16 %v5904
        %v6049 = vunpack.c.h.b16 %v5904
        %v6050 = vunpack.c.l.b16 %v5905
        %v6051 = vunpack.c.h.b16 %v5905
        %v6052 = vunpack.c.l.b16 %v5906
        %v6053 = vunpack.c.h.b16 %v5906
        %v6054 = vunpack.c.l.b16 %v5907
        %v6055 = vunpack.c.h.b16 %v5907
        %v6056 = vunpack.c.l.b16 %v5908
        %v6057 = vunpack.c.h.b16 %v5908
        %v6058 = vunpack.c.l.b16 %v5909
        %v6059 = vunpack.c.h.b16 %v5909
        %v6060 = vunpack.c.l.b16 %v5910
        %v6061 = vunpack.c.h.b16 %v5910
        %v6062 = vunpack.c.l.b16 %v5911
        %v6063 = vunpack.c.h.b16 %v5911
        %v6064 = vunpack.c.l.b16 %v5912
        %v6065 = vunpack.c.h.b16 %v5912
        %v6066 = vunpack.c.l.b16 %v5913
        %v6067 = vunpack.c.h.b16 %v5913
        %v6068 = vunpack.c.l.b16 %v5914
        %v6069 = vunpack.c.h.b16 %v5914
        %v6070 = vunpack.c.l.b16 %v5915
        %v6071 = vunpack.c.h.b16 %v5915
        %v6072 = vunpack.c.l.b16 %v5916
        %v6073 = vunpack.c.h.b16 %v5916
        %v6074 = vunpack.c.l.b16 %v5917
        %v6075 = vunpack.c.h.b16 %v5917
        %v6076 = vunpack.c.l.b16 %v5918
        %v6077 = vunpack.c.h.b16 %v5918
        %v6078 = vunpack.c.l.b16 %v5919
        %v6079 = vunpack.c.h.b16 %v5919
        %v6080 = vunpack.c.l.b16 %v5920
        %v6081 = vunpack.c.h.b16 %v5920
        %v6082 = vunpack.c.l.b16 %v5921
        %v6083 = vunpack.c.h.b16 %v5921
        %v6084 = vunpack.c.l.b16 %v5922
        %v6085 = vunpack.c.h.b16 %v5922
        %v6086 = vunpack.c.l.b16 %v5923
        %v6087 = vunpack.c.h.b16 %v5923
        %v6088 = vunpack.c.l.b16 %v5924
        %v6089 = vunpack.c.h.b16 %v5924
        %v6090 = vunpack.c.l.b16 %v5925
        %v6091 = vunpack.c.h.b16 %v5925
        %v6092 = vunpack.c.l.b16 %v5926
        %v6093 = vunpack.c.h.b16 %v5926
        %v6094 = vpack.c.b16 %v6024, %v6022
        %v6095 = vpack.c.b16 %v6025, %v6023
        %v6096 = vpack.c.b16 %v6028, %v6026
        %v6097 = vpack.c.b16 %v6029, %v6027
        %v6098 = vpack.c.b16 %v6032, %v6030
        %v6099 = vpack.c.b16 %v6033, %v6031
        %v6100 = vpack.c.b16 %v6036, %v6034
        %v6101 = vpack.c.b16 %v6037, %v6035
        %v6102 = vpack.c.b16 %v6040, %v6038
        %v6103 = vpack.c.b16 %v6041, %v6039
        %v6104 = vpack.c.b16 %v6044, %v6042
        %v6105 = vpack.c.b16 %v6045, %v6043
        %v6106 = vpack.c.b16 %v6048, %v6046
        %v6107 = vpack.c.b16 %v6049, %v6047
        %v6108 = vpack.c.b16 %v6052, %v6050
        %v6109 = vpack.c.b16 %v6053, %v6051
        %v6110 = vpack.c.b16 %v6056, %v6054
        %v6111 = vpack.c.b16 %v6057, %v6055
        %v6112 = vpack.c.b16 %v6060, %v6058
        %v6113 = vpack.c.b16 %v6061, %v6059
        %v6114 = vpack.c.b16 %v6064, %v6062
        %v6115 = vpack.c.b16 %v6065, %v6063
        %v6116 = vpack.c.b16 %v6068, %v6066
        %v6117 = vpack.c.b16 %v6069, %v6067
        %v6118 = vpack.c.b16 %v6072, %v6070
        %v6119 = vpack.c.b16 %v6073, %v6071
        %v6120 = vpack.c.b16 %v6076, %v6074
        %v6121 = vpack.c.b16 %v6077, %v6075
        %v6122 = vpack.c.b16 %v6080, %v6078
        %v6123 = vpack.c.b16 %v6081, %v6079
        %v6124 = vpack.c.b16 %v6084, %v6082
        %v6125 = vpack.c.b16 %v6085, %v6083
        %v6126 = vpack.c.b16 %v6088, %v6086
        %v6127 = vpack.c.b16 %v6089, %v6087
        %v6128 = vpack.c.b16 %v6092, %v6090
        %v6129 = vpack.c.b16 %v6093, %v6091
        %v6167 = vsel %vm704, %v5983, 0
        %6169 = vmatprep.subr.bf16.mxu0 %v6095
        %6170 = vmatpush1.bf16.msra.mxu0 %v6094
        %6171 = vmatprep.subr.bf16.mxu0 %v6097
        %6172 = vmatpush1.bf16.msra.mxu0 %v6096
        %6173 = vmatprep.subr.bf16.mxu0 %v6099
        %6174 = vmatpush1.bf16.msra.mxu0 %v6098
        %6175 = vmatprep.subr.bf16.mxu0 %v6101
        %6176 = vmatpush1.bf16.msra.mxu0 %v6100
        %6177 = vmatprep.subr.bf16.mxu0 %v6103
        %6178 = vmatpush1.bf16.msra.mxu0 %v6102
        %6179 = vmatprep.subr.bf16.mxu0 %v6105
        %6180 = vmatpush1.bf16.msra.mxu0 %v6104
        %6181 = vmatprep.subr.bf16.mxu0 %v6107
        %6182 = vmatpush1.bf16.msra.mxu0 %v6106
        %6183 = vmatprep.subr.bf16.mxu0 %v6109
        %6184 = vmatpush1.bf16.msra.mxu0 %v6108
        %6185 = vmatprep.subr.bf16.mxu0 %v6111
        %6186 = vmatpush1.bf16.msra.mxu0 %v6110
        %6187 = vmatprep.subr.bf16.mxu0 %v6113
        %6188 = vmatpush1.bf16.msra.mxu0 %v6112
        %6189 = vmatprep.subr.bf16.mxu0 %v6115
        %6190 = vmatpush1.bf16.msra.mxu0 %v6114
        %6191 = vmatprep.subr.bf16.mxu0 %v6117
        %6192 = vmatpush1.bf16.msra.mxu0 %v6116
        %6193 = vmatprep.subr.bf16.mxu0 %v6119
        %6194 = vmatpush1.bf16.msra.mxu0 %v6118
        %6195 = vmatprep.subr.bf16.mxu0 %v6121
        %6196 = vmatpush1.bf16.msra.mxu0 %v6120
        %6197 = vmatprep.subr.bf16.mxu0 %v6123
        %6198 = vmatpush1.bf16.msra.mxu0 %v6122
        %6199 = vmatprep.subr.bf16.mxu0 %v6125
        %6200 = vmatpush1.bf16.msra.mxu0 %v6124
        %6201 = vmatprep.mubr.bf16.mxu0 %v5971
        %6202 = vmatmul.mubr.bf16.gmra.mrb[0].mxu0 %v5959
        %v6203 = vpop.f32.mrb[0].mxu0
        %v6204 = vadd.f32 0.0, %v6203
        %v6205 = vpop.f32.mrb[0].mxu0
        %v6206 = vadd.f32 0.0, %v6205
        %v6207 = vpop.f32.mrb[0].mxu0
        %v6208 = vadd.f32 0.0, %v6207
        %v6209 = vpop.f32.mrb[0].mxu0
        %v6210 = vadd.f32 0.0, %v6209
        %6211 = vdwg.mxu0
        %6212 = vmatprep.subr.bf16.mxu0 %v6127
        %6213 = vmatpush1.bf16.msra.mxu0 %v6126
        %6214 = vmatprep.subr.bf16.mxu0 %v6129
        %6215 = vmatpush1.bf16.msra.mxu0 %v6128
        %6216 = vmatprep.subr.bf16.mxu0 0
        %6217 = vmatpush1.bf16.msra.mxu0 0
        %6218 = vmatprep.subr.bf16.mxu0 0
        %6219 = vmatpush1.bf16.msra.mxu0 0
        %6220 = vmatprep.subr.bf16.mxu0 0
        %6221 = vmatpush1.bf16.msra.mxu0 0
        %6222 = vmatprep.subr.bf16.mxu0 0
        %6223 = vmatpush1.bf16.msra.mxu0 0
        %6224 = vmatprep.subr.bf16.mxu0 0
        %6225 = vmatpush1.bf16.msra.mxu0 0
        %6226 = vmatprep.subr.bf16.mxu0 0
        %6227 = vmatpush1.bf16.msra.mxu0 0
        %6228 = vmatprep.subr.bf16.mxu0 0
        %6229 = vmatpush1.bf16.msra.mxu0 0
        %6230 = vmatprep.subr.bf16.mxu0 0
        %6231 = vmatpush1.bf16.msra.mxu0 0
        %6232 = vmatprep.subr.bf16.mxu0 0
        %6233 = vmatpush1.bf16.msra.mxu0 0
        %6234 = vmatprep.subr.bf16.mxu0 0
        %6235 = vmatpush1.bf16.msra.mxu0 0
        %6236 = vmatprep.subr.bf16.mxu0 0
        %6237 = vmatpush1.bf16.msra.mxu0 0
        %6238 = vmatprep.subr.bf16.mxu0 0
        %6239 = vmatpush1.bf16.msra.mxu0 0
        %6240 = vmatprep.subr.bf16.mxu0 0
        %6241 = vmatpush1.bf16.msra.mxu0 0
        %6242 = vmatprep.subr.bf16.mxu0 0
        %6243 = vmatpush1.bf16.msra.mxu0 0
        %6244 = vmatprep.mubr.bf16.mxu0 0
        %6245 = vmatmul.mubr.bf16.gmra.mrb[0].mxu0 %v6167
        %v6246 = vpop.f32.mrb[0].mxu0
        %v6247 = vadd.f32 %v6204, %v6246
        %v6248 = vpop.f32.mrb[0].mxu0
        %v6249 = vadd.f32 %v6206, %v6248
        %v6250 = vpop.f32.mrb[0].mxu0
        %v6251 = vadd.f32 %v6208, %v6250
        %v6252 = vpop.f32.mrb[0].mxu0
        %v6253 = vadd.f32 %v6210, %v6252
        %6254 = vdwg.mxu0
        %v6293 = vunpack.c.l.b16 %v5852
        %v6294 = vunpack.c.h.b16 %v5852
        %v6295 = vunpack.c.l.b16 %v5853
        %v6296 = vunpack.c.h.b16 %v5853
        %v6297 = vunpack.c.l.b16 %v5854
        %v6298 = vunpack.c.h.b16 %v5854
        %v6299 = vunpack.c.l.b16 %v5855
        %v6300 = vunpack.c.h.b16 %v5855
        %v6301 = vunpack.c.l.b16 %v5856
        %v6302 = vunpack.c.h.b16 %v5856
        %v6303 = vunpack.c.l.b16 %v5857
        %v6304 = vunpack.c.h.b16 %v5857
        %v6305 = vunpack.c.l.b16 %v5858
        %v6306 = vunpack.c.h.b16 %v5858
        %v6307 = vunpack.c.l.b16 %v5859
        %v6308 = vunpack.c.h.b16 %v5859
        %v6309 = vunpack.c.l.b16 %v5860
        %v6310 = vunpack.c.h.b16 %v5860
        %v6311 = vunpack.c.l.b16 %v5861
        %v6312 = vunpack.c.h.b16 %v5861
        %v6313 = vunpack.c.l.b16 %v5862
        %v6314 = vunpack.c.h.b16 %v5862
        %v6315 = vunpack.c.l.b16 %v5863
        %v6316 = vunpack.c.h.b16 %v5863
        %v6317 = vunpack.c.l.b16 %v5864
        %v6318 = vunpack.c.h.b16 %v5864
        %v6319 = vunpack.c.l.b16 %v5865
        %v6320 = vunpack.c.h.b16 %v5865
        %v6321 = vunpack.c.l.b16 %v5866
        %v6322 = vunpack.c.h.b16 %v5866
        %v6323 = vunpack.c.l.b16 %v5867
        %v6324 = vunpack.c.h.b16 %v5867
        %v6325 = vunpack.c.l.b16 %v5868
        %v6326 = vunpack.c.h.b16 %v5868
        %v6327 = vunpack.c.l.b16 %v5869
        %v6328 = vunpack.c.h.b16 %v5869
        %v6329 = vunpack.c.l.b16 %v5870
        %v6330 = vunpack.c.h.b16 %v5870
        %v6331 = vunpack.c.l.b16 %v5871
        %v6332 = vunpack.c.h.b16 %v5871
        %v6333 = vunpack.c.l.b16 %v5872
        %v6334 = vunpack.c.h.b16 %v5872
        %v6335 = vunpack.c.l.b16 %v5873
        %v6336 = vunpack.c.h.b16 %v5873
        %v6337 = vunpack.c.l.b16 %v5874
        %v6338 = vunpack.c.h.b16 %v5874
        %v6339 = vunpack.c.l.b16 %v5875
        %v6340 = vunpack.c.h.b16 %v5875
        %v6341 = vunpack.c.l.b16 %v5876
        %v6342 = vunpack.c.h.b16 %v5876
        %v6343 = vunpack.c.l.b16 %v5877
        %v6344 = vunpack.c.h.b16 %v5877
        %v6345 = vunpack.c.l.b16 %v5878
        %v6346 = vunpack.c.h.b16 %v5878
        %v6347 = vunpack.c.l.b16 %v5879
        %v6348 = vunpack.c.h.b16 %v5879
        %v6349 = vunpack.c.l.b16 %v5880
        %v6350 = vunpack.c.h.b16 %v5880
        %v6351 = vunpack.c.l.b16 %v5881
        %v6352 = vunpack.c.h.b16 %v5881
        %v6353 = vunpack.c.l.b16 %v5882
        %v6354 = vunpack.c.h.b16 %v5882
        %v6355 = vunpack.c.l.b16 %v5883
        %v6356 = vunpack.c.h.b16 %v5883
        %v6357 = vunpack.c.l.b16 %v5884
        %v6358 = vunpack.c.h.b16 %v5884
        %v6359 = vunpack.c.l.b16 %v5885
        %v6360 = vunpack.c.h.b16 %v5885
        %v6361 = vunpack.c.l.b16 %v5886
        %v6362 = vunpack.c.h.b16 %v5886
        %v6363 = vunpack.c.l.b16 %v5887
        %v6364 = vunpack.c.h.b16 %v5887
        %v6365 = vpack.c.b16 %v6295, %v6293
        %v6366 = vpack.c.b16 %v6296, %v6294
        %v6367 = vpack.c.b16 %v6299, %v6297
        %v6368 = vpack.c.b16 %v6300, %v6298
        %v6369 = vpack.c.b16 %v6303, %v6301
        %v6370 = vpack.c.b16 %v6304, %v6302
        %v6371 = vpack.c.b16 %v6307, %v6305
        %v6372 = vpack.c.b16 %v6308, %v6306
        %v6373 = vpack.c.b16 %v6311, %v6309
        %v6374 = vpack.c.b16 %v6312, %v6310
        %v6375 = vpack.c.b16 %v6315, %v6313
        %v6376 = vpack.c.b16 %v6316, %v6314
        %v6377 = vpack.c.b16 %v6319, %v6317
        %v6378 = vpack.c.b16 %v6320, %v6318
        %v6379 = vpack.c.b16 %v6323, %v6321
        %v6380 = vpack.c.b16 %v6324, %v6322
        %v6381 = vpack.c.b16 %v6327, %v6325
        %v6382 = vpack.c.b16 %v6328, %v6326
        %v6383 = vpack.c.b16 %v6331, %v6329
        %v6384 = vpack.c.b16 %v6332, %v6330
        %v6385 = vpack.c.b16 %v6335, %v6333
        %v6386 = vpack.c.b16 %v6336, %v6334
        %v6387 = vpack.c.b16 %v6339, %v6337
        %v6388 = vpack.c.b16 %v6340, %v6338
        %v6389 = vpack.c.b16 %v6343, %v6341
        %v6390 = vpack.c.b16 %v6344, %v6342
        %v6391 = vpack.c.b16 %v6347, %v6345
        %v6392 = vpack.c.b16 %v6348, %v6346
        %v6393 = vpack.c.b16 %v6351, %v6349
        %v6394 = vpack.c.b16 %v6352, %v6350
        %v6395 = vpack.c.b16 %v6355, %v6353
        %v6396 = vpack.c.b16 %v6356, %v6354
        %v6397 = vpack.c.b16 %v6359, %v6357
        %v6398 = vpack.c.b16 %v6360, %v6358
        %v6399 = vpack.c.b16 %v6363, %v6361
        %v6400 = vpack.c.b16 %v6364, %v6362
        %v6437 = vsel %vm704, %v5944, 0
        %6439 = vmatprep.subr.bf16.mxu0 %v6366
        %6440 = vmatpush1.bf16.msra.mxu0 %v6365
        %6441 = vmatprep.subr.bf16.mxu0 %v6368
        %6442 = vmatpush1.bf16.msra.mxu0 %v6367
        %6443 = vmatprep.subr.bf16.mxu0 %v6370
        %6444 = vmatpush1.bf16.msra.mxu0 %v6369
        %6445 = vmatprep.subr.bf16.mxu0 %v6372
        %6446 = vmatpush1.bf16.msra.mxu0 %v6371
        %6447 = vmatprep.subr.bf16.mxu0 %v6374
        %6448 = vmatpush1.bf16.msra.mxu0 %v6373
        %6449 = vmatprep.subr.bf16.mxu0 %v6376
        %6450 = vmatpush1.bf16.msra.mxu0 %v6375
        %6451 = vmatprep.subr.bf16.mxu0 %v6378
        %6452 = vmatpush1.bf16.msra.mxu0 %v6377
        %6453 = vmatprep.subr.bf16.mxu0 %v6380
        %6454 = vmatpush1.bf16.msra.mxu0 %v6379
        %6455 = vmatprep.subr.bf16.mxu0 %v6382
        %6456 = vmatpush1.bf16.msra.mxu0 %v6381
        %6457 = vmatprep.subr.bf16.mxu0 %v6384
        %6458 = vmatpush1.bf16.msra.mxu0 %v6383
        %6459 = vmatprep.subr.bf16.mxu0 %v6386
        %6460 = vmatpush1.bf16.msra.mxu0 %v6385
        %6461 = vmatprep.subr.bf16.mxu0 %v6388
        %6462 = vmatpush1.bf16.msra.mxu0 %v6387
        %6463 = vmatprep.subr.bf16.mxu0 %v6390
        %6464 = vmatpush1.bf16.msra.mxu0 %v6389
        %6465 = vmatprep.subr.bf16.mxu0 %v6392
        %6466 = vmatpush1.bf16.msra.mxu0 %v6391
        %6467 = vmatprep.subr.bf16.mxu0 %v6394
        %6468 = vmatpush1.bf16.msra.mxu0 %v6393
        %6469 = vmatprep.subr.bf16.mxu0 %v6396
        %6470 = vmatpush1.bf16.msra.mxu0 %v6395
        %6471 = vmatprep.mubr.bf16.mxu0 %v5943
        %6472 = vmatmul.mubr.bf16.gmra.mrb[0].mxu0 %v5942
        %v6473 = vpop.f32.mrb[0].mxu0
        %v6474 = vadd.f32 %v6247, %v6473
        %v6475 = vpop.f32.mrb[0].mxu0
        %v6476 = vadd.f32 %v6249, %v6475
        %v6477 = vpop.f32.mrb[0].mxu0
        %v6478 = vadd.f32 %v6251, %v6477
        %v6479 = vpop.f32.mrb[0].mxu0
        %v6480 = vadd.f32 %v6253, %v6479
        %6481 = vdwg.mxu0
        %6482 = vmatprep.subr.bf16.mxu0 %v6398
        %6483 = vmatpush1.bf16.msra.mxu0 %v6397
        %6484 = vmatprep.subr.bf16.mxu0 %v6400
        %6485 = vmatpush1.bf16.msra.mxu0 %v6399
        %6486 = vmatprep.subr.bf16.mxu0 0
        %6487 = vmatpush1.bf16.msra.mxu0 0
        %6488 = vmatprep.subr.bf16.mxu0 0
        %6489 = vmatpush1.bf16.msra.mxu0 0
        %6490 = vmatprep.subr.bf16.mxu0 0
        %6491 = vmatpush1.bf16.msra.mxu0 0
        %6492 = vmatprep.subr.bf16.mxu0 0
        %6493 = vmatpush1.bf16.msra.mxu0 0
        %6494 = vmatprep.subr.bf16.mxu0 0
        %6495 = vmatpush1.bf16.msra.mxu0 0
        %6496 = vmatprep.subr.bf16.mxu0 0
        %6497 = vmatpush1.bf16.msra.mxu0 0
        %6498 = vmatprep.subr.bf16.mxu0 0
        %6499 = vmatpush1.bf16.msra.mxu0 0
        %6500 = vmatprep.subr.bf16.mxu0 0
        %6501 = vmatpush1.bf16.msra.mxu0 0
        %6502 = vmatprep.subr.bf16.mxu0 0
        %6503 = vmatpush1.bf16.msra.mxu0 0
        %6504 = vmatprep.subr.bf16.mxu0 0
        %6505 = vmatpush1.bf16.msra.mxu0 0
        %6506 = vmatprep.subr.bf16.mxu0 0
        %6507 = vmatpush1.bf16.msra.mxu0 0
        %6508 = vmatprep.subr.bf16.mxu0 0
        %6509 = vmatpush1.bf16.msra.mxu0 0
        %6510 = vmatprep.subr.bf16.mxu0 0
        %6511 = vmatpush1.bf16.msra.mxu0 0
        %6512 = vmatprep.subr.bf16.mxu0 0
        %6513 = vmatpush1.bf16.msra.mxu0 0
        %6514 = vmatprep.mubr.bf16.mxu0 0
        %6515 = vmatmul.mubr.bf16.gmra.mrb[0].mxu0 %v6437
        %v6516 = vpop.f32.mrb[0].mxu0
        %v6517 = vadd.f32 %v6474, %v6516
        %v6518 = vpop.f32.mrb[0].mxu0
        %v6519 = vadd.f32 %v6476, %v6518
        %v6520 = vpop.f32.mrb[0].mxu0
        %v6521 = vadd.f32 %v6478, %v6520
        %v6522 = vpop.f32.mrb[0].mxu0
        %v6523 = vadd.f32 %v6480, %v6522
        %6524 = vdwg.mxu0
        %v6525 = vld [vmem:[#allocation4] sm:$0xee]
        %v6526 = vld [vmem:[#allocation4 + $0x8] sm:$0xe]
        %s6527 = scalar_lea.vmem [#allocation11], 576
        %v6528 = vld [vmem:[%s6527] sm:$0xff]
        %v6529 = vld [vmem:[%s6527 + $0x8] sm:$0xff]
        %v6530 = vld [vmem:[%s6527 + $0x10] sm:$0xff]
        %v6531 = vld [vmem:[%s6527 + $0x18] sm:$0xff]
        %v6532 = vld [vmem:[%s6527 + $0x20] sm:$0xff]
        %v6533 = vld [vmem:[%s6527 + $0x28] sm:$0xff]
        %v6534 = vld [vmem:[%s6527 + $0x30] sm:$0xff]
        %v6535 = vld [vmem:[%s6527 + $0x38] sm:$0xff]
        %v6536 = vld [vmem:[%s6527 + $0x40] sm:$0xff]
        %v6537 = vld [vmem:[%s6527 + $0x48] sm:$0xff]
        %v6538 = vld [vmem:[%s6527 + $0x50] sm:$0xff]
        %v6539 = vld [vmem:[%s6527 + $0x58] sm:$0xff]
        %v6540 = vld [vmem:[%s6527 + $0x60] sm:$0xff]
        %v6541 = vld [vmem:[%s6527 + $0x68] sm:$0xff]
        %v6542 = vld [vmem:[%s6527 + $0x70] sm:$0xff]
        %v6543 = vld [vmem:[%s6527 + $0x78] sm:$0xff]
        %v6544 = vld [vmem:[%s6527 + $0x80] sm:$0xff]
        %v6545 = vld [vmem:[%s6527 + $0x88] sm:$0xff]
        %v6546 = vld [vmem:[%s6527 + $0x90] sm:$0xff]
        %v6547 = vld [vmem:[%s6527 + $0x98] sm:$0xff]
        %v6548 = vld [vmem:[%s6527 + $0xa0] sm:$0xff]
        %v6549 = vld [vmem:[%s6527 + $0xa8] sm:$0xff]
        %v6550 = vld [vmem:[%s6527 + $0xb0] sm:$0xff]
        %v6551 = vld [vmem:[%s6527 + $0xb8] sm:$0xff]
        %v6552 = vld [vmem:[%s6527 + $0xc0] sm:$0xff]
        %v6553 = vld [vmem:[%s6527 + $0xc8] sm:$0xff]
        %v6554 = vld [vmem:[%s6527 + $0xd0] sm:$0xff]
        %v6555 = vld [vmem:[%s6527 + $0xd8] sm:$0xff]
        %v6556 = vld [vmem:[%s6527 + $0xe0] sm:$0xff]
        %v6557 = vld [vmem:[%s6527 + $0xe8] sm:$0xff]
        %v6558 = vld [vmem:[%s6527 + $0xf0] sm:$0xff]
        %v6559 = vld [vmem:[%s6527 + $0xf8] sm:$0xff]
        %v6560 = vld [vmem:[%s6527 + $0x100] sm:$0xff]
        %v6561 = vld [vmem:[%s6527 + $0x108] sm:$0xff]
        %v6562 = vld [vmem:[%s6527 + $0x110] sm:$0xff]
        %v6563 = vld [vmem:[%s6527 + $0x118] sm:$0xff]
        %v6566 = vunpack.c.l.b16 %v6525
        %v6567 = vunpack.c.h.b16 %v6525
        %v6568 = vunpack.c.l.b16 %v6526
        %v6569 = vpack.c.b16 %v5936, %v6566
        %v6570 = vpack.c.b16 %v5937, %v6567
        %v6571 = vpack.c.b16 %v5938, %v6568
        %v6572 = vrot.slane %v6569, 1
        %v6573 = vrot.slane %v5945, 1
        %v6574 = vsel %vm3403, %v6572, %v6573
        %v6575 = vrot.slane %v6570, 1
        %v6576 = vrot.slane %v5946, 1
        %v6577 = vsel %vm3403, %v6575, %v6576
        %v6578 = vrot.slane %v6571, 1
        %v6579 = vrot.slane %v5947, 1
        %v6580 = vsel %vm3403, %v6578, %v6579
        %v6619 = vunpack.c.l.b16 %v6528
        %v6620 = vunpack.c.h.b16 %v6528
        %v6621 = vunpack.c.l.b16 %v6529
        %v6622 = vunpack.c.h.b16 %v6529
        %v6623 = vunpack.c.l.b16 %v6530
        %v6624 = vunpack.c.h.b16 %v6530
        %v6625 = vunpack.c.l.b16 %v6531
        %v6626 = vunpack.c.h.b16 %v6531
        %v6627 = vunpack.c.l.b16 %v6532
        %v6628 = vunpack.c.h.b16 %v6532
        %v6629 = vunpack.c.l.b16 %v6533
        %v6630 = vunpack.c.h.b16 %v6533
        %v6631 = vunpack.c.l.b16 %v6534
        %v6632 = vunpack.c.h.b16 %v6534
        %v6633 = vunpack.c.l.b16 %v6535
        %v6634 = vunpack.c.h.b16 %v6535
        %v6635 = vunpack.c.l.b16 %v6536
        %v6636 = vunpack.c.h.b16 %v6536
        %v6637 = vunpack.c.l.b16 %v6537
        %v6638 = vunpack.c.h.b16 %v6537
        %v6639 = vunpack.c.l.b16 %v6538
        %v6640 = vunpack.c.h.b16 %v6538
        %v6641 = vunpack.c.l.b16 %v6539
        %v6642 = vunpack.c.h.b16 %v6539
        %v6643 = vunpack.c.l.b16 %v6540
        %v6644 = vunpack.c.h.b16 %v6540
        %v6645 = vunpack.c.l.b16 %v6541
        %v6646 = vunpack.c.h.b16 %v6541
        %v6647 = vunpack.c.l.b16 %v6542
        %v6648 = vunpack.c.h.b16 %v6542
        %v6649 = vunpack.c.l.b16 %v6543
        %v6650 = vunpack.c.h.b16 %v6543
        %v6651 = vunpack.c.l.b16 %v6544
        %v6652 = vunpack.c.h.b16 %v6544
        %v6653 = vunpack.c.l.b16 %v6545
        %v6654 = vunpack.c.h.b16 %v6545
        %v6655 = vunpack.c.l.b16 %v6546
        %v6656 = vunpack.c.h.b16 %v6546
        %v6657 = vunpack.c.l.b16 %v6547
        %v6658 = vunpack.c.h.b16 %v6547
        %v6659 = vunpack.c.l.b16 %v6548
        %v6660 = vunpack.c.h.b16 %v6548
        %v6661 = vunpack.c.l.b16 %v6549
        %v6662 = vunpack.c.h.b16 %v6549
        %v6663 = vunpack.c.l.b16 %v6550
        %v6664 = vunpack.c.h.b16 %v6550
        %v6665 = vunpack.c.l.b16 %v6551
        %v6666 = vunpack.c.h.b16 %v6551
        %v6667 = vunpack.c.l.b16 %v6552
        %v6668 = vunpack.c.h.b16 %v6552
        %v6669 = vunpack.c.l.b16 %v6553
        %v6670 = vunpack.c.h.b16 %v6553
        %v6671 = vunpack.c.l.b16 %v6554
        %v6672 = vunpack.c.h.b16 %v6554
        %v6673 = vunpack.c.l.b16 %v6555
        %v6674 = vunpack.c.h.b16 %v6555
        %v6675 = vunpack.c.l.b16 %v6556
        %v6676 = vunpack.c.h.b16 %v6556
        %v6677 = vunpack.c.l.b16 %v6557
        %v6678 = vunpack.c.h.b16 %v6557
        %v6679 = vunpack.c.l.b16 %v6558
        %v6680 = vunpack.c.h.b16 %v6558
        %v6681 = vunpack.c.l.b16 %v6559
        %v6682 = vunpack.c.h.b16 %v6559
        %v6683 = vunpack.c.l.b16 %v6560
        %v6684 = vunpack.c.h.b16 %v6560
        %v6685 = vunpack.c.l.b16 %v6561
        %v6686 = vunpack.c.h.b16 %v6561
        %v6687 = vunpack.c.l.b16 %v6562
        %v6688 = vunpack.c.h.b16 %v6562
        %v6689 = vunpack.c.l.b16 %v6563
        %v6690 = vunpack.c.h.b16 %v6563
        %v6691 = vpack.c.b16 %v6621, %v6619
        %v6692 = vpack.c.b16 %v6622, %v6620
        %v6693 = vpack.c.b16 %v6625, %v6623
        %v6694 = vpack.c.b16 %v6626, %v6624
        %v6695 = vpack.c.b16 %v6629, %v6627
        %v6696 = vpack.c.b16 %v6630, %v6628
        %v6697 = vpack.c.b16 %v6633, %v6631
        %v6698 = vpack.c.b16 %v6634, %v6632
        %v6699 = vpack.c.b16 %v6637, %v6635
        %v6700 = vpack.c.b16 %v6638, %v6636
        %v6701 = vpack.c.b16 %v6641, %v6639
        %v6702 = vpack.c.b16 %v6642, %v6640
        %v6703 = vpack.c.b16 %v6645, %v6643
        %v6704 = vpack.c.b16 %v6646, %v6644
        %v6705 = vpack.c.b16 %v6649, %v6647
        %v6706 = vpack.c.b16 %v6650, %v6648
        %v6707 = vpack.c.b16 %v6653, %v6651
        %v6708 = vpack.c.b16 %v6654, %v6652
        %v6709 = vpack.c.b16 %v6657, %v6655
        %v6710 = vpack.c.b16 %v6658, %v6656
        %v6711 = vpack.c.b16 %v6661, %v6659
        %v6712 = vpack.c.b16 %v6662, %v6660
        %v6713 = vpack.c.b16 %v6665, %v6663
        %v6714 = vpack.c.b16 %v6666, %v6664
        %v6715 = vpack.c.b16 %v6669, %v6667
        %v6716 = vpack.c.b16 %v6670, %v6668
        %v6717 = vpack.c.b16 %v6673, %v6671
        %v6718 = vpack.c.b16 %v6674, %v6672
        %v6719 = vpack.c.b16 %v6677, %v6675
        %v6720 = vpack.c.b16 %v6678, %v6676
        %v6721 = vpack.c.b16 %v6681, %v6679
        %v6722 = vpack.c.b16 %v6682, %v6680
        %v6723 = vpack.c.b16 %v6685, %v6683
        %v6724 = vpack.c.b16 %v6686, %v6684
        %v6725 = vpack.c.b16 %v6689, %v6687
        %v6726 = vpack.c.b16 %v6690, %v6688
        %v6764 = vsel %vm704, %v6580, 0
        %6766 = vmatprep.subr.bf16.mxu0 %v6692
        %6767 = vmatpush1.bf16.msra.mxu0 %v6691
        %6768 = vmatprep.subr.bf16.mxu0 %v6694
        %6769 = vmatpush1.bf16.msra.mxu0 %v6693
        %6770 = vmatprep.subr.bf16.mxu0 %v6696
        %6771 = vmatpush1.bf16.msra.mxu0 %v6695
        %6772 = vmatprep.subr.bf16.mxu0 %v6698
        %6773 = vmatpush1.bf16.msra.mxu0 %v6697
        %6774 = vmatprep.subr.bf16.mxu0 %v6700
        %6775 = vmatpush1.bf16.msra.mxu0 %v6699
        %6776 = vmatprep.subr.bf16.mxu0 %v6702
        %6777 = vmatpush1.bf16.msra.mxu0 %v6701
        %6778 = vmatprep.subr.bf16.mxu0 %v6704
        %6779 = vmatpush1.bf16.msra.mxu0 %v6703
        %6780 = vmatprep.subr.bf16.mxu0 %v6706
        %6781 = vmatpush1.bf16.msra.mxu0 %v6705
        %6782 = vmatprep.subr.bf16.mxu0 %v6708
        %6783 = vmatpush1.bf16.msra.mxu0 %v6707
        %6784 = vmatprep.subr.bf16.mxu0 %v6710
        %6785 = vmatpush1.bf16.msra.mxu0 %v6709
        %6786 = vmatprep.subr.bf16.mxu0 %v6712
        %6787 = vmatpush1.bf16.msra.mxu0 %v6711
        %6788 = vmatprep.subr.bf16.mxu0 %v6714
        %6789 = vmatpush1.bf16.msra.mxu0 %v6713
        %6790 = vmatprep.subr.bf16.mxu0 %v6716
        %6791 = vmatpush1.bf16.msra.mxu0 %v6715
        %6792 = vmatprep.subr.bf16.mxu0 %v6718
        %6793 = vmatpush1.bf16.msra.mxu0 %v6717
        %6794 = vmatprep.subr.bf16.mxu0 %v6720
        %6795 = vmatpush1.bf16.msra.mxu0 %v6719
        %6796 = vmatprep.subr.bf16.mxu0 %v6722
        %6797 = vmatpush1.bf16.msra.mxu0 %v6721
        %6798 = vmatprep.mubr.bf16.mxu0 %v6577
        %6799 = vmatmul.mubr.bf16.gmra.mrb[0].mxu0 %v6574
        %v6800 = vpop.f32.mrb[0].mxu0
        %v6801 = vadd.f32 0.0, %v6800
        %v6802 = vpop.f32.mrb[0].mxu0
        %v6803 = vadd.f32 0.0, %v6802
        %v6804 = vpop.f32.mrb[0].mxu0
        %v6805 = vadd.f32 0.0, %v6804
        %v6806 = vpop.f32.mrb[0].mxu0
        %v6807 = vadd.f32 0.0, %v6806
        %6808 = vdwg.mxu0
        %6809 = vmatprep.subr.bf16.mxu0 %v6724
        %6810 = vmatpush1.bf16.msra.mxu0 %v6723
        %6811 = vmatprep.subr.bf16.mxu0 %v6726
        %6812 = vmatpush1.bf16.msra.mxu0 %v6725
        %6813 = vmatprep.subr.bf16.mxu0 0
        %6814 = vmatpush1.bf16.msra.mxu0 0
        %6815 = vmatprep.subr.bf16.mxu0 0
        %6816 = vmatpush1.bf16.msra.mxu0 0
        %6817 = vmatprep.subr.bf16.mxu0 0
        %6818 = vmatpush1.bf16.msra.mxu0 0
        %6819 = vmatprep.subr.bf16.mxu0 0
        %6820 = vmatpush1.bf16.msra.mxu0 0
        %6821 = vmatprep.subr.bf16.mxu0 0
        %6822 = vmatpush1.bf16.msra.mxu0 0
        %6823 = vmatprep.subr.bf16.mxu0 0
        %6824 = vmatpush1.bf16.msra.mxu0 0
        %6825 = vmatprep.subr.bf16.mxu0 0
        %6826 = vmatpush1.bf16.msra.mxu0 0
        %6827 = vmatprep.subr.bf16.mxu0 0
        %6828 = vmatpush1.bf16.msra.mxu0 0
        %6829 = vmatprep.subr.bf16.mxu0 0
        %6830 = vmatpush1.bf16.msra.mxu0 0
        %6831 = vmatprep.subr.bf16.mxu0 0
        %6832 = vmatpush1.bf16.msra.mxu0 0
        %6833 = vmatprep.subr.bf16.mxu0 0
        %6834 = vmatpush1.bf16.msra.mxu0 0
        %6835 = vmatprep.subr.bf16.mxu0 0
        %6836 = vmatpush1.bf16.msra.mxu0 0
        %6837 = vmatprep.subr.bf16.mxu0 0
        %6838 = vmatpush1.bf16.msra.mxu0 0
        %6839 = vmatprep.subr.bf16.mxu0 0
        %6840 = vmatpush1.bf16.msra.mxu0 0
        %6841 = vmatprep.mubr.bf16.mxu0 0
        %6842 = vmatmul.mubr.bf16.gmra.mrb[0].mxu0 %v6764
        %v6843 = vpop.f32.mrb[0].mxu0
        %v6844 = vadd.f32 %v6801, %v6843
        %v6845 = vpop.f32.mrb[0].mxu0
        %v6846 = vadd.f32 %v6803, %v6845
        %v6847 = vpop.f32.mrb[0].mxu0
        %v6848 = vadd.f32 %v6805, %v6847
        %v6849 = vpop.f32.mrb[0].mxu0
        %v6850 = vadd.f32 %v6807, %v6849
        %6851 = vdwg.mxu0
        %v6852 = vadd.f32 %v6517, %v6844
        %v6853 = vadd.f32 %v6519, %v6846
        %v6854 = vadd.f32 %v6521, %v6848
        %v6855 = vadd.f32 %v6523, %v6850
        %v6856 = vld [vmem:[%s12] sm:$0x3]
        %v6858 = vlaneseq
        %v6859 = vshrl.u32 %v6858, 7
        %v6860 = vsub.s32 0, %v6859
        %v6861 = vrot.slane %v6856, %v6860
        %v6862 = vlaneseq
        %v6863 = vshrl.u32 %v6862, 7
        %v6864 = vsub.s32 1, %v6863
        %v6865 = vrot.slane %v6856, %v6864
        %v6868 = vadd.f32 %v6852, %v6861
        %v6869 = vadd.f32 %v6853, %v6865
        %v6870 = vadd.f32 %v6854, %v6861
        %v6871 = vadd.f32 %v6855, %v6865
        %v6872 = vmax.f32 %v6868, 0.0
        %v6873 = vmax.f32 %v6869, 0.0
        %v6874 = vmax.f32 %v6870, 0.0
        %v6875 = vmax.f32 %v6871, 0.0
        %6876 = vst [vmem:[%s507] sm:$0xff] %v6872
        %6877 = vst [vmem:[%s507 + $0x8] sm:$0xff] %v6873
        %6878 = vst [vmem:[%s507 + $0x10] sm:$0xff] %v6874
        %6879 = vst [vmem:[%s507 + $0x18] sm:$0xff] %v6875
        %s6880 = sand.u32 %s321, 1
        %s6881 = scalar_lea.sflag [#allocation7], %s6880
        %s6882 = sand.u32 %s321, 1
        %s6883 = smul.addr %s6882, 32
        %s6884 = scalar_lea.vmem [#allocation13], %s6883
        // Predicated region
        $region89: #{tpu_custom_call.1} parent=71 // pred_check
          %p6885 = pneg %p331
        $region90: #{tpu_custom_call.1} parent=71 // pred_check_branch
          %6887 = sbr.rel (%p6885) target = $region92
        $region91: #{tpu_custom_call.1} parent=71 // pred_region
          %s6889 = ssub.s32 512, 512
          %6890 = vsyncadd %s6881, %s6889
          %s6891 = smul.addr %s30, 4
          %s6892 = smul.addr %s6891, 128
          %s6893 = scalar_lea.hbm %s13, %s6892
          %s6894 = sshll.u32 %s6884, 4
          %s6895 = int_to_ptr.vmem [resolvable:$true] %s6894
          %6900 = dma.vmem_to_hbm [thread:$0]  %s6895, 512, %s6893, %s6881, 256, 256, 16
        $region92: #{tpu_custom_call.1} parent=71 // pred_fallthru
          _
      $region72: #{tpu_custom_call.1} parent=5 // pred_fallthru
        _
      %p6901 = scmp.le.s32.totalorder 2, %s25
      // Predicated region
      $region93: #{tpu_custom_call.1} parent=5 // pred_check
        %p6902 = pneg %p6901
      $region94: #{tpu_custom_call.1} parent=5 // pred_check_branch
        %6904 = sbr.rel (%p6902) target = $region96
      $region95: #{tpu_custom_call.1} parent=5 // pred_region
        %s6905 = ssub.s32 %s25, 2
        // Predicated region
        $region97: #{tpu_custom_call.1} parent=95 // pred_check
          %p6906 = pneg %p337
        $region98: #{tpu_custom_call.1} parent=95 // pred_check_branch
          %6908 = sbr.rel (%p6906) target = $region100
        $region99: #{tpu_custom_call.1} parent=95 // pred_region
          %s6909 = sand.u32 %s322, 1
          %s6910 = scalar_lea.sflag [#allocation7], %s6909
          %s6911 = sand.u32 %s322, 1
          %s6912 = smul.addr %s6911, 32
          %s6913 = scalar_lea.vmem [#allocation13], %s6912
          %6914 = dma.done %s6910, 512
        $region100: #{tpu_custom_call.1} parent=95 // pred_fallthru
          _
      $region96: #{tpu_custom_call.1} parent=5 // pred_fallthru
        _
    $region6: #{tpu_custom_call.1} parent=1 // loop_footer
      %s29 = sadd.s32 1, %s25
    $region7: #{tpu_custom_call.1} parent=1 // loop_footer_branch
      %24 = sbr.rel target = $region3
    $region8: #{tpu_custom_call.1} parent=1 // loop_exit
      _
    %6915 = vsyncpa [#allocation6], 1
    %s6916 = scalar_lea.sflag [#allocation6], 1
    %6917 = vsyncpa %s6916, 1
    %6918 = vsyncpa [#allocation9], 1
    %6919 = vsyncpa [#allocation12], 1
    %6920 = vsyncpa [#allocation7], 1
    %s6921 = scalar_lea.sflag [#allocation7], 1
    %6922 = vsyncpa %s6921, 1

</llo_original>
